<compile_context>
chip_gen: v5e
topology: v5e:2x2
jax: 0.10.0
libtpu: 0.0.40
codegen_flags: <defaults>
</compile_context>

<pallas_src>
import jax
import jax.numpy as jnp
import numpy as np
from jax.experimental import pallas as pl
from jax.experimental.pallas import tpu as pltpu


def _round_up(x, m):
    return ((x + m - 1) // m) * m


def decoder_kernel(g1e_ref, keyT_ref, valf_ref, maskb_ref,
                   w1c_ref, w1h_ref, w2x_ref, w2h_ref, b2_ref,
                   wph_ref, wpc_ref, bp_ref, out_ref):
    """Single invocation: full T_dec recurrence unrolled inside the kernel."""
    T_dec, N, _ = g1e_ref.shape
    Hp = w1h_ref.shape[0]              # padded lstm1 hidden size (lane multiple)
    K = w2h_ref.shape[0]               # lstm2 hidden size == key_size
    Vocp = out_ref.shape[-1]
    bf16 = jnp.bfloat16
    f32 = jnp.float32

    # Hoist the tiny bias broadcasts out of the unrolled loop (not CSE'd by JAX).
    b2b = jnp.broadcast_to(b2_ref[...], (N, 4 * K))
    bpb = jnp.broadcast_to(bp_ref[...], (N, Vocp))

    h1 = jnp.zeros((N, Hp), f32)
    c1 = jnp.zeros((N, Hp), f32)
    h2 = jnp.zeros((N, K), f32)
    c2 = jnp.zeros((N, K), f32)

    # T_dec is small and static -> unroll in Python; ref reads stay inside the
    # loop so live ranges stay bounded (no spill around steps).
    for i in range(T_dec):
        h1_bf = h1.astype(bf16)
        h2_bf = h2.astype(bf16)

        # ---- Matmuls depending only on previous-step state: issue first so the
        # scheduler can overlap them with the attention chain.
        g1h = jnp.dot(h1_bf, w1h_ref[...], preferred_element_type=f32)   # (N,4Hp)
        g2h = jnp.dot(h2_bf, w2h_ref[...], preferred_element_type=f32)   # (N,4K)

        # ---- Attention on the MXU: query = h2_prev vs flattened keys,
        # block-diagonal (+ src_lens) additive mask handles batch separation.
        energy = jnp.dot(h2_bf, keyT_ref[...],
                         preferred_element_type=f32) + maskb_ref[...]    # (N, N*T_enc)
        m = jnp.max(energy, axis=-1, keepdims=True)
        p = jnp.exp(energy - m)
        inv = pl.reciprocal(jnp.sum(p, axis=-1, keepdims=True), approx=True)
        attn = (p * inv).astype(bf16)
        context = jnp.dot(attn, valf_ref[...], preferred_element_type=f32)  # (N, V)
        ctx_bf = context.astype(bf16)

        # ---- Output-projection context half (independent of h2_new -> early).
        proj_c = jnp.dot(ctx_bf, wpc_ref[...], preferred_element_type=f32)  # (N, Vocp)

        # ---- LSTMCell 1 (gate order [i, f, o, g]; emb@W_ih + b precomputed).
        gates1 = (g1e_ref[i] + g1h
                  + jnp.dot(ctx_bf, w1c_ref[...], preferred_element_type=f32))
        s1 = jax.nn.sigmoid(gates1[:, :3 * Hp])
        g1 = jnp.tanh(gates1[:, 3 * Hp:])
        c1 = s1[:, Hp:2 * Hp] * c1 + s1[:, :Hp] * g1
        h1 = s1[:, 2 * Hp:3 * Hp] * jnp.tanh(c1)

        # ---- LSTMCell 2.
        gates2 = (g2h + b2b
                  + jnp.dot(h1.astype(bf16), w2x_ref[...],
                            preferred_element_type=f32))
        s2 = jax.nn.sigmoid(gates2[:, :3 * K])
        g2 = jnp.tanh(gates2[:, 3 * K:])
        c2 = s2[:, K:2 * K] * c2 + s2[:, :K] * g2
        h2 = s2[:, 2 * K:3 * K] * jnp.tanh(c2)

        # ---- character_prob: h2 half of projection, lane-dense (N, Vocp) store.
        out_ref[i] = (proj_c + bpb
                      + jnp.dot(h2.astype(bf16), wph_ref[...],
                                preferred_element_type=f32))


def decoder_forward(params, key, value, src_lens, text):
    """key/value: (N, T_enc, K/V) f32; src_lens: (N,) i32; text: (N, T_dec) i32."""
    N, T_enc, K = key.shape
    V = value.shape[-1]
    T_dec = text.shape[1]
    H = params["w1h"].shape[0]
    vocab = params["wph"].shape[1]
    f32, bf16 = jnp.float32, jnp.bfloat16

    Hp = _round_up(H, 128)          # pad lstm1 hidden to lane width
    Vocp = _round_up(vocab, 128)    # pad vocab to lane width
    NT = N * T_enc

    def prep_gates(w, h, hp):
        """Reorder gate cols [i,f,g,o] -> [i,f,o,g], zero-pad each gate to hp."""
        lead = w.shape[:-1]
        w4 = w.reshape(lead + (4, h))[..., (0, 1, 3, 2), :]
        w4 = jnp.pad(w4, [(0, 0)] * len(lead) + [(0, 0), (0, hp - h)])
        return w4.reshape(lead + (4 * hp,))

    # lstm1 weights kept separate (dependency split); padded + bf16 operands.
    w1e_p = prep_gates(params["w1e"].astype(f32), H, Hp)                 # (E, 4Hp)
    b1_p = prep_gates(params["b1"].astype(f32), H, Hp)                   # (1, 4Hp)
    w1c_p = prep_gates(params["w1c"].astype(f32), H, Hp).astype(bf16)    # (V, 4Hp)
    w1h_p = jnp.pad(prep_gates(params["w1h"].astype(f32), H, Hp),
                    [(0, Hp - H), (0, 0)]).astype(bf16)                  # (Hp, 4Hp)

    # lstm2 weights (gate width K already lane-aligned; reorder + pad h1 rows).
    w2x_p = jnp.pad(prep_gates(params["w2x"].astype(f32), K, K),
                    [(0, Hp - H), (0, 0)]).astype(bf16)                  # (Hp, 4K)
    w2h_p = prep_gates(params["w2h"].astype(f32), K, K).astype(bf16)     # (K, 4K)
    b2_p = prep_gates(params["b2"].astype(f32), K, K)                    # (1, 4K)

    # output projection: separate h2 / context halves, vocab padded to lanes.
    wph_p = jnp.pad(params["wph"].astype(f32),
                    [(0, 0), (0, Vocp - vocab)]).astype(bf16)            # (K, Vocp)
    wpc_p = jnp.pad(params["wpc"].astype(f32),
                    [(0, 0), (0, Vocp - vocab)]).astype(bf16)            # (V, Vocp)
    bp_p = jnp.pad(params["bp"].astype(f32), [(0, 0), (0, Vocp - vocab)])

    # hoisted non-recurrent input-gate matmul (one big XLA matmul, M = T_dec*N)
    emb = jnp.take(params["emb"], text, axis=0).astype(f32)              # (N,T_dec,E)
    g1e = jnp.einsum('nte,eg->tng', emb, w1e_p) + b1_p                   # (T_dec,N,4Hp)

    # flattened key/value for MXU attention + block-diagonal additive mask
    keyT = key.astype(f32).reshape(NT, K).T.astype(bf16)                 # (K, NT)
    valf = value.astype(f32).reshape(NT, V).astype(bf16)                 # (NT, V)
    flat_b = jnp.arange(NT)[None, :] // T_enc
    flat_t = jnp.arange(NT)[None, :] % T_enc
    valid = (flat_b == jnp.arange(N)[:, None]) & (flat_t < src_lens[:, None])
    maskb = jnp.where(valid, jnp.float32(0.0), jnp.float32(-1e9))        # (N, NT)

    vmem = pl.BlockSpec(memory_space=pltpu.MemorySpace.VMEM)
    out = pl.pallas_call(
        decoder_kernel,
        out_shape=jax.ShapeDtypeStruct((T_dec, N, Vocp), jnp.float32),
        in_specs=[vmem] * 12,
        out_specs=pl.BlockSpec(memory_space=pltpu.MemorySpace.VMEM),
    )(g1e, keyT, valf, maskb,
      w1c_p, w1h_p, w2x_p, w2h_p, b2_p, wph_p, wpc_p, bp_p)

    # back to PyTorch convention (N, T_dec, vocab), drop vocab padding
    return jnp.transpose(out, (1, 0, 2))[:, :, :vocab]


def reference_forward(params, key, value, src_lens, text):
    """Pure-JAX f32 reference mirroring the PyTorch forward (teacher forcing path)."""
    N, T_enc, K = key.shape
    T_dec = text.shape[1]
    H = params["w1h"].shape[0]
    emb = jnp.take(params["emb"], text, axis=0)
    mask = jnp.arange(T_enc)[None, :] >= src_lens[:, None]
    h1 = jnp.zeros((N, H)); c1 = jnp.zeros((N, H))
    h2 = jnp.zeros((N, K)); c2 = jnp.zeros((N, K))
    preds = []
    for i in range(T_dec):
        energy = jnp.sum(key * h2[:, None, :], axis=-1)
        energy = jnp.where(mask, -1e9, energy)
        attn = jax.nn.softmax(energy, axis=1)
        context = jnp.sum(attn[:, :, None] * value, axis=1)
        x = emb[:, i, :]
        g1 = x @ params["w1e"] + context @ params["w1c"] + h1 @ params["w1h"] + params["b1"]
        i1, f1, gg1, o1 = jnp.split(g1, 4, axis=1)
        c1 = jax.nn.sigmoid(f1) * c1 + jax.nn.sigmoid(i1) * jnp.tanh(gg1)
        h1 = jax.nn.sigmoid(o1) * jnp.tanh(c1)
        g2 = h1 @ params["w2x"] + h2 @ params["w2h"] + params["b2"]
        i2, f2, gg2, o2 = jnp.split(g2, 4, axis=1)
        c2 = jax.nn.sigmoid(f2) * c2 + jax.nn.sigmoid(i2) * jnp.tanh(gg2)
        h2 = jax.nn.sigmoid(o2) * jnp.tanh(c2)
        logits = h2 @ params["wph"] + context @ params["wpc"] + params["bp"]
        preds.append(logits[:, None, :])
    return jnp.concatenate(preds, axis=1)


def init_params(rng, vocab_size, emb_dim, hidden_dim, key_size, value_size):
    """Deterministic uniform(-0.1, 0.1) init (matches the module's init_weights)."""
    initrange = 0.1
    keys = jax.random.split(rng, 11)
    u = lambda k, shape: jax.random.uniform(k, shape, jnp.float32, -initrange, initrange)
    return {
        "emb":  u(keys[0], (vocab_size, emb_dim)),
        # lstm1: W_ih split into emb rows / context rows (pre-transposed), W_hh, bias(ih+hh)
        "w1e":  u(keys[1], (emb_dim, 4 * hidden_dim)),
        "w1c":  u(keys[2], (value_size, 4 * hidden_dim)),
        "w1h":  u(keys[3], (hidden_dim, 4 * hidden_dim)),
        "b1":   u(keys[4], (1, 4 * hidden_dim)),
        # lstm2
        "w2x":  u(keys[5], (hidden_dim, 4 * key_size)),
        "w2h":  u(keys[6], (key_size, 4 * key_size)),
        "b2":   u(keys[7], (1, 4 * key_size)),
        # character_prob linear (split into h2 rows / context rows, pre-transposed)
        "wph":  u(keys[8], (key_size, vocab_size)),
        "wpc":  u(keys[9], (value_size, vocab_size)),
        "bp":   u(keys[10], (1, vocab_size)),
    }


if __name__ == "__main__":
    # small shapes consistent with the module
    N, T_enc, T_dec = 8, 16, 8
    vocab_size, emb_dim, hidden_dim = 64, 32, 64
    key_size, value_size = 128, 128

    root = jax.random.PRNGKey(0)
    k_par, k_key, k_val, k_txt = jax.random.split(root, 4)

    params = init_params(k_par, vocab_size, emb_dim, hidden_dim, key_size, value_size)
    key = jax.random.normal(k_key, (N, T_enc, key_size), jnp.float32) * 0.5
    value = jax.random.normal(k_val, (N, T_enc, value_size), jnp.float32) * 0.5
    src_lens = jnp.array([16, 12, 8, 16, 10, 16, 5, 16], dtype=jnp.int32)
    text = jax.random.randint(k_txt, (N, T_dec), 1, vocab_size, dtype=jnp.int32)

    out = jax.block_until_ready(decoder_forward(params, key, value, src_lens, text))
    ref = jax.block_until_ready(reference_forward(params, key, value, src_lens, text))

    assert out.shape == (N, T_dec, vocab_size), out.shape
    # bf16 MXU operands (f32 accumulation) -> slightly looser tolerance than pure f32.
    np.testing.assert_allclose(np.asarray(out), np.asarray(ref), rtol=2e-2, atol=2e-2)
    print("KERNEL_OK")
</pallas_src>

<mosaic_0001>
module attributes {stable_mosaic.version = 11 : i64} {
  func.func @decoder_kernel(%arg0: memref<8x8x512xf32, #tpu.memory_space<vmem>>, %arg1: memref<128x128xbf16, #tpu.memory_space<vmem>>, %arg2: memref<128x128xbf16, #tpu.memory_space<vmem>>, %arg3: memref<8x128xf32, #tpu.memory_space<vmem>>, %arg4: memref<128x512xbf16, #tpu.memory_space<vmem>>, %arg5: memref<128x512xbf16, #tpu.memory_space<vmem>>, %arg6: memref<128x512xbf16, #tpu.memory_space<vmem>>, %arg7: memref<128x512xbf16, #tpu.memory_space<vmem>>, %arg8: memref<1x512xf32, #tpu.memory_space<vmem>>, %arg9: memref<128x128xbf16, #tpu.memory_space<vmem>>, %arg10: memref<128x128xbf16, #tpu.memory_space<vmem>>, %arg11: memref<1x128xf32, #tpu.memory_space<vmem>>, %arg12: memref<8x8x128xf32, #tpu.memory_space<vmem>>) attributes {dimension_semantics = [], scalar_prefetch = 0 : i64, scratch_operands = 0 : i64, tpu.core_type = #tpu.core_type<tc>} {
    %c0 = arith.constant 0 : index
    %c0_0 = arith.constant 0 : index
    %0 = vector.load %arg8[%c0, %c0_0] : memref<1x512xf32, #tpu.memory_space<vmem>>, vector<1x512xf32>
    %1 = vector.shape_cast %0 : vector<1x512xf32> to vector<1x512xf32>
    %2 = vector.broadcast %1 : vector<1x512xf32> to vector<8x512xf32>
    %c0_1 = arith.constant 0 : index
    %c0_2 = arith.constant 0 : index
    %3 = vector.load %arg11[%c0_1, %c0_2] : memref<1x128xf32, #tpu.memory_space<vmem>>, vector<1x128xf32>
    %4 = vector.shape_cast %3 : vector<1x128xf32> to vector<1x128xf32>
    %5 = vector.broadcast %4 : vector<1x128xf32> to vector<8x128xf32>
    %cst = arith.constant 0.000000e+00 : f32
    %6 = vector.broadcast %cst : f32 to vector<8x128xf32>
    %cst_3 = arith.constant 0.000000e+00 : f32
    %7 = vector.broadcast %cst_3 : f32 to vector<8x128xf32>
    %cst_4 = arith.constant 0.000000e+00 : f32
    %8 = vector.broadcast %cst_4 : f32 to vector<8x128xf32>
    %cst_5 = arith.constant 0.000000e+00 : f32
    %9 = vector.broadcast %cst_5 : f32 to vector<8x128xf32>
    %10 = arith.truncf %6 : vector<8x128xf32> to vector<8x128xbf16>
    %11 = arith.truncf %8 : vector<8x128xf32> to vector<8x128xbf16>
    %c0_6 = arith.constant 0 : index
    %c0_7 = arith.constant 0 : index
    %12 = vector.load %arg5[%c0_6, %c0_7] : memref<128x512xbf16, #tpu.memory_space<vmem>>, vector<128x512xbf16>
    %cst_8 = arith.constant dense<0.000000e+00> : vector<8x512xf32>
    %13 = tpu.matmul %10, %12, %cst_8 {dimension_numbers = #tpu.dot_dimension_numbers<[1], [0], [0], [1], [0, 0, 1, 1], [], []>} : vector<8x128xbf16>, vector<128x512xbf16>, vector<8x512xf32> -> vector<8x512xf32>
    %c0_9 = arith.constant 0 : index
    %c0_10 = arith.constant 0 : index
    %14 = vector.load %arg7[%c0_9, %c0_10] : memref<128x512xbf16, #tpu.memory_space<vmem>>, vector<128x512xbf16>
    %cst_11 = arith.constant dense<0.000000e+00> : vector<8x512xf32>
    %15 = tpu.matmul %11, %14, %cst_11 {dimension_numbers = #tpu.dot_dimension_numbers<[1], [0], [0], [1], [0, 0, 1, 1], [], []>} : vector<8x128xbf16>, vector<128x512xbf16>, vector<8x512xf32> -> vector<8x512xf32>
    %c0_12 = arith.constant 0 : index
    %c0_13 = arith.constant 0 : index
    %16 = vector.load %arg1[%c0_12, %c0_13] : memref<128x128xbf16, #tpu.memory_space<vmem>>, vector<128x128xbf16>
    %cst_14 = arith.constant dense<0.000000e+00> : vector<8x128xf32>
    %17 = tpu.matmul %11, %16, %cst_14 {dimension_numbers = #tpu.dot_dimension_numbers<[1], [0], [0], [1], [0, 0, 1, 1], [], []>} : vector<8x128xbf16>, vector<128x128xbf16>, vector<8x128xf32> -> vector<8x128xf32>
    %c0_15 = arith.constant 0 : index
    %c0_16 = arith.constant 0 : index
    %18 = vector.load %arg3[%c0_15, %c0_16] : memref<8x128xf32, #tpu.memory_space<vmem>>, vector<8x128xf32>
    %19 = arith.addf %17, %18 : vector<8x128xf32>
    %cst_17 = arith.constant dense<0xFF800000> : vector<8xf32>
    %20 = vector.multi_reduction <maximumf>, %19, %cst_17 [1] : vector<8x128xf32> to vector<8xf32>
    %21 = vector.shape_cast %20 : vector<8xf32> to vector<8x1xf32>
    %22 = vector.broadcast %21 : vector<8x1xf32> to vector<8x128xf32>
    %23 = arith.subf %19, %22 : vector<8x128xf32>
    %24 = math.exp %23 : vector<8x128xf32>
    %cst_18 = arith.constant dense<0.000000e+00> : vector<8xf32>
    %25 = vector.multi_reduction <add>, %24, %cst_18 [1] : vector<8x128xf32> to vector<8xf32>
    %26 = vector.shape_cast %25 : vector<8xf32> to vector<8x1xf32>
    %27 = tpu.reciprocal %26 {approx = true} : vector<8x1xf32> -> vector<8x1xf32>
    %28 = vector.broadcast %27 : vector<8x1xf32> to vector<8x128xf32>
    %29 = arith.mulf %24, %28 : vector<8x128xf32>
    %30 = arith.truncf %29 : vector<8x128xf32> to vector<8x128xbf16>
    %c0_19 = arith.constant 0 : index
    %c0_20 = arith.constant 0 : index
    %31 = vector.load %arg2[%c0_19, %c0_20] : memref<128x128xbf16, #tpu.memory_space<vmem>>, vector<128x128xbf16>
    %cst_21 = arith.constant dense<0.000000e+00> : vector<8x128xf32>
    %32 = tpu.matmul %30, %31, %cst_21 {dimension_numbers = #tpu.dot_dimension_numbers<[1], [0], [0], [1], [0, 0, 1, 1], [], []>} : vector<8x128xbf16>, vector<128x128xbf16>, vector<8x128xf32> -> vector<8x128xf32>
    %33 = arith.truncf %32 : vector<8x128xf32> to vector<8x128xbf16>
    %c0_22 = arith.constant 0 : index
    %c0_23 = arith.constant 0 : index
    %34 = vector.load %arg10[%c0_22, %c0_23] : memref<128x128xbf16, #tpu.memory_space<vmem>>, vector<128x128xbf16>
    %cst_24 = arith.constant dense<0.000000e+00> : vector<8x128xf32>
    %35 = tpu.matmul %33, %34, %cst_24 {dimension_numbers = #tpu.dot_dimension_numbers<[1], [0], [0], [1], [0, 0, 1, 1], [], []>} : vector<8x128xbf16>, vector<128x128xbf16>, vector<8x128xf32> -> vector<8x128xf32>
    %c0_25 = arith.constant 0 : index
    %c0_26 = arith.constant 0 : index
    %c0_27 = arith.constant 0 : index
    %36 = vector.load %arg0[%c0_25, %c0_26, %c0_27] : memref<8x8x512xf32, #tpu.memory_space<vmem>>, vector<1x8x512xf32>
    %37 = vector.shape_cast %36 : vector<1x8x512xf32> to vector<8x512xf32>
    %38 = arith.addf %37, %13 : vector<8x512xf32>
    %c0_28 = arith.constant 0 : index
    %c0_29 = arith.constant 0 : index
    %39 = vector.load %arg4[%c0_28, %c0_29] : memref<128x512xbf16, #tpu.memory_space<vmem>>, vector<128x512xbf16>
    %cst_30 = arith.constant dense<0.000000e+00> : vector<8x512xf32>
    %40 = tpu.matmul %33, %39, %cst_30 {dimension_numbers = #tpu.dot_dimension_numbers<[1], [0], [0], [1], [0, 0, 1, 1], [], []>} : vector<8x128xbf16>, vector<128x512xbf16>, vector<8x512xf32> -> vector<8x512xf32>
    %41 = arith.addf %38, %40 : vector<8x512xf32>
    %42 = vector.extract_strided_slice %41 {offsets = [0, 0], sizes = [8, 384], strides = [1, 1]} : vector<8x512xf32> to vector<8x384xf32>
    %43 = arith.negf %42 : vector<8x384xf32>
    %44 = math.exp %43 : vector<8x384xf32>
    %cst_31 = arith.constant 1.000000e+00 : f32
    %45 = vector.broadcast %cst_31 : f32 to vector<8x384xf32>
    %46 = arith.addf %45, %44 : vector<8x384xf32>
    %47 = arith.divf %45, %46 : vector<8x384xf32>
    %48 = vector.extract_strided_slice %41 {offsets = [0, 384], sizes = [8, 128], strides = [1, 1]} : vector<8x512xf32> to vector<8x128xf32>
    %49 = math.tanh %48 : vector<8x128xf32>
    %50 = vector.extract_strided_slice %47 {offsets = [0, 128], sizes = [8, 128], strides = [1, 1]} : vector<8x384xf32> to vector<8x128xf32>
    %51 = arith.mulf %50, %7 : vector<8x128xf32>
    %52 = vector.extract_strided_slice %47 {offsets = [0, 0], sizes = [8, 128], strides = [1, 1]} : vector<8x384xf32> to vector<8x128xf32>
    %53 = arith.mulf %52, %49 : vector<8x128xf32>
    %54 = arith.addf %51, %53 : vector<8x128xf32>
    %55 = vector.extract_strided_slice %47 {offsets = [0, 256], sizes = [8, 128], strides = [1, 1]} : vector<8x384xf32> to vector<8x128xf32>
    %56 = math.tanh %54 : vector<8x128xf32>
    %57 = arith.mulf %55, %56 : vector<8x128xf32>
    %58 = arith.addf %15, %2 : vector<8x512xf32>
    %59 = arith.truncf %57 : vector<8x128xf32> to vector<8x128xbf16>
    %c0_32 = arith.constant 0 : index
    %c0_33 = arith.constant 0 : index
    %60 = vector.load %arg6[%c0_32, %c0_33] : memref<128x512xbf16, #tpu.memory_space<vmem>>, vector<128x512xbf16>
    %cst_34 = arith.constant dense<0.000000e+00> : vector<8x512xf32>
    %61 = tpu.matmul %59, %60, %cst_34 {dimension_numbers = #tpu.dot_dimension_numbers<[1], [0], [0], [1], [0, 0, 1, 1], [], []>} : vector<8x128xbf16>, vector<128x512xbf16>, vector<8x512xf32> -> vector<8x512xf32>
    %62 = arith.addf %58, %61 : vector<8x512xf32>
    %63 = vector.extract_strided_slice %62 {offsets = [0, 0], sizes = [8, 384], strides = [1, 1]} : vector<8x512xf32> to vector<8x384xf32>
    %64 = arith.negf %63 : vector<8x384xf32>
    %65 = math.exp %64 : vector<8x384xf32>
    %cst_35 = arith.constant 1.000000e+00 : f32
    %66 = vector.broadcast %cst_35 : f32 to vector<8x384xf32>
    %67 = arith.addf %66, %65 : vector<8x384xf32>
    %68 = arith.divf %66, %67 : vector<8x384xf32>
    %69 = vector.extract_strided_slice %62 {offsets = [0, 384], sizes = [8, 128], strides = [1, 1]} : vector<8x512xf32> to vector<8x128xf32>
    %70 = math.tanh %69 : vector<8x128xf32>
    %71 = vector.extract_strided_slice %68 {offsets = [0, 128], sizes = [8, 128], strides = [1, 1]} : vector<8x384xf32> to vector<8x128xf32>
    %72 = arith.mulf %71, %9 : vector<8x128xf32>
    %73 = vector.extract_strided_slice %68 {offsets = [0, 0], sizes = [8, 128], strides = [1, 1]} : vector<8x384xf32> to vector<8x128xf32>
    %74 = arith.mulf %73, %70 : vector<8x128xf32>
    %75 = arith.addf %72, %74 : vector<8x128xf32>
    %76 = vector.extract_strided_slice %68 {offsets = [0, 256], sizes = [8, 128], strides = [1, 1]} : vector<8x384xf32> to vector<8x128xf32>
    %77 = math.tanh %75 : vector<8x128xf32>
    %78 = arith.mulf %76, %77 : vector<8x128xf32>
    %79 = arith.addf %35, %5 : vector<8x128xf32>
    %80 = arith.truncf %78 : vector<8x128xf32> to vector<8x128xbf16>
    %c0_36 = arith.constant 0 : index
    %c0_37 = arith.constant 0 : index
    %81 = vector.load %arg9[%c0_36, %c0_37] : memref<128x128xbf16, #tpu.memory_space<vmem>>, vector<128x128xbf16>
    %cst_38 = arith.constant dense<0.000000e+00> : vector<8x128xf32>
    %82 = tpu.matmul %80, %81, %cst_38 {dimension_numbers = #tpu.dot_dimension_numbers<[1], [0], [0], [1], [0, 0, 1, 1], [], []>} : vector<8x128xbf16>, vector<128x128xbf16>, vector<8x128xf32> -> vector<8x128xf32>
    %83 = arith.addf %79, %82 : vector<8x128xf32>
    %c0_39 = arith.constant 0 : index
    %c0_40 = arith.constant 0 : index
    %c0_41 = arith.constant 0 : index
    %84 = vector.load %arg12[%c0_39, %c0_40, %c0_41] : memref<8x8x128xf32, #tpu.memory_space<vmem>>, vector<1x8x128xf32>
    %85 = vector.shape_cast %84 : vector<1x8x128xf32> to vector<8x128xf32>
    %86 = vector.shape_cast %83 : vector<8x128xf32> to vector<1x8x128xf32>
    tpu.vector_store %arg12[%c0_39, %c0_40, %c0_41], %86 {strides = array<i32>} : memref<8x8x128xf32, #tpu.memory_space<vmem>>, vector<1x8x128xf32>,
    %87 = arith.truncf %57 : vector<8x128xf32> to vector<8x128xbf16>
    %88 = arith.truncf %78 : vector<8x128xf32> to vector<8x128xbf16>
    %c0_42 = arith.constant 0 : index
    %c0_43 = arith.constant 0 : index
    %89 = vector.load %arg5[%c0_42, %c0_43] : memref<128x512xbf16, #tpu.memory_space<vmem>>, vector<128x512xbf16>
    %cst_44 = arith.constant dense<0.000000e+00> : vector<8x512xf32>
    %90 = tpu.matmul %87, %89, %cst_44 {dimension_numbers = #tpu.dot_dimension_numbers<[1], [0], [0], [1], [0, 0, 1, 1], [], []>} : vector<8x128xbf16>, vector<128x512xbf16>, vector<8x512xf32> -> vector<8x512xf32>
    %c0_45 = arith.constant 0 : index
    %c0_46 = arith.constant 0 : index
    %91 = vector.load %arg7[%c0_45, %c0_46] : memref<128x512xbf16, #tpu.memory_space<vmem>>, vector<128x512xbf16>
    %cst_47 = arith.constant dense<0.000000e+00> : vector<8x512xf32>
    %92 = tpu.matmul %88, %91, %cst_47 {dimension_numbers = #tpu.dot_dimension_numbers<[1], [0], [0], [1], [0, 0, 1, 1], [], []>} : vector<8x128xbf16>, vector<128x512xbf16>, vector<8x512xf32> -> vector<8x512xf32>
    %c0_48 = arith.constant 0 : index
    %c0_49 = arith.constant 0 : index
    %93 = vector.load %arg1[%c0_48, %c0_49] : memref<128x128xbf16, #tpu.memory_space<vmem>>, vector<128x128xbf16>
    %cst_50 = arith.constant dense<0.000000e+00> : vector<8x128xf32>
    %94 = tpu.matmul %88, %93, %cst_50 {dimension_numbers = #tpu.dot_dimension_numbers<[1], [0], [0], [1], [0, 0, 1, 1], [], []>} : vector<8x128xbf16>, vector<128x128xbf16>, vector<8x128xf32> -> vector<8x128xf32>
    %c0_51 = arith.constant 0 : index
    %c0_52 = arith.constant 0 : index
    %95 = vector.load %arg3[%c0_51, %c0_52] : memref<8x128xf32, #tpu.memory_space<vmem>>, vector<8x128xf32>
    %96 = arith.addf %94, %95 : vector<8x128xf32>
    %cst_53 = arith.constant dense<0xFF800000> : vector<8xf32>
    %97 = vector.multi_reduction <maximumf>, %96, %cst_53 [1] : vector<8x128xf32> to vector<8xf32>
    %98 = vector.shape_cast %97 : vector<8xf32> to vector<8x1xf32>
    %99 = vector.broadcast %98 : vector<8x1xf32> to vector<8x128xf32>
    %100 = arith.subf %96, %99 : vector<8x128xf32>
    %101 = math.exp %100 : vector<8x128xf32>
    %cst_54 = arith.constant dense<0.000000e+00> : vector<8xf32>
    %102 = vector.multi_reduction <add>, %101, %cst_54 [1] : vector<8x128xf32> to vector<8xf32>
    %103 = vector.shape_cast %102 : vector<8xf32> to vector<8x1xf32>
    %104 = tpu.reciprocal %103 {approx = true} : vector<8x1xf32> -> vector<8x1xf32>
    %105 = vector.broadcast %104 : vector<8x1xf32> to vector<8x128xf32>
    %106 = arith.mulf %101, %105 : vector<8x128xf32>
    %107 = arith.truncf %106 : vector<8x128xf32> to vector<8x128xbf16>
    %c0_55 = arith.constant 0 : index
    %c0_56 = arith.constant 0 : index
    %108 = vector.load %arg2[%c0_55, %c0_56] : memref<128x128xbf16, #tpu.memory_space<vmem>>, vector<128x128xbf16>
    %cst_57 = arith.constant dense<0.000000e+00> : vector<8x128xf32>
    %109 = tpu.matmul %107, %108, %cst_57 {dimension_numbers = #tpu.dot_dimension_numbers<[1], [0], [0], [1], [0, 0, 1, 1], [], []>} : vector<8x128xbf16>, vector<128x128xbf16>, vector<8x128xf32> -> vector<8x128xf32>
    %110 = arith.truncf %109 : vector<8x128xf32> to vector<8x128xbf16>
    %c0_58 = arith.constant 0 : index
    %c0_59 = arith.constant 0 : index
    %111 = vector.load %arg10[%c0_58, %c0_59] : memref<128x128xbf16, #tpu.memory_space<vmem>>, vector<128x128xbf16>
    %cst_60 = arith.constant dense<0.000000e+00> : vector<8x128xf32>
    %112 = tpu.matmul %110, %111, %cst_60 {dimension_numbers = #tpu.dot_dimension_numbers<[1], [0], [0], [1], [0, 0, 1, 1], [], []>} : vector<8x128xbf16>, vector<128x128xbf16>, vector<8x128xf32> -> vector<8x128xf32>
    %c1 = arith.constant 1 : index
    %c0_61 = arith.constant 0 : index
    %c0_62 = arith.constant 0 : index
    %113 = vector.load %arg0[%c1, %c0_61, %c0_62] : memref<8x8x512xf32, #tpu.memory_space<vmem>>, vector<1x8x512xf32>
    %114 = vector.shape_cast %113 : vector<1x8x512xf32> to vector<8x512xf32>
    %115 = arith.addf %114, %90 : vector<8x512xf32>
    %c0_63 = arith.constant 0 : index
    %c0_64 = arith.constant 0 : index
    %116 = vector.load %arg4[%c0_63, %c0_64] : memref<128x512xbf16, #tpu.memory_space<vmem>>, vector<128x512xbf16>
    %cst_65 = arith.constant dense<0.000000e+00> : vector<8x512xf32>
    %117 = tpu.matmul %110, %116, %cst_65 {dimension_numbers = #tpu.dot_dimension_numbers<[1], [0], [0], [1], [0, 0, 1, 1], [], []>} : vector<8x128xbf16>, vector<128x512xbf16>, vector<8x512xf32> -> vector<8x512xf32>
    %118 = arith.addf %115, %117 : vector<8x512xf32>
    %119 = vector.extract_strided_slice %118 {offsets = [0, 0], sizes = [8, 384], strides = [1, 1]} : vector<8x512xf32> to vector<8x384xf32>
    %120 = arith.negf %119 : vector<8x384xf32>
    %121 = math.exp %120 : vector<8x384xf32>
    %cst_66 = arith.constant 1.000000e+00 : f32
    %122 = vector.broadcast %cst_66 : f32 to vector<8x384xf32>
    %123 = arith.addf %122, %121 : vector<8x384xf32>
    %124 = arith.divf %122, %123 : vector<8x384xf32>
    %125 = vector.extract_strided_slice %118 {offsets = [0, 384], sizes = [8, 128], strides = [1, 1]} : vector<8x512xf32> to vector<8x128xf32>
    %126 = math.tanh %125 : vector<8x128xf32>
    %127 = vector.extract_strided_slice %124 {offsets = [0, 128], sizes = [8, 128], strides = [1, 1]} : vector<8x384xf32> to vector<8x128xf32>
    %128 = arith.mulf %127, %54 : vector<8x128xf32>
    %129 = vector.extract_strided_slice %124 {offsets = [0, 0], sizes = [8, 128], strides = [1, 1]} : vector<8x384xf32> to vector<8x128xf32>
    %130 = arith.mulf %129, %126 : vector<8x128xf32>
    %131 = arith.addf %128, %130 : vector<8x128xf32>
    %132 = vector.extract_strided_slice %124 {offsets = [0, 256], sizes = [8, 128], strides = [1, 1]} : vector<8x384xf32> to vector<8x128xf32>
    %133 = math.tanh %131 : vector<8x128xf32>
    %134 = arith.mulf %132, %133 : vector<8x128xf32>
    %135 = arith.addf %92, %2 : vector<8x512xf32>
    %136 = arith.truncf %134 : vector<8x128xf32> to vector<8x128xbf16>
    %c0_67 = arith.constant 0 : index
    %c0_68 = arith.constant 0 : index
    %137 = vector.load %arg6[%c0_67, %c0_68] : memref<128x512xbf16, #tpu.memory_space<vmem>>, vector<128x512xbf16>
    %cst_69 = arith.constant dense<0.000000e+00> : vector<8x512xf32>
    %138 = tpu.matmul %136, %137, %cst_69 {dimension_numbers = #tpu.dot_dimension_numbers<[1], [0], [0], [1], [0, 0, 1, 1], [], []>} : vector<8x128xbf16>, vector<128x512xbf16>, vector<8x512xf32> -> vector<8x512xf32>
    %139 = arith.addf %135, %138 : vector<8x512xf32>
    %140 = vector.extract_strided_slice %139 {offsets = [0, 0], sizes = [8, 384], strides = [1, 1]} : vector<8x512xf32> to vector<8x384xf32>
    %141 = arith.negf %140 : vector<8x384xf32>
    %142 = math.exp %141 : vector<8x384xf32>
    %cst_70 = arith.constant 1.000000e+00 : f32
    %143 = vector.broadcast %cst_70 : f32 to vector<8x384xf32>
    %144 = arith.addf %143, %142 : vector<8x384xf32>
    %145 = arith.divf %143, %144 : vector<8x384xf32>
    %146 = vector.extract_strided_slice %139 {offsets = [0, 384], sizes = [8, 128], strides = [1, 1]} : vector<8x512xf32> to vector<8x128xf32>
    %147 = math.tanh %146 : vector<8x128xf32>
    %148 = vector.extract_strided_slice %145 {offsets = [0, 128], sizes = [8, 128], strides = [1, 1]} : vector<8x384xf32> to vector<8x128xf32>
    %149 = arith.mulf %148, %75 : vector<8x128xf32>
    %150 = vector.extract_strided_slice %145 {offsets = [0, 0], sizes = [8, 128], strides = [1, 1]} : vector<8x384xf32> to vector<8x128xf32>
    %151 = arith.mulf %150, %147 : vector<8x128xf32>
    %152 = arith.addf %149, %151 : vector<8x128xf32>
    %153 = vector.extract_strided_slice %145 {offsets = [0, 256], sizes = [8, 128], strides = [1, 1]} : vector<8x384xf32> to vector<8x128xf32>
    %154 = math.tanh %152 : vector<8x128xf32>
    %155 = arith.mulf %153, %154 : vector<8x128xf32>
    %156 = arith.addf %112, %5 : vector<8x128xf32>
    %157 = arith.truncf %155 : vector<8x128xf32> to vector<8x128xbf16>
    %c0_71 = arith.constant 0 : index
    %c0_72 = arith.constant 0 : index
    %158 = vector.load %arg9[%c0_71, %c0_72] : memref<128x128xbf16, #tpu.memory_space<vmem>>, vector<128x128xbf16>
    %cst_73 = arith.constant dense<0.000000e+00> : vector<8x128xf32>
    %159 = tpu.matmul %157, %158, %cst_73 {dimension_numbers = #tpu.dot_dimension_numbers<[1], [0], [0], [1], [0, 0, 1, 1], [], []>} : vector<8x128xbf16>, vector<128x128xbf16>, vector<8x128xf32> -> vector<8x128xf32>
    %160 = arith.addf %156, %159 : vector<8x128xf32>
    %c1_74 = arith.constant 1 : index
    %c0_75 = arith.constant 0 : index
    %c0_76 = arith.constant 0 : index
    %161 = vector.load %arg12[%c1_74, %c0_75, %c0_76] : memref<8x8x128xf32, #tpu.memory_space<vmem>>, vector<1x8x128xf32>
    %162 = vector.shape_cast %161 : vector<1x8x128xf32> to vector<8x128xf32>
    %163 = vector.shape_cast %160 : vector<8x128xf32> to vector<1x8x128xf32>
    tpu.vector_store %arg12[%c1_74, %c0_75, %c0_76], %163 {strides = array<i32>} : memref<8x8x128xf32, #tpu.memory_space<vmem>>, vector<1x8x128xf32>,
    %164 = arith.truncf %134 : vector<8x128xf32> to vector<8x128xbf16>
    %165 = arith.truncf %155 : vector<8x128xf32> to vector<8x128xbf16>
    %c0_77 = arith.constant 0 : index
    %c0_78 = arith.constant 0 : index
    %166 = vector.load %arg5[%c0_77, %c0_78] : memref<128x512xbf16, #tpu.memory_space<vmem>>, vector<128x512xbf16>
    %cst_79 = arith.constant dense<0.000000e+00> : vector<8x512xf32>
    %167 = tpu.matmul %164, %166, %cst_79 {dimension_numbers = #tpu.dot_dimension_numbers<[1], [0], [0], [1], [0, 0, 1, 1], [], []>} : vector<8x128xbf16>, vector<128x512xbf16>, vector<8x512xf32> -> vector<8x512xf32>
    %c0_80 = arith.constant 0 : index
    %c0_81 = arith.constant 0 : index
    %168 = vector.load %arg7[%c0_80, %c0_81] : memref<128x512xbf16, #tpu.memory_space<vmem>>, vector<128x512xbf16>
    %cst_82 = arith.constant dense<0.000000e+00> : vector<8x512xf32>
    %169 = tpu.matmul %165, %168, %cst_82 {dimension_numbers = #tpu.dot_dimension_numbers<[1], [0], [0], [1], [0, 0, 1, 1], [], []>} : vector<8x128xbf16>, vector<128x512xbf16>, vector<8x512xf32> -> vector<8x512xf32>
    %c0_83 = arith.constant 0 : index
    %c0_84 = arith.constant 0 : index
    %170 = vector.load %arg1[%c0_83, %c0_84] : memref<128x128xbf16, #tpu.memory_space<vmem>>, vector<128x128xbf16>
    %cst_85 = arith.constant dense<0.000000e+00> : vector<8x128xf32>
    %171 = tpu.matmul %165, %170, %cst_85 {dimension_numbers = #tpu.dot_dimension_numbers<[1], [0], [0], [1], [0, 0, 1, 1], [], []>} : vector<8x128xbf16>, vector<128x128xbf16>, vector<8x128xf32> -> vector<8x128xf32>
    %c0_86 = arith.constant 0 : index
    %c0_87 = arith.constant 0 : index
    %172 = vector.load %arg3[%c0_86, %c0_87] : memref<8x128xf32, #tpu.memory_space<vmem>>, vector<8x128xf32>
    %173 = arith.addf %171, %172 : vector<8x128xf32>
    %cst_88 = arith.constant dense<0xFF800000> : vector<8xf32>
    %174 = vector.multi_reduction <maximumf>, %173, %cst_88 [1] : vector<8x128xf32> to vector<8xf32>
    %175 = vector.shape_cast %174 : vector<8xf32> to vector<8x1xf32>
    %176 = vector.broadcast %175 : vector<8x1xf32> to vector<8x128xf32>
    %177 = arith.subf %173, %176 : vector<8x128xf32>
    %178 = math.exp %177 : vector<8x128xf32>
    %cst_89 = arith.constant dense<0.000000e+00> : vector<8xf32>
    %179 = vector.multi_reduction <add>, %178, %cst_89 [1] : vector<8x128xf32> to vector<8xf32>
    %180 = vector.shape_cast %179 : vector<8xf32> to vector<8x1xf32>
    %181 = tpu.reciprocal %180 {approx = true} : vector<8x1xf32> -> vector<8x1xf32>
    %182 = vector.broadcast %181 : vector<8x1xf32> to vector<8x128xf32>
    %183 = arith.mulf %178, %182 : vector<8x128xf32>
    %184 = arith.truncf %183 : vector<8x128xf32> to vector<8x128xbf16>
    %c0_90 = arith.constant 0 : index
    %c0_91 = arith.constant 0 : index
    %185 = vector.load %arg2[%c0_90, %c0_91] : memref<128x128xbf16, #tpu.memory_space<vmem>>, vector<128x128xbf16>
    %cst_92 = arith.constant dense<0.000000e+00> : vector<8x128xf32>
    %186 = tpu.matmul %184, %185, %cst_92 {dimension_numbers = #tpu.dot_dimension_numbers<[1], [0], [0], [1], [0, 0, 1, 1], [], []>} : vector<8x128xbf16>, vector<128x128xbf16>, vector<8x128xf32> -> vector<8x128xf32>
    %187 = arith.truncf %186 : vector<8x128xf32> to vector<8x128xbf16>
    %c0_93 = arith.constant 0 : index
    %c0_94 = arith.constant 0 : index
    %188 = vector.load %arg10[%c0_93, %c0_94] : memref<128x128xbf16, #tpu.memory_space<vmem>>, vector<128x128xbf16>
    %cst_95 = arith.constant dense<0.000000e+00> : vector<8x128xf32>
    %189 = tpu.matmul %187, %188, %cst_95 {dimension_numbers = #tpu.dot_dimension_numbers<[1], [0], [0], [1], [0, 0, 1, 1], [], []>} : vector<8x128xbf16>, vector<128x128xbf16>, vector<8x128xf32> -> vector<8x128xf32>
    %c2 = arith.constant 2 : index
    %c0_96 = arith.constant 0 : index
    %c0_97 = arith.constant 0 : index
    %190 = vector.load %arg0[%c2, %c0_96, %c0_97] : memref<8x8x512xf32, #tpu.memory_space<vmem>>, vector<1x8x512xf32>
    %191 = vector.shape_cast %190 : vector<1x8x512xf32> to vector<8x512xf32>
    %192 = arith.addf %191, %167 : vector<8x512xf32>
    %c0_98 = arith.constant 0 : index
    %c0_99 = arith.constant 0 : index
    %193 = vector.load %arg4[%c0_98, %c0_99] : memref<128x512xbf16, #tpu.memory_space<vmem>>, vector<128x512xbf16>
    %cst_100 = arith.constant dense<0.000000e+00> : vector<8x512xf32>
    %194 = tpu.matmul %187, %193, %cst_100 {dimension_numbers = #tpu.dot_dimension_numbers<[1], [0], [0], [1], [0, 0, 1, 1], [], []>} : vector<8x128xbf16>, vector<128x512xbf16>, vector<8x512xf32> -> vector<8x512xf32>
    %195 = arith.addf %192, %194 : vector<8x512xf32>
    %196 = vector.extract_strided_slice %195 {offsets = [0, 0], sizes = [8, 384], strides = [1, 1]} : vector<8x512xf32> to vector<8x384xf32>
    %197 = arith.negf %196 : vector<8x384xf32>
    %198 = math.exp %197 : vector<8x384xf32>
    %cst_101 = arith.constant 1.000000e+00 : f32
    %199 = vector.broadcast %cst_101 : f32 to vector<8x384xf32>
    %200 = arith.addf %199, %198 : vector<8x384xf32>
    %201 = arith.divf %199, %200 : vector<8x384xf32>
    %202 = vector.extract_strided_slice %195 {offsets = [0, 384], sizes = [8, 128], strides = [1, 1]} : vector<8x512xf32> to vector<8x128xf32>
    %203 = math.tanh %202 : vector<8x128xf32>
    %204 = vector.extract_strided_slice %201 {offsets = [0, 128], sizes = [8, 128], strides = [1, 1]} : vector<8x384xf32> to vector<8x128xf32>
    %205 = arith.mulf %204, %131 : vector<8x128xf32>
    %206 = vector.extract_strided_slice %201 {offsets = [0, 0], sizes = [8, 128], strides = [1, 1]} : vector<8x384xf32> to vector<8x128xf32>
    %207 = arith.mulf %206, %203 : vector<8x128xf32>
    %208 = arith.addf %205, %207 : vector<8x128xf32>
    %209 = vector.extract_strided_slice %201 {offsets = [0, 256], sizes = [8, 128], strides = [1, 1]} : vector<8x384xf32> to vector<8x128xf32>
    %210 = math.tanh %208 : vector<8x128xf32>
    %211 = arith.mulf %209, %210 : vector<8x128xf32>
    %212 = arith.addf %169, %2 : vector<8x512xf32>
    %213 = arith.truncf %211 : vector<8x128xf32> to vector<8x128xbf16>
    %c0_102 = arith.constant 0 : index
    %c0_103 = arith.constant 0 : index
    %214 = vector.load %arg6[%c0_102, %c0_103] : memref<128x512xbf16, #tpu.memory_space<vmem>>, vector<128x512xbf16>
    %cst_104 = arith.constant dense<0.000000e+00> : vector<8x512xf32>
    %215 = tpu.matmul %213, %214, %cst_104 {dimension_numbers = #tpu.dot_dimension_numbers<[1], [0], [0], [1], [0, 0, 1, 1], [], []>} : vector<8x128xbf16>, vector<128x512xbf16>, vector<8x512xf32> -> vector<8x512xf32>
    %216 = arith.addf %212, %215 : vector<8x512xf32>
    %217 = vector.extract_strided_slice %216 {offsets = [0, 0], sizes = [8, 384], strides = [1, 1]} : vector<8x512xf32> to vector<8x384xf32>
    %218 = arith.negf %217 : vector<8x384xf32>
    %219 = math.exp %218 : vector<8x384xf32>
    %cst_105 = arith.constant 1.000000e+00 : f32
    %220 = vector.broadcast %cst_105 : f32 to vector<8x384xf32>
    %221 = arith.addf %220, %219 : vector<8x384xf32>
    %222 = arith.divf %220, %221 : vector<8x384xf32>
    %223 = vector.extract_strided_slice %216 {offsets = [0, 384], sizes = [8, 128], strides = [1, 1]} : vector<8x512xf32> to vector<8x128xf32>
    %224 = math.tanh %223 : vector<8x128xf32>
    %225 = vector.extract_strided_slice %222 {offsets = [0, 128], sizes = [8, 128], strides = [1, 1]} : vector<8x384xf32> to vector<8x128xf32>
    %226 = arith.mulf %225, %152 : vector<8x128xf32>
    %227 = vector.extract_strided_slice %222 {offsets = [0, 0], sizes = [8, 128], strides = [1, 1]} : vector<8x384xf32> to vector<8x128xf32>
    %228 = arith.mulf %227, %224 : vector<8x128xf32>
    %229 = arith.addf %226, %228 : vector<8x128xf32>
    %230 = vector.extract_strided_slice %222 {offsets = [0, 256], sizes = [8, 128], strides = [1, 1]} : vector<8x384xf32> to vector<8x128xf32>
    %231 = math.tanh %229 : vector<8x128xf32>
    %232 = arith.mulf %230, %231 : vector<8x128xf32>
    %233 = arith.addf %189, %5 : vector<8x128xf32>
    %234 = arith.truncf %232 : vector<8x128xf32> to vector<8x128xbf16>
    %c0_106 = arith.constant 0 : index
    %c0_107 = arith.constant 0 : index
    %235 = vector.load %arg9[%c0_106, %c0_107] : memref<128x128xbf16, #tpu.memory_space<vmem>>, vector<128x128xbf16>
    %cst_108 = arith.constant dense<0.000000e+00> : vector<8x128xf32>
    %236 = tpu.matmul %234, %235, %cst_108 {dimension_numbers = #tpu.dot_dimension_numbers<[1], [0], [0], [1], [0, 0, 1, 1], [], []>} : vector<8x128xbf16>, vector<128x128xbf16>, vector<8x128xf32> -> vector<8x128xf32>
    %237 = arith.addf %233, %236 : vector<8x128xf32>
    %c2_109 = arith.constant 2 : index
    %c0_110 = arith.constant 0 : index
    %c0_111 = arith.constant 0 : index
    %238 = vector.load %arg12[%c2_109, %c0_110, %c0_111] : memref<8x8x128xf32, #tpu.memory_space<vmem>>, vector<1x8x128xf32>
    %239 = vector.shape_cast %238 : vector<1x8x128xf32> to vector<8x128xf32>
    %240 = vector.shape_cast %237 : vector<8x128xf32> to vector<1x8x128xf32>
    tpu.vector_store %arg12[%c2_109, %c0_110, %c0_111], %240 {strides = array<i32>} : memref<8x8x128xf32, #tpu.memory_space<vmem>>, vector<1x8x128xf32>,
    %241 = arith.truncf %211 : vector<8x128xf32> to vector<8x128xbf16>
    %242 = arith.truncf %232 : vector<8x128xf32> to vector<8x128xbf16>
    %c0_112 = arith.constant 0 : index
    %c0_113 = arith.constant 0 : index
    %243 = vector.load %arg5[%c0_112, %c0_113] : memref<128x512xbf16, #tpu.memory_space<vmem>>, vector<128x512xbf16>
    %cst_114 = arith.constant dense<0.000000e+00> : vector<8x512xf32>
    %244 = tpu.matmul %241, %243, %cst_114 {dimension_numbers = #tpu.dot_dimension_numbers<[1], [0], [0], [1], [0, 0, 1, 1], [], []>} : vector<8x128xbf16>, vector<128x512xbf16>, vector<8x512xf32> -> vector<8x512xf32>
    %c0_115 = arith.constant 0 : index
    %c0_116 = arith.constant 0 : index
    %245 = vector.load %arg7[%c0_115, %c0_116] : memref<128x512xbf16, #tpu.memory_space<vmem>>, vector<128x512xbf16>
    %cst_117 = arith.constant dense<0.000000e+00> : vector<8x512xf32>
    %246 = tpu.matmul %242, %245, %cst_117 {dimension_numbers = #tpu.dot_dimension_numbers<[1], [0], [0], [1], [0, 0, 1, 1], [], []>} : vector<8x128xbf16>, vector<128x512xbf16>, vector<8x512xf32> -> vector<8x512xf32>
    %c0_118 = arith.constant 0 : index
    %c0_119 = arith.constant 0 : index
    %247 = vector.load %arg1[%c0_118, %c0_119] : memref<128x128xbf16, #tpu.memory_space<vmem>>, vector<128x128xbf16>
    %cst_120 = arith.constant dense<0.000000e+00> : vector<8x128xf32>
    %248 = tpu.matmul %242, %247, %cst_120 {dimension_numbers = #tpu.dot_dimension_numbers<[1], [0], [0], [1], [0, 0, 1, 1], [], []>} : vector<8x128xbf16>, vector<128x128xbf16>, vector<8x128xf32> -> vector<8x128xf32>
    %c0_121 = arith.constant 0 : index
    %c0_122 = arith.constant 0 : index
    %249 = vector.load %arg3[%c0_121, %c0_122] : memref<8x128xf32, #tpu.memory_space<vmem>>, vector<8x128xf32>
    %250 = arith.addf %248, %249 : vector<8x128xf32>
    %cst_123 = arith.constant dense<0xFF800000> : vector<8xf32>
    %251 = vector.multi_reduction <maximumf>, %250, %cst_123 [1] : vector<8x128xf32> to vector<8xf32>
    %252 = vector.shape_cast %251 : vector<8xf32> to vector<8x1xf32>
    %253 = vector.broadcast %252 : vector<8x1xf32> to vector<8x128xf32>
    %254 = arith.subf %250, %253 : vector<8x128xf32>
    %255 = math.exp %254 : vector<8x128xf32>
    %cst_124 = arith.constant dense<0.000000e+00> : vector<8xf32>
    %256 = vector.multi_reduction <add>, %255, %cst_124 [1] : vector<8x128xf32> to vector<8xf32>
    %257 = vector.shape_cast %256 : vector<8xf32> to vector<8x1xf32>
    %258 = tpu.reciprocal %257 {approx = true} : vector<8x1xf32> -> vector<8x1xf32>
    %259 = vector.broadcast %258 : vector<8x1xf32> to vector<8x128xf32>
    %260 = arith.mulf %255, %259 : vector<8x128xf32>
    %261 = arith.truncf %260 : vector<8x128xf32> to vector<8x128xbf16>
    %c0_125 = arith.constant 0 : index
    %c0_126 = arith.constant 0 : index
    %262 = vector.load %arg2[%c0_125, %c0_126] : memref<128x128xbf16, #tpu.memory_space<vmem>>, vector<128x128xbf16>
    %cst_127 = arith.constant dense<0.000000e+00> : vector<8x128xf32>
    %263 = tpu.matmul %261, %262, %cst_127 {dimension_numbers = #tpu.dot_dimension_numbers<[1], [0], [0], [1], [0, 0, 1, 1], [], []>} : vector<8x128xbf16>, vector<128x128xbf16>, vector<8x128xf32> -> vector<8x128xf32>
    %264 = arith.truncf %263 : vector<8x128xf32> to vector<8x128xbf16>
    %c0_128 = arith.constant 0 : index
    %c0_129 = arith.constant 0 : index
    %265 = vector.load %arg10[%c0_128, %c0_129] : memref<128x128xbf16, #tpu.memory_space<vmem>>, vector<128x128xbf16>
    %cst_130 = arith.constant dense<0.000000e+00> : vector<8x128xf32>
    %266 = tpu.matmul %264, %265, %cst_130 {dimension_numbers = #tpu.dot_dimension_numbers<[1], [0], [0], [1], [0, 0, 1, 1], [], []>} : vector<8x128xbf16>, vector<128x128xbf16>, vector<8x128xf32> -> vector<8x128xf32>
    %c3 = arith.constant 3 : index
    %c0_131 = arith.constant 0 : index
    %c0_132 = arith.constant 0 : index
    %267 = vector.load %arg0[%c3, %c0_131, %c0_132] : memref<8x8x512xf32, #tpu.memory_space<vmem>>, vector<1x8x512xf32>
    %268 = vector.shape_cast %267 : vector<1x8x512xf32> to vector<8x512xf32>
    %269 = arith.addf %268, %244 : vector<8x512xf32>
    %c0_133 = arith.constant 0 : index
    %c0_134 = arith.constant 0 : index
    %270 = vector.load %arg4[%c0_133, %c0_134] : memref<128x512xbf16, #tpu.memory_space<vmem>>, vector<128x512xbf16>
    %cst_135 = arith.constant dense<0.000000e+00> : vector<8x512xf32>
    %271 = tpu.matmul %264, %270, %cst_135 {dimension_numbers = #tpu.dot_dimension_numbers<[1], [0], [0], [1], [0, 0, 1, 1], [], []>} : vector<8x128xbf16>, vector<128x512xbf16>, vector<8x512xf32> -> vector<8x512xf32>
    %272 = arith.addf %269, %271 : vector<8x512xf32>
    %273 = vector.extract_strided_slice %272 {offsets = [0, 0], sizes = [8, 384], strides = [1, 1]} : vector<8x512xf32> to vector<8x384xf32>
    %274 = arith.negf %273 : vector<8x384xf32>
    %275 = math.exp %274 : vector<8x384xf32>
    %cst_136 = arith.constant 1.000000e+00 : f32
    %276 = vector.broadcast %cst_136 : f32 to vector<8x384xf32>
    %277 = arith.addf %276, %275 : vector<8x384xf32>
    %278 = arith.divf %276, %277 : vector<8x384xf32>
    %279 = vector.extract_strided_slice %272 {offsets = [0, 384], sizes = [8, 128], strides = [1, 1]} : vector<8x512xf32> to vector<8x128xf32>
    %280 = math.tanh %279 : vector<8x128xf32>
    %281 = vector.extract_strided_slice %278 {offsets = [0, 128], sizes = [8, 128], strides = [1, 1]} : vector<8x384xf32> to vector<8x128xf32>
    %282 = arith.mulf %281, %208 : vector<8x128xf32>
    %283 = vector.extract_strided_slice %278 {offsets = [0, 0], sizes = [8, 128], strides = [1, 1]} : vector<8x384xf32> to vector<8x128xf32>
    %284 = arith.mulf %283, %280 : vector<8x128xf32>
    %285 = arith.addf %282, %284 : vector<8x128xf32>
    %286 = vector.extract_strided_slice %278 {offsets = [0, 256], sizes = [8, 128], strides = [1, 1]} : vector<8x384xf32> to vector<8x128xf32>
    %287 = math.tanh %285 : vector<8x128xf32>
    %288 = arith.mulf %286, %287 : vector<8x128xf32>
    %289 = arith.addf %246, %2 : vector<8x512xf32>
    %290 = arith.truncf %288 : vector<8x128xf32> to vector<8x128xbf16>
    %c0_137 = arith.constant 0 : index
    %c0_138 = arith.constant 0 : index
    %291 = vector.load %arg6[%c0_137, %c0_138] : memref<128x512xbf16, #tpu.memory_space<vmem>>, vector<128x512xbf16>
    %cst_139 = arith.constant dense<0.000000e+00> : vector<8x512xf32>
    %292 = tpu.matmul %290, %291, %cst_139 {dimension_numbers = #tpu.dot_dimension_numbers<[1], [0], [0], [1], [0, 0, 1, 1], [], []>} : vector<8x128xbf16>, vector<128x512xbf16>, vector<8x512xf32> -> vector<8x512xf32>
    %293 = arith.addf %289, %292 : vector<8x512xf32>
    %294 = vector.extract_strided_slice %293 {offsets = [0, 0], sizes = [8, 384], strides = [1, 1]} : vector<8x512xf32> to vector<8x384xf32>
    %295 = arith.negf %294 : vector<8x384xf32>
    %296 = math.exp %295 : vector<8x384xf32>
    %cst_140 = arith.constant 1.000000e+00 : f32
    %297 = vector.broadcast %cst_140 : f32 to vector<8x384xf32>
    %298 = arith.addf %297, %296 : vector<8x384xf32>
    %299 = arith.divf %297, %298 : vector<8x384xf32>
    %300 = vector.extract_strided_slice %293 {offsets = [0, 384], sizes = [8, 128], strides = [1, 1]} : vector<8x512xf32> to vector<8x128xf32>
    %301 = math.tanh %300 : vector<8x128xf32>
    %302 = vector.extract_strided_slice %299 {offsets = [0, 128], sizes = [8, 128], strides = [1, 1]} : vector<8x384xf32> to vector<8x128xf32>
    %303 = arith.mulf %302, %229 : vector<8x128xf32>
    %304 = vector.extract_strided_slice %299 {offsets = [0, 0], sizes = [8, 128], strides = [1, 1]} : vector<8x384xf32> to vector<8x128xf32>
    %305 = arith.mulf %304, %301 : vector<8x128xf32>
    %306 = arith.addf %303, %305 : vector<8x128xf32>
    %307 = vector.extract_strided_slice %299 {offsets = [0, 256], sizes = [8, 128], strides = [1, 1]} : vector<8x384xf32> to vector<8x128xf32>
    %308 = math.tanh %306 : vector<8x128xf32>
    %309 = arith.mulf %307, %308 : vector<8x128xf32>
    %310 = arith.addf %266, %5 : vector<8x128xf32>
    %311 = arith.truncf %309 : vector<8x128xf32> to vector<8x128xbf16>
    %c0_141 = arith.constant 0 : index
    %c0_142 = arith.constant 0 : index
    %312 = vector.load %arg9[%c0_141, %c0_142] : memref<128x128xbf16, #tpu.memory_space<vmem>>, vector<128x128xbf16>
    %cst_143 = arith.constant dense<0.000000e+00> : vector<8x128xf32>
    %313 = tpu.matmul %311, %312, %cst_143 {dimension_numbers = #tpu.dot_dimension_numbers<[1], [0], [0], [1], [0, 0, 1, 1], [], []>} : vector<8x128xbf16>, vector<128x128xbf16>, vector<8x128xf32> -> vector<8x128xf32>
    %314 = arith.addf %310, %313 : vector<8x128xf32>
    %c3_144 = arith.constant 3 : index
    %c0_145 = arith.constant 0 : index
    %c0_146 = arith.constant 0 : index
    %315 = vector.load %arg12[%c3_144, %c0_145, %c0_146] : memref<8x8x128xf32, #tpu.memory_space<vmem>>, vector<1x8x128xf32>
    %316 = vector.shape_cast %315 : vector<1x8x128xf32> to vector<8x128xf32>
    %317 = vector.shape_cast %314 : vector<8x128xf32> to vector<1x8x128xf32>
    tpu.vector_store %arg12[%c3_144, %c0_145, %c0_146], %317 {strides = array<i32>} : memref<8x8x128xf32, #tpu.memory_space<vmem>>, vector<1x8x128xf32>,
    %318 = arith.truncf %288 : vector<8x128xf32> to vector<8x128xbf16>
    %319 = arith.truncf %309 : vector<8x128xf32> to vector<8x128xbf16>
    %c0_147 = arith.constant 0 : index
    %c0_148 = arith.constant 0 : index
    %320 = vector.load %arg5[%c0_147, %c0_148] : memref<128x512xbf16, #tpu.memory_space<vmem>>, vector<128x512xbf16>
    %cst_149 = arith.constant dense<0.000000e+00> : vector<8x512xf32>
    %321 = tpu.matmul %318, %320, %cst_149 {dimension_numbers = #tpu.dot_dimension_numbers<[1], [0], [0], [1], [0, 0, 1, 1], [], []>} : vector<8x128xbf16>, vector<128x512xbf16>, vector<8x512xf32> -> vector<8x512xf32>
    %c0_150 = arith.constant 0 : index
    %c0_151 = arith.constant 0 : index
    %322 = vector.load %arg7[%c0_150, %c0_151] : memref<128x512xbf16, #tpu.memory_space<vmem>>, vector<128x512xbf16>
    %cst_152 = arith.constant dense<0.000000e+00> : vector<8x512xf32>
    %323 = tpu.matmul %319, %322, %cst_152 {dimension_numbers = #tpu.dot_dimension_numbers<[1], [0], [0], [1], [0, 0, 1, 1], [], []>} : vector<8x128xbf16>, vector<128x512xbf16>, vector<8x512xf32> -> vector<8x512xf32>
    %c0_153 = arith.constant 0 : index
    %c0_154 = arith.constant 0 : index
    %324 = vector.load %arg1[%c0_153, %c0_154] : memref<128x128xbf16, #tpu.memory_space<vmem>>, vector<128x128xbf16>
    %cst_155 = arith.constant dense<0.000000e+00> : vector<8x128xf32>
    %325 = tpu.matmul %319, %324, %cst_155 {dimension_numbers = #tpu.dot_dimension_numbers<[1], [0], [0], [1], [0, 0, 1, 1], [], []>} : vector<8x128xbf16>, vector<128x128xbf16>, vector<8x128xf32> -> vector<8x128xf32>
    %c0_156 = arith.constant 0 : index
    %c0_157 = arith.constant 0 : index
    %326 = vector.load %arg3[%c0_156, %c0_157] : memref<8x128xf32, #tpu.memory_space<vmem>>, vector<8x128xf32>
    %327 = arith.addf %325, %326 : vector<8x128xf32>
    %cst_158 = arith.constant dense<0xFF800000> : vector<8xf32>
    %328 = vector.multi_reduction <maximumf>, %327, %cst_158 [1] : vector<8x128xf32> to vector<8xf32>
    %329 = vector.shape_cast %328 : vector<8xf32> to vector<8x1xf32>
    %330 = vector.broadcast %329 : vector<8x1xf32> to vector<8x128xf32>
    %331 = arith.subf %327, %330 : vector<8x128xf32>
    %332 = math.exp %331 : vector<8x128xf32>
    %cst_159 = arith.constant dense<0.000000e+00> : vector<8xf32>
    %333 = vector.multi_reduction <add>, %332, %cst_159 [1] : vector<8x128xf32> to vector<8xf32>
    %334 = vector.shape_cast %333 : vector<8xf32> to vector<8x1xf32>
    %335 = tpu.reciprocal %334 {approx = true} : vector<8x1xf32> -> vector<8x1xf32>
    %336 = vector.broadcast %335 : vector<8x1xf32> to vector<8x128xf32>
    %337 = arith.mulf %332, %336 : vector<8x128xf32>
    %338 = arith.truncf %337 : vector<8x128xf32> to vector<8x128xbf16>
    %c0_160 = arith.constant 0 : index
    %c0_161 = arith.constant 0 : index
    %339 = vector.load %arg2[%c0_160, %c0_161] : memref<128x128xbf16, #tpu.memory_space<vmem>>, vector<128x128xbf16>
    %cst_162 = arith.constant dense<0.000000e+00> : vector<8x128xf32>
    %340 = tpu.matmul %338, %339, %cst_162 {dimension_numbers = #tpu.dot_dimension_numbers<[1], [0], [0], [1], [0, 0, 1, 1], [], []>} : vector<8x128xbf16>, vector<128x128xbf16>, vector<8x128xf32> -> vector<8x128xf32>
    %341 = arith.truncf %340 : vector<8x128xf32> to vector<8x128xbf16>
    %c0_163 = arith.constant 0 : index
    %c0_164 = arith.constant 0 : index
    %342 = vector.load %arg10[%c0_163, %c0_164] : memref<128x128xbf16, #tpu.memory_space<vmem>>, vector<128x128xbf16>
    %cst_165 = arith.constant dense<0.000000e+00> : vector<8x128xf32>
    %343 = tpu.matmul %341, %342, %cst_165 {dimension_numbers = #tpu.dot_dimension_numbers<[1], [0], [0], [1], [0, 0, 1, 1], [], []>} : vector<8x128xbf16>, vector<128x128xbf16>, vector<8x128xf32> -> vector<8x128xf32>
    %c4 = arith.constant 4 : index
    %c0_166 = arith.constant 0 : index
    %c0_167 = arith.constant 0 : index
    %344 = vector.load %arg0[%c4, %c0_166, %c0_167] : memref<8x8x512xf32, #tpu.memory_space<vmem>>, vector<1x8x512xf32>
    %345 = vector.shape_cast %344 : vector<1x8x512xf32> to vector<8x512xf32>
    %346 = arith.addf %345, %321 : vector<8x512xf32>
    %c0_168 = arith.constant 0 : index
    %c0_169 = arith.constant 0 : index
    %347 = vector.load %arg4[%c0_168, %c0_169] : memref<128x512xbf16, #tpu.memory_space<vmem>>, vector<128x512xbf16>
    %cst_170 = arith.constant dense<0.000000e+00> : vector<8x512xf32>
    %348 = tpu.matmul %341, %347, %cst_170 {dimension_numbers = #tpu.dot_dimension_numbers<[1], [0], [0], [1], [0, 0, 1, 1], [], []>} : vector<8x128xbf16>, vector<128x512xbf16>, vector<8x512xf32> -> vector<8x512xf32>
    %349 = arith.addf %346, %348 : vector<8x512xf32>
    %350 = vector.extract_strided_slice %349 {offsets = [0, 0], sizes = [8, 384], strides = [1, 1]} : vector<8x512xf32> to vector<8x384xf32>
    %351 = arith.negf %350 : vector<8x384xf32>
    %352 = math.exp %351 : vector<8x384xf32>
    %cst_171 = arith.constant 1.000000e+00 : f32
    %353 = vector.broadcast %cst_171 : f32 to vector<8x384xf32>
    %354 = arith.addf %353, %352 : vector<8x384xf32>
    %355 = arith.divf %353, %354 : vector<8x384xf32>
    %356 = vector.extract_strided_slice %349 {offsets = [0, 384], sizes = [8, 128], strides = [1, 1]} : vector<8x512xf32> to vector<8x128xf32>
    %357 = math.tanh %356 : vector<8x128xf32>
    %358 = vector.extract_strided_slice %355 {offsets = [0, 128], sizes = [8, 128], strides = [1, 1]} : vector<8x384xf32> to vector<8x128xf32>
    %359 = arith.mulf %358, %285 : vector<8x128xf32>
    %360 = vector.extract_strided_slice %355 {offsets = [0, 0], sizes = [8, 128], strides = [1, 1]} : vector<8x384xf32> to vector<8x128xf32>
    %361 = arith.mulf %360, %357 : vector<8x128xf32>
    %362 = arith.addf %359, %361 : vector<8x128xf32>
    %363 = vector.extract_strided_slice %355 {offsets = [0, 256], sizes = [8, 128], strides = [1, 1]} : vector<8x384xf32> to vector<8x128xf32>
    %364 = math.tanh %362 : vector<8x128xf32>
    %365 = arith.mulf %363, %364 : vector<8x128xf32>
    %366 = arith.addf %323, %2 : vector<8x512xf32>
    %367 = arith.truncf %365 : vector<8x128xf32> to vector<8x128xbf16>
    %c0_172 = arith.constant 0 : index
    %c0_173 = arith.constant 0 : index
    %368 = vector.load %arg6[%c0_172, %c0_173] : memref<128x512xbf16, #tpu.memory_space<vmem>>, vector<128x512xbf16>
    %cst_174 = arith.constant dense<0.000000e+00> : vector<8x512xf32>
    %369 = tpu.matmul %367, %368, %cst_174 {dimension_numbers = #tpu.dot_dimension_numbers<[1], [0], [0], [1], [0, 0, 1, 1], [], []>} : vector<8x128xbf16>, vector<128x512xbf16>, vector<8x512xf32> -> vector<8x512xf32>
    %370 = arith.addf %366, %369 : vector<8x512xf32>
    %371 = vector.extract_strided_slice %370 {offsets = [0, 0], sizes = [8, 384], strides = [1, 1]} : vector<8x512xf32> to vector<8x384xf32>
    %372 = arith.negf %371 : vector<8x384xf32>
    %373 = math.exp %372 : vector<8x384xf32>
    %cst_175 = arith.constant 1.000000e+00 : f32
    %374 = vector.broadcast %cst_175 : f32 to vector<8x384xf32>
    %375 = arith.addf %374, %373 : vector<8x384xf32>
    %376 = arith.divf %374, %375 : vector<8x384xf32>
    %377 = vector.extract_strided_slice %370 {offsets = [0, 384], sizes = [8, 128], strides = [1, 1]} : vector<8x512xf32> to vector<8x128xf32>
    %378 = math.tanh %377 : vector<8x128xf32>
    %379 = vector.extract_strided_slice %376 {offsets = [0, 128], sizes = [8, 128], strides = [1, 1]} : vector<8x384xf32> to vector<8x128xf32>
    %380 = arith.mulf %379, %306 : vector<8x128xf32>
    %381 = vector.extract_strided_slice %376 {offsets = [0, 0], sizes = [8, 128], strides = [1, 1]} : vector<8x384xf32> to vector<8x128xf32>
    %382 = arith.mulf %381, %378 : vector<8x128xf32>
    %383 = arith.addf %380, %382 : vector<8x128xf32>
    %384 = vector.extract_strided_slice %376 {offsets = [0, 256], sizes = [8, 128], strides = [1, 1]} : vector<8x384xf32> to vector<8x128xf32>
    %385 = math.tanh %383 : vector<8x128xf32>
    %386 = arith.mulf %384, %385 : vector<8x128xf32>
    %387 = arith.addf %343, %5 : vector<8x128xf32>
    %388 = arith.truncf %386 : vector<8x128xf32> to vector<8x128xbf16>
    %c0_176 = arith.constant 0 : index
    %c0_177 = arith.constant 0 : index
    %389 = vector.load %arg9[%c0_176, %c0_177] : memref<128x128xbf16, #tpu.memory_space<vmem>>, vector<128x128xbf16>
    %cst_178 = arith.constant dense<0.000000e+00> : vector<8x128xf32>
    %390 = tpu.matmul %388, %389, %cst_178 {dimension_numbers = #tpu.dot_dimension_numbers<[1], [0], [0], [1], [0, 0, 1, 1], [], []>} : vector<8x128xbf16>, vector<128x128xbf16>, vector<8x128xf32> -> vector<8x128xf32>
    %391 = arith.addf %387, %390 : vector<8x128xf32>
    %c4_179 = arith.constant 4 : index
    %c0_180 = arith.constant 0 : index
    %c0_181 = arith.constant 0 : index
    %392 = vector.load %arg12[%c4_179, %c0_180, %c0_181] : memref<8x8x128xf32, #tpu.memory_space<vmem>>, vector<1x8x128xf32>
    %393 = vector.shape_cast %392 : vector<1x8x128xf32> to vector<8x128xf32>
    %394 = vector.shape_cast %391 : vector<8x128xf32> to vector<1x8x128xf32>
    tpu.vector_store %arg12[%c4_179, %c0_180, %c0_181], %394 {strides = array<i32>} : memref<8x8x128xf32, #tpu.memory_space<vmem>>, vector<1x8x128xf32>,
    %395 = arith.truncf %365 : vector<8x128xf32> to vector<8x128xbf16>
    %396 = arith.truncf %386 : vector<8x128xf32> to vector<8x128xbf16>
    %c0_182 = arith.constant 0 : index
    %c0_183 = arith.constant 0 : index
    %397 = vector.load %arg5[%c0_182, %c0_183] : memref<128x512xbf16, #tpu.memory_space<vmem>>, vector<128x512xbf16>
    %cst_184 = arith.constant dense<0.000000e+00> : vector<8x512xf32>
    %398 = tpu.matmul %395, %397, %cst_184 {dimension_numbers = #tpu.dot_dimension_numbers<[1], [0], [0], [1], [0, 0, 1, 1], [], []>} : vector<8x128xbf16>, vector<128x512xbf16>, vector<8x512xf32> -> vector<8x512xf32>
    %c0_185 = arith.constant 0 : index
    %c0_186 = arith.constant 0 : index
    %399 = vector.load %arg7[%c0_185, %c0_186] : memref<128x512xbf16, #tpu.memory_space<vmem>>, vector<128x512xbf16>
    %cst_187 = arith.constant dense<0.000000e+00> : vector<8x512xf32>
    %400 = tpu.matmul %396, %399, %cst_187 {dimension_numbers = #tpu.dot_dimension_numbers<[1], [0], [0], [1], [0, 0, 1, 1], [], []>} : vector<8x128xbf16>, vector<128x512xbf16>, vector<8x512xf32> -> vector<8x512xf32>
    %c0_188 = arith.constant 0 : index
    %c0_189 = arith.constant 0 : index
    %401 = vector.load %arg1[%c0_188, %c0_189] : memref<128x128xbf16, #tpu.memory_space<vmem>>, vector<128x128xbf16>
    %cst_190 = arith.constant dense<0.000000e+00> : vector<8x128xf32>
    %402 = tpu.matmul %396, %401, %cst_190 {dimension_numbers = #tpu.dot_dimension_numbers<[1], [0], [0], [1], [0, 0, 1, 1], [], []>} : vector<8x128xbf16>, vector<128x128xbf16>, vector<8x128xf32> -> vector<8x128xf32>
    %c0_191 = arith.constant 0 : index
    %c0_192 = arith.constant 0 : index
    %403 = vector.load %arg3[%c0_191, %c0_192] : memref<8x128xf32, #tpu.memory_space<vmem>>, vector<8x128xf32>
    %404 = arith.addf %402, %403 : vector<8x128xf32>
    %cst_193 = arith.constant dense<0xFF800000> : vector<8xf32>
    %405 = vector.multi_reduction <maximumf>, %404, %cst_193 [1] : vector<8x128xf32> to vector<8xf32>
    %406 = vector.shape_cast %405 : vector<8xf32> to vector<8x1xf32>
    %407 = vector.broadcast %406 : vector<8x1xf32> to vector<8x128xf32>
    %408 = arith.subf %404, %407 : vector<8x128xf32>
    %409 = math.exp %408 : vector<8x128xf32>
    %cst_194 = arith.constant dense<0.000000e+00> : vector<8xf32>
    %410 = vector.multi_reduction <add>, %409, %cst_194 [1] : vector<8x128xf32> to vector<8xf32>
    %411 = vector.shape_cast %410 : vector<8xf32> to vector<8x1xf32>
    %412 = tpu.reciprocal %411 {approx = true} : vector<8x1xf32> -> vector<8x1xf32>
    %413 = vector.broadcast %412 : vector<8x1xf32> to vector<8x128xf32>
    %414 = arith.mulf %409, %413 : vector<8x128xf32>
    %415 = arith.truncf %414 : vector<8x128xf32> to vector<8x128xbf16>
    %c0_195 = arith.constant 0 : index
    %c0_196 = arith.constant 0 : index
    %416 = vector.load %arg2[%c0_195, %c0_196] : memref<128x128xbf16, #tpu.memory_space<vmem>>, vector<128x128xbf16>
    %cst_197 = arith.constant dense<0.000000e+00> : vector<8x128xf32>
    %417 = tpu.matmul %415, %416, %cst_197 {dimension_numbers = #tpu.dot_dimension_numbers<[1], [0], [0], [1], [0, 0, 1, 1], [], []>} : vector<8x128xbf16>, vector<128x128xbf16>, vector<8x128xf32> -> vector<8x128xf32>
    %418 = arith.truncf %417 : vector<8x128xf32> to vector<8x128xbf16>
    %c0_198 = arith.constant 0 : index
    %c0_199 = arith.constant 0 : index
    %419 = vector.load %arg10[%c0_198, %c0_199] : memref<128x128xbf16, #tpu.memory_space<vmem>>, vector<128x128xbf16>
    %cst_200 = arith.constant dense<0.000000e+00> : vector<8x128xf32>
    %420 = tpu.matmul %418, %419, %cst_200 {dimension_numbers = #tpu.dot_dimension_numbers<[1], [0], [0], [1], [0, 0, 1, 1], [], []>} : vector<8x128xbf16>, vector<128x128xbf16>, vector<8x128xf32> -> vector<8x128xf32>
    %c5 = arith.constant 5 : index
    %c0_201 = arith.constant 0 : index
    %c0_202 = arith.constant 0 : index
    %421 = vector.load %arg0[%c5, %c0_201, %c0_202] : memref<8x8x512xf32, #tpu.memory_space<vmem>>, vector<1x8x512xf32>
    %422 = vector.shape_cast %421 : vector<1x8x512xf32> to vector<8x512xf32>
    %423 = arith.addf %422, %398 : vector<8x512xf32>
    %c0_203 = arith.constant 0 : index
    %c0_204 = arith.constant 0 : index
    %424 = vector.load %arg4[%c0_203, %c0_204] : memref<128x512xbf16, #tpu.memory_space<vmem>>, vector<128x512xbf16>
    %cst_205 = arith.constant dense<0.000000e+00> : vector<8x512xf32>
    %425 = tpu.matmul %418, %424, %cst_205 {dimension_numbers = #tpu.dot_dimension_numbers<[1], [0], [0], [1], [0, 0, 1, 1], [], []>} : vector<8x128xbf16>, vector<128x512xbf16>, vector<8x512xf32> -> vector<8x512xf32>
    %426 = arith.addf %423, %425 : vector<8x512xf32>
    %427 = vector.extract_strided_slice %426 {offsets = [0, 0], sizes = [8, 384], strides = [1, 1]} : vector<8x512xf32> to vector<8x384xf32>
    %428 = arith.negf %427 : vector<8x384xf32>
    %429 = math.exp %428 : vector<8x384xf32>
    %cst_206 = arith.constant 1.000000e+00 : f32
    %430 = vector.broadcast %cst_206 : f32 to vector<8x384xf32>
    %431 = arith.addf %430, %429 : vector<8x384xf32>
    %432 = arith.divf %430, %431 : vector<8x384xf32>
    %433 = vector.extract_strided_slice %426 {offsets = [0, 384], sizes = [8, 128], strides = [1, 1]} : vector<8x512xf32> to vector<8x128xf32>
    %434 = math.tanh %433 : vector<8x128xf32>
    %435 = vector.extract_strided_slice %432 {offsets = [0, 128], sizes = [8, 128], strides = [1, 1]} : vector<8x384xf32> to vector<8x128xf32>
    %436 = arith.mulf %435, %362 : vector<8x128xf32>
    %437 = vector.extract_strided_slice %432 {offsets = [0, 0], sizes = [8, 128], strides = [1, 1]} : vector<8x384xf32> to vector<8x128xf32>
    %438 = arith.mulf %437, %434 : vector<8x128xf32>
    %439 = arith.addf %436, %438 : vector<8x128xf32>
    %440 = vector.extract_strided_slice %432 {offsets = [0, 256], sizes = [8, 128], strides = [1, 1]} : vector<8x384xf32> to vector<8x128xf32>
    %441 = math.tanh %439 : vector<8x128xf32>
    %442 = arith.mulf %440, %441 : vector<8x128xf32>
    %443 = arith.addf %400, %2 : vector<8x512xf32>
    %444 = arith.truncf %442 : vector<8x128xf32> to vector<8x128xbf16>
    %c0_207 = arith.constant 0 : index
    %c0_208 = arith.constant 0 : index
    %445 = vector.load %arg6[%c0_207, %c0_208] : memref<128x512xbf16, #tpu.memory_space<vmem>>, vector<128x512xbf16>
    %cst_209 = arith.constant dense<0.000000e+00> : vector<8x512xf32>
    %446 = tpu.matmul %444, %445, %cst_209 {dimension_numbers = #tpu.dot_dimension_numbers<[1], [0], [0], [1], [0, 0, 1, 1], [], []>} : vector<8x128xbf16>, vector<128x512xbf16>, vector<8x512xf32> -> vector<8x512xf32>
    %447 = arith.addf %443, %446 : vector<8x512xf32>
    %448 = vector.extract_strided_slice %447 {offsets = [0, 0], sizes = [8, 384], strides = [1, 1]} : vector<8x512xf32> to vector<8x384xf32>
    %449 = arith.negf %448 : vector<8x384xf32>
    %450 = math.exp %449 : vector<8x384xf32>
    %cst_210 = arith.constant 1.000000e+00 : f32
    %451 = vector.broadcast %cst_210 : f32 to vector<8x384xf32>
    %452 = arith.addf %451, %450 : vector<8x384xf32>
    %453 = arith.divf %451, %452 : vector<8x384xf32>
    %454 = vector.extract_strided_slice %447 {offsets = [0, 384], sizes = [8, 128], strides = [1, 1]} : vector<8x512xf32> to vector<8x128xf32>
    %455 = math.tanh %454 : vector<8x128xf32>
    %456 = vector.extract_strided_slice %453 {offsets = [0, 128], sizes = [8, 128], strides = [1, 1]} : vector<8x384xf32> to vector<8x128xf32>
    %457 = arith.mulf %456, %383 : vector<8x128xf32>
    %458 = vector.extract_strided_slice %453 {offsets = [0, 0], sizes = [8, 128], strides = [1, 1]} : vector<8x384xf32> to vector<8x128xf32>
    %459 = arith.mulf %458, %455 : vector<8x128xf32>
    %460 = arith.addf %457, %459 : vector<8x128xf32>
    %461 = vector.extract_strided_slice %453 {offsets = [0, 256], sizes = [8, 128], strides = [1, 1]} : vector<8x384xf32> to vector<8x128xf32>
    %462 = math.tanh %460 : vector<8x128xf32>
    %463 = arith.mulf %461, %462 : vector<8x128xf32>
    %464 = arith.addf %420, %5 : vector<8x128xf32>
    %465 = arith.truncf %463 : vector<8x128xf32> to vector<8x128xbf16>
    %c0_211 = arith.constant 0 : index
    %c0_212 = arith.constant 0 : index
    %466 = vector.load %arg9[%c0_211, %c0_212] : memref<128x128xbf16, #tpu.memory_space<vmem>>, vector<128x128xbf16>
    %cst_213 = arith.constant dense<0.000000e+00> : vector<8x128xf32>
    %467 = tpu.matmul %465, %466, %cst_213 {dimension_numbers = #tpu.dot_dimension_numbers<[1], [0], [0], [1], [0, 0, 1, 1], [], []>} : vector<8x128xbf16>, vector<128x128xbf16>, vector<8x128xf32> -> vector<8x128xf32>
    %468 = arith.addf %464, %467 : vector<8x128xf32>
    %c5_214 = arith.constant 5 : index
    %c0_215 = arith.constant 0 : index
    %c0_216 = arith.constant 0 : index
    %469 = vector.load %arg12[%c5_214, %c0_215, %c0_216] : memref<8x8x128xf32, #tpu.memory_space<vmem>>, vector<1x8x128xf32>
    %470 = vector.shape_cast %469 : vector<1x8x128xf32> to vector<8x128xf32>
    %471 = vector.shape_cast %468 : vector<8x128xf32> to vector<1x8x128xf32>
    tpu.vector_store %arg12[%c5_214, %c0_215, %c0_216], %471 {strides = array<i32>} : memref<8x8x128xf32, #tpu.memory_space<vmem>>, vector<1x8x128xf32>,
    %472 = arith.truncf %442 : vector<8x128xf32> to vector<8x128xbf16>
    %473 = arith.truncf %463 : vector<8x128xf32> to vector<8x128xbf16>
    %c0_217 = arith.constant 0 : index
    %c0_218 = arith.constant 0 : index
    %474 = vector.load %arg5[%c0_217, %c0_218] : memref<128x512xbf16, #tpu.memory_space<vmem>>, vector<128x512xbf16>
    %cst_219 = arith.constant dense<0.000000e+00> : vector<8x512xf32>
    %475 = tpu.matmul %472, %474, %cst_219 {dimension_numbers = #tpu.dot_dimension_numbers<[1], [0], [0], [1], [0, 0, 1, 1], [], []>} : vector<8x128xbf16>, vector<128x512xbf16>, vector<8x512xf32> -> vector<8x512xf32>
    %c0_220 = arith.constant 0 : index
    %c0_221 = arith.constant 0 : index
    %476 = vector.load %arg7[%c0_220, %c0_221] : memref<128x512xbf16, #tpu.memory_space<vmem>>, vector<128x512xbf16>
    %cst_222 = arith.constant dense<0.000000e+00> : vector<8x512xf32>
    %477 = tpu.matmul %473, %476, %cst_222 {dimension_numbers = #tpu.dot_dimension_numbers<[1], [0], [0], [1], [0, 0, 1, 1], [], []>} : vector<8x128xbf16>, vector<128x512xbf16>, vector<8x512xf32> -> vector<8x512xf32>
    %c0_223 = arith.constant 0 : index
    %c0_224 = arith.constant 0 : index
    %478 = vector.load %arg1[%c0_223, %c0_224] : memref<128x128xbf16, #tpu.memory_space<vmem>>, vector<128x128xbf16>
    %cst_225 = arith.constant dense<0.000000e+00> : vector<8x128xf32>
    %479 = tpu.matmul %473, %478, %cst_225 {dimension_numbers = #tpu.dot_dimension_numbers<[1], [0], [0], [1], [0, 0, 1, 1], [], []>} : vector<8x128xbf16>, vector<128x128xbf16>, vector<8x128xf32> -> vector<8x128xf32>
    %c0_226 = arith.constant 0 : index
    %c0_227 = arith.constant 0 : index
    %480 = vector.load %arg3[%c0_226, %c0_227] : memref<8x128xf32, #tpu.memory_space<vmem>>, vector<8x128xf32>
    %481 = arith.addf %479, %480 : vector<8x128xf32>
    %cst_228 = arith.constant dense<0xFF800000> : vector<8xf32>
    %482 = vector.multi_reduction <maximumf>, %481, %cst_228 [1] : vector<8x128xf32> to vector<8xf32>
    %483 = vector.shape_cast %482 : vector<8xf32> to vector<8x1xf32>
    %484 = vector.broadcast %483 : vector<8x1xf32> to vector<8x128xf32>
    %485 = arith.subf %481, %484 : vector<8x128xf32>
    %486 = math.exp %485 : vector<8x128xf32>
    %cst_229 = arith.constant dense<0.000000e+00> : vector<8xf32>
    %487 = vector.multi_reduction <add>, %486, %cst_229 [1] : vector<8x128xf32> to vector<8xf32>
    %488 = vector.shape_cast %487 : vector<8xf32> to vector<8x1xf32>
    %489 = tpu.reciprocal %488 {approx = true} : vector<8x1xf32> -> vector<8x1xf32>
    %490 = vector.broadcast %489 : vector<8x1xf32> to vector<8x128xf32>
    %491 = arith.mulf %486, %490 : vector<8x128xf32>
    %492 = arith.truncf %491 : vector<8x128xf32> to vector<8x128xbf16>
    %c0_230 = arith.constant 0 : index
    %c0_231 = arith.constant 0 : index
    %493 = vector.load %arg2[%c0_230, %c0_231] : memref<128x128xbf16, #tpu.memory_space<vmem>>, vector<128x128xbf16>
    %cst_232 = arith.constant dense<0.000000e+00> : vector<8x128xf32>
    %494 = tpu.matmul %492, %493, %cst_232 {dimension_numbers = #tpu.dot_dimension_numbers<[1], [0], [0], [1], [0, 0, 1, 1], [], []>} : vector<8x128xbf16>, vector<128x128xbf16>, vector<8x128xf32> -> vector<8x128xf32>
    %495 = arith.truncf %494 : vector<8x128xf32> to vector<8x128xbf16>
    %c0_233 = arith.constant 0 : index
    %c0_234 = arith.constant 0 : index
    %496 = vector.load %arg10[%c0_233, %c0_234] : memref<128x128xbf16, #tpu.memory_space<vmem>>, vector<128x128xbf16>
    %cst_235 = arith.constant dense<0.000000e+00> : vector<8x128xf32>
    %497 = tpu.matmul %495, %496, %cst_235 {dimension_numbers = #tpu.dot_dimension_numbers<[1], [0], [0], [1], [0, 0, 1, 1], [], []>} : vector<8x128xbf16>, vector<128x128xbf16>, vector<8x128xf32> -> vector<8x128xf32>
    %c6 = arith.constant 6 : index
    %c0_236 = arith.constant 0 : index
    %c0_237 = arith.constant 0 : index
    %498 = vector.load %arg0[%c6, %c0_236, %c0_237] : memref<8x8x512xf32, #tpu.memory_space<vmem>>, vector<1x8x512xf32>
    %499 = vector.shape_cast %498 : vector<1x8x512xf32> to vector<8x512xf32>
    %500 = arith.addf %499, %475 : vector<8x512xf32>
    %c0_238 = arith.constant 0 : index
    %c0_239 = arith.constant 0 : index
    %501 = vector.load %arg4[%c0_238, %c0_239] : memref<128x512xbf16, #tpu.memory_space<vmem>>, vector<128x512xbf16>
    %cst_240 = arith.constant dense<0.000000e+00> : vector<8x512xf32>
    %502 = tpu.matmul %495, %501, %cst_240 {dimension_numbers = #tpu.dot_dimension_numbers<[1], [0], [0], [1], [0, 0, 1, 1], [], []>} : vector<8x128xbf16>, vector<128x512xbf16>, vector<8x512xf32> -> vector<8x512xf32>
    %503 = arith.addf %500, %502 : vector<8x512xf32>
    %504 = vector.extract_strided_slice %503 {offsets = [0, 0], sizes = [8, 384], strides = [1, 1]} : vector<8x512xf32> to vector<8x384xf32>
    %505 = arith.negf %504 : vector<8x384xf32>
    %506 = math.exp %505 : vector<8x384xf32>
    %cst_241 = arith.constant 1.000000e+00 : f32
    %507 = vector.broadcast %cst_241 : f32 to vector<8x384xf32>
    %508 = arith.addf %507, %506 : vector<8x384xf32>
    %509 = arith.divf %507, %508 : vector<8x384xf32>
    %510 = vector.extract_strided_slice %503 {offsets = [0, 384], sizes = [8, 128], strides = [1, 1]} : vector<8x512xf32> to vector<8x128xf32>
    %511 = math.tanh %510 : vector<8x128xf32>
    %512 = vector.extract_strided_slice %509 {offsets = [0, 128], sizes = [8, 128], strides = [1, 1]} : vector<8x384xf32> to vector<8x128xf32>
    %513 = arith.mulf %512, %439 : vector<8x128xf32>
    %514 = vector.extract_strided_slice %509 {offsets = [0, 0], sizes = [8, 128], strides = [1, 1]} : vector<8x384xf32> to vector<8x128xf32>
    %515 = arith.mulf %514, %511 : vector<8x128xf32>
    %516 = arith.addf %513, %515 : vector<8x128xf32>
    %517 = vector.extract_strided_slice %509 {offsets = [0, 256], sizes = [8, 128], strides = [1, 1]} : vector<8x384xf32> to vector<8x128xf32>
    %518 = math.tanh %516 : vector<8x128xf32>
    %519 = arith.mulf %517, %518 : vector<8x128xf32>
    %520 = arith.addf %477, %2 : vector<8x512xf32>
    %521 = arith.truncf %519 : vector<8x128xf32> to vector<8x128xbf16>
    %c0_242 = arith.constant 0 : index
    %c0_243 = arith.constant 0 : index
    %522 = vector.load %arg6[%c0_242, %c0_243] : memref<128x512xbf16, #tpu.memory_space<vmem>>, vector<128x512xbf16>
    %cst_244 = arith.constant dense<0.000000e+00> : vector<8x512xf32>
    %523 = tpu.matmul %521, %522, %cst_244 {dimension_numbers = #tpu.dot_dimension_numbers<[1], [0], [0], [1], [0, 0, 1, 1], [], []>} : vector<8x128xbf16>, vector<128x512xbf16>, vector<8x512xf32> -> vector<8x512xf32>
    %524 = arith.addf %520, %523 : vector<8x512xf32>
    %525 = vector.extract_strided_slice %524 {offsets = [0, 0], sizes = [8, 384], strides = [1, 1]} : vector<8x512xf32> to vector<8x384xf32>
    %526 = arith.negf %525 : vector<8x384xf32>
    %527 = math.exp %526 : vector<8x384xf32>
    %cst_245 = arith.constant 1.000000e+00 : f32
    %528 = vector.broadcast %cst_245 : f32 to vector<8x384xf32>
    %529 = arith.addf %528, %527 : vector<8x384xf32>
    %530 = arith.divf %528, %529 : vector<8x384xf32>
    %531 = vector.extract_strided_slice %524 {offsets = [0, 384], sizes = [8, 128], strides = [1, 1]} : vector<8x512xf32> to vector<8x128xf32>
    %532 = math.tanh %531 : vector<8x128xf32>
    %533 = vector.extract_strided_slice %530 {offsets = [0, 128], sizes = [8, 128], strides = [1, 1]} : vector<8x384xf32> to vector<8x128xf32>
    %534 = arith.mulf %533, %460 : vector<8x128xf32>
    %535 = vector.extract_strided_slice %530 {offsets = [0, 0], sizes = [8, 128], strides = [1, 1]} : vector<8x384xf32> to vector<8x128xf32>
    %536 = arith.mulf %535, %532 : vector<8x128xf32>
    %537 = arith.addf %534, %536 : vector<8x128xf32>
    %538 = vector.extract_strided_slice %530 {offsets = [0, 256], sizes = [8, 128], strides = [1, 1]} : vector<8x384xf32> to vector<8x128xf32>
    %539 = math.tanh %537 : vector<8x128xf32>
    %540 = arith.mulf %538, %539 : vector<8x128xf32>
    %541 = arith.addf %497, %5 : vector<8x128xf32>
    %542 = arith.truncf %540 : vector<8x128xf32> to vector<8x128xbf16>
    %c0_246 = arith.constant 0 : index
    %c0_247 = arith.constant 0 : index
    %543 = vector.load %arg9[%c0_246, %c0_247] : memref<128x128xbf16, #tpu.memory_space<vmem>>, vector<128x128xbf16>
    %cst_248 = arith.constant dense<0.000000e+00> : vector<8x128xf32>
    %544 = tpu.matmul %542, %543, %cst_248 {dimension_numbers = #tpu.dot_dimension_numbers<[1], [0], [0], [1], [0, 0, 1, 1], [], []>} : vector<8x128xbf16>, vector<128x128xbf16>, vector<8x128xf32> -> vector<8x128xf32>
    %545 = arith.addf %541, %544 : vector<8x128xf32>
    %c6_249 = arith.constant 6 : index
    %c0_250 = arith.constant 0 : index
    %c0_251 = arith.constant 0 : index
    %546 = vector.load %arg12[%c6_249, %c0_250, %c0_251] : memref<8x8x128xf32, #tpu.memory_space<vmem>>, vector<1x8x128xf32>
    %547 = vector.shape_cast %546 : vector<1x8x128xf32> to vector<8x128xf32>
    %548 = vector.shape_cast %545 : vector<8x128xf32> to vector<1x8x128xf32>
    tpu.vector_store %arg12[%c6_249, %c0_250, %c0_251], %548 {strides = array<i32>} : memref<8x8x128xf32, #tpu.memory_space<vmem>>, vector<1x8x128xf32>,
    %549 = arith.truncf %519 : vector<8x128xf32> to vector<8x128xbf16>
    %550 = arith.truncf %540 : vector<8x128xf32> to vector<8x128xbf16>
    %c0_252 = arith.constant 0 : index
    %c0_253 = arith.constant 0 : index
    %551 = vector.load %arg5[%c0_252, %c0_253] : memref<128x512xbf16, #tpu.memory_space<vmem>>, vector<128x512xbf16>
    %cst_254 = arith.constant dense<0.000000e+00> : vector<8x512xf32>
    %552 = tpu.matmul %549, %551, %cst_254 {dimension_numbers = #tpu.dot_dimension_numbers<[1], [0], [0], [1], [0, 0, 1, 1], [], []>} : vector<8x128xbf16>, vector<128x512xbf16>, vector<8x512xf32> -> vector<8x512xf32>
    %c0_255 = arith.constant 0 : index
    %c0_256 = arith.constant 0 : index
    %553 = vector.load %arg7[%c0_255, %c0_256] : memref<128x512xbf16, #tpu.memory_space<vmem>>, vector<128x512xbf16>
    %cst_257 = arith.constant dense<0.000000e+00> : vector<8x512xf32>
    %554 = tpu.matmul %550, %553, %cst_257 {dimension_numbers = #tpu.dot_dimension_numbers<[1], [0], [0], [1], [0, 0, 1, 1], [], []>} : vector<8x128xbf16>, vector<128x512xbf16>, vector<8x512xf32> -> vector<8x512xf32>
    %c0_258 = arith.constant 0 : index
    %c0_259 = arith.constant 0 : index
    %555 = vector.load %arg1[%c0_258, %c0_259] : memref<128x128xbf16, #tpu.memory_space<vmem>>, vector<128x128xbf16>
    %cst_260 = arith.constant dense<0.000000e+00> : vector<8x128xf32>
    %556 = tpu.matmul %550, %555, %cst_260 {dimension_numbers = #tpu.dot_dimension_numbers<[1], [0], [0], [1], [0, 0, 1, 1], [], []>} : vector<8x128xbf16>, vector<128x128xbf16>, vector<8x128xf32> -> vector<8x128xf32>
    %c0_261 = arith.constant 0 : index
    %c0_262 = arith.constant 0 : index
    %557 = vector.load %arg3[%c0_261, %c0_262] : memref<8x128xf32, #tpu.memory_space<vmem>>, vector<8x128xf32>
    %558 = arith.addf %556, %557 : vector<8x128xf32>
    %cst_263 = arith.constant dense<0xFF800000> : vector<8xf32>
    %559 = vector.multi_reduction <maximumf>, %558, %cst_263 [1] : vector<8x128xf32> to vector<8xf32>
    %560 = vector.shape_cast %559 : vector<8xf32> to vector<8x1xf32>
    %561 = vector.broadcast %560 : vector<8x1xf32> to vector<8x128xf32>
    %562 = arith.subf %558, %561 : vector<8x128xf32>
    %563 = math.exp %562 : vector<8x128xf32>
    %cst_264 = arith.constant dense<0.000000e+00> : vector<8xf32>
    %564 = vector.multi_reduction <add>, %563, %cst_264 [1] : vector<8x128xf32> to vector<8xf32>
    %565 = vector.shape_cast %564 : vector<8xf32> to vector<8x1xf32>
    %566 = tpu.reciprocal %565 {approx = true} : vector<8x1xf32> -> vector<8x1xf32>
    %567 = vector.broadcast %566 : vector<8x1xf32> to vector<8x128xf32>
    %568 = arith.mulf %563, %567 : vector<8x128xf32>
    %569 = arith.truncf %568 : vector<8x128xf32> to vector<8x128xbf16>
    %c0_265 = arith.constant 0 : index
    %c0_266 = arith.constant 0 : index
    %570 = vector.load %arg2[%c0_265, %c0_266] : memref<128x128xbf16, #tpu.memory_space<vmem>>, vector<128x128xbf16>
    %cst_267 = arith.constant dense<0.000000e+00> : vector<8x128xf32>
    %571 = tpu.matmul %569, %570, %cst_267 {dimension_numbers = #tpu.dot_dimension_numbers<[1], [0], [0], [1], [0, 0, 1, 1], [], []>} : vector<8x128xbf16>, vector<128x128xbf16>, vector<8x128xf32> -> vector<8x128xf32>
    %572 = arith.truncf %571 : vector<8x128xf32> to vector<8x128xbf16>
    %c0_268 = arith.constant 0 : index
    %c0_269 = arith.constant 0 : index
    %573 = vector.load %arg10[%c0_268, %c0_269] : memref<128x128xbf16, #tpu.memory_space<vmem>>, vector<128x128xbf16>
    %cst_270 = arith.constant dense<0.000000e+00> : vector<8x128xf32>
    %574 = tpu.matmul %572, %573, %cst_270 {dimension_numbers = #tpu.dot_dimension_numbers<[1], [0], [0], [1], [0, 0, 1, 1], [], []>} : vector<8x128xbf16>, vector<128x128xbf16>, vector<8x128xf32> -> vector<8x128xf32>
    %c7 = arith.constant 7 : index
    %c0_271 = arith.constant 0 : index
    %c0_272 = arith.constant 0 : index
    %575 = vector.load %arg0[%c7, %c0_271, %c0_272] : memref<8x8x512xf32, #tpu.memory_space<vmem>>, vector<1x8x512xf32>
    %576 = vector.shape_cast %575 : vector<1x8x512xf32> to vector<8x512xf32>
    %577 = arith.addf %576, %552 : vector<8x512xf32>
    %c0_273 = arith.constant 0 : index
    %c0_274 = arith.constant 0 : index
    %578 = vector.load %arg4[%c0_273, %c0_274] : memref<128x512xbf16, #tpu.memory_space<vmem>>, vector<128x512xbf16>
    %cst_275 = arith.constant dense<0.000000e+00> : vector<8x512xf32>
    %579 = tpu.matmul %572, %578, %cst_275 {dimension_numbers = #tpu.dot_dimension_numbers<[1], [0], [0], [1], [0, 0, 1, 1], [], []>} : vector<8x128xbf16>, vector<128x512xbf16>, vector<8x512xf32> -> vector<8x512xf32>
    %580 = arith.addf %577, %579 : vector<8x512xf32>
    %581 = vector.extract_strided_slice %580 {offsets = [0, 0], sizes = [8, 384], strides = [1, 1]} : vector<8x512xf32> to vector<8x384xf32>
    %582 = arith.negf %581 : vector<8x384xf32>
    %583 = math.exp %582 : vector<8x384xf32>
    %cst_276 = arith.constant 1.000000e+00 : f32
    %584 = vector.broadcast %cst_276 : f32 to vector<8x384xf32>
    %585 = arith.addf %584, %583 : vector<8x384xf32>
    %586 = arith.divf %584, %585 : vector<8x384xf32>
    %587 = vector.extract_strided_slice %580 {offsets = [0, 384], sizes = [8, 128], strides = [1, 1]} : vector<8x512xf32> to vector<8x128xf32>
    %588 = math.tanh %587 : vector<8x128xf32>
    %589 = vector.extract_strided_slice %586 {offsets = [0, 128], sizes = [8, 128], strides = [1, 1]} : vector<8x384xf32> to vector<8x128xf32>
    %590 = arith.mulf %589, %516 : vector<8x128xf32>
    %591 = vector.extract_strided_slice %586 {offsets = [0, 0], sizes = [8, 128], strides = [1, 1]} : vector<8x384xf32> to vector<8x128xf32>
    %592 = arith.mulf %591, %588 : vector<8x128xf32>
    %593 = arith.addf %590, %592 : vector<8x128xf32>
    %594 = vector.extract_strided_slice %586 {offsets = [0, 256], sizes = [8, 128], strides = [1, 1]} : vector<8x384xf32> to vector<8x128xf32>
    %595 = math.tanh %593 : vector<8x128xf32>
    %596 = arith.mulf %594, %595 : vector<8x128xf32>
    %597 = arith.addf %554, %2 : vector<8x512xf32>
    %598 = arith.truncf %596 : vector<8x128xf32> to vector<8x128xbf16>
    %c0_277 = arith.constant 0 : index
    %c0_278 = arith.constant 0 : index
    %599 = vector.load %arg6[%c0_277, %c0_278] : memref<128x512xbf16, #tpu.memory_space<vmem>>, vector<128x512xbf16>
    %cst_279 = arith.constant dense<0.000000e+00> : vector<8x512xf32>
    %600 = tpu.matmul %598, %599, %cst_279 {dimension_numbers = #tpu.dot_dimension_numbers<[1], [0], [0], [1], [0, 0, 1, 1], [], []>} : vector<8x128xbf16>, vector<128x512xbf16>, vector<8x512xf32> -> vector<8x512xf32>
    %601 = arith.addf %597, %600 : vector<8x512xf32>
    %602 = vector.extract_strided_slice %601 {offsets = [0, 0], sizes = [8, 384], strides = [1, 1]} : vector<8x512xf32> to vector<8x384xf32>
    %603 = arith.negf %602 : vector<8x384xf32>
    %604 = math.exp %603 : vector<8x384xf32>
    %cst_280 = arith.constant 1.000000e+00 : f32
    %605 = vector.broadcast %cst_280 : f32 to vector<8x384xf32>
    %606 = arith.addf %605, %604 : vector<8x384xf32>
    %607 = arith.divf %605, %606 : vector<8x384xf32>
    %608 = vector.extract_strided_slice %601 {offsets = [0, 384], sizes = [8, 128], strides = [1, 1]} : vector<8x512xf32> to vector<8x128xf32>
    %609 = math.tanh %608 : vector<8x128xf32>
    %610 = vector.extract_strided_slice %607 {offsets = [0, 128], sizes = [8, 128], strides = [1, 1]} : vector<8x384xf32> to vector<8x128xf32>
    %611 = arith.mulf %610, %537 : vector<8x128xf32>
    %612 = vector.extract_strided_slice %607 {offsets = [0, 0], sizes = [8, 128], strides = [1, 1]} : vector<8x384xf32> to vector<8x128xf32>
    %613 = arith.mulf %612, %609 : vector<8x128xf32>
    %614 = arith.addf %611, %613 : vector<8x128xf32>
    %615 = vector.extract_strided_slice %607 {offsets = [0, 256], sizes = [8, 128], strides = [1, 1]} : vector<8x384xf32> to vector<8x128xf32>
    %616 = math.tanh %614 : vector<8x128xf32>
    %617 = arith.mulf %615, %616 : vector<8x128xf32>
    %618 = arith.addf %574, %5 : vector<8x128xf32>
    %619 = arith.truncf %617 : vector<8x128xf32> to vector<8x128xbf16>
    %c0_281 = arith.constant 0 : index
    %c0_282 = arith.constant 0 : index
    %620 = vector.load %arg9[%c0_281, %c0_282] : memref<128x128xbf16, #tpu.memory_space<vmem>>, vector<128x128xbf16>
    %cst_283 = arith.constant dense<0.000000e+00> : vector<8x128xf32>
    %621 = tpu.matmul %619, %620, %cst_283 {dimension_numbers = #tpu.dot_dimension_numbers<[1], [0], [0], [1], [0, 0, 1, 1], [], []>} : vector<8x128xbf16>, vector<128x128xbf16>, vector<8x128xf32> -> vector<8x128xf32>
    %622 = arith.addf %618, %621 : vector<8x128xf32>
    %c7_284 = arith.constant 7 : index
    %c0_285 = arith.constant 0 : index
    %c0_286 = arith.constant 0 : index
    %623 = vector.load %arg12[%c7_284, %c0_285, %c0_286] : memref<8x8x128xf32, #tpu.memory_space<vmem>>, vector<1x8x128xf32>
    %624 = vector.shape_cast %623 : vector<1x8x128xf32> to vector<8x128xf32>
    %625 = vector.shape_cast %622 : vector<8x128xf32> to vector<1x8x128xf32>
    tpu.vector_store %arg12[%c7_284, %c0_285, %c0_286], %625 {strides = array<i32>} : memref<8x8x128xf32, #tpu.memory_space<vmem>>, vector<1x8x128xf32>,
    return
  }
}

</mosaic_0001>

<llo_original>
// kernel: tpu_custom_call.1
$region0: #{tpu_custom_call.1}
  #allocation0 [shape = 'u32[]', space=smem, size = 0x4, offset = 0x4, fixed_abs, tag = 'smem constant byte address 0x4 - core index']
  #allocation1 [shape = 'u32[72,128]{1,0:T(1,128)}', space=vmem, size = 0x9000, scoped, tag = 'internal scratch']
  %s0 = inlined_call_operand.hbm [shape: f32[8,8,512], index: 0, kind: input, shape index: {}]
  %s1 = inlined_call_operand.hbm [shape: bf16[128,128], index: 1, kind: input, shape index: {}]
  %s2 = inlined_call_operand.hbm [shape: bf16[128,128], index: 2, kind: input, shape index: {}]
  %s3 = inlined_call_operand.hbm [shape: f32[8,128], index: 3, kind: input, shape index: {}]
  %s4 = inlined_call_operand.hbm [shape: bf16[128,512], index: 4, kind: input, shape index: {}]
  %s5 = inlined_call_operand.hbm [shape: bf16[128,512], index: 5, kind: input, shape index: {}]
  %s6 = inlined_call_operand.hbm [shape: bf16[128,512], index: 6, kind: input, shape index: {}]
  %s7 = inlined_call_operand.hbm [shape: bf16[128,512], index: 7, kind: input, shape index: {}]
  %s8 = inlined_call_operand.vmem [shape: f32[1,512], index: 8, kind: input, shape index: {}]
  %s9 = inlined_call_operand.hbm [shape: bf16[128,128], index: 9, kind: input, shape index: {}]
  %s10 = inlined_call_operand.hbm [shape: bf16[128,128], index: 10, kind: input, shape index: {}]
  %s11 = inlined_call_operand.vmem [shape: f32[1,128], index: 11, kind: input, shape index: {}]
  %s12 = inlined_call_operand.hbm [shape: f32[8,8,128], index: 12, kind: output, shape index: {}]
  %s13 = sld [smem:[#allocation0]]
  $region98: #{tpu_custom_call.1} parent=0
    _
  %s15 = ssub.s32 1, %s13
  %s16 = scalar_select 0, %s15, %s13
  $region1: #{tpu_custom_call.1} parent=0
    #allocation2 [shape = 'u8[131072]{0}', space=vmem, size = 0x20000, scoped, tag = 'input window, operand 0, single buffered']
    #allocation3 [shape = 's32[1]{0}', space=sflag, size = 0x4, scoped, tag = 'scoped memory for tpu_custom_call.1']
    #allocation4 [shape = 's32[1]{0}', space=sflag, size = 0x4, scoped, tag = 'scoped memory for tpu_custom_call.1']
    #allocation5 [shape = 'u8[32768]{0}', space=vmem, size = 0x8000, scoped, tag = 'input window, operand 1, single buffered']
    #allocation6 [shape = 's32[1]{0}', space=sflag, size = 0x4, scoped, tag = 'scoped memory for tpu_custom_call.1']
    #allocation7 [shape = 'u8[32768]{0}', space=vmem, size = 0x8000, scoped, tag = 'input window, operand 2, single buffered']
    #allocation8 [shape = 'u8[4096]{0}', space=vmem, size = 0x1000, scoped, tag = 'input window, operand 3, single buffered']
    #allocation9 [shape = 's32[1]{0}', space=sflag, size = 0x4, scoped, tag = 'scoped memory for tpu_custom_call.1']
    #allocation10 [shape = 'u8[131072]{0}', space=vmem, size = 0x20000, scoped, tag = 'input window, operand 4, single buffered']
    #allocation11 [shape = 'u8[131072]{0}', space=vmem, size = 0x20000, scoped, tag = 'input window, operand 5, single buffered']
    #allocation12 [shape = 's32[1]{0}', space=sflag, size = 0x4, scoped, tag = 'scoped memory for tpu_custom_call.1']
    #allocation13 [shape = 'u8[131072]{0}', space=vmem, size = 0x20000, scoped, tag = 'input window, operand 6, single buffered']
    #allocation14 [shape = 'u8[131072]{0}', space=vmem, size = 0x20000, scoped, tag = 'input window, operand 7, single buffered']
    #allocation15 [shape = 's32[1]{0}', space=sflag, size = 0x4, scoped, tag = 'scoped memory for tpu_custom_call.1']
    #allocation16 [shape = 'u8[32768]{0}', space=vmem, size = 0x8000, scoped, tag = 'input window, operand 9, single buffered']
    #allocation17 [shape = 'u8[32768]{0}', space=vmem, size = 0x8000, scoped, tag = 'input window, operand 10, single buffered']
    #allocation18 [shape = 's32[1]{0}', space=sflag, size = 0x4, scoped, tag = 'scoped memory for tpu_custom_call.1']
    #allocation19 [shape = 'u8[32768]{0}', space=vmem, size = 0x8000, scoped, tag = 'output window, operand 0, single buffered']
    %17 = vsyncpa [#allocation3], 0
    %18 = vsyncpa [#allocation6], 0
    %19 = vsyncpa [#allocation9], 0
    %20 = vsyncpa [#allocation12], 0
    %21 = vsyncpa [#allocation15], 0
    %22 = vsyncpa [#allocation18], 0
    %23 = vsyncpa [#allocation4], 0
    // Predicated region
    $region2: #{tpu_custom_call.1} parent=1 // pred_check
      _
    $region3: #{tpu_custom_call.1} parent=1 // pred_check_branch
      %25 = sbr.rel (0) target = $region5
    $region4: #{tpu_custom_call.1} parent=1 // pred_region
      %27 = vsyncadd [#allocation3], 0
      %s28 = sshll.u32 %s0, 4
      %s29 = int_to_ptr.hbm [resolvable:$true] %s28
      %s30 = sshll.u32 [#allocation2], 4
      %s31 = int_to_ptr.vmem [resolvable:$true] %s30
      %36 = dma.hbm_to_vmem [thread:$0]  %s29, 4096, %s31, [#allocation3], 512, 512, 32
    $region5: #{tpu_custom_call.1} parent=1 // pred_fallthru
      _
    // Predicated region
    $region6: #{tpu_custom_call.1} parent=1 // pred_check
      _
    $region7: #{tpu_custom_call.1} parent=1 // pred_check_branch
      %38 = sbr.rel (0) target = $region9
    $region8: #{tpu_custom_call.1} parent=1 // pred_region
      %40 = vsyncadd [#allocation6], 0
      %s41 = sshll.u32 %s1, 4
      %s42 = int_to_ptr.hbm [resolvable:$true] %s41
      %s43 = sshll.u32 [#allocation5], 4
      %s44 = int_to_ptr.vmem [resolvable:$true] %s43
      %49 = dma.hbm_to_vmem [thread:$0]  %s42, 1024, %s44, [#allocation6], 64, 64, 4
    $region9: #{tpu_custom_call.1} parent=1 // pred_fallthru
      _
    // Predicated region
    $region10: #{tpu_custom_call.1} parent=1 // pred_check
      _
    $region11: #{tpu_custom_call.1} parent=1 // pred_check_branch
      %51 = sbr.rel (0) target = $region13
    $region12: #{tpu_custom_call.1} parent=1 // pred_region
      %53 = vsyncadd [#allocation6], 0
      %s54 = sshll.u32 %s2, 4
      %s55 = int_to_ptr.hbm [resolvable:$true] %s54
      %s56 = sshll.u32 [#allocation7], 4
      %s57 = int_to_ptr.vmem [resolvable:$true] %s56
      %62 = dma.hbm_to_vmem [thread:$0]  %s55, 1024, %s57, [#allocation6], 64, 64, 4
    $region13: #{tpu_custom_call.1} parent=1 // pred_fallthru
      _
    // Predicated region
    $region14: #{tpu_custom_call.1} parent=1 // pred_check
      _
    $region15: #{tpu_custom_call.1} parent=1 // pred_check_branch
      %64 = sbr.rel (0) target = $region17
    $region16: #{tpu_custom_call.1} parent=1 // pred_region
      %66 = vsyncadd [#allocation9], 0
      %s68 = sshll.u32 %s3, 4
      %s69 = int_to_ptr.hbm [resolvable:$true] %s68
      %s70 = sshll.u32 [#allocation8], 4
      %s71 = int_to_ptr.vmem [resolvable:$true] %s70
      %73 = dma.hbm_to_vmem [thread:$0]  %s69, 128, %s71, [#allocation9]
    $region17: #{tpu_custom_call.1} parent=1 // pred_fallthru
      _
    // Predicated region
    $region18: #{tpu_custom_call.1} parent=1 // pred_check
      _
    $region19: #{tpu_custom_call.1} parent=1 // pred_check_branch
      %75 = sbr.rel (0) target = $region21
    $region20: #{tpu_custom_call.1} parent=1 // pred_region
      %77 = vsyncadd [#allocation9], 0
      %s78 = sshll.u32 %s4, 4
      %s79 = int_to_ptr.hbm [resolvable:$true] %s78
      %s80 = sshll.u32 [#allocation10], 4
      %s81 = int_to_ptr.vmem [resolvable:$true] %s80
      %86 = dma.hbm_to_vmem [thread:$0]  %s79, 4096, %s81, [#allocation9], 256, 256, 16
    $region21: #{tpu_custom_call.1} parent=1 // pred_fallthru
      _
    // Predicated region
    $region22: #{tpu_custom_call.1} parent=1 // pred_check
      _
    $region23: #{tpu_custom_call.1} parent=1 // pred_check_branch
      %88 = sbr.rel (0) target = $region25
    $region24: #{tpu_custom_call.1} parent=1 // pred_region
      %90 = vsyncadd [#allocation12], 0
      %s91 = sshll.u32 %s5, 4
      %s92 = int_to_ptr.hbm [resolvable:$true] %s91
      %s93 = sshll.u32 [#allocation11], 4
      %s94 = int_to_ptr.vmem [resolvable:$true] %s93
      %99 = dma.hbm_to_vmem [thread:$0]  %s92, 4096, %s94, [#allocation12], 256, 256, 16
    $region25: #{tpu_custom_call.1} parent=1 // pred_fallthru
      _
    // Predicated region
    $region26: #{tpu_custom_call.1} parent=1 // pred_check
      _
    $region27: #{tpu_custom_call.1} parent=1 // pred_check_branch
      %101 = sbr.rel (0) target = $region29
    $region28: #{tpu_custom_call.1} parent=1 // pred_region
      %103 = vsyncadd [#allocation12], 0
      %s104 = sshll.u32 %s6, 4
      %s105 = int_to_ptr.hbm [resolvable:$true] %s104
      %s106 = sshll.u32 [#allocation13], 4
      %s107 = int_to_ptr.vmem [resolvable:$true] %s106
      %112 = dma.hbm_to_vmem [thread:$0]  %s105, 4096, %s107, [#allocation12], 256, 256, 16
    $region29: #{tpu_custom_call.1} parent=1 // pred_fallthru
      _
    // Predicated region
    $region30: #{tpu_custom_call.1} parent=1 // pred_check
      _
    $region31: #{tpu_custom_call.1} parent=1 // pred_check_branch
      %114 = sbr.rel (0) target = $region33
    $region32: #{tpu_custom_call.1} parent=1 // pred_region
      %116 = vsyncadd [#allocation15], 0
      %s117 = sshll.u32 %s7, 4
      %s118 = int_to_ptr.hbm [resolvable:$true] %s117
      %s119 = sshll.u32 [#allocation14], 4
      %s120 = int_to_ptr.vmem [resolvable:$true] %s119
      %125 = dma.hbm_to_vmem [thread:$0]  %s118, 4096, %s120, [#allocation15], 256, 256, 16
    $region33: #{tpu_custom_call.1} parent=1 // pred_fallthru
      _
    // Predicated region
    $region34: #{tpu_custom_call.1} parent=1 // pred_check
      _
    $region35: #{tpu_custom_call.1} parent=1 // pred_check_branch
      %127 = sbr.rel (0) target = $region37
    $region36: #{tpu_custom_call.1} parent=1 // pred_region
      _
    $region37: #{tpu_custom_call.1} parent=1 // pred_fallthru
      _
    // Predicated region
    $region38: #{tpu_custom_call.1} parent=1 // pred_check
      _
    $region39: #{tpu_custom_call.1} parent=1 // pred_check_branch
      %129 = sbr.rel (0) target = $region41
    $region40: #{tpu_custom_call.1} parent=1 // pred_region
      %131 = vsyncadd [#allocation15], 0
      %s132 = sshll.u32 %s9, 4
      %s133 = int_to_ptr.hbm [resolvable:$true] %s132
      %s134 = sshll.u32 [#allocation16], 4
      %s135 = int_to_ptr.vmem [resolvable:$true] %s134
      %140 = dma.hbm_to_vmem [thread:$0]  %s133, 1024, %s135, [#allocation15], 64, 64, 4
    $region41: #{tpu_custom_call.1} parent=1 // pred_fallthru
      _
    // Predicated region
    $region42: #{tpu_custom_call.1} parent=1 // pred_check
      _
    $region43: #{tpu_custom_call.1} parent=1 // pred_check_branch
      %142 = sbr.rel (0) target = $region45
    $region44: #{tpu_custom_call.1} parent=1 // pred_region
      %144 = vsyncadd [#allocation18], 0
      %s145 = sshll.u32 %s10, 4
      %s146 = int_to_ptr.hbm [resolvable:$true] %s145
      %s147 = sshll.u32 [#allocation17], 4
      %s148 = int_to_ptr.vmem [resolvable:$true] %s147
      %153 = dma.hbm_to_vmem [thread:$0]  %s146, 1024, %s148, [#allocation18], 64, 64, 4
    $region45: #{tpu_custom_call.1} parent=1 // pred_fallthru
      _
    // Predicated region
    $region46: #{tpu_custom_call.1} parent=1 // pred_check
      _
    $region47: #{tpu_custom_call.1} parent=1 // pred_check_branch
      %155 = sbr.rel (0) target = $region49
    $region48: #{tpu_custom_call.1} parent=1 // pred_region
      _
    $region49: #{tpu_custom_call.1} parent=1 // pred_fallthru
      _
    // Predicated region
    $region50: #{tpu_custom_call.1} parent=1 // pred_check
      _
    $region51: #{tpu_custom_call.1} parent=1 // pred_check_branch
      %157 = sbr.rel (0) target = $region53
    $region52: #{tpu_custom_call.1} parent=1 // pred_region
      %159 = dma.done [#allocation3], 4096
    $region53: #{tpu_custom_call.1} parent=1 // pred_fallthru
      _
    // Predicated region
    $region54: #{tpu_custom_call.1} parent=1 // pred_check
      _
    $region55: #{tpu_custom_call.1} parent=1 // pred_check_branch
      %161 = sbr.rel (0) target = $region57
    $region56: #{tpu_custom_call.1} parent=1 // pred_region
      %163 = dma.done [#allocation6], 1024
    $region57: #{tpu_custom_call.1} parent=1 // pred_fallthru
      _
    // Predicated region
    $region58: #{tpu_custom_call.1} parent=1 // pred_check
      _
    $region59: #{tpu_custom_call.1} parent=1 // pred_check_branch
      %165 = sbr.rel (0) target = $region61
    $region60: #{tpu_custom_call.1} parent=1 // pred_region
      %167 = dma.done [#allocation6], 1024
    $region61: #{tpu_custom_call.1} parent=1 // pred_fallthru
      _
    // Predicated region
    $region62: #{tpu_custom_call.1} parent=1 // pred_check
      _
    $region63: #{tpu_custom_call.1} parent=1 // pred_check_branch
      %169 = sbr.rel (0) target = $region65
    $region64: #{tpu_custom_call.1} parent=1 // pred_region
      %171 = dma.done [#allocation9], 128
    $region65: #{tpu_custom_call.1} parent=1 // pred_fallthru
      _
    // Predicated region
    $region66: #{tpu_custom_call.1} parent=1 // pred_check
      _
    $region67: #{tpu_custom_call.1} parent=1 // pred_check_branch
      %173 = sbr.rel (0) target = $region69
    $region68: #{tpu_custom_call.1} parent=1 // pred_region
      %175 = dma.done [#allocation9], 4096
    $region69: #{tpu_custom_call.1} parent=1 // pred_fallthru
      _
    // Predicated region
    $region70: #{tpu_custom_call.1} parent=1 // pred_check
      _
    $region71: #{tpu_custom_call.1} parent=1 // pred_check_branch
      %177 = sbr.rel (0) target = $region73
    $region72: #{tpu_custom_call.1} parent=1 // pred_region
      %179 = dma.done [#allocation12], 4096
    $region73: #{tpu_custom_call.1} parent=1 // pred_fallthru
      _
    // Predicated region
    $region74: #{tpu_custom_call.1} parent=1 // pred_check
      _
    $region75: #{tpu_custom_call.1} parent=1 // pred_check_branch
      %181 = sbr.rel (0) target = $region77
    $region76: #{tpu_custom_call.1} parent=1 // pred_region
      %183 = dma.done [#allocation12], 4096
    $region77: #{tpu_custom_call.1} parent=1 // pred_fallthru
      _
    // Predicated region
    $region78: #{tpu_custom_call.1} parent=1 // pred_check
      _
    $region79: #{tpu_custom_call.1} parent=1 // pred_check_branch
      %185 = sbr.rel (0) target = $region81
    $region80: #{tpu_custom_call.1} parent=1 // pred_region
      %187 = dma.done [#allocation15], 4096
    $region81: #{tpu_custom_call.1} parent=1 // pred_fallthru
      _
    // Predicated region
    $region82: #{tpu_custom_call.1} parent=1 // pred_check
      _
    $region83: #{tpu_custom_call.1} parent=1 // pred_check_branch
      %189 = sbr.rel (0) target = $region85
    $region84: #{tpu_custom_call.1} parent=1 // pred_region
      %191 = dma.done [#allocation15], 1024
    $region85: #{tpu_custom_call.1} parent=1 // pred_fallthru
      _
    // Predicated region
    $region86: #{tpu_custom_call.1} parent=1 // pred_check
      _
    $region87: #{tpu_custom_call.1} parent=1 // pred_check_branch
      %193 = sbr.rel (0) target = $region89
    $region88: #{tpu_custom_call.1} parent=1 // pred_region
      %195 = dma.done [#allocation18], 1024
    $region89: #{tpu_custom_call.1} parent=1 // pred_fallthru
      _
    %v197 = vld [vmem:[%s8] sm:$0xf]
    %v199 = vperm.slane %v197, 0
    %v200 = vperm.slane %v197, 1
    %v201 = vperm.slane %v197, 2
    %v202 = vperm.slane %v197, 3
    %v207 = vld [vmem:[%s11] sm:$0x1]
    %v209 = vperm.slane %v207, 0
    %v211 = vld [vmem:[#allocation11] sm:$0xff]
    %v212 = vld [vmem:[#allocation11 + $0x8] sm:$0xff]
    %v213 = vld [vmem:[#allocation11 + $0x10] sm:$0xff]
    %v214 = vld [vmem:[#allocation11 + $0x18] sm:$0xff]
    %v215 = vld [vmem:[#allocation11 + $0x20] sm:$0xff]
    %v216 = vld [vmem:[#allocation11 + $0x28] sm:$0xff]
    %v217 = vld [vmem:[#allocation11 + $0x30] sm:$0xff]
    %v218 = vld [vmem:[#allocation11 + $0x38] sm:$0xff]
    %v219 = vld [vmem:[#allocation11 + $0x40] sm:$0xff]
    %v220 = vld [vmem:[#allocation11 + $0x48] sm:$0xff]
    %v221 = vld [vmem:[#allocation11 + $0x50] sm:$0xff]
    %v222 = vld [vmem:[#allocation11 + $0x58] sm:$0xff]
    %v223 = vld [vmem:[#allocation11 + $0x60] sm:$0xff]
    %v224 = vld [vmem:[#allocation11 + $0x68] sm:$0xff]
    %v225 = vld [vmem:[#allocation11 + $0x70] sm:$0xff]
    %v226 = vld [vmem:[#allocation11 + $0x78] sm:$0xff]
    %v227 = vld [vmem:[#allocation11 + $0x80] sm:$0xff]
    %v228 = vld [vmem:[#allocation11 + $0x88] sm:$0xff]
    %v229 = vld [vmem:[#allocation11 + $0x90] sm:$0xff]
    %v230 = vld [vmem:[#allocation11 + $0x98] sm:$0xff]
    %v231 = vld [vmem:[#allocation11 + $0xa0] sm:$0xff]
    %v232 = vld [vmem:[#allocation11 + $0xa8] sm:$0xff]
    %v233 = vld [vmem:[#allocation11 + $0xb0] sm:$0xff]
    %v234 = vld [vmem:[#allocation11 + $0xb8] sm:$0xff]
    %v235 = vld [vmem:[#allocation11 + $0xc0] sm:$0xff]
    %v236 = vld [vmem:[#allocation11 + $0xc8] sm:$0xff]
    %v237 = vld [vmem:[#allocation11 + $0xd0] sm:$0xff]
    %v238 = vld [vmem:[#allocation11 + $0xd8] sm:$0xff]
    %v239 = vld [vmem:[#allocation11 + $0xe0] sm:$0xff]
    %v240 = vld [vmem:[#allocation11 + $0xe8] sm:$0xff]
    %v241 = vld [vmem:[#allocation11 + $0xf0] sm:$0xff]
    %v242 = vld [vmem:[#allocation11 + $0xf8] sm:$0xff]
    %v275 = vunpack.c.l.b16 %v211
    %v276 = vunpack.c.h.b16 %v211
    %v277 = vunpack.c.l.b16 %v212
    %v278 = vunpack.c.h.b16 %v212
    %v279 = vunpack.c.l.b16 %v213
    %v280 = vunpack.c.h.b16 %v213
    %v281 = vunpack.c.l.b16 %v214
    %v282 = vunpack.c.h.b16 %v214
    %v283 = vunpack.c.l.b16 %v215
    %v284 = vunpack.c.h.b16 %v215
    %v285 = vunpack.c.l.b16 %v216
    %v286 = vunpack.c.h.b16 %v216
    %v287 = vunpack.c.l.b16 %v217
    %v288 = vunpack.c.h.b16 %v217
    %v289 = vunpack.c.l.b16 %v218
    %v290 = vunpack.c.h.b16 %v218
    %v291 = vunpack.c.l.b16 %v219
    %v292 = vunpack.c.h.b16 %v219
    %v293 = vunpack.c.l.b16 %v220
    %v294 = vunpack.c.h.b16 %v220
    %v295 = vunpack.c.l.b16 %v221
    %v296 = vunpack.c.h.b16 %v221
    %v297 = vunpack.c.l.b16 %v222
    %v298 = vunpack.c.h.b16 %v222
    %v299 = vunpack.c.l.b16 %v223
    %v300 = vunpack.c.h.b16 %v223
    %v301 = vunpack.c.l.b16 %v224
    %v302 = vunpack.c.h.b16 %v224
    %v303 = vunpack.c.l.b16 %v225
    %v304 = vunpack.c.h.b16 %v225
    %v305 = vunpack.c.l.b16 %v226
    %v306 = vunpack.c.h.b16 %v226
    %v307 = vunpack.c.l.b16 %v227
    %v308 = vunpack.c.h.b16 %v227
    %v309 = vunpack.c.l.b16 %v228
    %v310 = vunpack.c.h.b16 %v228
    %v311 = vunpack.c.l.b16 %v229
    %v312 = vunpack.c.h.b16 %v229
    %v313 = vunpack.c.l.b16 %v230
    %v314 = vunpack.c.h.b16 %v230
    %v315 = vunpack.c.l.b16 %v231
    %v316 = vunpack.c.h.b16 %v231
    %v317 = vunpack.c.l.b16 %v232
    %v318 = vunpack.c.h.b16 %v232
    %v319 = vunpack.c.l.b16 %v233
    %v320 = vunpack.c.h.b16 %v233
    %v321 = vunpack.c.l.b16 %v234
    %v322 = vunpack.c.h.b16 %v234
    %v323 = vunpack.c.l.b16 %v235
    %v324 = vunpack.c.h.b16 %v235
    %v325 = vunpack.c.l.b16 %v236
    %v326 = vunpack.c.h.b16 %v236
    %v327 = vunpack.c.l.b16 %v237
    %v328 = vunpack.c.h.b16 %v237
    %v329 = vunpack.c.l.b16 %v238
    %v330 = vunpack.c.h.b16 %v238
    %v331 = vunpack.c.l.b16 %v239
    %v332 = vunpack.c.h.b16 %v239
    %v333 = vunpack.c.l.b16 %v240
    %v334 = vunpack.c.h.b16 %v240
    %v335 = vunpack.c.l.b16 %v241
    %v336 = vunpack.c.h.b16 %v241
    %v337 = vunpack.c.l.b16 %v242
    %v338 = vunpack.c.h.b16 %v242
    %v339 = vpack.c.b16 %v279, %v275
    %v340 = vpack.c.b16 %v280, %v276
    %v341 = vpack.c.b16 %v281, %v277
    %v342 = vpack.c.b16 %v282, %v278
    %v343 = vpack.c.b16 %v287, %v283
    %v344 = vpack.c.b16 %v288, %v284
    %v345 = vpack.c.b16 %v289, %v285
    %v346 = vpack.c.b16 %v290, %v286
    %v347 = vpack.c.b16 %v295, %v291
    %v348 = vpack.c.b16 %v296, %v292
    %v349 = vpack.c.b16 %v297, %v293
    %v350 = vpack.c.b16 %v298, %v294
    %v351 = vpack.c.b16 %v303, %v299
    %v352 = vpack.c.b16 %v304, %v300
    %v353 = vpack.c.b16 %v305, %v301
    %v354 = vpack.c.b16 %v306, %v302
    %v355 = vpack.c.b16 %v311, %v307
    %v356 = vpack.c.b16 %v312, %v308
    %v357 = vpack.c.b16 %v313, %v309
    %v358 = vpack.c.b16 %v314, %v310
    %v359 = vpack.c.b16 %v319, %v315
    %v360 = vpack.c.b16 %v320, %v316
    %v361 = vpack.c.b16 %v321, %v317
    %v362 = vpack.c.b16 %v322, %v318
    %v363 = vpack.c.b16 %v327, %v323
    %v364 = vpack.c.b16 %v328, %v324
    %v365 = vpack.c.b16 %v329, %v325
    %v366 = vpack.c.b16 %v330, %v326
    %v367 = vpack.c.b16 %v335, %v331
    %v368 = vpack.c.b16 %v336, %v332
    %v369 = vpack.c.b16 %v337, %v333
    %v370 = vpack.c.b16 %v338, %v334
    %403 = vmatpush.bf16.msra.mxu0 %v367
    %404 = vmatpush.bf16.msra.mxu0 %v363
    %405 = vmatpush.bf16.msra.mxu0 %v359
    %406 = vmatpush.bf16.msra.mxu0 %v355
    %407 = vmatpush.bf16.msra.mxu0 %v351
    %408 = vmatpush.bf16.msra.mxu0 %v347
    %409 = vmatpush.bf16.msra.mxu0 %v343
    %410 = vmatpush.bf16.msra.mxu0 %v339
    %411 = vmatmul.bf16.gmra.mxu0 0
    %v412 = vpop.f32.mrf.mxu0
    %v413 = vadd.f32 0.0, %v412
    %v414 = vpop.f32.mrf.mxu0
    %415 = vdwg.mxu0
    %416 = vmatpush.bf16.msra.mxu0 %v368
    %417 = vmatpush.bf16.msra.mxu0 %v364
    %418 = vmatpush.bf16.msra.mxu0 %v360
    %419 = vmatpush.bf16.msra.mxu0 %v356
    %420 = vmatpush.bf16.msra.mxu0 %v352
    %421 = vmatpush.bf16.msra.mxu0 %v348
    %422 = vmatpush.bf16.msra.mxu0 %v344
    %423 = vmatpush.bf16.msra.mxu0 %v340
    %424 = vmatmul.bf16.gmra.mxu0 0
    %v425 = vpop.f32.mrf.mxu0
    %v426 = vadd.f32 0.0, %v425
    %v427 = vpop.f32.mrf.mxu0
    %428 = vdwg.mxu0
    %429 = vmatpush.bf16.msra.mxu0 %v369
    %430 = vmatpush.bf16.msra.mxu0 %v365
    %431 = vmatpush.bf16.msra.mxu0 %v361
    %432 = vmatpush.bf16.msra.mxu0 %v357
    %433 = vmatpush.bf16.msra.mxu0 %v353
    %434 = vmatpush.bf16.msra.mxu0 %v349
    %435 = vmatpush.bf16.msra.mxu0 %v345
    %436 = vmatpush.bf16.msra.mxu0 %v341
    %437 = vmatmul.bf16.gmra.mxu0 0
    %v438 = vpop.f32.mrf.mxu0
    %v439 = vadd.f32 0.0, %v438
    %v440 = vpop.f32.mrf.mxu0
    %441 = vdwg.mxu0
    %442 = vmatpush.bf16.msra.mxu0 %v370
    %443 = vmatpush.bf16.msra.mxu0 %v366
    %444 = vmatpush.bf16.msra.mxu0 %v362
    %445 = vmatpush.bf16.msra.mxu0 %v358
    %446 = vmatpush.bf16.msra.mxu0 %v354
    %447 = vmatpush.bf16.msra.mxu0 %v350
    %448 = vmatpush.bf16.msra.mxu0 %v346
    %449 = vmatpush.bf16.msra.mxu0 %v342
    %450 = vmatmul.bf16.gmra.mxu0 0
    %v451 = vpop.f32.mrf.mxu0
    %v452 = vadd.f32 0.0, %v451
    %v453 = vpop.f32.mrf.mxu0
    %454 = vdwg.mxu0
    %v455 = vld [vmem:[#allocation14] sm:$0xff]
    %v456 = vld [vmem:[#allocation14 + $0x8] sm:$0xff]
    %v457 = vld [vmem:[#allocation14 + $0x10] sm:$0xff]
    %v458 = vld [vmem:[#allocation14 + $0x18] sm:$0xff]
    %v459 = vld [vmem:[#allocation14 + $0x20] sm:$0xff]
    %v460 = vld [vmem:[#allocation14 + $0x28] sm:$0xff]
    %v461 = vld [vmem:[#allocation14 + $0x30] sm:$0xff]
    %v462 = vld [vmem:[#allocation14 + $0x38] sm:$0xff]
    %v463 = vld [vmem:[#allocation14 + $0x40] sm:$0xff]
    %v464 = vld [vmem:[#allocation14 + $0x48] sm:$0xff]
    %v465 = vld [vmem:[#allocation14 + $0x50] sm:$0xff]
    %v466 = vld [vmem:[#allocation14 + $0x58] sm:$0xff]
    %v467 = vld [vmem:[#allocation14 + $0x60] sm:$0xff]
    %v468 = vld [vmem:[#allocation14 + $0x68] sm:$0xff]
    %v469 = vld [vmem:[#allocation14 + $0x70] sm:$0xff]
    %v470 = vld [vmem:[#allocation14 + $0x78] sm:$0xff]
    %v471 = vld [vmem:[#allocation14 + $0x80] sm:$0xff]
    %v472 = vld [vmem:[#allocation14 + $0x88] sm:$0xff]
    %v473 = vld [vmem:[#allocation14 + $0x90] sm:$0xff]
    %v474 = vld [vmem:[#allocation14 + $0x98] sm:$0xff]
    %v475 = vld [vmem:[#allocation14 + $0xa0] sm:$0xff]
    %v476 = vld [vmem:[#allocation14 + $0xa8] sm:$0xff]
    %v477 = vld [vmem:[#allocation14 + $0xb0] sm:$0xff]
    %v478 = vld [vmem:[#allocation14 + $0xb8] sm:$0xff]
    %v479 = vld [vmem:[#allocation14 + $0xc0] sm:$0xff]
    %v480 = vld [vmem:[#allocation14 + $0xc8] sm:$0xff]
    %v481 = vld [vmem:[#allocation14 + $0xd0] sm:$0xff]
    %v482 = vld [vmem:[#allocation14 + $0xd8] sm:$0xff]
    %v483 = vld [vmem:[#allocation14 + $0xe0] sm:$0xff]
    %v484 = vld [vmem:[#allocation14 + $0xe8] sm:$0xff]
    %v485 = vld [vmem:[#allocation14 + $0xf0] sm:$0xff]
    %v486 = vld [vmem:[#allocation14 + $0xf8] sm:$0xff]
    %v487 = vld [vmem:[#allocation5] sm:$0xf]
    %v488 = vld [vmem:[#allocation5 + $0x4] sm:$0xf]
    %v489 = vld [vmem:[#allocation5 + $0x8] sm:$0xf]
    %v490 = vld [vmem:[#allocation5 + $0xc] sm:$0xf]
    %v491 = vld [vmem:[#allocation5 + $0x10] sm:$0xf]
    %v492 = vld [vmem:[#allocation5 + $0x14] sm:$0xf]
    %v493 = vld [vmem:[#allocation5 + $0x18] sm:$0xf]
    %v494 = vld [vmem:[#allocation5 + $0x1c] sm:$0xf]
    %v495 = vld [vmem:[#allocation5 + $0x20] sm:$0xf]
    %v496 = vld [vmem:[#allocation5 + $0x24] sm:$0xf]
    %v497 = vld [vmem:[#allocation5 + $0x28] sm:$0xf]
    %v498 = vld [vmem:[#allocation5 + $0x2c] sm:$0xf]
    %v499 = vld [vmem:[#allocation5 + $0x30] sm:$0xf]
    %v500 = vld [vmem:[#allocation5 + $0x34] sm:$0xf]
    %v501 = vld [vmem:[#allocation5 + $0x38] sm:$0xf]
    %v502 = vld [vmem:[#allocation5 + $0x3c] sm:$0xf]
    %v503 = vld [vmem:[#allocation8] sm:$0xff]
    %v520 = vunpack.c.l.b16 %v487
    %v521 = vunpack.c.l.b16 %v488
    %v522 = vunpack.c.l.b16 %v489
    %v523 = vunpack.c.l.b16 %v490
    %v524 = vunpack.c.l.b16 %v491
    %v525 = vunpack.c.l.b16 %v492
    %v526 = vunpack.c.l.b16 %v493
    %v527 = vunpack.c.l.b16 %v494
    %v528 = vunpack.c.l.b16 %v495
    %v529 = vunpack.c.l.b16 %v496
    %v530 = vunpack.c.l.b16 %v497
    %v531 = vunpack.c.l.b16 %v498
    %v532 = vunpack.c.l.b16 %v499
    %v533 = vunpack.c.l.b16 %v500
    %v534 = vunpack.c.l.b16 %v501
    %v535 = vunpack.c.l.b16 %v502
    %v536 = vpack.c.b16 %v521, %v520
    %v537 = vpack.c.b16 %v523, %v522
    %v538 = vpack.c.b16 %v525, %v524
    %v539 = vpack.c.b16 %v527, %v526
    %v540 = vpack.c.b16 %v529, %v528
    %v541 = vpack.c.b16 %v531, %v530
    %v542 = vpack.c.b16 %v533, %v532
    %v543 = vpack.c.b16 %v535, %v534
    %552 = vmatpush.bf16.msra.mxu0 %v543
    %553 = vmatpush.bf16.msra.mxu0 %v542
    %554 = vmatpush.bf16.msra.mxu0 %v541
    %555 = vmatpush.bf16.msra.mxu0 %v540
    %556 = vmatpush.bf16.msra.mxu0 %v539
    %557 = vmatpush.bf16.msra.mxu0 %v538
    %558 = vmatpush.bf16.msra.mxu0 %v537
    %559 = vmatpush.bf16.msra.mxu0 %v536
    %560 = vmatmul.bf16.gmra.mxu0 0
    %v561 = vpop.f32.mrf.mxu0
    %v562 = vadd.f32 %v503, %v561
    %v563 = vpop.f32.mrf.mxu0
    %564 = vdwg.mxu0
    %565 = vmax.xlane.f32.xlu0 %v562
    %v566 = vpop.xlane.xlu0 %565
    %v567 = vsub.f32 %v562, %v566
    %v568 = vmul.f32 %v567, 1.442695
    %v569 = vpow.pop %v568
    %570 = vadd.xlane.f32.xlu0 %v569
    %v571 = vpop.xlane.xlu0 %570
    %v572 = vrcp.pop %v571
    %v573 = vmul.f32 %v569, %v572
    %v574 = vpack.c.bf16 %v573, %v573
    %v575 = vld [vmem:[#allocation7] sm:$0xf]
    %v576 = vld [vmem:[#allocation7 + $0x4] sm:$0xf]
    %v577 = vld [vmem:[#allocation7 + $0x8] sm:$0xf]
    %v578 = vld [vmem:[#allocation7 + $0xc] sm:$0xf]
    %v579 = vld [vmem:[#allocation7 + $0x10] sm:$0xf]
    %v580 = vld [vmem:[#allocation7 + $0x14] sm:$0xf]
    %v581 = vld [vmem:[#allocation7 + $0x18] sm:$0xf]
    %v582 = vld [vmem:[#allocation7 + $0x1c] sm:$0xf]
    %v583 = vld [vmem:[#allocation7 + $0x20] sm:$0xf]
    %v584 = vld [vmem:[#allocation7 + $0x24] sm:$0xf]
    %v585 = vld [vmem:[#allocation7 + $0x28] sm:$0xf]
    %v586 = vld [vmem:[#allocation7 + $0x2c] sm:$0xf]
    %v587 = vld [vmem:[#allocation7 + $0x30] sm:$0xf]
    %v588 = vld [vmem:[#allocation7 + $0x34] sm:$0xf]
    %v589 = vld [vmem:[#allocation7 + $0x38] sm:$0xf]
    %v590 = vld [vmem:[#allocation7 + $0x3c] sm:$0xf]
    %v607 = vunpack.c.l.b16 %v575
    %v608 = vunpack.c.l.b16 %v576
    %v609 = vunpack.c.l.b16 %v577
    %v610 = vunpack.c.l.b16 %v578
    %v611 = vunpack.c.l.b16 %v579
    %v612 = vunpack.c.l.b16 %v580
    %v613 = vunpack.c.l.b16 %v581
    %v614 = vunpack.c.l.b16 %v582
    %v615 = vunpack.c.l.b16 %v583
    %v616 = vunpack.c.l.b16 %v584
    %v617 = vunpack.c.l.b16 %v585
    %v618 = vunpack.c.l.b16 %v586
    %v619 = vunpack.c.l.b16 %v587
    %v620 = vunpack.c.l.b16 %v588
    %v621 = vunpack.c.l.b16 %v589
    %v622 = vunpack.c.l.b16 %v590
    %v623 = vpack.c.b16 %v608, %v607
    %v624 = vpack.c.b16 %v610, %v609
    %v625 = vpack.c.b16 %v612, %v611
    %v626 = vpack.c.b16 %v614, %v613
    %v627 = vpack.c.b16 %v616, %v615
    %v628 = vpack.c.b16 %v618, %v617
    %v629 = vpack.c.b16 %v620, %v619
    %v630 = vpack.c.b16 %v622, %v621
    %639 = vmatpush.bf16.msra.mxu0 %v630
    %640 = vmatpush.bf16.msra.mxu0 %v629
    %641 = vmatpush.bf16.msra.mxu0 %v628
    %642 = vmatpush.bf16.msra.mxu0 %v627
    %643 = vmatpush.bf16.msra.mxu0 %v626
    %644 = vmatpush.bf16.msra.mxu0 %v625
    %645 = vmatpush.bf16.msra.mxu0 %v624
    %646 = vmatpush.bf16.msra.mxu0 %v623
    %647 = vmatmul.bf16.gmra.mxu0 %v574
    %v648 = vpop.f32.mrf.mxu0
    %v649 = vadd.f32 0.0, %v648
    %v650 = vpop.f32.mrf.mxu0
    %651 = vdwg.mxu0
    %v652 = vpack.c.bf16 %v649, %v649
    %v653 = vld [vmem:[#allocation17] sm:$0xf]
    %v654 = vld [vmem:[#allocation17 + $0x4] sm:$0xf]
    %v655 = vld [vmem:[#allocation17 + $0x8] sm:$0xf]
    %v656 = vld [vmem:[#allocation17 + $0xc] sm:$0xf]
    %v657 = vld [vmem:[#allocation17 + $0x10] sm:$0xf]
    %v658 = vld [vmem:[#allocation17 + $0x14] sm:$0xf]
    %v659 = vld [vmem:[#allocation17 + $0x18] sm:$0xf]
    %v660 = vld [vmem:[#allocation17 + $0x1c] sm:$0xf]
    %v661 = vld [vmem:[#allocation17 + $0x20] sm:$0xf]
    %v662 = vld [vmem:[#allocation17 + $0x24] sm:$0xf]
    %v663 = vld [vmem:[#allocation17 + $0x28] sm:$0xf]
    %v664 = vld [vmem:[#allocation17 + $0x2c] sm:$0xf]
    %v665 = vld [vmem:[#allocation17 + $0x30] sm:$0xf]
    %v666 = vld [vmem:[#allocation17 + $0x34] sm:$0xf]
    %v667 = vld [vmem:[#allocation17 + $0x38] sm:$0xf]
    %v668 = vld [vmem:[#allocation17 + $0x3c] sm:$0xf]
    %v669 = vld [vmem:[#allocation2] sm:$0xff]
    %v670 = vld [vmem:[#allocation2 + $0x8] sm:$0xff]
    %v671 = vld [vmem:[#allocation2 + $0x10] sm:$0xff]
    %v672 = vld [vmem:[#allocation2 + $0x18] sm:$0xff]
    %v673 = vadd.f32 %v669, %v413
    %v674 = vadd.f32 %v670, %v426
    %v675 = vadd.f32 %v671, %v439
    %v676 = vadd.f32 %v672, %v452
    %v677 = vld [vmem:[#allocation10] sm:$0xff]
    %v678 = vld [vmem:[#allocation10 + $0x8] sm:$0xff]
    %v679 = vld [vmem:[#allocation10 + $0x10] sm:$0xff]
    %v680 = vld [vmem:[#allocation10 + $0x18] sm:$0xff]
    %v681 = vld [vmem:[#allocation10 + $0x20] sm:$0xff]
    %v682 = vld [vmem:[#allocation10 + $0x28] sm:$0xff]
    %v683 = vld [vmem:[#allocation10 + $0x30] sm:$0xff]
    %v684 = vld [vmem:[#allocation10 + $0x38] sm:$0xff]
    %v685 = vld [vmem:[#allocation10 + $0x40] sm:$0xff]
    %v686 = vld [vmem:[#allocation10 + $0x48] sm:$0xff]
    %v687 = vld [vmem:[#allocation10 + $0x50] sm:$0xff]
    %v688 = vld [vmem:[#allocation10 + $0x58] sm:$0xff]
    %v689 = vld [vmem:[#allocation10 + $0x60] sm:$0xff]
    %v690 = vld [vmem:[#allocation10 + $0x68] sm:$0xff]
    %v691 = vld [vmem:[#allocation10 + $0x70] sm:$0xff]
    %v692 = vld [vmem:[#allocation10 + $0x78] sm:$0xff]
    %v693 = vld [vmem:[#allocation10 + $0x80] sm:$0xff]
    %v694 = vld [vmem:[#allocation10 + $0x88] sm:$0xff]
    %v695 = vld [vmem:[#allocation10 + $0x90] sm:$0xff]
    %v696 = vld [vmem:[#allocation10 + $0x98] sm:$0xff]
    %v697 = vld [vmem:[#allocation10 + $0xa0] sm:$0xff]
    %v698 = vld [vmem:[#allocation10 + $0xa8] sm:$0xff]
    %v699 = vld [vmem:[#allocation10 + $0xb0] sm:$0xff]
    %v700 = vld [vmem:[#allocation10 + $0xb8] sm:$0xff]
    %v701 = vld [vmem:[#allocation10 + $0xc0] sm:$0xff]
    %v702 = vld [vmem:[#allocation10 + $0xc8] sm:$0xff]
    %v703 = vld [vmem:[#allocation10 + $0xd0] sm:$0xff]
    %v704 = vld [vmem:[#allocation10 + $0xd8] sm:$0xff]
    %v705 = vld [vmem:[#allocation10 + $0xe0] sm:$0xff]
    %v706 = vld [vmem:[#allocation10 + $0xe8] sm:$0xff]
    %v707 = vld [vmem:[#allocation10 + $0xf0] sm:$0xff]
    %v708 = vld [vmem:[#allocation10 + $0xf8] sm:$0xff]
    %v741 = vunpack.c.l.b16 %v677
    %v742 = vunpack.c.h.b16 %v677
    %v743 = vunpack.c.l.b16 %v678
    %v744 = vunpack.c.h.b16 %v678
    %v745 = vunpack.c.l.b16 %v679
    %v746 = vunpack.c.h.b16 %v679
    %v747 = vunpack.c.l.b16 %v680
    %v748 = vunpack.c.h.b16 %v680
    %v749 = vunpack.c.l.b16 %v681
    %v750 = vunpack.c.h.b16 %v681
    %v751 = vunpack.c.l.b16 %v682
    %v752 = vunpack.c.h.b16 %v682
    %v753 = vunpack.c.l.b16 %v683
    %v754 = vunpack.c.h.b16 %v683
    %v755 = vunpack.c.l.b16 %v684
    %v756 = vunpack.c.h.b16 %v684
    %v757 = vunpack.c.l.b16 %v685
    %v758 = vunpack.c.h.b16 %v685
    %v759 = vunpack.c.l.b16 %v686
    %v760 = vunpack.c.h.b16 %v686
    %v761 = vunpack.c.l.b16 %v687
    %v762 = vunpack.c.h.b16 %v687
    %v763 = vunpack.c.l.b16 %v688
    %v764 = vunpack.c.h.b16 %v688
    %v765 = vunpack.c.l.b16 %v689
    %v766 = vunpack.c.h.b16 %v689
    %v767 = vunpack.c.l.b16 %v690
    %v768 = vunpack.c.h.b16 %v690
    %v769 = vunpack.c.l.b16 %v691
    %v770 = vunpack.c.h.b16 %v691
    %v771 = vunpack.c.l.b16 %v692
    %v772 = vunpack.c.h.b16 %v692
    %v773 = vunpack.c.l.b16 %v693
    %v774 = vunpack.c.h.b16 %v693
    %v775 = vunpack.c.l.b16 %v694
    %v776 = vunpack.c.h.b16 %v694
    %v777 = vunpack.c.l.b16 %v695
    %v778 = vunpack.c.h.b16 %v695
    %v779 = vunpack.c.l.b16 %v696
    %v780 = vunpack.c.h.b16 %v696
    %v781 = vunpack.c.l.b16 %v697
    %v782 = vunpack.c.h.b16 %v697
    %v783 = vunpack.c.l.b16 %v698
    %v784 = vunpack.c.h.b16 %v698
    %v785 = vunpack.c.l.b16 %v699
    %v786 = vunpack.c.h.b16 %v699
    %v787 = vunpack.c.l.b16 %v700
    %v788 = vunpack.c.h.b16 %v700
    %v789 = vunpack.c.l.b16 %v701
    %v790 = vunpack.c.h.b16 %v701
    %v791 = vunpack.c.l.b16 %v702
    %v792 = vunpack.c.h.b16 %v702
    %v793 = vunpack.c.l.b16 %v703
    %v794 = vunpack.c.h.b16 %v703
    %v795 = vunpack.c.l.b16 %v704
    %v796 = vunpack.c.h.b16 %v704
    %v797 = vunpack.c.l.b16 %v705
    %v798 = vunpack.c.h.b16 %v705
    %v799 = vunpack.c.l.b16 %v706
    %v800 = vunpack.c.h.b16 %v706
    %v801 = vunpack.c.l.b16 %v707
    %v802 = vunpack.c.h.b16 %v707
    %v803 = vunpack.c.l.b16 %v708
    %v804 = vunpack.c.h.b16 %v708
    %v805 = vpack.c.b16 %v745, %v741
    %v806 = vpack.c.b16 %v746, %v742
    %v807 = vpack.c.b16 %v747, %v743
    %v808 = vpack.c.b16 %v748, %v744
    %v809 = vpack.c.b16 %v753, %v749
    %v810 = vpack.c.b16 %v754, %v750
    %v811 = vpack.c.b16 %v755, %v751
    %v812 = vpack.c.b16 %v756, %v752
    %v813 = vpack.c.b16 %v761, %v757
    %v814 = vpack.c.b16 %v762, %v758
    %v815 = vpack.c.b16 %v763, %v759
    %v816 = vpack.c.b16 %v764, %v760
    %v817 = vpack.c.b16 %v769, %v765
    %v818 = vpack.c.b16 %v770, %v766
    %v819 = vpack.c.b16 %v771, %v767
    %v820 = vpack.c.b16 %v772, %v768
    %v821 = vpack.c.b16 %v777, %v773
    %v822 = vpack.c.b16 %v778, %v774
    %v823 = vpack.c.b16 %v779, %v775
    %v824 = vpack.c.b16 %v780, %v776
    %v825 = vpack.c.b16 %v785, %v781
    %v826 = vpack.c.b16 %v786, %v782
    %v827 = vpack.c.b16 %v787, %v783
    %v828 = vpack.c.b16 %v788, %v784
    %v829 = vpack.c.b16 %v793, %v789
    %v830 = vpack.c.b16 %v794, %v790
    %v831 = vpack.c.b16 %v795, %v791
    %v832 = vpack.c.b16 %v796, %v792
    %v833 = vpack.c.b16 %v801, %v797
    %v834 = vpack.c.b16 %v802, %v798
    %v835 = vpack.c.b16 %v803, %v799
    %v836 = vpack.c.b16 %v804, %v800
    %869 = vmatpush.bf16.msra.mxu0 %v833
    %870 = vmatpush.bf16.msra.mxu0 %v829
    %871 = vmatpush.bf16.msra.mxu0 %v825
    %872 = vmatpush.bf16.msra.mxu0 %v821
    %873 = vmatpush.bf16.msra.mxu0 %v817
    %874 = vmatpush.bf16.msra.mxu0 %v813
    %875 = vmatpush.bf16.msra.mxu0 %v809
    %876 = vmatpush.bf16.msra.mxu0 %v805
    %877 = vmatmul.bf16.gmra.mxu0 %v652
    %v878 = vpop.f32.mrf.mxu0
    %v879 = vadd.f32 0.0, %v878
    %v880 = vpop.f32.mrf.mxu0
    %881 = vdwg.mxu0
    %882 = vmatpush.bf16.msra.mxu0 %v834
    %883 = vmatpush.bf16.msra.mxu0 %v830
    %884 = vmatpush.bf16.msra.mxu0 %v826
    %885 = vmatpush.bf16.msra.mxu0 %v822
    %886 = vmatpush.bf16.msra.mxu0 %v818
    %887 = vmatpush.bf16.msra.mxu0 %v814
    %888 = vmatpush.bf16.msra.mxu0 %v810
    %889 = vmatpush.bf16.msra.mxu0 %v806
    %890 = vmatmul.bf16.gmra.mxu0 %v652
    %v891 = vpop.f32.mrf.mxu0
    %v892 = vadd.f32 0.0, %v891
    %v893 = vpop.f32.mrf.mxu0
    %894 = vdwg.mxu0
    %895 = vmatpush.bf16.msra.mxu0 %v835
    %896 = vmatpush.bf16.msra.mxu0 %v831
    %897 = vmatpush.bf16.msra.mxu0 %v827
    %898 = vmatpush.bf16.msra.mxu0 %v823
    %899 = vmatpush.bf16.msra.mxu0 %v819
    %900 = vmatpush.bf16.msra.mxu0 %v815
    %901 = vmatpush.bf16.msra.mxu0 %v811
    %902 = vmatpush.bf16.msra.mxu0 %v807
    %903 = vmatmul.bf16.gmra.mxu0 %v652
    %v904 = vpop.f32.mrf.mxu0
    %v905 = vadd.f32 0.0, %v904
    %v906 = vpop.f32.mrf.mxu0
    %907 = vdwg.mxu0
    %908 = vmatpush.bf16.msra.mxu0 %v836
    %909 = vmatpush.bf16.msra.mxu0 %v832
    %910 = vmatpush.bf16.msra.mxu0 %v828
    %911 = vmatpush.bf16.msra.mxu0 %v824
    %912 = vmatpush.bf16.msra.mxu0 %v820
    %913 = vmatpush.bf16.msra.mxu0 %v816
    %914 = vmatpush.bf16.msra.mxu0 %v812
    %915 = vmatpush.bf16.msra.mxu0 %v808
    %916 = vmatmul.bf16.gmra.mxu0 %v652
    %v917 = vpop.f32.mrf.mxu0
    %v918 = vadd.f32 0.0, %v917
    %v919 = vpop.f32.mrf.mxu0
    %920 = vdwg.mxu0
    %v921 = vadd.f32 %v673, %v879
    %v922 = vadd.f32 %v674, %v892
    %v923 = vadd.f32 %v675, %v905
    %v924 = vadd.f32 %v676, %v918
    %v925 = vxor.u32 %v921, 2147483648
    %v926 = vxor.u32 %v922, 2147483648
    %v927 = vxor.u32 %v923, 2147483648
    %v928 = vmul.f32 %v925, 1.442695
    %v929 = vpow.pop %v928
    %v930 = vmul.f32 %v926, 1.442695
    %v931 = vpow.pop %v930
    %v932 = vmul.f32 %v927, 1.442695
    %v933 = vpow.pop %v932
    %v934 = vadd.f32 %v929, 1.0
    %v935 = vadd.f32 %v931, 1.0
    %v936 = vadd.f32 %v933, 1.0
    %v937 = vrcp.pop %v934
    %v938 = vmul.f32 %v934, %v937
    %v939 = vsub.f32 1.0, %v938
    %v940 = vmul.f32 %v937, %v939
    %v941 = vadd.f32 %v937, %v940
    %vm942 = vweird.f32 %v934
    %vm943 = vweird.f32 %v937
    %vm944 = vmor %vm942, %vm943
    %v945 = vsel %vm944, %v937, %v941
    %v946 = vand.u32 2147483647, %v934
    %vm947 = vcmp.eq.f32.partialorder %v946, 8.507059e+37
    %v948 = vand.u32 %v934, 2147483648
    %v949 = vor.u32 1.1754944e-38, %v948
    %v950 = vsel %vm947, %v949, %v945
    %v951 = vmul.f32 1.0, %v950
    %v952 = vrcp.pop %v935
    %v953 = vmul.f32 %v935, %v952
    %v954 = vsub.f32 1.0, %v953
    %v955 = vmul.f32 %v952, %v954
    %v956 = vadd.f32 %v952, %v955
    %vm957 = vweird.f32 %v935
    %vm958 = vweird.f32 %v952
    %vm959 = vmor %vm957, %vm958
    %v960 = vsel %vm959, %v952, %v956
    %v961 = vand.u32 2147483647, %v935
    %vm962 = vcmp.eq.f32.partialorder %v961, 8.507059e+37
    %v963 = vand.u32 %v935, 2147483648
    %v964 = vor.u32 1.1754944e-38, %v963
    %v965 = vsel %vm962, %v964, %v960
    %v966 = vmul.f32 1.0, %v965
    %v967 = vrcp.pop %v936
    %v968 = vmul.f32 %v936, %v967
    %v969 = vsub.f32 1.0, %v968
    %v970 = vmul.f32 %v967, %v969
    %v971 = vadd.f32 %v967, %v970
    %vm972 = vweird.f32 %v936
    %vm973 = vweird.f32 %v967
    %vm974 = vmor %vm972, %vm973
    %v975 = vsel %vm974, %v967, %v971
    %v976 = vand.u32 2147483647, %v936
    %vm977 = vcmp.eq.f32.partialorder %v976, 8.507059e+37
    %v978 = vand.u32 %v936, 2147483648
    %v979 = vor.u32 1.1754944e-38, %v978
    %v980 = vsel %vm977, %v979, %v975
    %v981 = vmul.f32 1.0, %v980
    %v982 = vtanh.pop %v924
    %v983 = vmul.f32 %v966, 0.0
    %v984 = vmul.f32 %v951, %v982
    %v985 = vadd.f32 %v983, %v984
    %v986 = vtanh.pop %v985
    %v987 = vmul.f32 %v981, %v986
    %v1020 = vunpack.c.l.b16 %v455
    %v1021 = vunpack.c.h.b16 %v455
    %v1022 = vunpack.c.l.b16 %v456
    %v1023 = vunpack.c.h.b16 %v456
    %v1024 = vunpack.c.l.b16 %v457
    %v1025 = vunpack.c.h.b16 %v457
    %v1026 = vunpack.c.l.b16 %v458
    %v1027 = vunpack.c.h.b16 %v458
    %v1028 = vunpack.c.l.b16 %v459
    %v1029 = vunpack.c.h.b16 %v459
    %v1030 = vunpack.c.l.b16 %v460
    %v1031 = vunpack.c.h.b16 %v460
    %v1032 = vunpack.c.l.b16 %v461
    %v1033 = vunpack.c.h.b16 %v461
    %v1034 = vunpack.c.l.b16 %v462
    %v1035 = vunpack.c.h.b16 %v462
    %v1036 = vunpack.c.l.b16 %v463
    %v1037 = vunpack.c.h.b16 %v463
    %v1038 = vunpack.c.l.b16 %v464
    %v1039 = vunpack.c.h.b16 %v464
    %v1040 = vunpack.c.l.b16 %v465
    %v1041 = vunpack.c.h.b16 %v465
    %v1042 = vunpack.c.l.b16 %v466
    %v1043 = vunpack.c.h.b16 %v466
    %v1044 = vunpack.c.l.b16 %v467
    %v1045 = vunpack.c.h.b16 %v467
    %v1046 = vunpack.c.l.b16 %v468
    %v1047 = vunpack.c.h.b16 %v468
    %v1048 = vunpack.c.l.b16 %v469
    %v1049 = vunpack.c.h.b16 %v469
    %v1050 = vunpack.c.l.b16 %v470
    %v1051 = vunpack.c.h.b16 %v470
    %v1052 = vunpack.c.l.b16 %v471
    %v1053 = vunpack.c.h.b16 %v471
    %v1054 = vunpack.c.l.b16 %v472
    %v1055 = vunpack.c.h.b16 %v472
    %v1056 = vunpack.c.l.b16 %v473
    %v1057 = vunpack.c.h.b16 %v473
    %v1058 = vunpack.c.l.b16 %v474
    %v1059 = vunpack.c.h.b16 %v474
    %v1060 = vunpack.c.l.b16 %v475
    %v1061 = vunpack.c.h.b16 %v475
    %v1062 = vunpack.c.l.b16 %v476
    %v1063 = vunpack.c.h.b16 %v476
    %v1064 = vunpack.c.l.b16 %v477
    %v1065 = vunpack.c.h.b16 %v477
    %v1066 = vunpack.c.l.b16 %v478
    %v1067 = vunpack.c.h.b16 %v478
    %v1068 = vunpack.c.l.b16 %v479
    %v1069 = vunpack.c.h.b16 %v479
    %v1070 = vunpack.c.l.b16 %v480
    %v1071 = vunpack.c.h.b16 %v480
    %v1072 = vunpack.c.l.b16 %v481
    %v1073 = vunpack.c.h.b16 %v481
    %v1074 = vunpack.c.l.b16 %v482
    %v1075 = vunpack.c.h.b16 %v482
    %v1076 = vunpack.c.l.b16 %v483
    %v1077 = vunpack.c.h.b16 %v483
    %v1078 = vunpack.c.l.b16 %v484
    %v1079 = vunpack.c.h.b16 %v484
    %v1080 = vunpack.c.l.b16 %v485
    %v1081 = vunpack.c.h.b16 %v485
    %v1082 = vunpack.c.l.b16 %v486
    %v1083 = vunpack.c.h.b16 %v486
    %v1084 = vpack.c.b16 %v1024, %v1020
    %v1085 = vpack.c.b16 %v1025, %v1021
    %v1086 = vpack.c.b16 %v1026, %v1022
    %v1087 = vpack.c.b16 %v1027, %v1023
    %v1088 = vpack.c.b16 %v1032, %v1028
    %v1089 = vpack.c.b16 %v1033, %v1029
    %v1090 = vpack.c.b16 %v1034, %v1030
    %v1091 = vpack.c.b16 %v1035, %v1031
    %v1092 = vpack.c.b16 %v1040, %v1036
    %v1093 = vpack.c.b16 %v1041, %v1037
    %v1094 = vpack.c.b16 %v1042, %v1038
    %v1095 = vpack.c.b16 %v1043, %v1039
    %v1096 = vpack.c.b16 %v1048, %v1044
    %v1097 = vpack.c.b16 %v1049, %v1045
    %v1098 = vpack.c.b16 %v1050, %v1046
    %v1099 = vpack.c.b16 %v1051, %v1047
    %v1100 = vpack.c.b16 %v1056, %v1052
    %v1101 = vpack.c.b16 %v1057, %v1053
    %v1102 = vpack.c.b16 %v1058, %v1054
    %v1103 = vpack.c.b16 %v1059, %v1055
    %v1104 = vpack.c.b16 %v1064, %v1060
    %v1105 = vpack.c.b16 %v1065, %v1061
    %v1106 = vpack.c.b16 %v1066, %v1062
    %v1107 = vpack.c.b16 %v1067, %v1063
    %v1108 = vpack.c.b16 %v1072, %v1068
    %v1109 = vpack.c.b16 %v1073, %v1069
    %v1110 = vpack.c.b16 %v1074, %v1070
    %v1111 = vpack.c.b16 %v1075, %v1071
    %v1112 = vpack.c.b16 %v1080, %v1076
    %v1113 = vpack.c.b16 %v1081, %v1077
    %v1114 = vpack.c.b16 %v1082, %v1078
    %v1115 = vpack.c.b16 %v1083, %v1079
    %1148 = vmatpush.bf16.msra.mxu0 %v1112
    %1149 = vmatpush.bf16.msra.mxu0 %v1108
    %1150 = vmatpush.bf16.msra.mxu0 %v1104
    %1151 = vmatpush.bf16.msra.mxu0 %v1100
    %1152 = vmatpush.bf16.msra.mxu0 %v1096
    %1153 = vmatpush.bf16.msra.mxu0 %v1092
    %1154 = vmatpush.bf16.msra.mxu0 %v1088
    %1155 = vmatpush.bf16.msra.mxu0 %v1084
    %1156 = vmatmul.bf16.gmra.mxu0 0
    %v1157 = vpop.f32.mrf.mxu0
    %v1158 = vadd.f32 %v199, %v1157
    %v1159 = vpop.f32.mrf.mxu0
    %1160 = vdwg.mxu0
    %1161 = vmatpush.bf16.msra.mxu0 %v1113
    %1162 = vmatpush.bf16.msra.mxu0 %v1109
    %1163 = vmatpush.bf16.msra.mxu0 %v1105
    %1164 = vmatpush.bf16.msra.mxu0 %v1101
    %1165 = vmatpush.bf16.msra.mxu0 %v1097
    %1166 = vmatpush.bf16.msra.mxu0 %v1093
    %1167 = vmatpush.bf16.msra.mxu0 %v1089
    %1168 = vmatpush.bf16.msra.mxu0 %v1085
    %1169 = vmatmul.bf16.gmra.mxu0 0
    %v1170 = vpop.f32.mrf.mxu0
    %v1171 = vadd.f32 %v200, %v1170
    %v1172 = vpop.f32.mrf.mxu0
    %1173 = vdwg.mxu0
    %1174 = vmatpush.bf16.msra.mxu0 %v1114
    %1175 = vmatpush.bf16.msra.mxu0 %v1110
    %1176 = vmatpush.bf16.msra.mxu0 %v1106
    %1177 = vmatpush.bf16.msra.mxu0 %v1102
    %1178 = vmatpush.bf16.msra.mxu0 %v1098
    %1179 = vmatpush.bf16.msra.mxu0 %v1094
    %1180 = vmatpush.bf16.msra.mxu0 %v1090
    %1181 = vmatpush.bf16.msra.mxu0 %v1086
    %1182 = vmatmul.bf16.gmra.mxu0 0
    %v1183 = vpop.f32.mrf.mxu0
    %v1184 = vadd.f32 %v201, %v1183
    %v1185 = vpop.f32.mrf.mxu0
    %1186 = vdwg.mxu0
    %1187 = vmatpush.bf16.msra.mxu0 %v1115
    %1188 = vmatpush.bf16.msra.mxu0 %v1111
    %1189 = vmatpush.bf16.msra.mxu0 %v1107
    %1190 = vmatpush.bf16.msra.mxu0 %v1103
    %1191 = vmatpush.bf16.msra.mxu0 %v1099
    %1192 = vmatpush.bf16.msra.mxu0 %v1095
    %1193 = vmatpush.bf16.msra.mxu0 %v1091
    %1194 = vmatpush.bf16.msra.mxu0 %v1087
    %1195 = vmatmul.bf16.gmra.mxu0 0
    %v1196 = vpop.f32.mrf.mxu0
    %v1197 = vadd.f32 %v202, %v1196
    %v1198 = vpop.f32.mrf.mxu0
    %1199 = vdwg.mxu0
    %v1200 = vpack.c.bf16 %v987, %v987
    %v1201 = vld [vmem:[#allocation13] sm:$0xff]
    %v1202 = vld [vmem:[#allocation13 + $0x8] sm:$0xff]
    %v1203 = vld [vmem:[#allocation13 + $0x10] sm:$0xff]
    %v1204 = vld [vmem:[#allocation13 + $0x18] sm:$0xff]
    %v1205 = vld [vmem:[#allocation13 + $0x20] sm:$0xff]
    %v1206 = vld [vmem:[#allocation13 + $0x28] sm:$0xff]
    %v1207 = vld [vmem:[#allocation13 + $0x30] sm:$0xff]
    %v1208 = vld [vmem:[#allocation13 + $0x38] sm:$0xff]
    %v1209 = vld [vmem:[#allocation13 + $0x40] sm:$0xff]
    %v1210 = vld [vmem:[#allocation13 + $0x48] sm:$0xff]
    %v1211 = vld [vmem:[#allocation13 + $0x50] sm:$0xff]
    %v1212 = vld [vmem:[#allocation13 + $0x58] sm:$0xff]
    %v1213 = vld [vmem:[#allocation13 + $0x60] sm:$0xff]
    %v1214 = vld [vmem:[#allocation13 + $0x68] sm:$0xff]
    %v1215 = vld [vmem:[#allocation13 + $0x70] sm:$0xff]
    %v1216 = vld [vmem:[#allocation13 + $0x78] sm:$0xff]
    %v1217 = vld [vmem:[#allocation13 + $0x80] sm:$0xff]
    %v1218 = vld [vmem:[#allocation13 + $0x88] sm:$0xff]
    %v1219 = vld [vmem:[#allocation13 + $0x90] sm:$0xff]
    %v1220 = vld [vmem:[#allocation13 + $0x98] sm:$0xff]
    %v1221 = vld [vmem:[#allocation13 + $0xa0] sm:$0xff]
    %v1222 = vld [vmem:[#allocation13 + $0xa8] sm:$0xff]
    %v1223 = vld [vmem:[#allocation13 + $0xb0] sm:$0xff]
    %v1224 = vld [vmem:[#allocation13 + $0xb8] sm:$0xff]
    %v1225 = vld [vmem:[#allocation13 + $0xc0] sm:$0xff]
    %v1226 = vld [vmem:[#allocation13 + $0xc8] sm:$0xff]
    %v1227 = vld [vmem:[#allocation13 + $0xd0] sm:$0xff]
    %v1228 = vld [vmem:[#allocation13 + $0xd8] sm:$0xff]
    %v1229 = vld [vmem:[#allocation13 + $0xe0] sm:$0xff]
    %v1230 = vld [vmem:[#allocation13 + $0xe8] sm:$0xff]
    %v1231 = vld [vmem:[#allocation13 + $0xf0] sm:$0xff]
    %v1232 = vld [vmem:[#allocation13 + $0xf8] sm:$0xff]
    %v1265 = vunpack.c.l.b16 %v1201
    %v1266 = vunpack.c.h.b16 %v1201
    %v1267 = vunpack.c.l.b16 %v1202
    %v1268 = vunpack.c.h.b16 %v1202
    %v1269 = vunpack.c.l.b16 %v1203
    %v1270 = vunpack.c.h.b16 %v1203
    %v1271 = vunpack.c.l.b16 %v1204
    %v1272 = vunpack.c.h.b16 %v1204
    %v1273 = vunpack.c.l.b16 %v1205
    %v1274 = vunpack.c.h.b16 %v1205
    %v1275 = vunpack.c.l.b16 %v1206
    %v1276 = vunpack.c.h.b16 %v1206
    %v1277 = vunpack.c.l.b16 %v1207
    %v1278 = vunpack.c.h.b16 %v1207
    %v1279 = vunpack.c.l.b16 %v1208
    %v1280 = vunpack.c.h.b16 %v1208
    %v1281 = vunpack.c.l.b16 %v1209
    %v1282 = vunpack.c.h.b16 %v1209
    %v1283 = vunpack.c.l.b16 %v1210
    %v1284 = vunpack.c.h.b16 %v1210
    %v1285 = vunpack.c.l.b16 %v1211
    %v1286 = vunpack.c.h.b16 %v1211
    %v1287 = vunpack.c.l.b16 %v1212
    %v1288 = vunpack.c.h.b16 %v1212
    %v1289 = vunpack.c.l.b16 %v1213
    %v1290 = vunpack.c.h.b16 %v1213
    %v1291 = vunpack.c.l.b16 %v1214
    %v1292 = vunpack.c.h.b16 %v1214
    %v1293 = vunpack.c.l.b16 %v1215
    %v1294 = vunpack.c.h.b16 %v1215
    %v1295 = vunpack.c.l.b16 %v1216
    %v1296 = vunpack.c.h.b16 %v1216
    %v1297 = vunpack.c.l.b16 %v1217
    %v1298 = vunpack.c.h.b16 %v1217
    %v1299 = vunpack.c.l.b16 %v1218
    %v1300 = vunpack.c.h.b16 %v1218
    %v1301 = vunpack.c.l.b16 %v1219
    %v1302 = vunpack.c.h.b16 %v1219
    %v1303 = vunpack.c.l.b16 %v1220
    %v1304 = vunpack.c.h.b16 %v1220
    %v1305 = vunpack.c.l.b16 %v1221
    %v1306 = vunpack.c.h.b16 %v1221
    %v1307 = vunpack.c.l.b16 %v1222
    %v1308 = vunpack.c.h.b16 %v1222
    %v1309 = vunpack.c.l.b16 %v1223
    %v1310 = vunpack.c.h.b16 %v1223
    %v1311 = vunpack.c.l.b16 %v1224
    %v1312 = vunpack.c.h.b16 %v1224
    %v1313 = vunpack.c.l.b16 %v1225
    %v1314 = vunpack.c.h.b16 %v1225
    %v1315 = vunpack.c.l.b16 %v1226
    %v1316 = vunpack.c.h.b16 %v1226
    %v1317 = vunpack.c.l.b16 %v1227
    %v1318 = vunpack.c.h.b16 %v1227
    %v1319 = vunpack.c.l.b16 %v1228
    %v1320 = vunpack.c.h.b16 %v1228
    %v1321 = vunpack.c.l.b16 %v1229
    %v1322 = vunpack.c.h.b16 %v1229
    %v1323 = vunpack.c.l.b16 %v1230
    %v1324 = vunpack.c.h.b16 %v1230
    %v1325 = vunpack.c.l.b16 %v1231
    %v1326 = vunpack.c.h.b16 %v1231
    %v1327 = vunpack.c.l.b16 %v1232
    %v1328 = vunpack.c.h.b16 %v1232
    %v1329 = vpack.c.b16 %v1269, %v1265
    %v1330 = vpack.c.b16 %v1270, %v1266
    %v1331 = vpack.c.b16 %v1271, %v1267
    %v1332 = vpack.c.b16 %v1272, %v1268
    %v1333 = vpack.c.b16 %v1277, %v1273
    %v1334 = vpack.c.b16 %v1278, %v1274
    %v1335 = vpack.c.b16 %v1279, %v1275
    %v1336 = vpack.c.b16 %v1280, %v1276
    %v1337 = vpack.c.b16 %v1285, %v1281
    %v1338 = vpack.c.b16 %v1286, %v1282
    %v1339 = vpack.c.b16 %v1287, %v1283
    %v1340 = vpack.c.b16 %v1288, %v1284
    %v1341 = vpack.c.b16 %v1293, %v1289
    %v1342 = vpack.c.b16 %v1294, %v1290
    %v1343 = vpack.c.b16 %v1295, %v1291
    %v1344 = vpack.c.b16 %v1296, %v1292
    %v1345 = vpack.c.b16 %v1301, %v1297
    %v1346 = vpack.c.b16 %v1302, %v1298
    %v1347 = vpack.c.b16 %v1303, %v1299
    %v1348 = vpack.c.b16 %v1304, %v1300
    %v1349 = vpack.c.b16 %v1309, %v1305
    %v1350 = vpack.c.b16 %v1310, %v1306
    %v1351 = vpack.c.b16 %v1311, %v1307
    %v1352 = vpack.c.b16 %v1312, %v1308
    %v1353 = vpack.c.b16 %v1317, %v1313
    %v1354 = vpack.c.b16 %v1318, %v1314
    %v1355 = vpack.c.b16 %v1319, %v1315
    %v1356 = vpack.c.b16 %v1320, %v1316
    %v1357 = vpack.c.b16 %v1325, %v1321
    %v1358 = vpack.c.b16 %v1326, %v1322
    %v1359 = vpack.c.b16 %v1327, %v1323
    %v1360 = vpack.c.b16 %v1328, %v1324
    %1393 = vmatpush.bf16.msra.mxu0 %v1357
    %1394 = vmatpush.bf16.msra.mxu0 %v1353
    %1395 = vmatpush.bf16.msra.mxu0 %v1349
    %1396 = vmatpush.bf16.msra.mxu0 %v1345
    %1397 = vmatpush.bf16.msra.mxu0 %v1341
    %1398 = vmatpush.bf16.msra.mxu0 %v1337
    %1399 = vmatpush.bf16.msra.mxu0 %v1333
    %1400 = vmatpush.bf16.msra.mxu0 %v1329
    %1401 = vmatmul.bf16.gmra.mxu0 %v1200
    %v1402 = vpop.f32.mrf.mxu0
    %v1403 = vadd.f32 0.0, %v1402
    %v1404 = vpop.f32.mrf.mxu0
    %1405 = vdwg.mxu0
    %1406 = vmatpush.bf16.msra.mxu0 %v1358
    %1407 = vmatpush.bf16.msra.mxu0 %v1354
    %1408 = vmatpush.bf16.msra.mxu0 %v1350
    %1409 = vmatpush.bf16.msra.mxu0 %v1346
    %1410 = vmatpush.bf16.msra.mxu0 %v1342
    %1411 = vmatpush.bf16.msra.mxu0 %v1338
    %1412 = vmatpush.bf16.msra.mxu0 %v1334
    %1413 = vmatpush.bf16.msra.mxu0 %v1330
    %1414 = vmatmul.bf16.gmra.mxu0 %v1200
    %v1415 = vpop.f32.mrf.mxu0
    %v1416 = vadd.f32 0.0, %v1415
    %v1417 = vpop.f32.mrf.mxu0
    %1418 = vdwg.mxu0
    %1419 = vmatpush.bf16.msra.mxu0 %v1359
    %1420 = vmatpush.bf16.msra.mxu0 %v1355
    %1421 = vmatpush.bf16.msra.mxu0 %v1351
    %1422 = vmatpush.bf16.msra.mxu0 %v1347
    %1423 = vmatpush.bf16.msra.mxu0 %v1343
    %1424 = vmatpush.bf16.msra.mxu0 %v1339
    %1425 = vmatpush.bf16.msra.mxu0 %v1335
    %1426 = vmatpush.bf16.msra.mxu0 %v1331
    %1427 = vmatmul.bf16.gmra.mxu0 %v1200
    %v1428 = vpop.f32.mrf.mxu0
    %v1429 = vadd.f32 0.0, %v1428
    %v1430 = vpop.f32.mrf.mxu0
    %1431 = vdwg.mxu0
    %1432 = vmatpush.bf16.msra.mxu0 %v1360
    %1433 = vmatpush.bf16.msra.mxu0 %v1356
    %1434 = vmatpush.bf16.msra.mxu0 %v1352
    %1435 = vmatpush.bf16.msra.mxu0 %v1348
    %1436 = vmatpush.bf16.msra.mxu0 %v1344
    %1437 = vmatpush.bf16.msra.mxu0 %v1340
    %1438 = vmatpush.bf16.msra.mxu0 %v1336
    %1439 = vmatpush.bf16.msra.mxu0 %v1332
    %1440 = vmatmul.bf16.gmra.mxu0 %v1200
    %v1441 = vpop.f32.mrf.mxu0
    %v1442 = vadd.f32 0.0, %v1441
    %v1443 = vpop.f32.mrf.mxu0
    %1444 = vdwg.mxu0
    %v1445 = vadd.f32 %v1158, %v1403
    %v1446 = vadd.f32 %v1171, %v1416
    %v1447 = vadd.f32 %v1184, %v1429
    %v1448 = vadd.f32 %v1197, %v1442
    %v1449 = vxor.u32 %v1445, 2147483648
    %v1450 = vxor.u32 %v1446, 2147483648
    %v1451 = vxor.u32 %v1447, 2147483648
    %v1452 = vmul.f32 %v1449, 1.442695
    %v1453 = vpow.pop %v1452
    %v1454 = vmul.f32 %v1450, 1.442695
    %v1455 = vpow.pop %v1454
    %v1456 = vmul.f32 %v1451, 1.442695
    %v1457 = vpow.pop %v1456
    %v1458 = vadd.f32 %v1453, 1.0
    %v1459 = vadd.f32 %v1455, 1.0
    %v1460 = vadd.f32 %v1457, 1.0
    %v1461 = vrcp.pop %v1458
    %v1462 = vmul.f32 %v1458, %v1461
    %v1463 = vsub.f32 1.0, %v1462
    %v1464 = vmul.f32 %v1461, %v1463
    %v1465 = vadd.f32 %v1461, %v1464
    %vm1466 = vweird.f32 %v1458
    %vm1467 = vweird.f32 %v1461
    %vm1468 = vmor %vm1466, %vm1467
    %v1469 = vsel %vm1468, %v1461, %v1465
    %v1470 = vand.u32 2147483647, %v1458
    %vm1471 = vcmp.eq.f32.partialorder %v1470, 8.507059e+37
    %v1472 = vand.u32 %v1458, 2147483648
    %v1473 = vor.u32 1.1754944e-38, %v1472
    %v1474 = vsel %vm1471, %v1473, %v1469
    %v1475 = vmul.f32 1.0, %v1474
    %v1476 = vrcp.pop %v1459
    %v1477 = vmul.f32 %v1459, %v1476
    %v1478 = vsub.f32 1.0, %v1477
    %v1479 = vmul.f32 %v1476, %v1478
    %v1480 = vadd.f32 %v1476, %v1479
    %vm1481 = vweird.f32 %v1459
    %vm1482 = vweird.f32 %v1476
    %vm1483 = vmor %vm1481, %vm1482
    %v1484 = vsel %vm1483, %v1476, %v1480
    %v1485 = vand.u32 2147483647, %v1459
    %vm1486 = vcmp.eq.f32.partialorder %v1485, 8.507059e+37
    %v1487 = vand.u32 %v1459, 2147483648
    %v1488 = vor.u32 1.1754944e-38, %v1487
    %v1489 = vsel %vm1486, %v1488, %v1484
    %v1490 = vmul.f32 1.0, %v1489
    %v1491 = vrcp.pop %v1460
    %v1492 = vmul.f32 %v1460, %v1491
    %v1493 = vsub.f32 1.0, %v1492
    %v1494 = vmul.f32 %v1491, %v1493
    %v1495 = vadd.f32 %v1491, %v1494
    %vm1496 = vweird.f32 %v1460
    %vm1497 = vweird.f32 %v1491
    %vm1498 = vmor %vm1496, %vm1497
    %v1499 = vsel %vm1498, %v1491, %v1495
    %v1500 = vand.u32 2147483647, %v1460
    %vm1501 = vcmp.eq.f32.partialorder %v1500, 8.507059e+37
    %v1502 = vand.u32 %v1460, 2147483648
    %v1503 = vor.u32 1.1754944e-38, %v1502
    %v1504 = vsel %vm1501, %v1503, %v1499
    %v1505 = vmul.f32 1.0, %v1504
    %v1506 = vtanh.pop %v1448
    %v1507 = vmul.f32 %v1490, 0.0
    %v1508 = vmul.f32 %v1475, %v1506
    %v1509 = vadd.f32 %v1507, %v1508
    %v1510 = vtanh.pop %v1509
    %v1511 = vmul.f32 %v1505, %v1510
    %v1528 = vunpack.c.l.b16 %v653
    %v1529 = vunpack.c.l.b16 %v654
    %v1530 = vunpack.c.l.b16 %v655
    %v1531 = vunpack.c.l.b16 %v656
    %v1532 = vunpack.c.l.b16 %v657
    %v1533 = vunpack.c.l.b16 %v658
    %v1534 = vunpack.c.l.b16 %v659
    %v1535 = vunpack.c.l.b16 %v660
    %v1536 = vunpack.c.l.b16 %v661
    %v1537 = vunpack.c.l.b16 %v662
    %v1538 = vunpack.c.l.b16 %v663
    %v1539 = vunpack.c.l.b16 %v664
    %v1540 = vunpack.c.l.b16 %v665
    %v1541 = vunpack.c.l.b16 %v666
    %v1542 = vunpack.c.l.b16 %v667
    %v1543 = vunpack.c.l.b16 %v668
    %v1544 = vpack.c.b16 %v1529, %v1528
    %v1545 = vpack.c.b16 %v1531, %v1530
    %v1546 = vpack.c.b16 %v1533, %v1532
    %v1547 = vpack.c.b16 %v1535, %v1534
    %v1548 = vpack.c.b16 %v1537, %v1536
    %v1549 = vpack.c.b16 %v1539, %v1538
    %v1550 = vpack.c.b16 %v1541, %v1540
    %v1551 = vpack.c.b16 %v1543, %v1542
    %1560 = vmatpush.bf16.msra.mxu0 %v1551
    %1561 = vmatpush.bf16.msra.mxu0 %v1550
    %1562 = vmatpush.bf16.msra.mxu0 %v1549
    %1563 = vmatpush.bf16.msra.mxu0 %v1548
    %1564 = vmatpush.bf16.msra.mxu0 %v1547
    %1565 = vmatpush.bf16.msra.mxu0 %v1546
    %1566 = vmatpush.bf16.msra.mxu0 %v1545
    %1567 = vmatpush.bf16.msra.mxu0 %v1544
    %1568 = vmatmul.bf16.gmra.mxu0 %v652
    %v1569 = vpop.f32.mrf.mxu0
    %v1570 = vadd.f32 %v209, %v1569
    %v1571 = vpop.f32.mrf.mxu0
    %1572 = vdwg.mxu0
    %v1573 = vpack.c.bf16 %v1511, %v1511
    %v1574 = vld [vmem:[#allocation16] sm:$0xf]
    %v1575 = vld [vmem:[#allocation16 + $0x4] sm:$0xf]
    %v1576 = vld [vmem:[#allocation16 + $0x8] sm:$0xf]
    %v1577 = vld [vmem:[#allocation16 + $0xc] sm:$0xf]
    %v1578 = vld [vmem:[#allocation16 + $0x10] sm:$0xf]
    %v1579 = vld [vmem:[#allocation16 + $0x14] sm:$0xf]
    %v1580 = vld [vmem:[#allocation16 + $0x18] sm:$0xf]
    %v1581 = vld [vmem:[#allocation16 + $0x1c] sm:$0xf]
    %v1582 = vld [vmem:[#allocation16 + $0x20] sm:$0xf]
    %v1583 = vld [vmem:[#allocation16 + $0x24] sm:$0xf]
    %v1584 = vld [vmem:[#allocation16 + $0x28] sm:$0xf]
    %v1585 = vld [vmem:[#allocation16 + $0x2c] sm:$0xf]
    %v1586 = vld [vmem:[#allocation16 + $0x30] sm:$0xf]
    %v1587 = vld [vmem:[#allocation16 + $0x34] sm:$0xf]
    %v1588 = vld [vmem:[#allocation16 + $0x38] sm:$0xf]
    %v1589 = vld [vmem:[#allocation16 + $0x3c] sm:$0xf]
    %v1606 = vunpack.c.l.b16 %v1574
    %v1607 = vunpack.c.l.b16 %v1575
    %v1608 = vunpack.c.l.b16 %v1576
    %v1609 = vunpack.c.l.b16 %v1577
    %v1610 = vunpack.c.l.b16 %v1578
    %v1611 = vunpack.c.l.b16 %v1579
    %v1612 = vunpack.c.l.b16 %v1580
    %v1613 = vunpack.c.l.b16 %v1581
    %v1614 = vunpack.c.l.b16 %v1582
    %v1615 = vunpack.c.l.b16 %v1583
    %v1616 = vunpack.c.l.b16 %v1584
    %v1617 = vunpack.c.l.b16 %v1585
    %v1618 = vunpack.c.l.b16 %v1586
    %v1619 = vunpack.c.l.b16 %v1587
    %v1620 = vunpack.c.l.b16 %v1588
    %v1621 = vunpack.c.l.b16 %v1589
    %v1622 = vpack.c.b16 %v1607, %v1606
    %v1623 = vpack.c.b16 %v1609, %v1608
    %v1624 = vpack.c.b16 %v1611, %v1610
    %v1625 = vpack.c.b16 %v1613, %v1612
    %v1626 = vpack.c.b16 %v1615, %v1614
    %v1627 = vpack.c.b16 %v1617, %v1616
    %v1628 = vpack.c.b16 %v1619, %v1618
    %v1629 = vpack.c.b16 %v1621, %v1620
    %1638 = vmatpush.bf16.msra.mxu0 %v1629
    %1639 = vmatpush.bf16.msra.mxu0 %v1628
    %1640 = vmatpush.bf16.msra.mxu0 %v1627
    %1641 = vmatpush.bf16.msra.mxu0 %v1626
    %1642 = vmatpush.bf16.msra.mxu0 %v1625
    %1643 = vmatpush.bf16.msra.mxu0 %v1624
    %1644 = vmatpush.bf16.msra.mxu0 %v1623
    %1645 = vmatpush.bf16.msra.mxu0 %v1622
    %1646 = vmatmul.bf16.gmra.mxu0 %v1573
    %v1647 = vpop.f32.mrf.mxu0
    %v1648 = vadd.f32 0.0, %v1647
    %v1649 = vpop.f32.mrf.mxu0
    %1650 = vdwg.mxu0
    %v1651 = vadd.f32 %v1570, %v1648
    %1652 = vst [vmem:[#allocation19] sm:$0xff] %v1651
    %v1653 = vld [vmem:[#allocation11] sm:$0xff]
    %v1654 = vld [vmem:[#allocation11 + $0x8] sm:$0xff]
    %v1655 = vld [vmem:[#allocation11 + $0x10] sm:$0xff]
    %v1656 = vld [vmem:[#allocation11 + $0x18] sm:$0xff]
    %v1657 = vld [vmem:[#allocation11 + $0x20] sm:$0xff]
    %v1658 = vld [vmem:[#allocation11 + $0x28] sm:$0xff]
    %v1659 = vld [vmem:[#allocation11 + $0x30] sm:$0xff]
    %v1660 = vld [vmem:[#allocation11 + $0x38] sm:$0xff]
    %v1661 = vld [vmem:[#allocation11 + $0x40] sm:$0xff]
    %v1662 = vld [vmem:[#allocation11 + $0x48] sm:$0xff]
    %v1663 = vld [vmem:[#allocation11 + $0x50] sm:$0xff]
    %v1664 = vld [vmem:[#allocation11 + $0x58] sm:$0xff]
    %v1665 = vld [vmem:[#allocation11 + $0x60] sm:$0xff]
    %v1666 = vld [vmem:[#allocation11 + $0x68] sm:$0xff]
    %v1667 = vld [vmem:[#allocation11 + $0x70] sm:$0xff]
    %v1668 = vld [vmem:[#allocation11 + $0x78] sm:$0xff]
    %v1669 = vld [vmem:[#allocation11 + $0x80] sm:$0xff]
    %v1670 = vld [vmem:[#allocation11 + $0x88] sm:$0xff]
    %v1671 = vld [vmem:[#allocation11 + $0x90] sm:$0xff]
    %v1672 = vld [vmem:[#allocation11 + $0x98] sm:$0xff]
    %v1673 = vld [vmem:[#allocation11 + $0xa0] sm:$0xff]
    %v1674 = vld [vmem:[#allocation11 + $0xa8] sm:$0xff]
    %v1675 = vld [vmem:[#allocation11 + $0xb0] sm:$0xff]
    %v1676 = vld [vmem:[#allocation11 + $0xb8] sm:$0xff]
    %v1677 = vld [vmem:[#allocation11 + $0xc0] sm:$0xff]
    %v1678 = vld [vmem:[#allocation11 + $0xc8] sm:$0xff]
    %v1679 = vld [vmem:[#allocation11 + $0xd0] sm:$0xff]
    %v1680 = vld [vmem:[#allocation11 + $0xd8] sm:$0xff]
    %v1681 = vld [vmem:[#allocation11 + $0xe0] sm:$0xff]
    %v1682 = vld [vmem:[#allocation11 + $0xe8] sm:$0xff]
    %v1683 = vld [vmem:[#allocation11 + $0xf0] sm:$0xff]
    %v1684 = vld [vmem:[#allocation11 + $0xf8] sm:$0xff]
    %v1717 = vunpack.c.l.b16 %v1653
    %v1718 = vunpack.c.h.b16 %v1653
    %v1719 = vunpack.c.l.b16 %v1654
    %v1720 = vunpack.c.h.b16 %v1654
    %v1721 = vunpack.c.l.b16 %v1655
    %v1722 = vunpack.c.h.b16 %v1655
    %v1723 = vunpack.c.l.b16 %v1656
    %v1724 = vunpack.c.h.b16 %v1656
    %v1725 = vunpack.c.l.b16 %v1657
    %v1726 = vunpack.c.h.b16 %v1657
    %v1727 = vunpack.c.l.b16 %v1658
    %v1728 = vunpack.c.h.b16 %v1658
    %v1729 = vunpack.c.l.b16 %v1659
    %v1730 = vunpack.c.h.b16 %v1659
    %v1731 = vunpack.c.l.b16 %v1660
    %v1732 = vunpack.c.h.b16 %v1660
    %v1733 = vunpack.c.l.b16 %v1661
    %v1734 = vunpack.c.h.b16 %v1661
    %v1735 = vunpack.c.l.b16 %v1662
    %v1736 = vunpack.c.h.b16 %v1662
    %v1737 = vunpack.c.l.b16 %v1663
    %v1738 = vunpack.c.h.b16 %v1663
    %v1739 = vunpack.c.l.b16 %v1664
    %v1740 = vunpack.c.h.b16 %v1664
    %v1741 = vunpack.c.l.b16 %v1665
    %v1742 = vunpack.c.h.b16 %v1665
    %v1743 = vunpack.c.l.b16 %v1666
    %v1744 = vunpack.c.h.b16 %v1666
    %v1745 = vunpack.c.l.b16 %v1667
    %v1746 = vunpack.c.h.b16 %v1667
    %v1747 = vunpack.c.l.b16 %v1668
    %v1748 = vunpack.c.h.b16 %v1668
    %v1749 = vunpack.c.l.b16 %v1669
    %v1750 = vunpack.c.h.b16 %v1669
    %v1751 = vunpack.c.l.b16 %v1670
    %v1752 = vunpack.c.h.b16 %v1670
    %v1753 = vunpack.c.l.b16 %v1671
    %v1754 = vunpack.c.h.b16 %v1671
    %v1755 = vunpack.c.l.b16 %v1672
    %v1756 = vunpack.c.h.b16 %v1672
    %v1757 = vunpack.c.l.b16 %v1673
    %v1758 = vunpack.c.h.b16 %v1673
    %v1759 = vunpack.c.l.b16 %v1674
    %v1760 = vunpack.c.h.b16 %v1674
    %v1761 = vunpack.c.l.b16 %v1675
    %v1762 = vunpack.c.h.b16 %v1675
    %v1763 = vunpack.c.l.b16 %v1676
    %v1764 = vunpack.c.h.b16 %v1676
    %v1765 = vunpack.c.l.b16 %v1677
    %v1766 = vunpack.c.h.b16 %v1677
    %v1767 = vunpack.c.l.b16 %v1678
    %v1768 = vunpack.c.h.b16 %v1678
    %v1769 = vunpack.c.l.b16 %v1679
    %v1770 = vunpack.c.h.b16 %v1679
    %v1771 = vunpack.c.l.b16 %v1680
    %v1772 = vunpack.c.h.b16 %v1680
    %v1773 = vunpack.c.l.b16 %v1681
    %v1774 = vunpack.c.h.b16 %v1681
    %v1775 = vunpack.c.l.b16 %v1682
    %v1776 = vunpack.c.h.b16 %v1682
    %v1777 = vunpack.c.l.b16 %v1683
    %v1778 = vunpack.c.h.b16 %v1683
    %v1779 = vunpack.c.l.b16 %v1684
    %v1780 = vunpack.c.h.b16 %v1684
    %v1781 = vpack.c.b16 %v1721, %v1717
    %v1782 = vpack.c.b16 %v1722, %v1718
    %v1783 = vpack.c.b16 %v1723, %v1719
    %v1784 = vpack.c.b16 %v1724, %v1720
    %v1785 = vpack.c.b16 %v1729, %v1725
    %v1786 = vpack.c.b16 %v1730, %v1726
    %v1787 = vpack.c.b16 %v1731, %v1727
    %v1788 = vpack.c.b16 %v1732, %v1728
    %v1789 = vpack.c.b16 %v1737, %v1733
    %v1790 = vpack.c.b16 %v1738, %v1734
    %v1791 = vpack.c.b16 %v1739, %v1735
    %v1792 = vpack.c.b16 %v1740, %v1736
    %v1793 = vpack.c.b16 %v1745, %v1741
    %v1794 = vpack.c.b16 %v1746, %v1742
    %v1795 = vpack.c.b16 %v1747, %v1743
    %v1796 = vpack.c.b16 %v1748, %v1744
    %v1797 = vpack.c.b16 %v1753, %v1749
    %v1798 = vpack.c.b16 %v1754, %v1750
    %v1799 = vpack.c.b16 %v1755, %v1751
    %v1800 = vpack.c.b16 %v1756, %v1752
    %v1801 = vpack.c.b16 %v1761, %v1757
    %v1802 = vpack.c.b16 %v1762, %v1758
    %v1803 = vpack.c.b16 %v1763, %v1759
    %v1804 = vpack.c.b16 %v1764, %v1760
    %v1805 = vpack.c.b16 %v1769, %v1765
    %v1806 = vpack.c.b16 %v1770, %v1766
    %v1807 = vpack.c.b16 %v1771, %v1767
    %v1808 = vpack.c.b16 %v1772, %v1768
    %v1809 = vpack.c.b16 %v1777, %v1773
    %v1810 = vpack.c.b16 %v1778, %v1774
    %v1811 = vpack.c.b16 %v1779, %v1775
    %v1812 = vpack.c.b16 %v1780, %v1776
    %1845 = vmatpush.bf16.msra.mxu0 %v1809
    %1846 = vmatpush.bf16.msra.mxu0 %v1805
    %1847 = vmatpush.bf16.msra.mxu0 %v1801
    %1848 = vmatpush.bf16.msra.mxu0 %v1797
    %1849 = vmatpush.bf16.msra.mxu0 %v1793
    %1850 = vmatpush.bf16.msra.mxu0 %v1789
    %1851 = vmatpush.bf16.msra.mxu0 %v1785
    %1852 = vmatpush.bf16.msra.mxu0 %v1781
    %1853 = vmatmul.bf16.gmra.mxu0 %v1200
    %v1854 = vpop.f32.mrf.mxu0
    %v1855 = vadd.f32 0.0, %v1854
    %v1856 = vpop.f32.mrf.mxu0
    %1857 = vdwg.mxu0
    %1858 = vmatpush.bf16.msra.mxu0 %v1810
    %1859 = vmatpush.bf16.msra.mxu0 %v1806
    %1860 = vmatpush.bf16.msra.mxu0 %v1802
    %1861 = vmatpush.bf16.msra.mxu0 %v1798
    %1862 = vmatpush.bf16.msra.mxu0 %v1794
    %1863 = vmatpush.bf16.msra.mxu0 %v1790
    %1864 = vmatpush.bf16.msra.mxu0 %v1786
    %1865 = vmatpush.bf16.msra.mxu0 %v1782
    %1866 = vmatmul.bf16.gmra.mxu0 %v1200
    %v1867 = vpop.f32.mrf.mxu0
    %v1868 = vadd.f32 0.0, %v1867
    %v1869 = vpop.f32.mrf.mxu0
    %1870 = vdwg.mxu0
    %1871 = vmatpush.bf16.msra.mxu0 %v1811
    %1872 = vmatpush.bf16.msra.mxu0 %v1807
    %1873 = vmatpush.bf16.msra.mxu0 %v1803
    %1874 = vmatpush.bf16.msra.mxu0 %v1799
    %1875 = vmatpush.bf16.msra.mxu0 %v1795
    %1876 = vmatpush.bf16.msra.mxu0 %v1791
    %1877 = vmatpush.bf16.msra.mxu0 %v1787
    %1878 = vmatpush.bf16.msra.mxu0 %v1783
    %1879 = vmatmul.bf16.gmra.mxu0 %v1200
    %v1880 = vpop.f32.mrf.mxu0
    %v1881 = vadd.f32 0.0, %v1880
    %v1882 = vpop.f32.mrf.mxu0
    %1883 = vdwg.mxu0
    %1884 = vmatpush.bf16.msra.mxu0 %v1812
    %1885 = vmatpush.bf16.msra.mxu0 %v1808
    %1886 = vmatpush.bf16.msra.mxu0 %v1804
    %1887 = vmatpush.bf16.msra.mxu0 %v1800
    %1888 = vmatpush.bf16.msra.mxu0 %v1796
    %1889 = vmatpush.bf16.msra.mxu0 %v1792
    %1890 = vmatpush.bf16.msra.mxu0 %v1788
    %1891 = vmatpush.bf16.msra.mxu0 %v1784
    %1892 = vmatmul.bf16.gmra.mxu0 %v1200
    %v1893 = vpop.f32.mrf.mxu0
    %v1894 = vadd.f32 0.0, %v1893
    %v1895 = vpop.f32.mrf.mxu0
    %1896 = vdwg.mxu0
    %v1897 = vld [vmem:[#allocation14] sm:$0xff]
    %v1898 = vld [vmem:[#allocation14 + $0x8] sm:$0xff]
    %v1899 = vld [vmem:[#allocation14 + $0x10] sm:$0xff]
    %v1900 = vld [vmem:[#allocation14 + $0x18] sm:$0xff]
    %v1901 = vld [vmem:[#allocation14 + $0x20] sm:$0xff]
    %v1902 = vld [vmem:[#allocation14 + $0x28] sm:$0xff]
    %v1903 = vld [vmem:[#allocation14 + $0x30] sm:$0xff]
    %v1904 = vld [vmem:[#allocation14 + $0x38] sm:$0xff]
    %v1905 = vld [vmem:[#allocation14 + $0x40] sm:$0xff]
    %v1906 = vld [vmem:[#allocation14 + $0x48] sm:$0xff]
    %v1907 = vld [vmem:[#allocation14 + $0x50] sm:$0xff]
    %v1908 = vld [vmem:[#allocation14 + $0x58] sm:$0xff]
    %v1909 = vld [vmem:[#allocation14 + $0x60] sm:$0xff]
    %v1910 = vld [vmem:[#allocation14 + $0x68] sm:$0xff]
    %v1911 = vld [vmem:[#allocation14 + $0x70] sm:$0xff]
    %v1912 = vld [vmem:[#allocation14 + $0x78] sm:$0xff]
    %v1913 = vld [vmem:[#allocation14 + $0x80] sm:$0xff]
    %v1914 = vld [vmem:[#allocation14 + $0x88] sm:$0xff]
    %v1915 = vld [vmem:[#allocation14 + $0x90] sm:$0xff]
    %v1916 = vld [vmem:[#allocation14 + $0x98] sm:$0xff]
    %v1917 = vld [vmem:[#allocation14 + $0xa0] sm:$0xff]
    %v1918 = vld [vmem:[#allocation14 + $0xa8] sm:$0xff]
    %v1919 = vld [vmem:[#allocation14 + $0xb0] sm:$0xff]
    %v1920 = vld [vmem:[#allocation14 + $0xb8] sm:$0xff]
    %v1921 = vld [vmem:[#allocation14 + $0xc0] sm:$0xff]
    %v1922 = vld [vmem:[#allocation14 + $0xc8] sm:$0xff]
    %v1923 = vld [vmem:[#allocation14 + $0xd0] sm:$0xff]
    %v1924 = vld [vmem:[#allocation14 + $0xd8] sm:$0xff]
    %v1925 = vld [vmem:[#allocation14 + $0xe0] sm:$0xff]
    %v1926 = vld [vmem:[#allocation14 + $0xe8] sm:$0xff]
    %v1927 = vld [vmem:[#allocation14 + $0xf0] sm:$0xff]
    %v1928 = vld [vmem:[#allocation14 + $0xf8] sm:$0xff]
    %v1929 = vld [vmem:[#allocation5] sm:$0xf]
    %v1930 = vld [vmem:[#allocation5 + $0x4] sm:$0xf]
    %v1931 = vld [vmem:[#allocation5 + $0x8] sm:$0xf]
    %v1932 = vld [vmem:[#allocation5 + $0xc] sm:$0xf]
    %v1933 = vld [vmem:[#allocation5 + $0x10] sm:$0xf]
    %v1934 = vld [vmem:[#allocation5 + $0x14] sm:$0xf]
    %v1935 = vld [vmem:[#allocation5 + $0x18] sm:$0xf]
    %v1936 = vld [vmem:[#allocation5 + $0x1c] sm:$0xf]
    %v1937 = vld [vmem:[#allocation5 + $0x20] sm:$0xf]
    %v1938 = vld [vmem:[#allocation5 + $0x24] sm:$0xf]
    %v1939 = vld [vmem:[#allocation5 + $0x28] sm:$0xf]
    %v1940 = vld [vmem:[#allocation5 + $0x2c] sm:$0xf]
    %v1941 = vld [vmem:[#allocation5 + $0x30] sm:$0xf]
    %v1942 = vld [vmem:[#allocation5 + $0x34] sm:$0xf]
    %v1943 = vld [vmem:[#allocation5 + $0x38] sm:$0xf]
    %v1944 = vld [vmem:[#allocation5 + $0x3c] sm:$0xf]
    %v1945 = vld [vmem:[#allocation8] sm:$0xff]
    %v1962 = vunpack.c.l.b16 %v1929
    %v1963 = vunpack.c.l.b16 %v1930
    %v1964 = vunpack.c.l.b16 %v1931
    %v1965 = vunpack.c.l.b16 %v1932
    %v1966 = vunpack.c.l.b16 %v1933
    %v1967 = vunpack.c.l.b16 %v1934
    %v1968 = vunpack.c.l.b16 %v1935
    %v1969 = vunpack.c.l.b16 %v1936
    %v1970 = vunpack.c.l.b16 %v1937
    %v1971 = vunpack.c.l.b16 %v1938
    %v1972 = vunpack.c.l.b16 %v1939
    %v1973 = vunpack.c.l.b16 %v1940
    %v1974 = vunpack.c.l.b16 %v1941
    %v1975 = vunpack.c.l.b16 %v1942
    %v1976 = vunpack.c.l.b16 %v1943
    %v1977 = vunpack.c.l.b16 %v1944
    %v1978 = vpack.c.b16 %v1963, %v1962
    %v1979 = vpack.c.b16 %v1965, %v1964
    %v1980 = vpack.c.b16 %v1967, %v1966
    %v1981 = vpack.c.b16 %v1969, %v1968
    %v1982 = vpack.c.b16 %v1971, %v1970
    %v1983 = vpack.c.b16 %v1973, %v1972
    %v1984 = vpack.c.b16 %v1975, %v1974
    %v1985 = vpack.c.b16 %v1977, %v1976
    %1994 = vmatpush.bf16.msra.mxu0 %v1985
    %1995 = vmatpush.bf16.msra.mxu0 %v1984
    %1996 = vmatpush.bf16.msra.mxu0 %v1983
    %1997 = vmatpush.bf16.msra.mxu0 %v1982
    %1998 = vmatpush.bf16.msra.mxu0 %v1981
    %1999 = vmatpush.bf16.msra.mxu0 %v1980
    %2000 = vmatpush.bf16.msra.mxu0 %v1979
    %2001 = vmatpush.bf16.msra.mxu0 %v1978
    %2002 = vmatmul.bf16.gmra.mxu0 %v1573
    %v2003 = vpop.f32.mrf.mxu0
    %v2004 = vadd.f32 %v1945, %v2003
    %v2005 = vpop.f32.mrf.mxu0
    %2006 = vdwg.mxu0
    %2007 = vmax.xlane.f32.xlu0 %v2004
    %v2008 = vpop.xlane.xlu0 %2007
    %v2009 = vsub.f32 %v2004, %v2008
    %v2010 = vmul.f32 %v2009, 1.442695
    %v2011 = vpow.pop %v2010
    %2012 = vadd.xlane.f32.xlu0 %v2011
    %v2013 = vpop.xlane.xlu0 %2012
    %v2014 = vrcp.pop %v2013
    %v2015 = vmul.f32 %v2011, %v2014
    %v2016 = vpack.c.bf16 %v2015, %v2015
    %v2017 = vld [vmem:[#allocation7] sm:$0xf]
    %v2018 = vld [vmem:[#allocation7 + $0x4] sm:$0xf]
    %v2019 = vld [vmem:[#allocation7 + $0x8] sm:$0xf]
    %v2020 = vld [vmem:[#allocation7 + $0xc] sm:$0xf]
    %v2021 = vld [vmem:[#allocation7 + $0x10] sm:$0xf]
    %v2022 = vld [vmem:[#allocation7 + $0x14] sm:$0xf]
    %v2023 = vld [vmem:[#allocation7 + $0x18] sm:$0xf]
    %v2024 = vld [vmem:[#allocation7 + $0x1c] sm:$0xf]
    %v2025 = vld [vmem:[#allocation7 + $0x20] sm:$0xf]
    %v2026 = vld [vmem:[#allocation7 + $0x24] sm:$0xf]
    %v2027 = vld [vmem:[#allocation7 + $0x28] sm:$0xf]
    %v2028 = vld [vmem:[#allocation7 + $0x2c] sm:$0xf]
    %v2029 = vld [vmem:[#allocation7 + $0x30] sm:$0xf]
    %v2030 = vld [vmem:[#allocation7 + $0x34] sm:$0xf]
    %v2031 = vld [vmem:[#allocation7 + $0x38] sm:$0xf]
    %v2032 = vld [vmem:[#allocation7 + $0x3c] sm:$0xf]
    %v2049 = vunpack.c.l.b16 %v2017
    %v2050 = vunpack.c.l.b16 %v2018
    %v2051 = vunpack.c.l.b16 %v2019
    %v2052 = vunpack.c.l.b16 %v2020
    %v2053 = vunpack.c.l.b16 %v2021
    %v2054 = vunpack.c.l.b16 %v2022
    %v2055 = vunpack.c.l.b16 %v2023
    %v2056 = vunpack.c.l.b16 %v2024
    %v2057 = vunpack.c.l.b16 %v2025
    %v2058 = vunpack.c.l.b16 %v2026
    %v2059 = vunpack.c.l.b16 %v2027
    %v2060 = vunpack.c.l.b16 %v2028
    %v2061 = vunpack.c.l.b16 %v2029
    %v2062 = vunpack.c.l.b16 %v2030
    %v2063 = vunpack.c.l.b16 %v2031
    %v2064 = vunpack.c.l.b16 %v2032
    %v2065 = vpack.c.b16 %v2050, %v2049
    %v2066 = vpack.c.b16 %v2052, %v2051
    %v2067 = vpack.c.b16 %v2054, %v2053
    %v2068 = vpack.c.b16 %v2056, %v2055
    %v2069 = vpack.c.b16 %v2058, %v2057
    %v2070 = vpack.c.b16 %v2060, %v2059
    %v2071 = vpack.c.b16 %v2062, %v2061
    %v2072 = vpack.c.b16 %v2064, %v2063
    %2081 = vmatpush.bf16.msra.mxu0 %v2072
    %2082 = vmatpush.bf16.msra.mxu0 %v2071
    %2083 = vmatpush.bf16.msra.mxu0 %v2070
    %2084 = vmatpush.bf16.msra.mxu0 %v2069
    %2085 = vmatpush.bf16.msra.mxu0 %v2068
    %2086 = vmatpush.bf16.msra.mxu0 %v2067
    %2087 = vmatpush.bf16.msra.mxu0 %v2066
    %2088 = vmatpush.bf16.msra.mxu0 %v2065
    %2089 = vmatmul.bf16.gmra.mxu0 %v2016
    %v2090 = vpop.f32.mrf.mxu0
    %v2091 = vadd.f32 0.0, %v2090
    %v2092 = vpop.f32.mrf.mxu0
    %2093 = vdwg.mxu0
    %v2094 = vpack.c.bf16 %v2091, %v2091
    %v2095 = vld [vmem:[#allocation17] sm:$0xf]
    %v2096 = vld [vmem:[#allocation17 + $0x4] sm:$0xf]
    %v2097 = vld [vmem:[#allocation17 + $0x8] sm:$0xf]
    %v2098 = vld [vmem:[#allocation17 + $0xc] sm:$0xf]
    %v2099 = vld [vmem:[#allocation17 + $0x10] sm:$0xf]
    %v2100 = vld [vmem:[#allocation17 + $0x14] sm:$0xf]
    %v2101 = vld [vmem:[#allocation17 + $0x18] sm:$0xf]
    %v2102 = vld [vmem:[#allocation17 + $0x1c] sm:$0xf]
    %v2103 = vld [vmem:[#allocation17 + $0x20] sm:$0xf]
    %v2104 = vld [vmem:[#allocation17 + $0x24] sm:$0xf]
    %v2105 = vld [vmem:[#allocation17 + $0x28] sm:$0xf]
    %v2106 = vld [vmem:[#allocation17 + $0x2c] sm:$0xf]
    %v2107 = vld [vmem:[#allocation17 + $0x30] sm:$0xf]
    %v2108 = vld [vmem:[#allocation17 + $0x34] sm:$0xf]
    %v2109 = vld [vmem:[#allocation17 + $0x38] sm:$0xf]
    %v2110 = vld [vmem:[#allocation17 + $0x3c] sm:$0xf]
    %s2111 = scalar_lea.vmem [#allocation2], 32
    %v2112 = vld [vmem:[%s2111] sm:$0xff]
    %v2113 = vld [vmem:[%s2111 + $0x8] sm:$0xff]
    %v2114 = vld [vmem:[%s2111 + $0x10] sm:$0xff]
    %v2115 = vld [vmem:[%s2111 + $0x18] sm:$0xff]
    %v2116 = vadd.f32 %v2112, %v1855
    %v2117 = vadd.f32 %v2113, %v1868
    %v2118 = vadd.f32 %v2114, %v1881
    %v2119 = vadd.f32 %v2115, %v1894
    %v2120 = vld [vmem:[#allocation10] sm:$0xff]
    %v2121 = vld [vmem:[#allocation10 + $0x8] sm:$0xff]
    %v2122 = vld [vmem:[#allocation10 + $0x10] sm:$0xff]
    %v2123 = vld [vmem:[#allocation10 + $0x18] sm:$0xff]
    %v2124 = vld [vmem:[#allocation10 + $0x20] sm:$0xff]
    %v2125 = vld [vmem:[#allocation10 + $0x28] sm:$0xff]
    %v2126 = vld [vmem:[#allocation10 + $0x30] sm:$0xff]
    %v2127 = vld [vmem:[#allocation10 + $0x38] sm:$0xff]
    %v2128 = vld [vmem:[#allocation10 + $0x40] sm:$0xff]
    %v2129 = vld [vmem:[#allocation10 + $0x48] sm:$0xff]
    %v2130 = vld [vmem:[#allocation10 + $0x50] sm:$0xff]
    %v2131 = vld [vmem:[#allocation10 + $0x58] sm:$0xff]
    %v2132 = vld [vmem:[#allocation10 + $0x60] sm:$0xff]
    %v2133 = vld [vmem:[#allocation10 + $0x68] sm:$0xff]
    %v2134 = vld [vmem:[#allocation10 + $0x70] sm:$0xff]
    %v2135 = vld [vmem:[#allocation10 + $0x78] sm:$0xff]
    %v2136 = vld [vmem:[#allocation10 + $0x80] sm:$0xff]
    %v2137 = vld [vmem:[#allocation10 + $0x88] sm:$0xff]
    %v2138 = vld [vmem:[#allocation10 + $0x90] sm:$0xff]
    %v2139 = vld [vmem:[#allocation10 + $0x98] sm:$0xff]
    %v2140 = vld [vmem:[#allocation10 + $0xa0] sm:$0xff]
    %v2141 = vld [vmem:[#allocation10 + $0xa8] sm:$0xff]
    %v2142 = vld [vmem:[#allocation10 + $0xb0] sm:$0xff]
    %v2143 = vld [vmem:[#allocation10 + $0xb8] sm:$0xff]
    %v2144 = vld [vmem:[#allocation10 + $0xc0] sm:$0xff]
    %v2145 = vld [vmem:[#allocation10 + $0xc8] sm:$0xff]
    %v2146 = vld [vmem:[#allocation10 + $0xd0] sm:$0xff]
    %v2147 = vld [vmem:[#allocation10 + $0xd8] sm:$0xff]
    %v2148 = vld [vmem:[#allocation10 + $0xe0] sm:$0xff]
    %v2149 = vld [vmem:[#allocation10 + $0xe8] sm:$0xff]
    %v2150 = vld [vmem:[#allocation10 + $0xf0] sm:$0xff]
    %v2151 = vld [vmem:[#allocation10 + $0xf8] sm:$0xff]
    %v2184 = vunpack.c.l.b16 %v2120
    %v2185 = vunpack.c.h.b16 %v2120
    %v2186 = vunpack.c.l.b16 %v2121
    %v2187 = vunpack.c.h.b16 %v2121
    %v2188 = vunpack.c.l.b16 %v2122
    %v2189 = vunpack.c.h.b16 %v2122
    %v2190 = vunpack.c.l.b16 %v2123
    %v2191 = vunpack.c.h.b16 %v2123
    %v2192 = vunpack.c.l.b16 %v2124
    %v2193 = vunpack.c.h.b16 %v2124
    %v2194 = vunpack.c.l.b16 %v2125
    %v2195 = vunpack.c.h.b16 %v2125
    %v2196 = vunpack.c.l.b16 %v2126
    %v2197 = vunpack.c.h.b16 %v2126
    %v2198 = vunpack.c.l.b16 %v2127
    %v2199 = vunpack.c.h.b16 %v2127
    %v2200 = vunpack.c.l.b16 %v2128
    %v2201 = vunpack.c.h.b16 %v2128
    %v2202 = vunpack.c.l.b16 %v2129
    %v2203 = vunpack.c.h.b16 %v2129
    %v2204 = vunpack.c.l.b16 %v2130
    %v2205 = vunpack.c.h.b16 %v2130
    %v2206 = vunpack.c.l.b16 %v2131
    %v2207 = vunpack.c.h.b16 %v2131
    %v2208 = vunpack.c.l.b16 %v2132
    %v2209 = vunpack.c.h.b16 %v2132
    %v2210 = vunpack.c.l.b16 %v2133
    %v2211 = vunpack.c.h.b16 %v2133
    %v2212 = vunpack.c.l.b16 %v2134
    %v2213 = vunpack.c.h.b16 %v2134
    %v2214 = vunpack.c.l.b16 %v2135
    %v2215 = vunpack.c.h.b16 %v2135
    %v2216 = vunpack.c.l.b16 %v2136
    %v2217 = vunpack.c.h.b16 %v2136
    %v2218 = vunpack.c.l.b16 %v2137
    %v2219 = vunpack.c.h.b16 %v2137
    %v2220 = vunpack.c.l.b16 %v2138
    %v2221 = vunpack.c.h.b16 %v2138
    %v2222 = vunpack.c.l.b16 %v2139
    %v2223 = vunpack.c.h.b16 %v2139
    %v2224 = vunpack.c.l.b16 %v2140
    %v2225 = vunpack.c.h.b16 %v2140
    %v2226 = vunpack.c.l.b16 %v2141
    %v2227 = vunpack.c.h.b16 %v2141
    %v2228 = vunpack.c.l.b16 %v2142
    %v2229 = vunpack.c.h.b16 %v2142
    %v2230 = vunpack.c.l.b16 %v2143
    %v2231 = vunpack.c.h.b16 %v2143
    %v2232 = vunpack.c.l.b16 %v2144
    %v2233 = vunpack.c.h.b16 %v2144
    %v2234 = vunpack.c.l.b16 %v2145
    %v2235 = vunpack.c.h.b16 %v2145
    %v2236 = vunpack.c.l.b16 %v2146
    %v2237 = vunpack.c.h.b16 %v2146
    %v2238 = vunpack.c.l.b16 %v2147
    %v2239 = vunpack.c.h.b16 %v2147
    %v2240 = vunpack.c.l.b16 %v2148
    %v2241 = vunpack.c.h.b16 %v2148
    %v2242 = vunpack.c.l.b16 %v2149
    %v2243 = vunpack.c.h.b16 %v2149
    %v2244 = vunpack.c.l.b16 %v2150
    %v2245 = vunpack.c.h.b16 %v2150
    %v2246 = vunpack.c.l.b16 %v2151
    %v2247 = vunpack.c.h.b16 %v2151
    %v2248 = vpack.c.b16 %v2188, %v2184
    %v2249 = vpack.c.b16 %v2189, %v2185
    %v2250 = vpack.c.b16 %v2190, %v2186
    %v2251 = vpack.c.b16 %v2191, %v2187
    %v2252 = vpack.c.b16 %v2196, %v2192
    %v2253 = vpack.c.b16 %v2197, %v2193
    %v2254 = vpack.c.b16 %v2198, %v2194
    %v2255 = vpack.c.b16 %v2199, %v2195
    %v2256 = vpack.c.b16 %v2204, %v2200
    %v2257 = vpack.c.b16 %v2205, %v2201
    %v2258 = vpack.c.b16 %v2206, %v2202
    %v2259 = vpack.c.b16 %v2207, %v2203
    %v2260 = vpack.c.b16 %v2212, %v2208
    %v2261 = vpack.c.b16 %v2213, %v2209
    %v2262 = vpack.c.b16 %v2214, %v2210
    %v2263 = vpack.c.b16 %v2215, %v2211
    %v2264 = vpack.c.b16 %v2220, %v2216
    %v2265 = vpack.c.b16 %v2221, %v2217
    %v2266 = vpack.c.b16 %v2222, %v2218
    %v2267 = vpack.c.b16 %v2223, %v2219
    %v2268 = vpack.c.b16 %v2228, %v2224
    %v2269 = vpack.c.b16 %v2229, %v2225
    %v2270 = vpack.c.b16 %v2230, %v2226
    %v2271 = vpack.c.b16 %v2231, %v2227
    %v2272 = vpack.c.b16 %v2236, %v2232
    %v2273 = vpack.c.b16 %v2237, %v2233
    %v2274 = vpack.c.b16 %v2238, %v2234
    %v2275 = vpack.c.b16 %v2239, %v2235
    %v2276 = vpack.c.b16 %v2244, %v2240
    %v2277 = vpack.c.b16 %v2245, %v2241
    %v2278 = vpack.c.b16 %v2246, %v2242
    %v2279 = vpack.c.b16 %v2247, %v2243
    %2312 = vmatpush.bf16.msra.mxu0 %v2276
    %2313 = vmatpush.bf16.msra.mxu0 %v2272
    %2314 = vmatpush.bf16.msra.mxu0 %v2268
    %2315 = vmatpush.bf16.msra.mxu0 %v2264
    %2316 = vmatpush.bf16.msra.mxu0 %v2260
    %2317 = vmatpush.bf16.msra.mxu0 %v2256
    %2318 = vmatpush.bf16.msra.mxu0 %v2252
    %2319 = vmatpush.bf16.msra.mxu0 %v2248
    %2320 = vmatmul.bf16.gmra.mxu0 %v2094
    %v2321 = vpop.f32.mrf.mxu0
    %v2322 = vadd.f32 0.0, %v2321
    %v2323 = vpop.f32.mrf.mxu0
    %2324 = vdwg.mxu0
    %2325 = vmatpush.bf16.msra.mxu0 %v2277
    %2326 = vmatpush.bf16.msra.mxu0 %v2273
    %2327 = vmatpush.bf16.msra.mxu0 %v2269
    %2328 = vmatpush.bf16.msra.mxu0 %v2265
    %2329 = vmatpush.bf16.msra.mxu0 %v2261
    %2330 = vmatpush.bf16.msra.mxu0 %v2257
    %2331 = vmatpush.bf16.msra.mxu0 %v2253
    %2332 = vmatpush.bf16.msra.mxu0 %v2249
    %2333 = vmatmul.bf16.gmra.mxu0 %v2094
    %v2334 = vpop.f32.mrf.mxu0
    %v2335 = vadd.f32 0.0, %v2334
    %v2336 = vpop.f32.mrf.mxu0
    %2337 = vdwg.mxu0
    %2338 = vmatpush.bf16.msra.mxu0 %v2278
    %2339 = vmatpush.bf16.msra.mxu0 %v2274
    %2340 = vmatpush.bf16.msra.mxu0 %v2270
    %2341 = vmatpush.bf16.msra.mxu0 %v2266
    %2342 = vmatpush.bf16.msra.mxu0 %v2262
    %2343 = vmatpush.bf16.msra.mxu0 %v2258
    %2344 = vmatpush.bf16.msra.mxu0 %v2254
    %2345 = vmatpush.bf16.msra.mxu0 %v2250
    %2346 = vmatmul.bf16.gmra.mxu0 %v2094
    %v2347 = vpop.f32.mrf.mxu0
    %v2348 = vadd.f32 0.0, %v2347
    %v2349 = vpop.f32.mrf.mxu0
    %2350 = vdwg.mxu0
    %2351 = vmatpush.bf16.msra.mxu0 %v2279
    %2352 = vmatpush.bf16.msra.mxu0 %v2275
    %2353 = vmatpush.bf16.msra.mxu0 %v2271
    %2354 = vmatpush.bf16.msra.mxu0 %v2267
    %2355 = vmatpush.bf16.msra.mxu0 %v2263
    %2356 = vmatpush.bf16.msra.mxu0 %v2259
    %2357 = vmatpush.bf16.msra.mxu0 %v2255
    %2358 = vmatpush.bf16.msra.mxu0 %v2251
    %2359 = vmatmul.bf16.gmra.mxu0 %v2094
    %v2360 = vpop.f32.mrf.mxu0
    %v2361 = vadd.f32 0.0, %v2360
    %v2362 = vpop.f32.mrf.mxu0
    %2363 = vdwg.mxu0
    %v2364 = vadd.f32 %v2116, %v2322
    %v2365 = vadd.f32 %v2117, %v2335
    %v2366 = vadd.f32 %v2118, %v2348
    %v2367 = vadd.f32 %v2119, %v2361
    %v2368 = vxor.u32 %v2364, 2147483648
    %v2369 = vxor.u32 %v2365, 2147483648
    %v2370 = vxor.u32 %v2366, 2147483648
    %v2371 = vmul.f32 %v2368, 1.442695
    %v2372 = vpow.pop %v2371
    %v2373 = vmul.f32 %v2369, 1.442695
    %v2374 = vpow.pop %v2373
    %v2375 = vmul.f32 %v2370, 1.442695
    %v2376 = vpow.pop %v2375
    %v2377 = vadd.f32 %v2372, 1.0
    %v2378 = vadd.f32 %v2374, 1.0
    %v2379 = vadd.f32 %v2376, 1.0
    %v2380 = vrcp.pop %v2377
    %v2381 = vmul.f32 %v2377, %v2380
    %v2382 = vsub.f32 1.0, %v2381
    %v2383 = vmul.f32 %v2380, %v2382
    %v2384 = vadd.f32 %v2380, %v2383
    %vm2385 = vweird.f32 %v2377
    %vm2386 = vweird.f32 %v2380
    %vm2387 = vmor %vm2385, %vm2386
    %v2388 = vsel %vm2387, %v2380, %v2384
    %v2389 = vand.u32 2147483647, %v2377
    %vm2390 = vcmp.eq.f32.partialorder %v2389, 8.507059e+37
    %v2391 = vand.u32 %v2377, 2147483648
    %v2392 = vor.u32 1.1754944e-38, %v2391
    %v2393 = vsel %vm2390, %v2392, %v2388
    %v2394 = vmul.f32 1.0, %v2393
    %v2395 = vrcp.pop %v2378
    %v2396 = vmul.f32 %v2378, %v2395
    %v2397 = vsub.f32 1.0, %v2396
    %v2398 = vmul.f32 %v2395, %v2397
    %v2399 = vadd.f32 %v2395, %v2398
    %vm2400 = vweird.f32 %v2378
    %vm2401 = vweird.f32 %v2395
    %vm2402 = vmor %vm2400, %vm2401
    %v2403 = vsel %vm2402, %v2395, %v2399
    %v2404 = vand.u32 2147483647, %v2378
    %vm2405 = vcmp.eq.f32.partialorder %v2404, 8.507059e+37
    %v2406 = vand.u32 %v2378, 2147483648
    %v2407 = vor.u32 1.1754944e-38, %v2406
    %v2408 = vsel %vm2405, %v2407, %v2403
    %v2409 = vmul.f32 1.0, %v2408
    %v2410 = vrcp.pop %v2379
    %v2411 = vmul.f32 %v2379, %v2410
    %v2412 = vsub.f32 1.0, %v2411
    %v2413 = vmul.f32 %v2410, %v2412
    %v2414 = vadd.f32 %v2410, %v2413
    %vm2415 = vweird.f32 %v2379
    %vm2416 = vweird.f32 %v2410
    %vm2417 = vmor %vm2415, %vm2416
    %v2418 = vsel %vm2417, %v2410, %v2414
    %v2419 = vand.u32 2147483647, %v2379
    %vm2420 = vcmp.eq.f32.partialorder %v2419, 8.507059e+37
    %v2421 = vand.u32 %v2379, 2147483648
    %v2422 = vor.u32 1.1754944e-38, %v2421
    %v2423 = vsel %vm2420, %v2422, %v2418
    %v2424 = vmul.f32 1.0, %v2423
    %v2425 = vtanh.pop %v2367
    %v2426 = vmul.f32 %v2409, %v985
    %v2427 = vmul.f32 %v2394, %v2425
    %v2428 = vadd.f32 %v2426, %v2427
    %v2429 = vtanh.pop %v2428
    %v2430 = vmul.f32 %v2424, %v2429
    %v2463 = vunpack.c.l.b16 %v1897
    %v2464 = vunpack.c.h.b16 %v1897
    %v2465 = vunpack.c.l.b16 %v1898
    %v2466 = vunpack.c.h.b16 %v1898
    %v2467 = vunpack.c.l.b16 %v1899
    %v2468 = vunpack.c.h.b16 %v1899
    %v2469 = vunpack.c.l.b16 %v1900
    %v2470 = vunpack.c.h.b16 %v1900
    %v2471 = vunpack.c.l.b16 %v1901
    %v2472 = vunpack.c.h.b16 %v1901
    %v2473 = vunpack.c.l.b16 %v1902
    %v2474 = vunpack.c.h.b16 %v1902
    %v2475 = vunpack.c.l.b16 %v1903
    %v2476 = vunpack.c.h.b16 %v1903
    %v2477 = vunpack.c.l.b16 %v1904
    %v2478 = vunpack.c.h.b16 %v1904
    %v2479 = vunpack.c.l.b16 %v1905
    %v2480 = vunpack.c.h.b16 %v1905
    %v2481 = vunpack.c.l.b16 %v1906
    %v2482 = vunpack.c.h.b16 %v1906
    %v2483 = vunpack.c.l.b16 %v1907
    %v2484 = vunpack.c.h.b16 %v1907
    %v2485 = vunpack.c.l.b16 %v1908
    %v2486 = vunpack.c.h.b16 %v1908
    %v2487 = vunpack.c.l.b16 %v1909
    %v2488 = vunpack.c.h.b16 %v1909
    %v2489 = vunpack.c.l.b16 %v1910
    %v2490 = vunpack.c.h.b16 %v1910
    %v2491 = vunpack.c.l.b16 %v1911
    %v2492 = vunpack.c.h.b16 %v1911
    %v2493 = vunpack.c.l.b16 %v1912
    %v2494 = vunpack.c.h.b16 %v1912
    %v2495 = vunpack.c.l.b16 %v1913
    %v2496 = vunpack.c.h.b16 %v1913
    %v2497 = vunpack.c.l.b16 %v1914
    %v2498 = vunpack.c.h.b16 %v1914
    %v2499 = vunpack.c.l.b16 %v1915
    %v2500 = vunpack.c.h.b16 %v1915
    %v2501 = vunpack.c.l.b16 %v1916
    %v2502 = vunpack.c.h.b16 %v1916
    %v2503 = vunpack.c.l.b16 %v1917
    %v2504 = vunpack.c.h.b16 %v1917
    %v2505 = vunpack.c.l.b16 %v1918
    %v2506 = vunpack.c.h.b16 %v1918
    %v2507 = vunpack.c.l.b16 %v1919
    %v2508 = vunpack.c.h.b16 %v1919
    %v2509 = vunpack.c.l.b16 %v1920
    %v2510 = vunpack.c.h.b16 %v1920
    %v2511 = vunpack.c.l.b16 %v1921
    %v2512 = vunpack.c.h.b16 %v1921
    %v2513 = vunpack.c.l.b16 %v1922
    %v2514 = vunpack.c.h.b16 %v1922
    %v2515 = vunpack.c.l.b16 %v1923
    %v2516 = vunpack.c.h.b16 %v1923
    %v2517 = vunpack.c.l.b16 %v1924
    %v2518 = vunpack.c.h.b16 %v1924
    %v2519 = vunpack.c.l.b16 %v1925
    %v2520 = vunpack.c.h.b16 %v1925
    %v2521 = vunpack.c.l.b16 %v1926
    %v2522 = vunpack.c.h.b16 %v1926
    %v2523 = vunpack.c.l.b16 %v1927
    %v2524 = vunpack.c.h.b16 %v1927
    %v2525 = vunpack.c.l.b16 %v1928
    %v2526 = vunpack.c.h.b16 %v1928
    %v2527 = vpack.c.b16 %v2467, %v2463
    %v2528 = vpack.c.b16 %v2468, %v2464
    %v2529 = vpack.c.b16 %v2469, %v2465
    %v2530 = vpack.c.b16 %v2470, %v2466
    %v2531 = vpack.c.b16 %v2475, %v2471
    %v2532 = vpack.c.b16 %v2476, %v2472
    %v2533 = vpack.c.b16 %v2477, %v2473
    %v2534 = vpack.c.b16 %v2478, %v2474
    %v2535 = vpack.c.b16 %v2483, %v2479
    %v2536 = vpack.c.b16 %v2484, %v2480
    %v2537 = vpack.c.b16 %v2485, %v2481
    %v2538 = vpack.c.b16 %v2486, %v2482
    %v2539 = vpack.c.b16 %v2491, %v2487
    %v2540 = vpack.c.b16 %v2492, %v2488
    %v2541 = vpack.c.b16 %v2493, %v2489
    %v2542 = vpack.c.b16 %v2494, %v2490
    %v2543 = vpack.c.b16 %v2499, %v2495
    %v2544 = vpack.c.b16 %v2500, %v2496
    %v2545 = vpack.c.b16 %v2501, %v2497
    %v2546 = vpack.c.b16 %v2502, %v2498
    %v2547 = vpack.c.b16 %v2507, %v2503
    %v2548 = vpack.c.b16 %v2508, %v2504
    %v2549 = vpack.c.b16 %v2509, %v2505
    %v2550 = vpack.c.b16 %v2510, %v2506
    %v2551 = vpack.c.b16 %v2515, %v2511
    %v2552 = vpack.c.b16 %v2516, %v2512
    %v2553 = vpack.c.b16 %v2517, %v2513
    %v2554 = vpack.c.b16 %v2518, %v2514
    %v2555 = vpack.c.b16 %v2523, %v2519
    %v2556 = vpack.c.b16 %v2524, %v2520
    %v2557 = vpack.c.b16 %v2525, %v2521
    %v2558 = vpack.c.b16 %v2526, %v2522
    %2591 = vmatpush.bf16.msra.mxu0 %v2555
    %2592 = vmatpush.bf16.msra.mxu0 %v2551
    %2593 = vmatpush.bf16.msra.mxu0 %v2547
    %2594 = vmatpush.bf16.msra.mxu0 %v2543
    %2595 = vmatpush.bf16.msra.mxu0 %v2539
    %2596 = vmatpush.bf16.msra.mxu0 %v2535
    %2597 = vmatpush.bf16.msra.mxu0 %v2531
    %2598 = vmatpush.bf16.msra.mxu0 %v2527
    %2599 = vmatmul.bf16.gmra.mxu0 %v1573
    %v2600 = vpop.f32.mrf.mxu0
    %v2601 = vadd.f32 %v199, %v2600
    %v2602 = vpop.f32.mrf.mxu0
    %2603 = vdwg.mxu0
    %2604 = vmatpush.bf16.msra.mxu0 %v2556
    %2605 = vmatpush.bf16.msra.mxu0 %v2552
    %2606 = vmatpush.bf16.msra.mxu0 %v2548
    %2607 = vmatpush.bf16.msra.mxu0 %v2544
    %2608 = vmatpush.bf16.msra.mxu0 %v2540
    %2609 = vmatpush.bf16.msra.mxu0 %v2536
    %2610 = vmatpush.bf16.msra.mxu0 %v2532
    %2611 = vmatpush.bf16.msra.mxu0 %v2528
    %2612 = vmatmul.bf16.gmra.mxu0 %v1573
    %v2613 = vpop.f32.mrf.mxu0
    %v2614 = vadd.f32 %v200, %v2613
    %v2615 = vpop.f32.mrf.mxu0
    %2616 = vdwg.mxu0
    %2617 = vmatpush.bf16.msra.mxu0 %v2557
    %2618 = vmatpush.bf16.msra.mxu0 %v2553
    %2619 = vmatpush.bf16.msra.mxu0 %v2549
    %2620 = vmatpush.bf16.msra.mxu0 %v2545
    %2621 = vmatpush.bf16.msra.mxu0 %v2541
    %2622 = vmatpush.bf16.msra.mxu0 %v2537
    %2623 = vmatpush.bf16.msra.mxu0 %v2533
    %2624 = vmatpush.bf16.msra.mxu0 %v2529
    %2625 = vmatmul.bf16.gmra.mxu0 %v1573
    %v2626 = vpop.f32.mrf.mxu0
    %v2627 = vadd.f32 %v201, %v2626
    %v2628 = vpop.f32.mrf.mxu0
    %2629 = vdwg.mxu0
    %2630 = vmatpush.bf16.msra.mxu0 %v2558
    %2631 = vmatpush.bf16.msra.mxu0 %v2554
    %2632 = vmatpush.bf16.msra.mxu0 %v2550
    %2633 = vmatpush.bf16.msra.mxu0 %v2546
    %2634 = vmatpush.bf16.msra.mxu0 %v2542
    %2635 = vmatpush.bf16.msra.mxu0 %v2538
    %2636 = vmatpush.bf16.msra.mxu0 %v2534
    %2637 = vmatpush.bf16.msra.mxu0 %v2530
    %2638 = vmatmul.bf16.gmra.mxu0 %v1573
    %v2639 = vpop.f32.mrf.mxu0
    %v2640 = vadd.f32 %v202, %v2639
    %v2641 = vpop.f32.mrf.mxu0
    %2642 = vdwg.mxu0
    %v2643 = vpack.c.bf16 %v2430, %v2430
    %v2644 = vld [vmem:[#allocation13] sm:$0xff]
    %v2645 = vld [vmem:[#allocation13 + $0x8] sm:$0xff]
    %v2646 = vld [vmem:[#allocation13 + $0x10] sm:$0xff]
    %v2647 = vld [vmem:[#allocation13 + $0x18] sm:$0xff]
    %v2648 = vld [vmem:[#allocation13 + $0x20] sm:$0xff]
    %v2649 = vld [vmem:[#allocation13 + $0x28] sm:$0xff]
    %v2650 = vld [vmem:[#allocation13 + $0x30] sm:$0xff]
    %v2651 = vld [vmem:[#allocation13 + $0x38] sm:$0xff]
    %v2652 = vld [vmem:[#allocation13 + $0x40] sm:$0xff]
    %v2653 = vld [vmem:[#allocation13 + $0x48] sm:$0xff]
    %v2654 = vld [vmem:[#allocation13 + $0x50] sm:$0xff]
    %v2655 = vld [vmem:[#allocation13 + $0x58] sm:$0xff]
    %v2656 = vld [vmem:[#allocation13 + $0x60] sm:$0xff]
    %v2657 = vld [vmem:[#allocation13 + $0x68] sm:$0xff]
    %v2658 = vld [vmem:[#allocation13 + $0x70] sm:$0xff]
    %v2659 = vld [vmem:[#allocation13 + $0x78] sm:$0xff]
    %v2660 = vld [vmem:[#allocation13 + $0x80] sm:$0xff]
    %v2661 = vld [vmem:[#allocation13 + $0x88] sm:$0xff]
    %v2662 = vld [vmem:[#allocation13 + $0x90] sm:$0xff]
    %v2663 = vld [vmem:[#allocation13 + $0x98] sm:$0xff]
    %v2664 = vld [vmem:[#allocation13 + $0xa0] sm:$0xff]
    %v2665 = vld [vmem:[#allocation13 + $0xa8] sm:$0xff]
    %v2666 = vld [vmem:[#allocation13 + $0xb0] sm:$0xff]
    %v2667 = vld [vmem:[#allocation13 + $0xb8] sm:$0xff]
    %v2668 = vld [vmem:[#allocation13 + $0xc0] sm:$0xff]
    %v2669 = vld [vmem:[#allocation13 + $0xc8] sm:$0xff]
    %v2670 = vld [vmem:[#allocation13 + $0xd0] sm:$0xff]
    %v2671 = vld [vmem:[#allocation13 + $0xd8] sm:$0xff]
    %v2672 = vld [vmem:[#allocation13 + $0xe0] sm:$0xff]
    %v2673 = vld [vmem:[#allocation13 + $0xe8] sm:$0xff]
    %v2674 = vld [vmem:[#allocation13 + $0xf0] sm:$0xff]
    %v2675 = vld [vmem:[#allocation13 + $0xf8] sm:$0xff]
    %v2708 = vunpack.c.l.b16 %v2644
    %v2709 = vunpack.c.h.b16 %v2644
    %v2710 = vunpack.c.l.b16 %v2645
    %v2711 = vunpack.c.h.b16 %v2645
    %v2712 = vunpack.c.l.b16 %v2646
    %v2713 = vunpack.c.h.b16 %v2646
    %v2714 = vunpack.c.l.b16 %v2647
    %v2715 = vunpack.c.h.b16 %v2647
    %v2716 = vunpack.c.l.b16 %v2648
    %v2717 = vunpack.c.h.b16 %v2648
    %v2718 = vunpack.c.l.b16 %v2649
    %v2719 = vunpack.c.h.b16 %v2649
    %v2720 = vunpack.c.l.b16 %v2650
    %v2721 = vunpack.c.h.b16 %v2650
    %v2722 = vunpack.c.l.b16 %v2651
    %v2723 = vunpack.c.h.b16 %v2651
    %v2724 = vunpack.c.l.b16 %v2652
    %v2725 = vunpack.c.h.b16 %v2652
    %v2726 = vunpack.c.l.b16 %v2653
    %v2727 = vunpack.c.h.b16 %v2653
    %v2728 = vunpack.c.l.b16 %v2654
    %v2729 = vunpack.c.h.b16 %v2654
    %v2730 = vunpack.c.l.b16 %v2655
    %v2731 = vunpack.c.h.b16 %v2655
    %v2732 = vunpack.c.l.b16 %v2656
    %v2733 = vunpack.c.h.b16 %v2656
    %v2734 = vunpack.c.l.b16 %v2657
    %v2735 = vunpack.c.h.b16 %v2657
    %v2736 = vunpack.c.l.b16 %v2658
    %v2737 = vunpack.c.h.b16 %v2658
    %v2738 = vunpack.c.l.b16 %v2659
    %v2739 = vunpack.c.h.b16 %v2659
    %v2740 = vunpack.c.l.b16 %v2660
    %v2741 = vunpack.c.h.b16 %v2660
    %v2742 = vunpack.c.l.b16 %v2661
    %v2743 = vunpack.c.h.b16 %v2661
    %v2744 = vunpack.c.l.b16 %v2662
    %v2745 = vunpack.c.h.b16 %v2662
    %v2746 = vunpack.c.l.b16 %v2663
    %v2747 = vunpack.c.h.b16 %v2663
    %v2748 = vunpack.c.l.b16 %v2664
    %v2749 = vunpack.c.h.b16 %v2664
    %v2750 = vunpack.c.l.b16 %v2665
    %v2751 = vunpack.c.h.b16 %v2665
    %v2752 = vunpack.c.l.b16 %v2666
    %v2753 = vunpack.c.h.b16 %v2666
    %v2754 = vunpack.c.l.b16 %v2667
    %v2755 = vunpack.c.h.b16 %v2667
    %v2756 = vunpack.c.l.b16 %v2668
    %v2757 = vunpack.c.h.b16 %v2668
    %v2758 = vunpack.c.l.b16 %v2669
    %v2759 = vunpack.c.h.b16 %v2669
    %v2760 = vunpack.c.l.b16 %v2670
    %v2761 = vunpack.c.h.b16 %v2670
    %v2762 = vunpack.c.l.b16 %v2671
    %v2763 = vunpack.c.h.b16 %v2671
    %v2764 = vunpack.c.l.b16 %v2672
    %v2765 = vunpack.c.h.b16 %v2672
    %v2766 = vunpack.c.l.b16 %v2673
    %v2767 = vunpack.c.h.b16 %v2673
    %v2768 = vunpack.c.l.b16 %v2674
    %v2769 = vunpack.c.h.b16 %v2674
    %v2770 = vunpack.c.l.b16 %v2675
    %v2771 = vunpack.c.h.b16 %v2675
    %v2772 = vpack.c.b16 %v2712, %v2708
    %v2773 = vpack.c.b16 %v2713, %v2709
    %v2774 = vpack.c.b16 %v2714, %v2710
    %v2775 = vpack.c.b16 %v2715, %v2711
    %v2776 = vpack.c.b16 %v2720, %v2716
    %v2777 = vpack.c.b16 %v2721, %v2717
    %v2778 = vpack.c.b16 %v2722, %v2718
    %v2779 = vpack.c.b16 %v2723, %v2719
    %v2780 = vpack.c.b16 %v2728, %v2724
    %v2781 = vpack.c.b16 %v2729, %v2725
    %v2782 = vpack.c.b16 %v2730, %v2726
    %v2783 = vpack.c.b16 %v2731, %v2727
    %v2784 = vpack.c.b16 %v2736, %v2732
    %v2785 = vpack.c.b16 %v2737, %v2733
    %v2786 = vpack.c.b16 %v2738, %v2734
    %v2787 = vpack.c.b16 %v2739, %v2735
    %v2788 = vpack.c.b16 %v2744, %v2740
    %v2789 = vpack.c.b16 %v2745, %v2741
    %v2790 = vpack.c.b16 %v2746, %v2742
    %v2791 = vpack.c.b16 %v2747, %v2743
    %v2792 = vpack.c.b16 %v2752, %v2748
    %v2793 = vpack.c.b16 %v2753, %v2749
    %v2794 = vpack.c.b16 %v2754, %v2750
    %v2795 = vpack.c.b16 %v2755, %v2751
    %v2796 = vpack.c.b16 %v2760, %v2756
    %v2797 = vpack.c.b16 %v2761, %v2757
    %v2798 = vpack.c.b16 %v2762, %v2758
    %v2799 = vpack.c.b16 %v2763, %v2759
    %v2800 = vpack.c.b16 %v2768, %v2764
    %v2801 = vpack.c.b16 %v2769, %v2765
    %v2802 = vpack.c.b16 %v2770, %v2766
    %v2803 = vpack.c.b16 %v2771, %v2767
    %2836 = vmatpush.bf16.msra.mxu0 %v2800
    %2837 = vmatpush.bf16.msra.mxu0 %v2796
    %2838 = vmatpush.bf16.msra.mxu0 %v2792
    %2839 = vmatpush.bf16.msra.mxu0 %v2788
    %2840 = vmatpush.bf16.msra.mxu0 %v2784
    %2841 = vmatpush.bf16.msra.mxu0 %v2780
    %2842 = vmatpush.bf16.msra.mxu0 %v2776
    %2843 = vmatpush.bf16.msra.mxu0 %v2772
    %2844 = vmatmul.bf16.gmra.mxu0 %v2643
    %v2845 = vpop.f32.mrf.mxu0
    %v2846 = vadd.f32 0.0, %v2845
    %v2847 = vpop.f32.mrf.mxu0
    %2848 = vdwg.mxu0
    %2849 = vmatpush.bf16.msra.mxu0 %v2801
    %2850 = vmatpush.bf16.msra.mxu0 %v2797
    %2851 = vmatpush.bf16.msra.mxu0 %v2793
    %2852 = vmatpush.bf16.msra.mxu0 %v2789
    %2853 = vmatpush.bf16.msra.mxu0 %v2785
    %2854 = vmatpush.bf16.msra.mxu0 %v2781
    %2855 = vmatpush.bf16.msra.mxu0 %v2777
    %2856 = vmatpush.bf16.msra.mxu0 %v2773
    %2857 = vmatmul.bf16.gmra.mxu0 %v2643
    %v2858 = vpop.f32.mrf.mxu0
    %v2859 = vadd.f32 0.0, %v2858
    %v2860 = vpop.f32.mrf.mxu0
    %2861 = vdwg.mxu0
    %2862 = vmatpush.bf16.msra.mxu0 %v2802
    %2863 = vmatpush.bf16.msra.mxu0 %v2798
    %2864 = vmatpush.bf16.msra.mxu0 %v2794
    %2865 = vmatpush.bf16.msra.mxu0 %v2790
    %2866 = vmatpush.bf16.msra.mxu0 %v2786
    %2867 = vmatpush.bf16.msra.mxu0 %v2782
    %2868 = vmatpush.bf16.msra.mxu0 %v2778
    %2869 = vmatpush.bf16.msra.mxu0 %v2774
    %2870 = vmatmul.bf16.gmra.mxu0 %v2643
    %v2871 = vpop.f32.mrf.mxu0
    %v2872 = vadd.f32 0.0, %v2871
    %v2873 = vpop.f32.mrf.mxu0
    %2874 = vdwg.mxu0
    %2875 = vmatpush.bf16.msra.mxu0 %v2803
    %2876 = vmatpush.bf16.msra.mxu0 %v2799
    %2877 = vmatpush.bf16.msra.mxu0 %v2795
    %2878 = vmatpush.bf16.msra.mxu0 %v2791
    %2879 = vmatpush.bf16.msra.mxu0 %v2787
    %2880 = vmatpush.bf16.msra.mxu0 %v2783
    %2881 = vmatpush.bf16.msra.mxu0 %v2779
    %2882 = vmatpush.bf16.msra.mxu0 %v2775
    %2883 = vmatmul.bf16.gmra.mxu0 %v2643
    %v2884 = vpop.f32.mrf.mxu0
    %v2885 = vadd.f32 0.0, %v2884
    %v2886 = vpop.f32.mrf.mxu0
    %2887 = vdwg.mxu0
    %v2888 = vadd.f32 %v2601, %v2846
    %v2889 = vadd.f32 %v2614, %v2859
    %v2890 = vadd.f32 %v2627, %v2872
    %v2891 = vadd.f32 %v2640, %v2885
    %v2892 = vxor.u32 %v2888, 2147483648
    %v2893 = vxor.u32 %v2889, 2147483648
    %v2894 = vxor.u32 %v2890, 2147483648
    %v2895 = vmul.f32 %v2892, 1.442695
    %v2896 = vpow.pop %v2895
    %v2897 = vmul.f32 %v2893, 1.442695
    %v2898 = vpow.pop %v2897
    %v2899 = vmul.f32 %v2894, 1.442695
    %v2900 = vpow.pop %v2899
    %v2901 = vadd.f32 %v2896, 1.0
    %v2902 = vadd.f32 %v2898, 1.0
    %v2903 = vadd.f32 %v2900, 1.0
    %v2904 = vrcp.pop %v2901
    %v2905 = vmul.f32 %v2901, %v2904
    %v2906 = vsub.f32 1.0, %v2905
    %v2907 = vmul.f32 %v2904, %v2906
    %v2908 = vadd.f32 %v2904, %v2907
    %vm2909 = vweird.f32 %v2901
    %vm2910 = vweird.f32 %v2904
    %vm2911 = vmor %vm2909, %vm2910
    %v2912 = vsel %vm2911, %v2904, %v2908
    %v2913 = vand.u32 2147483647, %v2901
    %vm2914 = vcmp.eq.f32.partialorder %v2913, 8.507059e+37
    %v2915 = vand.u32 %v2901, 2147483648
    %v2916 = vor.u32 1.1754944e-38, %v2915
    %v2917 = vsel %vm2914, %v2916, %v2912
    %v2918 = vmul.f32 1.0, %v2917
    %v2919 = vrcp.pop %v2902
    %v2920 = vmul.f32 %v2902, %v2919
    %v2921 = vsub.f32 1.0, %v2920
    %v2922 = vmul.f32 %v2919, %v2921
    %v2923 = vadd.f32 %v2919, %v2922
    %vm2924 = vweird.f32 %v2902
    %vm2925 = vweird.f32 %v2919
    %vm2926 = vmor %vm2924, %vm2925
    %v2927 = vsel %vm2926, %v2919, %v2923
    %v2928 = vand.u32 2147483647, %v2902
    %vm2929 = vcmp.eq.f32.partialorder %v2928, 8.507059e+37
    %v2930 = vand.u32 %v2902, 2147483648
    %v2931 = vor.u32 1.1754944e-38, %v2930
    %v2932 = vsel %vm2929, %v2931, %v2927
    %v2933 = vmul.f32 1.0, %v2932
    %v2934 = vrcp.pop %v2903
    %v2935 = vmul.f32 %v2903, %v2934
    %v2936 = vsub.f32 1.0, %v2935
    %v2937 = vmul.f32 %v2934, %v2936
    %v2938 = vadd.f32 %v2934, %v2937
    %vm2939 = vweird.f32 %v2903
    %vm2940 = vweird.f32 %v2934
    %vm2941 = vmor %vm2939, %vm2940
    %v2942 = vsel %vm2941, %v2934, %v2938
    %v2943 = vand.u32 2147483647, %v2903
    %vm2944 = vcmp.eq.f32.partialorder %v2943, 8.507059e+37
    %v2945 = vand.u32 %v2903, 2147483648
    %v2946 = vor.u32 1.1754944e-38, %v2945
    %v2947 = vsel %vm2944, %v2946, %v2942
    %v2948 = vmul.f32 1.0, %v2947
    %v2949 = vtanh.pop %v2891
    %v2950 = vmul.f32 %v2933, %v1509
    %v2951 = vmul.f32 %v2918, %v2949
    %v2952 = vadd.f32 %v2950, %v2951
    %v2953 = vtanh.pop %v2952
    %v2954 = vmul.f32 %v2948, %v2953
    %v2971 = vunpack.c.l.b16 %v2095
    %v2972 = vunpack.c.l.b16 %v2096
    %v2973 = vunpack.c.l.b16 %v2097
    %v2974 = vunpack.c.l.b16 %v2098
    %v2975 = vunpack.c.l.b16 %v2099
    %v2976 = vunpack.c.l.b16 %v2100
    %v2977 = vunpack.c.l.b16 %v2101
    %v2978 = vunpack.c.l.b16 %v2102
    %v2979 = vunpack.c.l.b16 %v2103
    %v2980 = vunpack.c.l.b16 %v2104
    %v2981 = vunpack.c.l.b16 %v2105
    %v2982 = vunpack.c.l.b16 %v2106
    %v2983 = vunpack.c.l.b16 %v2107
    %v2984 = vunpack.c.l.b16 %v2108
    %v2985 = vunpack.c.l.b16 %v2109
    %v2986 = vunpack.c.l.b16 %v2110
    %v2987 = vpack.c.b16 %v2972, %v2971
    %v2988 = vpack.c.b16 %v2974, %v2973
    %v2989 = vpack.c.b16 %v2976, %v2975
    %v2990 = vpack.c.b16 %v2978, %v2977
    %v2991 = vpack.c.b16 %v2980, %v2979
    %v2992 = vpack.c.b16 %v2982, %v2981
    %v2993 = vpack.c.b16 %v2984, %v2983
    %v2994 = vpack.c.b16 %v2986, %v2985
    %3003 = vmatpush.bf16.msra.mxu0 %v2994
    %3004 = vmatpush.bf16.msra.mxu0 %v2993
    %3005 = vmatpush.bf16.msra.mxu0 %v2992
    %3006 = vmatpush.bf16.msra.mxu0 %v2991
    %3007 = vmatpush.bf16.msra.mxu0 %v2990
    %3008 = vmatpush.bf16.msra.mxu0 %v2989
    %3009 = vmatpush.bf16.msra.mxu0 %v2988
    %3010 = vmatpush.bf16.msra.mxu0 %v2987
    %3011 = vmatmul.bf16.gmra.mxu0 %v2094
    %v3012 = vpop.f32.mrf.mxu0
    %v3013 = vadd.f32 %v209, %v3012
    %v3014 = vpop.f32.mrf.mxu0
    %3015 = vdwg.mxu0
    %v3016 = vpack.c.bf16 %v2954, %v2954
    %v3017 = vld [vmem:[#allocation16] sm:$0xf]
    %v3018 = vld [vmem:[#allocation16 + $0x4] sm:$0xf]
    %v3019 = vld [vmem:[#allocation16 + $0x8] sm:$0xf]
    %v3020 = vld [vmem:[#allocation16 + $0xc] sm:$0xf]
    %v3021 = vld [vmem:[#allocation16 + $0x10] sm:$0xf]
    %v3022 = vld [vmem:[#allocation16 + $0x14] sm:$0xf]
    %v3023 = vld [vmem:[#allocation16 + $0x18] sm:$0xf]
    %v3024 = vld [vmem:[#allocation16 + $0x1c] sm:$0xf]
    %v3025 = vld [vmem:[#allocation16 + $0x20] sm:$0xf]
    %v3026 = vld [vmem:[#allocation16 + $0x24] sm:$0xf]
    %v3027 = vld [vmem:[#allocation16 + $0x28] sm:$0xf]
    %v3028 = vld [vmem:[#allocation16 + $0x2c] sm:$0xf]
    %v3029 = vld [vmem:[#allocation16 + $0x30] sm:$0xf]
    %v3030 = vld [vmem:[#allocation16 + $0x34] sm:$0xf]
    %v3031 = vld [vmem:[#allocation16 + $0x38] sm:$0xf]
    %v3032 = vld [vmem:[#allocation16 + $0x3c] sm:$0xf]
    %v3049 = vunpack.c.l.b16 %v3017
    %v3050 = vunpack.c.l.b16 %v3018
    %v3051 = vunpack.c.l.b16 %v3019
    %v3052 = vunpack.c.l.b16 %v3020
    %v3053 = vunpack.c.l.b16 %v3021
    %v3054 = vunpack.c.l.b16 %v3022
    %v3055 = vunpack.c.l.b16 %v3023
    %v3056 = vunpack.c.l.b16 %v3024
    %v3057 = vunpack.c.l.b16 %v3025
    %v3058 = vunpack.c.l.b16 %v3026
    %v3059 = vunpack.c.l.b16 %v3027
    %v3060 = vunpack.c.l.b16 %v3028
    %v3061 = vunpack.c.l.b16 %v3029
    %v3062 = vunpack.c.l.b16 %v3030
    %v3063 = vunpack.c.l.b16 %v3031
    %v3064 = vunpack.c.l.b16 %v3032
    %v3065 = vpack.c.b16 %v3050, %v3049
    %v3066 = vpack.c.b16 %v3052, %v3051
    %v3067 = vpack.c.b16 %v3054, %v3053
    %v3068 = vpack.c.b16 %v3056, %v3055
    %v3069 = vpack.c.b16 %v3058, %v3057
    %v3070 = vpack.c.b16 %v3060, %v3059
    %v3071 = vpack.c.b16 %v3062, %v3061
    %v3072 = vpack.c.b16 %v3064, %v3063
    %3081 = vmatpush.bf16.msra.mxu0 %v3072
    %3082 = vmatpush.bf16.msra.mxu0 %v3071
    %3083 = vmatpush.bf16.msra.mxu0 %v3070
    %3084 = vmatpush.bf16.msra.mxu0 %v3069
    %3085 = vmatpush.bf16.msra.mxu0 %v3068
    %3086 = vmatpush.bf16.msra.mxu0 %v3067
    %3087 = vmatpush.bf16.msra.mxu0 %v3066
    %3088 = vmatpush.bf16.msra.mxu0 %v3065
    %3089 = vmatmul.bf16.gmra.mxu0 %v3016
    %v3090 = vpop.f32.mrf.mxu0
    %v3091 = vadd.f32 0.0, %v3090
    %v3092 = vpop.f32.mrf.mxu0
    %3093 = vdwg.mxu0
    %v3094 = vadd.f32 %v3013, %v3091
    %s3095 = scalar_lea.vmem [#allocation19], 8
    %3096 = vst [vmem:[%s3095] sm:$0xff] %v3094
    %v3097 = vld [vmem:[#allocation11] sm:$0xff]
    %v3098 = vld [vmem:[#allocation11 + $0x8] sm:$0xff]
    %v3099 = vld [vmem:[#allocation11 + $0x10] sm:$0xff]
    %v3100 = vld [vmem:[#allocation11 + $0x18] sm:$0xff]
    %v3101 = vld [vmem:[#allocation11 + $0x20] sm:$0xff]
    %v3102 = vld [vmem:[#allocation11 + $0x28] sm:$0xff]
    %v3103 = vld [vmem:[#allocation11 + $0x30] sm:$0xff]
    %v3104 = vld [vmem:[#allocation11 + $0x38] sm:$0xff]
    %v3105 = vld [vmem:[#allocation11 + $0x40] sm:$0xff]
    %v3106 = vld [vmem:[#allocation11 + $0x48] sm:$0xff]
    %v3107 = vld [vmem:[#allocation11 + $0x50] sm:$0xff]
    %v3108 = vld [vmem:[#allocation11 + $0x58] sm:$0xff]
    %v3109 = vld [vmem:[#allocation11 + $0x60] sm:$0xff]
    %v3110 = vld [vmem:[#allocation11 + $0x68] sm:$0xff]
    %v3111 = vld [vmem:[#allocation11 + $0x70] sm:$0xff]
    %v3112 = vld [vmem:[#allocation11 + $0x78] sm:$0xff]
    %v3113 = vld [vmem:[#allocation11 + $0x80] sm:$0xff]
    %v3114 = vld [vmem:[#allocation11 + $0x88] sm:$0xff]
    %v3115 = vld [vmem:[#allocation11 + $0x90] sm:$0xff]
    %v3116 = vld [vmem:[#allocation11 + $0x98] sm:$0xff]
    %v3117 = vld [vmem:[#allocation11 + $0xa0] sm:$0xff]
    %v3118 = vld [vmem:[#allocation11 + $0xa8] sm:$0xff]
    %v3119 = vld [vmem:[#allocation11 + $0xb0] sm:$0xff]
    %v3120 = vld [vmem:[#allocation11 + $0xb8] sm:$0xff]
    %v3121 = vld [vmem:[#allocation11 + $0xc0] sm:$0xff]
    %v3122 = vld [vmem:[#allocation11 + $0xc8] sm:$0xff]
    %v3123 = vld [vmem:[#allocation11 + $0xd0] sm:$0xff]
    %v3124 = vld [vmem:[#allocation11 + $0xd8] sm:$0xff]
    %v3125 = vld [vmem:[#allocation11 + $0xe0] sm:$0xff]
    %v3126 = vld [vmem:[#allocation11 + $0xe8] sm:$0xff]
    %v3127 = vld [vmem:[#allocation11 + $0xf0] sm:$0xff]
    %v3128 = vld [vmem:[#allocation11 + $0xf8] sm:$0xff]
    %v3161 = vunpack.c.l.b16 %v3097
    %v3162 = vunpack.c.h.b16 %v3097
    %v3163 = vunpack.c.l.b16 %v3098
    %v3164 = vunpack.c.h.b16 %v3098
    %v3165 = vunpack.c.l.b16 %v3099
    %v3166 = vunpack.c.h.b16 %v3099
    %v3167 = vunpack.c.l.b16 %v3100
    %v3168 = vunpack.c.h.b16 %v3100
    %v3169 = vunpack.c.l.b16 %v3101
    %v3170 = vunpack.c.h.b16 %v3101
    %v3171 = vunpack.c.l.b16 %v3102
    %v3172 = vunpack.c.h.b16 %v3102
    %v3173 = vunpack.c.l.b16 %v3103
    %v3174 = vunpack.c.h.b16 %v3103
    %v3175 = vunpack.c.l.b16 %v3104
    %v3176 = vunpack.c.h.b16 %v3104
    %v3177 = vunpack.c.l.b16 %v3105
    %v3178 = vunpack.c.h.b16 %v3105
    %v3179 = vunpack.c.l.b16 %v3106
    %v3180 = vunpack.c.h.b16 %v3106
    %v3181 = vunpack.c.l.b16 %v3107
    %v3182 = vunpack.c.h.b16 %v3107
    %v3183 = vunpack.c.l.b16 %v3108
    %v3184 = vunpack.c.h.b16 %v3108
    %v3185 = vunpack.c.l.b16 %v3109
    %v3186 = vunpack.c.h.b16 %v3109
    %v3187 = vunpack.c.l.b16 %v3110
    %v3188 = vunpack.c.h.b16 %v3110
    %v3189 = vunpack.c.l.b16 %v3111
    %v3190 = vunpack.c.h.b16 %v3111
    %v3191 = vunpack.c.l.b16 %v3112
    %v3192 = vunpack.c.h.b16 %v3112
    %v3193 = vunpack.c.l.b16 %v3113
    %v3194 = vunpack.c.h.b16 %v3113
    %v3195 = vunpack.c.l.b16 %v3114
    %v3196 = vunpack.c.h.b16 %v3114
    %v3197 = vunpack.c.l.b16 %v3115
    %v3198 = vunpack.c.h.b16 %v3115
    %v3199 = vunpack.c.l.b16 %v3116
    %v3200 = vunpack.c.h.b16 %v3116
    %v3201 = vunpack.c.l.b16 %v3117
    %v3202 = vunpack.c.h.b16 %v3117
    %v3203 = vunpack.c.l.b16 %v3118
    %v3204 = vunpack.c.h.b16 %v3118
    %v3205 = vunpack.c.l.b16 %v3119
    %v3206 = vunpack.c.h.b16 %v3119
    %v3207 = vunpack.c.l.b16 %v3120
    %v3208 = vunpack.c.h.b16 %v3120
    %v3209 = vunpack.c.l.b16 %v3121
    %v3210 = vunpack.c.h.b16 %v3121
    %v3211 = vunpack.c.l.b16 %v3122
    %v3212 = vunpack.c.h.b16 %v3122
    %v3213 = vunpack.c.l.b16 %v3123
    %v3214 = vunpack.c.h.b16 %v3123
    %v3215 = vunpack.c.l.b16 %v3124
    %v3216 = vunpack.c.h.b16 %v3124
    %v3217 = vunpack.c.l.b16 %v3125
    %v3218 = vunpack.c.h.b16 %v3125
    %v3219 = vunpack.c.l.b16 %v3126
    %v3220 = vunpack.c.h.b16 %v3126
    %v3221 = vunpack.c.l.b16 %v3127
    %v3222 = vunpack.c.h.b16 %v3127
    %v3223 = vunpack.c.l.b16 %v3128
    %v3224 = vunpack.c.h.b16 %v3128
    %v3225 = vpack.c.b16 %v3165, %v3161
    %v3226 = vpack.c.b16 %v3166, %v3162
    %v3227 = vpack.c.b16 %v3167, %v3163
    %v3228 = vpack.c.b16 %v3168, %v3164
    %v3229 = vpack.c.b16 %v3173, %v3169
    %v3230 = vpack.c.b16 %v3174, %v3170
    %v3231 = vpack.c.b16 %v3175, %v3171
    %v3232 = vpack.c.b16 %v3176, %v3172
    %v3233 = vpack.c.b16 %v3181, %v3177
    %v3234 = vpack.c.b16 %v3182, %v3178
    %v3235 = vpack.c.b16 %v3183, %v3179
    %v3236 = vpack.c.b16 %v3184, %v3180
    %v3237 = vpack.c.b16 %v3189, %v3185
    %v3238 = vpack.c.b16 %v3190, %v3186
    %v3239 = vpack.c.b16 %v3191, %v3187
    %v3240 = vpack.c.b16 %v3192, %v3188
    %v3241 = vpack.c.b16 %v3197, %v3193
    %v3242 = vpack.c.b16 %v3198, %v3194
    %v3243 = vpack.c.b16 %v3199, %v3195
    %v3244 = vpack.c.b16 %v3200, %v3196
    %v3245 = vpack.c.b16 %v3205, %v3201
    %v3246 = vpack.c.b16 %v3206, %v3202
    %v3247 = vpack.c.b16 %v3207, %v3203
    %v3248 = vpack.c.b16 %v3208, %v3204
    %v3249 = vpack.c.b16 %v3213, %v3209
    %v3250 = vpack.c.b16 %v3214, %v3210
    %v3251 = vpack.c.b16 %v3215, %v3211
    %v3252 = vpack.c.b16 %v3216, %v3212
    %v3253 = vpack.c.b16 %v3221, %v3217
    %v3254 = vpack.c.b16 %v3222, %v3218
    %v3255 = vpack.c.b16 %v3223, %v3219
    %v3256 = vpack.c.b16 %v3224, %v3220
    %3289 = vmatpush.bf16.msra.mxu0 %v3253
    %3290 = vmatpush.bf16.msra.mxu0 %v3249
    %3291 = vmatpush.bf16.msra.mxu0 %v3245
    %3292 = vmatpush.bf16.msra.mxu0 %v3241
    %3293 = vmatpush.bf16.msra.mxu0 %v3237
    %3294 = vmatpush.bf16.msra.mxu0 %v3233
    %3295 = vmatpush.bf16.msra.mxu0 %v3229
    %3296 = vmatpush.bf16.msra.mxu0 %v3225
    %3297 = vmatmul.bf16.gmra.mxu0 %v2643
    %v3298 = vpop.f32.mrf.mxu0
    %v3299 = vadd.f32 0.0, %v3298
    %v3300 = vpop.f32.mrf.mxu0
    %3301 = vdwg.mxu0
    %3302 = vmatpush.bf16.msra.mxu0 %v3254
    %3303 = vmatpush.bf16.msra.mxu0 %v3250
    %3304 = vmatpush.bf16.msra.mxu0 %v3246
    %3305 = vmatpush.bf16.msra.mxu0 %v3242
    %3306 = vmatpush.bf16.msra.mxu0 %v3238
    %3307 = vmatpush.bf16.msra.mxu0 %v3234
    %3308 = vmatpush.bf16.msra.mxu0 %v3230
    %3309 = vmatpush.bf16.msra.mxu0 %v3226
    %3310 = vmatmul.bf16.gmra.mxu0 %v2643
    %v3311 = vpop.f32.mrf.mxu0
    %v3312 = vadd.f32 0.0, %v3311
    %v3313 = vpop.f32.mrf.mxu0
    %3314 = vdwg.mxu0
    %3315 = vmatpush.bf16.msra.mxu0 %v3255
    %3316 = vmatpush.bf16.msra.mxu0 %v3251
    %3317 = vmatpush.bf16.msra.mxu0 %v3247
    %3318 = vmatpush.bf16.msra.mxu0 %v3243
    %3319 = vmatpush.bf16.msra.mxu0 %v3239
    %3320 = vmatpush.bf16.msra.mxu0 %v3235
    %3321 = vmatpush.bf16.msra.mxu0 %v3231
    %3322 = vmatpush.bf16.msra.mxu0 %v3227
    %3323 = vmatmul.bf16.gmra.mxu0 %v2643
    %v3324 = vpop.f32.mrf.mxu0
    %v3325 = vadd.f32 0.0, %v3324
    %v3326 = vpop.f32.mrf.mxu0
    %3327 = vdwg.mxu0
    %3328 = vmatpush.bf16.msra.mxu0 %v3256
    %3329 = vmatpush.bf16.msra.mxu0 %v3252
    %3330 = vmatpush.bf16.msra.mxu0 %v3248
    %3331 = vmatpush.bf16.msra.mxu0 %v3244
    %3332 = vmatpush.bf16.msra.mxu0 %v3240
    %3333 = vmatpush.bf16.msra.mxu0 %v3236
    %3334 = vmatpush.bf16.msra.mxu0 %v3232
    %3335 = vmatpush.bf16.msra.mxu0 %v3228
    %3336 = vmatmul.bf16.gmra.mxu0 %v2643
    %v3337 = vpop.f32.mrf.mxu0
    %v3338 = vadd.f32 0.0, %v3337
    %v3339 = vpop.f32.mrf.mxu0
    %3340 = vdwg.mxu0
    %v3341 = vld [vmem:[#allocation14] sm:$0xff]
    %v3342 = vld [vmem:[#allocation14 + $0x8] sm:$0xff]
    %v3343 = vld [vmem:[#allocation14 + $0x10] sm:$0xff]
    %v3344 = vld [vmem:[#allocation14 + $0x18] sm:$0xff]
    %v3345 = vld [vmem:[#allocation14 + $0x20] sm:$0xff]
    %v3346 = vld [vmem:[#allocation14 + $0x28] sm:$0xff]
    %v3347 = vld [vmem:[#allocation14 + $0x30] sm:$0xff]
    %v3348 = vld [vmem:[#allocation14 + $0x38] sm:$0xff]
    %v3349 = vld [vmem:[#allocation14 + $0x40] sm:$0xff]
    %v3350 = vld [vmem:[#allocation14 + $0x48] sm:$0xff]
    %v3351 = vld [vmem:[#allocation14 + $0x50] sm:$0xff]
    %v3352 = vld [vmem:[#allocation14 + $0x58] sm:$0xff]
    %v3353 = vld [vmem:[#allocation14 + $0x60] sm:$0xff]
    %v3354 = vld [vmem:[#allocation14 + $0x68] sm:$0xff]
    %v3355 = vld [vmem:[#allocation14 + $0x70] sm:$0xff]
    %v3356 = vld [vmem:[#allocation14 + $0x78] sm:$0xff]
    %v3357 = vld [vmem:[#allocation14 + $0x80] sm:$0xff]
    %v3358 = vld [vmem:[#allocation14 + $0x88] sm:$0xff]
    %v3359 = vld [vmem:[#allocation14 + $0x90] sm:$0xff]
    %v3360 = vld [vmem:[#allocation14 + $0x98] sm:$0xff]
    %v3361 = vld [vmem:[#allocation14 + $0xa0] sm:$0xff]
    %v3362 = vld [vmem:[#allocation14 + $0xa8] sm:$0xff]
    %v3363 = vld [vmem:[#allocation14 + $0xb0] sm:$0xff]
    %v3364 = vld [vmem:[#allocation14 + $0xb8] sm:$0xff]
    %v3365 = vld [vmem:[#allocation14 + $0xc0] sm:$0xff]
    %v3366 = vld [vmem:[#allocation14 + $0xc8] sm:$0xff]
    %v3367 = vld [vmem:[#allocation14 + $0xd0] sm:$0xff]
    %v3368 = vld [vmem:[#allocation14 + $0xd8] sm:$0xff]
    %v3369 = vld [vmem:[#allocation14 + $0xe0] sm:$0xff]
    %v3370 = vld [vmem:[#allocation14 + $0xe8] sm:$0xff]
    %v3371 = vld [vmem:[#allocation14 + $0xf0] sm:$0xff]
    %v3372 = vld [vmem:[#allocation14 + $0xf8] sm:$0xff]
    %v3373 = vld [vmem:[#allocation5] sm:$0xf]
    %v3374 = vld [vmem:[#allocation5 + $0x4] sm:$0xf]
    %v3375 = vld [vmem:[#allocation5 + $0x8] sm:$0xf]
    %v3376 = vld [vmem:[#allocation5 + $0xc] sm:$0xf]
    %v3377 = vld [vmem:[#allocation5 + $0x10] sm:$0xf]
    %v3378 = vld [vmem:[#allocation5 + $0x14] sm:$0xf]
    %v3379 = vld [vmem:[#allocation5 + $0x18] sm:$0xf]
    %v3380 = vld [vmem:[#allocation5 + $0x1c] sm:$0xf]
    %v3381 = vld [vmem:[#allocation5 + $0x20] sm:$0xf]
    %v3382 = vld [vmem:[#allocation5 + $0x24] sm:$0xf]
    %v3383 = vld [vmem:[#allocation5 + $0x28] sm:$0xf]
    %v3384 = vld [vmem:[#allocation5 + $0x2c] sm:$0xf]
    %v3385 = vld [vmem:[#allocation5 + $0x30] sm:$0xf]
    %v3386 = vld [vmem:[#allocation5 + $0x34] sm:$0xf]
    %v3387 = vld [vmem:[#allocation5 + $0x38] sm:$0xf]
    %v3388 = vld [vmem:[#allocation5 + $0x3c] sm:$0xf]
    %v3389 = vld [vmem:[#allocation8] sm:$0xff]
    %v3406 = vunpack.c.l.b16 %v3373
    %v3407 = vunpack.c.l.b16 %v3374
    %v3408 = vunpack.c.l.b16 %v3375
    %v3409 = vunpack.c.l.b16 %v3376
    %v3410 = vunpack.c.l.b16 %v3377
    %v3411 = vunpack.c.l.b16 %v3378
    %v3412 = vunpack.c.l.b16 %v3379
    %v3413 = vunpack.c.l.b16 %v3380
    %v3414 = vunpack.c.l.b16 %v3381
    %v3415 = vunpack.c.l.b16 %v3382
    %v3416 = vunpack.c.l.b16 %v3383
    %v3417 = vunpack.c.l.b16 %v3384
    %v3418 = vunpack.c.l.b16 %v3385
    %v3419 = vunpack.c.l.b16 %v3386
    %v3420 = vunpack.c.l.b16 %v3387
    %v3421 = vunpack.c.l.b16 %v3388
    %v3422 = vpack.c.b16 %v3407, %v3406
    %v3423 = vpack.c.b16 %v3409, %v3408
    %v3424 = vpack.c.b16 %v3411, %v3410
    %v3425 = vpack.c.b16 %v3413, %v3412
    %v3426 = vpack.c.b16 %v3415, %v3414
    %v3427 = vpack.c.b16 %v3417, %v3416
    %v3428 = vpack.c.b16 %v3419, %v3418
    %v3429 = vpack.c.b16 %v3421, %v3420
    %3438 = vmatpush.bf16.msra.mxu0 %v3429
    %3439 = vmatpush.bf16.msra.mxu0 %v3428
    %3440 = vmatpush.bf16.msra.mxu0 %v3427
    %3441 = vmatpush.bf16.msra.mxu0 %v3426
    %3442 = vmatpush.bf16.msra.mxu0 %v3425
    %3443 = vmatpush.bf16.msra.mxu0 %v3424
    %3444 = vmatpush.bf16.msra.mxu0 %v3423
    %3445 = vmatpush.bf16.msra.mxu0 %v3422
    %3446 = vmatmul.bf16.gmra.mxu0 %v3016
    %v3447 = vpop.f32.mrf.mxu0
    %v3448 = vadd.f32 %v3389, %v3447
    %v3449 = vpop.f32.mrf.mxu0
    %3450 = vdwg.mxu0
    %3451 = vmax.xlane.f32.xlu0 %v3448
    %v3452 = vpop.xlane.xlu0 %3451
    %v3453 = vsub.f32 %v3448, %v3452
    %v3454 = vmul.f32 %v3453, 1.442695
    %v3455 = vpow.pop %v3454
    %3456 = vadd.xlane.f32.xlu0 %v3455
    %v3457 = vpop.xlane.xlu0 %3456
    %v3458 = vrcp.pop %v3457
    %v3459 = vmul.f32 %v3455, %v3458
    %v3460 = vpack.c.bf16 %v3459, %v3459
    %v3461 = vld [vmem:[#allocation7] sm:$0xf]
    %v3462 = vld [vmem:[#allocation7 + $0x4] sm:$0xf]
    %v3463 = vld [vmem:[#allocation7 + $0x8] sm:$0xf]
    %v3464 = vld [vmem:[#allocation7 + $0xc] sm:$0xf]
    %v3465 = vld [vmem:[#allocation7 + $0x10] sm:$0xf]
    %v3466 = vld [vmem:[#allocation7 + $0x14] sm:$0xf]
    %v3467 = vld [vmem:[#allocation7 + $0x18] sm:$0xf]
    %v3468 = vld [vmem:[#allocation7 + $0x1c] sm:$0xf]
    %v3469 = vld [vmem:[#allocation7 + $0x20] sm:$0xf]
    %v3470 = vld [vmem:[#allocation7 + $0x24] sm:$0xf]
    %v3471 = vld [vmem:[#allocation7 + $0x28] sm:$0xf]
    %v3472 = vld [vmem:[#allocation7 + $0x2c] sm:$0xf]
    %v3473 = vld [vmem:[#allocation7 + $0x30] sm:$0xf]
    %v3474 = vld [vmem:[#allocation7 + $0x34] sm:$0xf]
    %v3475 = vld [vmem:[#allocation7 + $0x38] sm:$0xf]
    %v3476 = vld [vmem:[#allocation7 + $0x3c] sm:$0xf]
    %v3493 = vunpack.c.l.b16 %v3461
    %v3494 = vunpack.c.l.b16 %v3462
    %v3495 = vunpack.c.l.b16 %v3463
    %v3496 = vunpack.c.l.b16 %v3464
    %v3497 = vunpack.c.l.b16 %v3465
    %v3498 = vunpack.c.l.b16 %v3466
    %v3499 = vunpack.c.l.b16 %v3467
    %v3500 = vunpack.c.l.b16 %v3468
    %v3501 = vunpack.c.l.b16 %v3469
    %v3502 = vunpack.c.l.b16 %v3470
    %v3503 = vunpack.c.l.b16 %v3471
    %v3504 = vunpack.c.l.b16 %v3472
    %v3505 = vunpack.c.l.b16 %v3473
    %v3506 = vunpack.c.l.b16 %v3474
    %v3507 = vunpack.c.l.b16 %v3475
    %v3508 = vunpack.c.l.b16 %v3476
    %v3509 = vpack.c.b16 %v3494, %v3493
    %v3510 = vpack.c.b16 %v3496, %v3495
    %v3511 = vpack.c.b16 %v3498, %v3497
    %v3512 = vpack.c.b16 %v3500, %v3499
    %v3513 = vpack.c.b16 %v3502, %v3501
    %v3514 = vpack.c.b16 %v3504, %v3503
    %v3515 = vpack.c.b16 %v3506, %v3505
    %v3516 = vpack.c.b16 %v3508, %v3507
    %3525 = vmatpush.bf16.msra.mxu0 %v3516
    %3526 = vmatpush.bf16.msra.mxu0 %v3515
    %3527 = vmatpush.bf16.msra.mxu0 %v3514
    %3528 = vmatpush.bf16.msra.mxu0 %v3513
    %3529 = vmatpush.bf16.msra.mxu0 %v3512
    %3530 = vmatpush.bf16.msra.mxu0 %v3511
    %3531 = vmatpush.bf16.msra.mxu0 %v3510
    %3532 = vmatpush.bf16.msra.mxu0 %v3509
    %3533 = vmatmul.bf16.gmra.mxu0 %v3460
    %v3534 = vpop.f32.mrf.mxu0
    %v3535 = vadd.f32 0.0, %v3534
    %v3536 = vpop.f32.mrf.mxu0
    %3537 = vdwg.mxu0
    %v3538 = vpack.c.bf16 %v3535, %v3535
    %v3539 = vld [vmem:[#allocation17] sm:$0xf]
    %v3540 = vld [vmem:[#allocation17 + $0x4] sm:$0xf]
    %v3541 = vld [vmem:[#allocation17 + $0x8] sm:$0xf]
    %v3542 = vld [vmem:[#allocation17 + $0xc] sm:$0xf]
    %v3543 = vld [vmem:[#allocation17 + $0x10] sm:$0xf]
    %v3544 = vld [vmem:[#allocation17 + $0x14] sm:$0xf]
    %v3545 = vld [vmem:[#allocation17 + $0x18] sm:$0xf]
    %v3546 = vld [vmem:[#allocation17 + $0x1c] sm:$0xf]
    %v3547 = vld [vmem:[#allocation17 + $0x20] sm:$0xf]
    %v3548 = vld [vmem:[#allocation17 + $0x24] sm:$0xf]
    %v3549 = vld [vmem:[#allocation17 + $0x28] sm:$0xf]
    %v3550 = vld [vmem:[#allocation17 + $0x2c] sm:$0xf]
    %v3551 = vld [vmem:[#allocation17 + $0x30] sm:$0xf]
    %v3552 = vld [vmem:[#allocation17 + $0x34] sm:$0xf]
    %v3553 = vld [vmem:[#allocation17 + $0x38] sm:$0xf]
    %v3554 = vld [vmem:[#allocation17 + $0x3c] sm:$0xf]
    %s3555 = scalar_lea.vmem [#allocation2], 64
    %v3556 = vld [vmem:[%s3555] sm:$0xff]
    %v3557 = vld [vmem:[%s3555 + $0x8] sm:$0xff]
    %v3558 = vld [vmem:[%s3555 + $0x10] sm:$0xff]
    %v3559 = vld [vmem:[%s3555 + $0x18] sm:$0xff]
    %v3560 = vadd.f32 %v3556, %v3299
    %v3561 = vadd.f32 %v3557, %v3312
    %v3562 = vadd.f32 %v3558, %v3325
    %v3563 = vadd.f32 %v3559, %v3338
    %v3564 = vld [vmem:[#allocation10] sm:$0xff]
    %v3565 = vld [vmem:[#allocation10 + $0x8] sm:$0xff]
    %v3566 = vld [vmem:[#allocation10 + $0x10] sm:$0xff]
    %v3567 = vld [vmem:[#allocation10 + $0x18] sm:$0xff]
    %v3568 = vld [vmem:[#allocation10 + $0x20] sm:$0xff]
    %v3569 = vld [vmem:[#allocation10 + $0x28] sm:$0xff]
    %v3570 = vld [vmem:[#allocation10 + $0x30] sm:$0xff]
    %v3571 = vld [vmem:[#allocation10 + $0x38] sm:$0xff]
    %v3572 = vld [vmem:[#allocation10 + $0x40] sm:$0xff]
    %v3573 = vld [vmem:[#allocation10 + $0x48] sm:$0xff]
    %v3574 = vld [vmem:[#allocation10 + $0x50] sm:$0xff]
    %v3575 = vld [vmem:[#allocation10 + $0x58] sm:$0xff]
    %v3576 = vld [vmem:[#allocation10 + $0x60] sm:$0xff]
    %v3577 = vld [vmem:[#allocation10 + $0x68] sm:$0xff]
    %v3578 = vld [vmem:[#allocation10 + $0x70] sm:$0xff]
    %v3579 = vld [vmem:[#allocation10 + $0x78] sm:$0xff]
    %v3580 = vld [vmem:[#allocation10 + $0x80] sm:$0xff]
    %v3581 = vld [vmem:[#allocation10 + $0x88] sm:$0xff]
    %v3582 = vld [vmem:[#allocation10 + $0x90] sm:$0xff]
    %v3583 = vld [vmem:[#allocation10 + $0x98] sm:$0xff]
    %v3584 = vld [vmem:[#allocation10 + $0xa0] sm:$0xff]
    %v3585 = vld [vmem:[#allocation10 + $0xa8] sm:$0xff]
    %v3586 = vld [vmem:[#allocation10 + $0xb0] sm:$0xff]
    %v3587 = vld [vmem:[#allocation10 + $0xb8] sm:$0xff]
    %v3588 = vld [vmem:[#allocation10 + $0xc0] sm:$0xff]
    %v3589 = vld [vmem:[#allocation10 + $0xc8] sm:$0xff]
    %v3590 = vld [vmem:[#allocation10 + $0xd0] sm:$0xff]
    %v3591 = vld [vmem:[#allocation10 + $0xd8] sm:$0xff]
    %v3592 = vld [vmem:[#allocation10 + $0xe0] sm:$0xff]
    %v3593 = vld [vmem:[#allocation10 + $0xe8] sm:$0xff]
    %v3594 = vld [vmem:[#allocation10 + $0xf0] sm:$0xff]
    %v3595 = vld [vmem:[#allocation10 + $0xf8] sm:$0xff]
    %v3628 = vunpack.c.l.b16 %v3564
    %v3629 = vunpack.c.h.b16 %v3564
    %v3630 = vunpack.c.l.b16 %v3565
    %v3631 = vunpack.c.h.b16 %v3565
    %v3632 = vunpack.c.l.b16 %v3566
    %v3633 = vunpack.c.h.b16 %v3566
    %v3634 = vunpack.c.l.b16 %v3567
    %v3635 = vunpack.c.h.b16 %v3567
    %v3636 = vunpack.c.l.b16 %v3568
    %v3637 = vunpack.c.h.b16 %v3568
    %v3638 = vunpack.c.l.b16 %v3569
    %v3639 = vunpack.c.h.b16 %v3569
    %v3640 = vunpack.c.l.b16 %v3570
    %v3641 = vunpack.c.h.b16 %v3570
    %v3642 = vunpack.c.l.b16 %v3571
    %v3643 = vunpack.c.h.b16 %v3571
    %v3644 = vunpack.c.l.b16 %v3572
    %v3645 = vunpack.c.h.b16 %v3572
    %v3646 = vunpack.c.l.b16 %v3573
    %v3647 = vunpack.c.h.b16 %v3573
    %v3648 = vunpack.c.l.b16 %v3574
    %v3649 = vunpack.c.h.b16 %v3574
    %v3650 = vunpack.c.l.b16 %v3575
    %v3651 = vunpack.c.h.b16 %v3575
    %v3652 = vunpack.c.l.b16 %v3576
    %v3653 = vunpack.c.h.b16 %v3576
    %v3654 = vunpack.c.l.b16 %v3577
    %v3655 = vunpack.c.h.b16 %v3577
    %v3656 = vunpack.c.l.b16 %v3578
    %v3657 = vunpack.c.h.b16 %v3578
    %v3658 = vunpack.c.l.b16 %v3579
    %v3659 = vunpack.c.h.b16 %v3579
    %v3660 = vunpack.c.l.b16 %v3580
    %v3661 = vunpack.c.h.b16 %v3580
    %v3662 = vunpack.c.l.b16 %v3581
    %v3663 = vunpack.c.h.b16 %v3581
    %v3664 = vunpack.c.l.b16 %v3582
    %v3665 = vunpack.c.h.b16 %v3582
    %v3666 = vunpack.c.l.b16 %v3583
    %v3667 = vunpack.c.h.b16 %v3583
    %v3668 = vunpack.c.l.b16 %v3584
    %v3669 = vunpack.c.h.b16 %v3584
    %v3670 = vunpack.c.l.b16 %v3585
    %v3671 = vunpack.c.h.b16 %v3585
    %v3672 = vunpack.c.l.b16 %v3586
    %v3673 = vunpack.c.h.b16 %v3586
    %v3674 = vunpack.c.l.b16 %v3587
    %v3675 = vunpack.c.h.b16 %v3587
    %v3676 = vunpack.c.l.b16 %v3588
    %v3677 = vunpack.c.h.b16 %v3588
    %v3678 = vunpack.c.l.b16 %v3589
    %v3679 = vunpack.c.h.b16 %v3589
    %v3680 = vunpack.c.l.b16 %v3590
    %v3681 = vunpack.c.h.b16 %v3590
    %v3682 = vunpack.c.l.b16 %v3591
    %v3683 = vunpack.c.h.b16 %v3591
    %v3684 = vunpack.c.l.b16 %v3592
    %v3685 = vunpack.c.h.b16 %v3592
    %v3686 = vunpack.c.l.b16 %v3593
    %v3687 = vunpack.c.h.b16 %v3593
    %v3688 = vunpack.c.l.b16 %v3594
    %v3689 = vunpack.c.h.b16 %v3594
    %v3690 = vunpack.c.l.b16 %v3595
    %v3691 = vunpack.c.h.b16 %v3595
    %v3692 = vpack.c.b16 %v3632, %v3628
    %v3693 = vpack.c.b16 %v3633, %v3629
    %v3694 = vpack.c.b16 %v3634, %v3630
    %v3695 = vpack.c.b16 %v3635, %v3631
    %v3696 = vpack.c.b16 %v3640, %v3636
    %v3697 = vpack.c.b16 %v3641, %v3637
    %v3698 = vpack.c.b16 %v3642, %v3638
    %v3699 = vpack.c.b16 %v3643, %v3639
    %v3700 = vpack.c.b16 %v3648, %v3644
    %v3701 = vpack.c.b16 %v3649, %v3645
    %v3702 = vpack.c.b16 %v3650, %v3646
    %v3703 = vpack.c.b16 %v3651, %v3647
    %v3704 = vpack.c.b16 %v3656, %v3652
    %v3705 = vpack.c.b16 %v3657, %v3653
    %v3706 = vpack.c.b16 %v3658, %v3654
    %v3707 = vpack.c.b16 %v3659, %v3655
    %v3708 = vpack.c.b16 %v3664, %v3660
    %v3709 = vpack.c.b16 %v3665, %v3661
    %v3710 = vpack.c.b16 %v3666, %v3662
    %v3711 = vpack.c.b16 %v3667, %v3663
    %v3712 = vpack.c.b16 %v3672, %v3668
    %v3713 = vpack.c.b16 %v3673, %v3669
    %v3714 = vpack.c.b16 %v3674, %v3670
    %v3715 = vpack.c.b16 %v3675, %v3671
    %v3716 = vpack.c.b16 %v3680, %v3676
    %v3717 = vpack.c.b16 %v3681, %v3677
    %v3718 = vpack.c.b16 %v3682, %v3678
    %v3719 = vpack.c.b16 %v3683, %v3679
    %v3720 = vpack.c.b16 %v3688, %v3684
    %v3721 = vpack.c.b16 %v3689, %v3685
    %v3722 = vpack.c.b16 %v3690, %v3686
    %v3723 = vpack.c.b16 %v3691, %v3687
    %3756 = vmatpush.bf16.msra.mxu0 %v3720
    %3757 = vmatpush.bf16.msra.mxu0 %v3716
    %3758 = vmatpush.bf16.msra.mxu0 %v3712
    %3759 = vmatpush.bf16.msra.mxu0 %v3708
    %3760 = vmatpush.bf16.msra.mxu0 %v3704
    %3761 = vmatpush.bf16.msra.mxu0 %v3700
    %3762 = vmatpush.bf16.msra.mxu0 %v3696
    %3763 = vmatpush.bf16.msra.mxu0 %v3692
    %3764 = vmatmul.bf16.gmra.mxu0 %v3538
    %v3765 = vpop.f32.mrf.mxu0
    %v3766 = vadd.f32 0.0, %v3765
    %v3767 = vpop.f32.mrf.mxu0
    %3768 = vdwg.mxu0
    %3769 = vmatpush.bf16.msra.mxu0 %v3721
    %3770 = vmatpush.bf16.msra.mxu0 %v3717
    %3771 = vmatpush.bf16.msra.mxu0 %v3713
    %3772 = vmatpush.bf16.msra.mxu0 %v3709
    %3773 = vmatpush.bf16.msra.mxu0 %v3705
    %3774 = vmatpush.bf16.msra.mxu0 %v3701
    %3775 = vmatpush.bf16.msra.mxu0 %v3697
    %3776 = vmatpush.bf16.msra.mxu0 %v3693
    %3777 = vmatmul.bf16.gmra.mxu0 %v3538
    %v3778 = vpop.f32.mrf.mxu0
    %v3779 = vadd.f32 0.0, %v3778
    %v3780 = vpop.f32.mrf.mxu0
    %3781 = vdwg.mxu0
    %3782 = vmatpush.bf16.msra.mxu0 %v3722
    %3783 = vmatpush.bf16.msra.mxu0 %v3718
    %3784 = vmatpush.bf16.msra.mxu0 %v3714
    %3785 = vmatpush.bf16.msra.mxu0 %v3710
    %3786 = vmatpush.bf16.msra.mxu0 %v3706
    %3787 = vmatpush.bf16.msra.mxu0 %v3702
    %3788 = vmatpush.bf16.msra.mxu0 %v3698
    %3789 = vmatpush.bf16.msra.mxu0 %v3694
    %3790 = vmatmul.bf16.gmra.mxu0 %v3538
    %v3791 = vpop.f32.mrf.mxu0
    %v3792 = vadd.f32 0.0, %v3791
    %v3793 = vpop.f32.mrf.mxu0
    %3794 = vdwg.mxu0
    %3795 = vmatpush.bf16.msra.mxu0 %v3723
    %3796 = vmatpush.bf16.msra.mxu0 %v3719
    %3797 = vmatpush.bf16.msra.mxu0 %v3715
    %3798 = vmatpush.bf16.msra.mxu0 %v3711
    %3799 = vmatpush.bf16.msra.mxu0 %v3707
    %3800 = vmatpush.bf16.msra.mxu0 %v3703
    %3801 = vmatpush.bf16.msra.mxu0 %v3699
    %3802 = vmatpush.bf16.msra.mxu0 %v3695
    %3803 = vmatmul.bf16.gmra.mxu0 %v3538
    %v3804 = vpop.f32.mrf.mxu0
    %v3805 = vadd.f32 0.0, %v3804
    %v3806 = vpop.f32.mrf.mxu0
    %3807 = vdwg.mxu0
    %v3808 = vadd.f32 %v3560, %v3766
    %v3809 = vadd.f32 %v3561, %v3779
    %v3810 = vadd.f32 %v3562, %v3792
    %v3811 = vadd.f32 %v3563, %v3805
    %v3812 = vxor.u32 %v3808, 2147483648
    %v3813 = vxor.u32 %v3809, 2147483648
    %v3814 = vxor.u32 %v3810, 2147483648
    %v3815 = vmul.f32 %v3812, 1.442695
    %v3816 = vpow.pop %v3815
    %v3817 = vmul.f32 %v3813, 1.442695
    %v3818 = vpow.pop %v3817
    %v3819 = vmul.f32 %v3814, 1.442695
    %v3820 = vpow.pop %v3819
    %v3821 = vadd.f32 %v3816, 1.0
    %v3822 = vadd.f32 %v3818, 1.0
    %v3823 = vadd.f32 %v3820, 1.0
    %v3824 = vrcp.pop %v3821
    %v3825 = vmul.f32 %v3821, %v3824
    %v3826 = vsub.f32 1.0, %v3825
    %v3827 = vmul.f32 %v3824, %v3826
    %v3828 = vadd.f32 %v3824, %v3827
    %vm3829 = vweird.f32 %v3821
    %vm3830 = vweird.f32 %v3824
    %vm3831 = vmor %vm3829, %vm3830
    %v3832 = vsel %vm3831, %v3824, %v3828
    %v3833 = vand.u32 2147483647, %v3821
    %vm3834 = vcmp.eq.f32.partialorder %v3833, 8.507059e+37
    %v3835 = vand.u32 %v3821, 2147483648
    %v3836 = vor.u32 1.1754944e-38, %v3835
    %v3837 = vsel %vm3834, %v3836, %v3832
    %v3838 = vmul.f32 1.0, %v3837
    %v3839 = vrcp.pop %v3822
    %v3840 = vmul.f32 %v3822, %v3839
    %v3841 = vsub.f32 1.0, %v3840
    %v3842 = vmul.f32 %v3839, %v3841
    %v3843 = vadd.f32 %v3839, %v3842
    %vm3844 = vweird.f32 %v3822
    %vm3845 = vweird.f32 %v3839
    %vm3846 = vmor %vm3844, %vm3845
    %v3847 = vsel %vm3846, %v3839, %v3843
    %v3848 = vand.u32 2147483647, %v3822
    %vm3849 = vcmp.eq.f32.partialorder %v3848, 8.507059e+37
    %v3850 = vand.u32 %v3822, 2147483648
    %v3851 = vor.u32 1.1754944e-38, %v3850
    %v3852 = vsel %vm3849, %v3851, %v3847
    %v3853 = vmul.f32 1.0, %v3852
    %v3854 = vrcp.pop %v3823
    %v3855 = vmul.f32 %v3823, %v3854
    %v3856 = vsub.f32 1.0, %v3855
    %v3857 = vmul.f32 %v3854, %v3856
    %v3858 = vadd.f32 %v3854, %v3857
    %vm3859 = vweird.f32 %v3823
    %vm3860 = vweird.f32 %v3854
    %vm3861 = vmor %vm3859, %vm3860
    %v3862 = vsel %vm3861, %v3854, %v3858
    %v3863 = vand.u32 2147483647, %v3823
    %vm3864 = vcmp.eq.f32.partialorder %v3863, 8.507059e+37
    %v3865 = vand.u32 %v3823, 2147483648
    %v3866 = vor.u32 1.1754944e-38, %v3865
    %v3867 = vsel %vm3864, %v3866, %v3862
    %v3868 = vmul.f32 1.0, %v3867
    %v3869 = vtanh.pop %v3811
    %v3870 = vmul.f32 %v3853, %v2428
    %v3871 = vmul.f32 %v3838, %v3869
    %v3872 = vadd.f32 %v3870, %v3871
    %v3873 = vtanh.pop %v3872
    %v3874 = vmul.f32 %v3868, %v3873
    %v3907 = vunpack.c.l.b16 %v3341
    %v3908 = vunpack.c.h.b16 %v3341
    %v3909 = vunpack.c.l.b16 %v3342
    %v3910 = vunpack.c.h.b16 %v3342
    %v3911 = vunpack.c.l.b16 %v3343
    %v3912 = vunpack.c.h.b16 %v3343
    %v3913 = vunpack.c.l.b16 %v3344
    %v3914 = vunpack.c.h.b16 %v3344
    %v3915 = vunpack.c.l.b16 %v3345
    %v3916 = vunpack.c.h.b16 %v3345
    %v3917 = vunpack.c.l.b16 %v3346
    %v3918 = vunpack.c.h.b16 %v3346
    %v3919 = vunpack.c.l.b16 %v3347
    %v3920 = vunpack.c.h.b16 %v3347
    %v3921 = vunpack.c.l.b16 %v3348
    %v3922 = vunpack.c.h.b16 %v3348
    %v3923 = vunpack.c.l.b16 %v3349
    %v3924 = vunpack.c.h.b16 %v3349
    %v3925 = vunpack.c.l.b16 %v3350
    %v3926 = vunpack.c.h.b16 %v3350
    %v3927 = vunpack.c.l.b16 %v3351
    %v3928 = vunpack.c.h.b16 %v3351
    %v3929 = vunpack.c.l.b16 %v3352
    %v3930 = vunpack.c.h.b16 %v3352
    %v3931 = vunpack.c.l.b16 %v3353
    %v3932 = vunpack.c.h.b16 %v3353
    %v3933 = vunpack.c.l.b16 %v3354
    %v3934 = vunpack.c.h.b16 %v3354
    %v3935 = vunpack.c.l.b16 %v3355
    %v3936 = vunpack.c.h.b16 %v3355
    %v3937 = vunpack.c.l.b16 %v3356
    %v3938 = vunpack.c.h.b16 %v3356
    %v3939 = vunpack.c.l.b16 %v3357
    %v3940 = vunpack.c.h.b16 %v3357
    %v3941 = vunpack.c.l.b16 %v3358
    %v3942 = vunpack.c.h.b16 %v3358
    %v3943 = vunpack.c.l.b16 %v3359
    %v3944 = vunpack.c.h.b16 %v3359
    %v3945 = vunpack.c.l.b16 %v3360
    %v3946 = vunpack.c.h.b16 %v3360
    %v3947 = vunpack.c.l.b16 %v3361
    %v3948 = vunpack.c.h.b16 %v3361
    %v3949 = vunpack.c.l.b16 %v3362
    %v3950 = vunpack.c.h.b16 %v3362
    %v3951 = vunpack.c.l.b16 %v3363
    %v3952 = vunpack.c.h.b16 %v3363
    %v3953 = vunpack.c.l.b16 %v3364
    %v3954 = vunpack.c.h.b16 %v3364
    %v3955 = vunpack.c.l.b16 %v3365
    %v3956 = vunpack.c.h.b16 %v3365
    %v3957 = vunpack.c.l.b16 %v3366
    %v3958 = vunpack.c.h.b16 %v3366
    %v3959 = vunpack.c.l.b16 %v3367
    %v3960 = vunpack.c.h.b16 %v3367
    %v3961 = vunpack.c.l.b16 %v3368
    %v3962 = vunpack.c.h.b16 %v3368
    %v3963 = vunpack.c.l.b16 %v3369
    %v3964 = vunpack.c.h.b16 %v3369
    %v3965 = vunpack.c.l.b16 %v3370
    %v3966 = vunpack.c.h.b16 %v3370
    %v3967 = vunpack.c.l.b16 %v3371
    %v3968 = vunpack.c.h.b16 %v3371
    %v3969 = vunpack.c.l.b16 %v3372
    %v3970 = vunpack.c.h.b16 %v3372
    %v3971 = vpack.c.b16 %v3911, %v3907
    %v3972 = vpack.c.b16 %v3912, %v3908
    %v3973 = vpack.c.b16 %v3913, %v3909
    %v3974 = vpack.c.b16 %v3914, %v3910
    %v3975 = vpack.c.b16 %v3919, %v3915
    %v3976 = vpack.c.b16 %v3920, %v3916
    %v3977 = vpack.c.b16 %v3921, %v3917
    %v3978 = vpack.c.b16 %v3922, %v3918
    %v3979 = vpack.c.b16 %v3927, %v3923
    %v3980 = vpack.c.b16 %v3928, %v3924
    %v3981 = vpack.c.b16 %v3929, %v3925
    %v3982 = vpack.c.b16 %v3930, %v3926
    %v3983 = vpack.c.b16 %v3935, %v3931
    %v3984 = vpack.c.b16 %v3936, %v3932
    %v3985 = vpack.c.b16 %v3937, %v3933
    %v3986 = vpack.c.b16 %v3938, %v3934
    %v3987 = vpack.c.b16 %v3943, %v3939
    %v3988 = vpack.c.b16 %v3944, %v3940
    %v3989 = vpack.c.b16 %v3945, %v3941
    %v3990 = vpack.c.b16 %v3946, %v3942
    %v3991 = vpack.c.b16 %v3951, %v3947
    %v3992 = vpack.c.b16 %v3952, %v3948
    %v3993 = vpack.c.b16 %v3953, %v3949
    %v3994 = vpack.c.b16 %v3954, %v3950
    %v3995 = vpack.c.b16 %v3959, %v3955
    %v3996 = vpack.c.b16 %v3960, %v3956
    %v3997 = vpack.c.b16 %v3961, %v3957
    %v3998 = vpack.c.b16 %v3962, %v3958
    %v3999 = vpack.c.b16 %v3967, %v3963
    %v4000 = vpack.c.b16 %v3968, %v3964
    %v4001 = vpack.c.b16 %v3969, %v3965
    %v4002 = vpack.c.b16 %v3970, %v3966
    %4035 = vmatpush.bf16.msra.mxu0 %v3999
    %4036 = vmatpush.bf16.msra.mxu0 %v3995
    %4037 = vmatpush.bf16.msra.mxu0 %v3991
    %4038 = vmatpush.bf16.msra.mxu0 %v3987
    %4039 = vmatpush.bf16.msra.mxu0 %v3983
    %4040 = vmatpush.bf16.msra.mxu0 %v3979
    %4041 = vmatpush.bf16.msra.mxu0 %v3975
    %4042 = vmatpush.bf16.msra.mxu0 %v3971
    %4043 = vmatmul.bf16.gmra.mxu0 %v3016
    %v4044 = vpop.f32.mrf.mxu0
    %v4045 = vadd.f32 %v199, %v4044
    %v4046 = vpop.f32.mrf.mxu0
    %4047 = vdwg.mxu0
    %4048 = vmatpush.bf16.msra.mxu0 %v4000
    %4049 = vmatpush.bf16.msra.mxu0 %v3996
    %4050 = vmatpush.bf16.msra.mxu0 %v3992
    %4051 = vmatpush.bf16.msra.mxu0 %v3988
    %4052 = vmatpush.bf16.msra.mxu0 %v3984
    %4053 = vmatpush.bf16.msra.mxu0 %v3980
    %4054 = vmatpush.bf16.msra.mxu0 %v3976
    %4055 = vmatpush.bf16.msra.mxu0 %v3972
    %4056 = vmatmul.bf16.gmra.mxu0 %v3016
    %v4057 = vpop.f32.mrf.mxu0
    %v4058 = vadd.f32 %v200, %v4057
    %v4059 = vpop.f32.mrf.mxu0
    %4060 = vdwg.mxu0
    %4061 = vmatpush.bf16.msra.mxu0 %v4001
    %4062 = vmatpush.bf16.msra.mxu0 %v3997
    %4063 = vmatpush.bf16.msra.mxu0 %v3993
    %4064 = vmatpush.bf16.msra.mxu0 %v3989
    %4065 = vmatpush.bf16.msra.mxu0 %v3985
    %4066 = vmatpush.bf16.msra.mxu0 %v3981
    %4067 = vmatpush.bf16.msra.mxu0 %v3977
    %4068 = vmatpush.bf16.msra.mxu0 %v3973
    %4069 = vmatmul.bf16.gmra.mxu0 %v3016
    %v4070 = vpop.f32.mrf.mxu0
    %v4071 = vadd.f32 %v201, %v4070
    %v4072 = vpop.f32.mrf.mxu0
    %4073 = vdwg.mxu0
    %4074 = vmatpush.bf16.msra.mxu0 %v4002
    %4075 = vmatpush.bf16.msra.mxu0 %v3998
    %4076 = vmatpush.bf16.msra.mxu0 %v3994
    %4077 = vmatpush.bf16.msra.mxu0 %v3990
    %4078 = vmatpush.bf16.msra.mxu0 %v3986
    %4079 = vmatpush.bf16.msra.mxu0 %v3982
    %4080 = vmatpush.bf16.msra.mxu0 %v3978
    %4081 = vmatpush.bf16.msra.mxu0 %v3974
    %4082 = vmatmul.bf16.gmra.mxu0 %v3016
    %v4083 = vpop.f32.mrf.mxu0
    %v4084 = vadd.f32 %v202, %v4083
    %v4085 = vpop.f32.mrf.mxu0
    %4086 = vdwg.mxu0
    %v4087 = vpack.c.bf16 %v3874, %v3874
    %v4088 = vld [vmem:[#allocation13] sm:$0xff]
    %v4089 = vld [vmem:[#allocation13 + $0x8] sm:$0xff]
    %v4090 = vld [vmem:[#allocation13 + $0x10] sm:$0xff]
    %v4091 = vld [vmem:[#allocation13 + $0x18] sm:$0xff]
    %v4092 = vld [vmem:[#allocation13 + $0x20] sm:$0xff]
    %v4093 = vld [vmem:[#allocation13 + $0x28] sm:$0xff]
    %v4094 = vld [vmem:[#allocation13 + $0x30] sm:$0xff]
    %v4095 = vld [vmem:[#allocation13 + $0x38] sm:$0xff]
    %v4096 = vld [vmem:[#allocation13 + $0x40] sm:$0xff]
    %v4097 = vld [vmem:[#allocation13 + $0x48] sm:$0xff]
    %v4098 = vld [vmem:[#allocation13 + $0x50] sm:$0xff]
    %v4099 = vld [vmem:[#allocation13 + $0x58] sm:$0xff]
    %v4100 = vld [vmem:[#allocation13 + $0x60] sm:$0xff]
    %v4101 = vld [vmem:[#allocation13 + $0x68] sm:$0xff]
    %v4102 = vld [vmem:[#allocation13 + $0x70] sm:$0xff]
    %v4103 = vld [vmem:[#allocation13 + $0x78] sm:$0xff]
    %v4104 = vld [vmem:[#allocation13 + $0x80] sm:$0xff]
    %v4105 = vld [vmem:[#allocation13 + $0x88] sm:$0xff]
    %v4106 = vld [vmem:[#allocation13 + $0x90] sm:$0xff]
    %v4107 = vld [vmem:[#allocation13 + $0x98] sm:$0xff]
    %v4108 = vld [vmem:[#allocation13 + $0xa0] sm:$0xff]
    %v4109 = vld [vmem:[#allocation13 + $0xa8] sm:$0xff]
    %v4110 = vld [vmem:[#allocation13 + $0xb0] sm:$0xff]
    %v4111 = vld [vmem:[#allocation13 + $0xb8] sm:$0xff]
    %v4112 = vld [vmem:[#allocation13 + $0xc0] sm:$0xff]
    %v4113 = vld [vmem:[#allocation13 + $0xc8] sm:$0xff]
    %v4114 = vld [vmem:[#allocation13 + $0xd0] sm:$0xff]
    %v4115 = vld [vmem:[#allocation13 + $0xd8] sm:$0xff]
    %v4116 = vld [vmem:[#allocation13 + $0xe0] sm:$0xff]
    %v4117 = vld [vmem:[#allocation13 + $0xe8] sm:$0xff]
    %v4118 = vld [vmem:[#allocation13 + $0xf0] sm:$0xff]
    %v4119 = vld [vmem:[#allocation13 + $0xf8] sm:$0xff]
    %v4152 = vunpack.c.l.b16 %v4088
    %v4153 = vunpack.c.h.b16 %v4088
    %v4154 = vunpack.c.l.b16 %v4089
    %v4155 = vunpack.c.h.b16 %v4089
    %v4156 = vunpack.c.l.b16 %v4090
    %v4157 = vunpack.c.h.b16 %v4090
    %v4158 = vunpack.c.l.b16 %v4091
    %v4159 = vunpack.c.h.b16 %v4091
    %v4160 = vunpack.c.l.b16 %v4092
    %v4161 = vunpack.c.h.b16 %v4092
    %v4162 = vunpack.c.l.b16 %v4093
    %v4163 = vunpack.c.h.b16 %v4093
    %v4164 = vunpack.c.l.b16 %v4094
    %v4165 = vunpack.c.h.b16 %v4094
    %v4166 = vunpack.c.l.b16 %v4095
    %v4167 = vunpack.c.h.b16 %v4095
    %v4168 = vunpack.c.l.b16 %v4096
    %v4169 = vunpack.c.h.b16 %v4096
    %v4170 = vunpack.c.l.b16 %v4097
    %v4171 = vunpack.c.h.b16 %v4097
    %v4172 = vunpack.c.l.b16 %v4098
    %v4173 = vunpack.c.h.b16 %v4098
    %v4174 = vunpack.c.l.b16 %v4099
    %v4175 = vunpack.c.h.b16 %v4099
    %v4176 = vunpack.c.l.b16 %v4100
    %v4177 = vunpack.c.h.b16 %v4100
    %v4178 = vunpack.c.l.b16 %v4101
    %v4179 = vunpack.c.h.b16 %v4101
    %v4180 = vunpack.c.l.b16 %v4102
    %v4181 = vunpack.c.h.b16 %v4102
    %v4182 = vunpack.c.l.b16 %v4103
    %v4183 = vunpack.c.h.b16 %v4103
    %v4184 = vunpack.c.l.b16 %v4104
    %v4185 = vunpack.c.h.b16 %v4104
    %v4186 = vunpack.c.l.b16 %v4105
    %v4187 = vunpack.c.h.b16 %v4105
    %v4188 = vunpack.c.l.b16 %v4106
    %v4189 = vunpack.c.h.b16 %v4106
    %v4190 = vunpack.c.l.b16 %v4107
    %v4191 = vunpack.c.h.b16 %v4107
    %v4192 = vunpack.c.l.b16 %v4108
    %v4193 = vunpack.c.h.b16 %v4108
    %v4194 = vunpack.c.l.b16 %v4109
    %v4195 = vunpack.c.h.b16 %v4109
    %v4196 = vunpack.c.l.b16 %v4110
    %v4197 = vunpack.c.h.b16 %v4110
    %v4198 = vunpack.c.l.b16 %v4111
    %v4199 = vunpack.c.h.b16 %v4111
    %v4200 = vunpack.c.l.b16 %v4112
    %v4201 = vunpack.c.h.b16 %v4112
    %v4202 = vunpack.c.l.b16 %v4113
    %v4203 = vunpack.c.h.b16 %v4113
    %v4204 = vunpack.c.l.b16 %v4114
    %v4205 = vunpack.c.h.b16 %v4114
    %v4206 = vunpack.c.l.b16 %v4115
    %v4207 = vunpack.c.h.b16 %v4115
    %v4208 = vunpack.c.l.b16 %v4116
    %v4209 = vunpack.c.h.b16 %v4116
    %v4210 = vunpack.c.l.b16 %v4117
    %v4211 = vunpack.c.h.b16 %v4117
    %v4212 = vunpack.c.l.b16 %v4118
    %v4213 = vunpack.c.h.b16 %v4118
    %v4214 = vunpack.c.l.b16 %v4119
    %v4215 = vunpack.c.h.b16 %v4119
    %v4216 = vpack.c.b16 %v4156, %v4152
    %v4217 = vpack.c.b16 %v4157, %v4153
    %v4218 = vpack.c.b16 %v4158, %v4154
    %v4219 = vpack.c.b16 %v4159, %v4155
    %v4220 = vpack.c.b16 %v4164, %v4160
    %v4221 = vpack.c.b16 %v4165, %v4161
    %v4222 = vpack.c.b16 %v4166, %v4162
    %v4223 = vpack.c.b16 %v4167, %v4163
    %v4224 = vpack.c.b16 %v4172, %v4168
    %v4225 = vpack.c.b16 %v4173, %v4169
    %v4226 = vpack.c.b16 %v4174, %v4170
    %v4227 = vpack.c.b16 %v4175, %v4171
    %v4228 = vpack.c.b16 %v4180, %v4176
    %v4229 = vpack.c.b16 %v4181, %v4177
    %v4230 = vpack.c.b16 %v4182, %v4178
    %v4231 = vpack.c.b16 %v4183, %v4179
    %v4232 = vpack.c.b16 %v4188, %v4184
    %v4233 = vpack.c.b16 %v4189, %v4185
    %v4234 = vpack.c.b16 %v4190, %v4186
    %v4235 = vpack.c.b16 %v4191, %v4187
    %v4236 = vpack.c.b16 %v4196, %v4192
    %v4237 = vpack.c.b16 %v4197, %v4193
    %v4238 = vpack.c.b16 %v4198, %v4194
    %v4239 = vpack.c.b16 %v4199, %v4195
    %v4240 = vpack.c.b16 %v4204, %v4200
    %v4241 = vpack.c.b16 %v4205, %v4201
    %v4242 = vpack.c.b16 %v4206, %v4202
    %v4243 = vpack.c.b16 %v4207, %v4203
    %v4244 = vpack.c.b16 %v4212, %v4208
    %v4245 = vpack.c.b16 %v4213, %v4209
    %v4246 = vpack.c.b16 %v4214, %v4210
    %v4247 = vpack.c.b16 %v4215, %v4211
    %4280 = vmatpush.bf16.msra.mxu0 %v4244
    %4281 = vmatpush.bf16.msra.mxu0 %v4240
    %4282 = vmatpush.bf16.msra.mxu0 %v4236
    %4283 = vmatpush.bf16.msra.mxu0 %v4232
    %4284 = vmatpush.bf16.msra.mxu0 %v4228
    %4285 = vmatpush.bf16.msra.mxu0 %v4224
    %4286 = vmatpush.bf16.msra.mxu0 %v4220
    %4287 = vmatpush.bf16.msra.mxu0 %v4216
    %4288 = vmatmul.bf16.gmra.mxu0 %v4087
    %v4289 = vpop.f32.mrf.mxu0
    %v4290 = vadd.f32 0.0, %v4289
    %v4291 = vpop.f32.mrf.mxu0
    %4292 = vdwg.mxu0
    %4293 = vmatpush.bf16.msra.mxu0 %v4245
    %4294 = vmatpush.bf16.msra.mxu0 %v4241
    %4295 = vmatpush.bf16.msra.mxu0 %v4237
    %4296 = vmatpush.bf16.msra.mxu0 %v4233
    %4297 = vmatpush.bf16.msra.mxu0 %v4229
    %4298 = vmatpush.bf16.msra.mxu0 %v4225
    %4299 = vmatpush.bf16.msra.mxu0 %v4221
    %4300 = vmatpush.bf16.msra.mxu0 %v4217
    %4301 = vmatmul.bf16.gmra.mxu0 %v4087
    %v4302 = vpop.f32.mrf.mxu0
    %v4303 = vadd.f32 0.0, %v4302
    %v4304 = vpop.f32.mrf.mxu0
    %4305 = vdwg.mxu0
    %4306 = vmatpush.bf16.msra.mxu0 %v4246
    %4307 = vmatpush.bf16.msra.mxu0 %v4242
    %4308 = vmatpush.bf16.msra.mxu0 %v4238
    %4309 = vmatpush.bf16.msra.mxu0 %v4234
    %4310 = vmatpush.bf16.msra.mxu0 %v4230
    %4311 = vmatpush.bf16.msra.mxu0 %v4226
    %4312 = vmatpush.bf16.msra.mxu0 %v4222
    %4313 = vmatpush.bf16.msra.mxu0 %v4218
    %4314 = vmatmul.bf16.gmra.mxu0 %v4087
    %v4315 = vpop.f32.mrf.mxu0
    %v4316 = vadd.f32 0.0, %v4315
    %v4317 = vpop.f32.mrf.mxu0
    %4318 = vdwg.mxu0
    %4319 = vmatpush.bf16.msra.mxu0 %v4247
    %4320 = vmatpush.bf16.msra.mxu0 %v4243
    %4321 = vmatpush.bf16.msra.mxu0 %v4239
    %4322 = vmatpush.bf16.msra.mxu0 %v4235
    %4323 = vmatpush.bf16.msra.mxu0 %v4231
    %4324 = vmatpush.bf16.msra.mxu0 %v4227
    %4325 = vmatpush.bf16.msra.mxu0 %v4223
    %4326 = vmatpush.bf16.msra.mxu0 %v4219
    %4327 = vmatmul.bf16.gmra.mxu0 %v4087
    %v4328 = vpop.f32.mrf.mxu0
    %v4329 = vadd.f32 0.0, %v4328
    %v4330 = vpop.f32.mrf.mxu0
    %4331 = vdwg.mxu0
    %v4332 = vadd.f32 %v4045, %v4290
    %v4333 = vadd.f32 %v4058, %v4303
    %v4334 = vadd.f32 %v4071, %v4316
    %v4335 = vadd.f32 %v4084, %v4329
    %v4336 = vxor.u32 %v4332, 2147483648
    %v4337 = vxor.u32 %v4333, 2147483648
    %v4338 = vxor.u32 %v4334, 2147483648
    %v4339 = vmul.f32 %v4336, 1.442695
    %v4340 = vpow.pop %v4339
    %v4341 = vmul.f32 %v4337, 1.442695
    %v4342 = vpow.pop %v4341
    %v4343 = vmul.f32 %v4338, 1.442695
    %v4344 = vpow.pop %v4343
    %v4345 = vadd.f32 %v4340, 1.0
    %v4346 = vadd.f32 %v4342, 1.0
    %v4347 = vadd.f32 %v4344, 1.0
    %v4348 = vrcp.pop %v4345
    %v4349 = vmul.f32 %v4345, %v4348
    %v4350 = vsub.f32 1.0, %v4349
    %v4351 = vmul.f32 %v4348, %v4350
    %v4352 = vadd.f32 %v4348, %v4351
    %vm4353 = vweird.f32 %v4345
    %vm4354 = vweird.f32 %v4348
    %vm4355 = vmor %vm4353, %vm4354
    %v4356 = vsel %vm4355, %v4348, %v4352
    %v4357 = vand.u32 2147483647, %v4345
    %vm4358 = vcmp.eq.f32.partialorder %v4357, 8.507059e+37
    %v4359 = vand.u32 %v4345, 2147483648
    %v4360 = vor.u32 1.1754944e-38, %v4359
    %v4361 = vsel %vm4358, %v4360, %v4356
    %v4362 = vmul.f32 1.0, %v4361
    %v4363 = vrcp.pop %v4346
    %v4364 = vmul.f32 %v4346, %v4363
    %v4365 = vsub.f32 1.0, %v4364
    %v4366 = vmul.f32 %v4363, %v4365
    %v4367 = vadd.f32 %v4363, %v4366
    %vm4368 = vweird.f32 %v4346
    %vm4369 = vweird.f32 %v4363
    %vm4370 = vmor %vm4368, %vm4369
    %v4371 = vsel %vm4370, %v4363, %v4367
    %v4372 = vand.u32 2147483647, %v4346
    %vm4373 = vcmp.eq.f32.partialorder %v4372, 8.507059e+37
    %v4374 = vand.u32 %v4346, 2147483648
    %v4375 = vor.u32 1.1754944e-38, %v4374
    %v4376 = vsel %vm4373, %v4375, %v4371
    %v4377 = vmul.f32 1.0, %v4376
    %v4378 = vrcp.pop %v4347
    %v4379 = vmul.f32 %v4347, %v4378
    %v4380 = vsub.f32 1.0, %v4379
    %v4381 = vmul.f32 %v4378, %v4380
    %v4382 = vadd.f32 %v4378, %v4381
    %vm4383 = vweird.f32 %v4347
    %vm4384 = vweird.f32 %v4378
    %vm4385 = vmor %vm4383, %vm4384
    %v4386 = vsel %vm4385, %v4378, %v4382
    %v4387 = vand.u32 2147483647, %v4347
    %vm4388 = vcmp.eq.f32.partialorder %v4387, 8.507059e+37
    %v4389 = vand.u32 %v4347, 2147483648
    %v4390 = vor.u32 1.1754944e-38, %v4389
    %v4391 = vsel %vm4388, %v4390, %v4386
    %v4392 = vmul.f32 1.0, %v4391
    %v4393 = vtanh.pop %v4335
    %v4394 = vmul.f32 %v4377, %v2952
    %v4395 = vmul.f32 %v4362, %v4393
    %v4396 = vadd.f32 %v4394, %v4395
    %v4397 = vtanh.pop %v4396
    %v4398 = vmul.f32 %v4392, %v4397
    %v4415 = vunpack.c.l.b16 %v3539
    %v4416 = vunpack.c.l.b16 %v3540
    %v4417 = vunpack.c.l.b16 %v3541
    %v4418 = vunpack.c.l.b16 %v3542
    %v4419 = vunpack.c.l.b16 %v3543
    %v4420 = vunpack.c.l.b16 %v3544
    %v4421 = vunpack.c.l.b16 %v3545
    %v4422 = vunpack.c.l.b16 %v3546
    %v4423 = vunpack.c.l.b16 %v3547
    %v4424 = vunpack.c.l.b16 %v3548
    %v4425 = vunpack.c.l.b16 %v3549
    %v4426 = vunpack.c.l.b16 %v3550
    %v4427 = vunpack.c.l.b16 %v3551
    %v4428 = vunpack.c.l.b16 %v3552
    %v4429 = vunpack.c.l.b16 %v3553
    %v4430 = vunpack.c.l.b16 %v3554
    %v4431 = vpack.c.b16 %v4416, %v4415
    %v4432 = vpack.c.b16 %v4418, %v4417
    %v4433 = vpack.c.b16 %v4420, %v4419
    %v4434 = vpack.c.b16 %v4422, %v4421
    %v4435 = vpack.c.b16 %v4424, %v4423
    %v4436 = vpack.c.b16 %v4426, %v4425
    %v4437 = vpack.c.b16 %v4428, %v4427
    %v4438 = vpack.c.b16 %v4430, %v4429
    %4447 = vmatpush.bf16.msra.mxu0 %v4438
    %4448 = vmatpush.bf16.msra.mxu0 %v4437
    %4449 = vmatpush.bf16.msra.mxu0 %v4436
    %4450 = vmatpush.bf16.msra.mxu0 %v4435
    %4451 = vmatpush.bf16.msra.mxu0 %v4434
    %4452 = vmatpush.bf16.msra.mxu0 %v4433
    %4453 = vmatpush.bf16.msra.mxu0 %v4432
    %4454 = vmatpush.bf16.msra.mxu0 %v4431
    %4455 = vmatmul.bf16.gmra.mxu0 %v3538
    %v4456 = vpop.f32.mrf.mxu0
    %v4457 = vadd.f32 %v209, %v4456
    %v4458 = vpop.f32.mrf.mxu0
    %4459 = vdwg.mxu0
    %v4460 = vpack.c.bf16 %v4398, %v4398
    %v4461 = vld [vmem:[#allocation16] sm:$0xf]
    %v4462 = vld [vmem:[#allocation16 + $0x4] sm:$0xf]
    %v4463 = vld [vmem:[#allocation16 + $0x8] sm:$0xf]
    %v4464 = vld [vmem:[#allocation16 + $0xc] sm:$0xf]
    %v4465 = vld [vmem:[#allocation16 + $0x10] sm:$0xf]
    %v4466 = vld [vmem:[#allocation16 + $0x14] sm:$0xf]
    %v4467 = vld [vmem:[#allocation16 + $0x18] sm:$0xf]
    %v4468 = vld [vmem:[#allocation16 + $0x1c] sm:$0xf]
    %v4469 = vld [vmem:[#allocation16 + $0x20] sm:$0xf]
    %v4470 = vld [vmem:[#allocation16 + $0x24] sm:$0xf]
    %v4471 = vld [vmem:[#allocation16 + $0x28] sm:$0xf]
    %v4472 = vld [vmem:[#allocation16 + $0x2c] sm:$0xf]
    %v4473 = vld [vmem:[#allocation16 + $0x30] sm:$0xf]
    %v4474 = vld [vmem:[#allocation16 + $0x34] sm:$0xf]
    %v4475 = vld [vmem:[#allocation16 + $0x38] sm:$0xf]
    %v4476 = vld [vmem:[#allocation16 + $0x3c] sm:$0xf]
    %v4493 = vunpack.c.l.b16 %v4461
    %v4494 = vunpack.c.l.b16 %v4462
    %v4495 = vunpack.c.l.b16 %v4463
    %v4496 = vunpack.c.l.b16 %v4464
    %v4497 = vunpack.c.l.b16 %v4465
    %v4498 = vunpack.c.l.b16 %v4466
    %v4499 = vunpack.c.l.b16 %v4467
    %v4500 = vunpack.c.l.b16 %v4468
    %v4501 = vunpack.c.l.b16 %v4469
    %v4502 = vunpack.c.l.b16 %v4470
    %v4503 = vunpack.c.l.b16 %v4471
    %v4504 = vunpack.c.l.b16 %v4472
    %v4505 = vunpack.c.l.b16 %v4473
    %v4506 = vunpack.c.l.b16 %v4474
    %v4507 = vunpack.c.l.b16 %v4475
    %v4508 = vunpack.c.l.b16 %v4476
    %v4509 = vpack.c.b16 %v4494, %v4493
    %v4510 = vpack.c.b16 %v4496, %v4495
    %v4511 = vpack.c.b16 %v4498, %v4497
    %v4512 = vpack.c.b16 %v4500, %v4499
    %v4513 = vpack.c.b16 %v4502, %v4501
    %v4514 = vpack.c.b16 %v4504, %v4503
    %v4515 = vpack.c.b16 %v4506, %v4505
    %v4516 = vpack.c.b16 %v4508, %v4507
    %4525 = vmatpush.bf16.msra.mxu0 %v4516
    %4526 = vmatpush.bf16.msra.mxu0 %v4515
    %4527 = vmatpush.bf16.msra.mxu0 %v4514
    %4528 = vmatpush.bf16.msra.mxu0 %v4513
    %4529 = vmatpush.bf16.msra.mxu0 %v4512
    %4530 = vmatpush.bf16.msra.mxu0 %v4511
    %4531 = vmatpush.bf16.msra.mxu0 %v4510
    %4532 = vmatpush.bf16.msra.mxu0 %v4509
    %4533 = vmatmul.bf16.gmra.mxu0 %v4460
    %v4534 = vpop.f32.mrf.mxu0
    %v4535 = vadd.f32 0.0, %v4534
    %v4536 = vpop.f32.mrf.mxu0
    %4537 = vdwg.mxu0
    %v4538 = vadd.f32 %v4457, %v4535
    %s4539 = scalar_lea.vmem [#allocation19], 16
    %4540 = vst [vmem:[%s4539] sm:$0xff] %v4538
    %v4541 = vld [vmem:[#allocation11] sm:$0xff]
    %v4542 = vld [vmem:[#allocation11 + $0x8] sm:$0xff]
    %v4543 = vld [vmem:[#allocation11 + $0x10] sm:$0xff]
    %v4544 = vld [vmem:[#allocation11 + $0x18] sm:$0xff]
    %v4545 = vld [vmem:[#allocation11 + $0x20] sm:$0xff]
    %v4546 = vld [vmem:[#allocation11 + $0x28] sm:$0xff]
    %v4547 = vld [vmem:[#allocation11 + $0x30] sm:$0xff]
    %v4548 = vld [vmem:[#allocation11 + $0x38] sm:$0xff]
    %v4549 = vld [vmem:[#allocation11 + $0x40] sm:$0xff]
    %v4550 = vld [vmem:[#allocation11 + $0x48] sm:$0xff]
    %v4551 = vld [vmem:[#allocation11 + $0x50] sm:$0xff]
    %v4552 = vld [vmem:[#allocation11 + $0x58] sm:$0xff]
    %v4553 = vld [vmem:[#allocation11 + $0x60] sm:$0xff]
    %v4554 = vld [vmem:[#allocation11 + $0x68] sm:$0xff]
    %v4555 = vld [vmem:[#allocation11 + $0x70] sm:$0xff]
    %v4556 = vld [vmem:[#allocation11 + $0x78] sm:$0xff]
    %v4557 = vld [vmem:[#allocation11 + $0x80] sm:$0xff]
    %v4558 = vld [vmem:[#allocation11 + $0x88] sm:$0xff]
    %v4559 = vld [vmem:[#allocation11 + $0x90] sm:$0xff]
    %v4560 = vld [vmem:[#allocation11 + $0x98] sm:$0xff]
    %v4561 = vld [vmem:[#allocation11 + $0xa0] sm:$0xff]
    %v4562 = vld [vmem:[#allocation11 + $0xa8] sm:$0xff]
    %v4563 = vld [vmem:[#allocation11 + $0xb0] sm:$0xff]
    %v4564 = vld [vmem:[#allocation11 + $0xb8] sm:$0xff]
    %v4565 = vld [vmem:[#allocation11 + $0xc0] sm:$0xff]
    %v4566 = vld [vmem:[#allocation11 + $0xc8] sm:$0xff]
    %v4567 = vld [vmem:[#allocation11 + $0xd0] sm:$0xff]
    %v4568 = vld [vmem:[#allocation11 + $0xd8] sm:$0xff]
    %v4569 = vld [vmem:[#allocation11 + $0xe0] sm:$0xff]
    %v4570 = vld [vmem:[#allocation11 + $0xe8] sm:$0xff]
    %v4571 = vld [vmem:[#allocation11 + $0xf0] sm:$0xff]
    %v4572 = vld [vmem:[#allocation11 + $0xf8] sm:$0xff]
    %v4605 = vunpack.c.l.b16 %v4541
    %v4606 = vunpack.c.h.b16 %v4541
    %v4607 = vunpack.c.l.b16 %v4542
    %v4608 = vunpack.c.h.b16 %v4542
    %v4609 = vunpack.c.l.b16 %v4543
    %v4610 = vunpack.c.h.b16 %v4543
    %v4611 = vunpack.c.l.b16 %v4544
    %v4612 = vunpack.c.h.b16 %v4544
    %v4613 = vunpack.c.l.b16 %v4545
    %v4614 = vunpack.c.h.b16 %v4545
    %v4615 = vunpack.c.l.b16 %v4546
    %v4616 = vunpack.c.h.b16 %v4546
    %v4617 = vunpack.c.l.b16 %v4547
    %v4618 = vunpack.c.h.b16 %v4547
    %v4619 = vunpack.c.l.b16 %v4548
    %v4620 = vunpack.c.h.b16 %v4548
    %v4621 = vunpack.c.l.b16 %v4549
    %v4622 = vunpack.c.h.b16 %v4549
    %v4623 = vunpack.c.l.b16 %v4550
    %v4624 = vunpack.c.h.b16 %v4550
    %v4625 = vunpack.c.l.b16 %v4551
    %v4626 = vunpack.c.h.b16 %v4551
    %v4627 = vunpack.c.l.b16 %v4552
    %v4628 = vunpack.c.h.b16 %v4552
    %v4629 = vunpack.c.l.b16 %v4553
    %v4630 = vunpack.c.h.b16 %v4553
    %v4631 = vunpack.c.l.b16 %v4554
    %v4632 = vunpack.c.h.b16 %v4554
    %v4633 = vunpack.c.l.b16 %v4555
    %v4634 = vunpack.c.h.b16 %v4555
    %v4635 = vunpack.c.l.b16 %v4556
    %v4636 = vunpack.c.h.b16 %v4556
    %v4637 = vunpack.c.l.b16 %v4557
    %v4638 = vunpack.c.h.b16 %v4557
    %v4639 = vunpack.c.l.b16 %v4558
    %v4640 = vunpack.c.h.b16 %v4558
    %v4641 = vunpack.c.l.b16 %v4559
    %v4642 = vunpack.c.h.b16 %v4559
    %v4643 = vunpack.c.l.b16 %v4560
    %v4644 = vunpack.c.h.b16 %v4560
    %v4645 = vunpack.c.l.b16 %v4561
    %v4646 = vunpack.c.h.b16 %v4561
    %v4647 = vunpack.c.l.b16 %v4562
    %v4648 = vunpack.c.h.b16 %v4562
    %v4649 = vunpack.c.l.b16 %v4563
    %v4650 = vunpack.c.h.b16 %v4563
    %v4651 = vunpack.c.l.b16 %v4564
    %v4652 = vunpack.c.h.b16 %v4564
    %v4653 = vunpack.c.l.b16 %v4565
    %v4654 = vunpack.c.h.b16 %v4565
    %v4655 = vunpack.c.l.b16 %v4566
    %v4656 = vunpack.c.h.b16 %v4566
    %v4657 = vunpack.c.l.b16 %v4567
    %v4658 = vunpack.c.h.b16 %v4567
    %v4659 = vunpack.c.l.b16 %v4568
    %v4660 = vunpack.c.h.b16 %v4568
    %v4661 = vunpack.c.l.b16 %v4569
    %v4662 = vunpack.c.h.b16 %v4569
    %v4663 = vunpack.c.l.b16 %v4570
    %v4664 = vunpack.c.h.b16 %v4570
    %v4665 = vunpack.c.l.b16 %v4571
    %v4666 = vunpack.c.h.b16 %v4571
    %v4667 = vunpack.c.l.b16 %v4572
    %v4668 = vunpack.c.h.b16 %v4572
    %v4669 = vpack.c.b16 %v4609, %v4605
    %v4670 = vpack.c.b16 %v4610, %v4606
    %v4671 = vpack.c.b16 %v4611, %v4607
    %v4672 = vpack.c.b16 %v4612, %v4608
    %v4673 = vpack.c.b16 %v4617, %v4613
    %v4674 = vpack.c.b16 %v4618, %v4614
    %v4675 = vpack.c.b16 %v4619, %v4615
    %v4676 = vpack.c.b16 %v4620, %v4616
    %v4677 = vpack.c.b16 %v4625, %v4621
    %v4678 = vpack.c.b16 %v4626, %v4622
    %v4679 = vpack.c.b16 %v4627, %v4623
    %v4680 = vpack.c.b16 %v4628, %v4624
    %v4681 = vpack.c.b16 %v4633, %v4629
    %v4682 = vpack.c.b16 %v4634, %v4630
    %v4683 = vpack.c.b16 %v4635, %v4631
    %v4684 = vpack.c.b16 %v4636, %v4632
    %v4685 = vpack.c.b16 %v4641, %v4637
    %v4686 = vpack.c.b16 %v4642, %v4638
    %v4687 = vpack.c.b16 %v4643, %v4639
    %v4688 = vpack.c.b16 %v4644, %v4640
    %v4689 = vpack.c.b16 %v4649, %v4645
    %v4690 = vpack.c.b16 %v4650, %v4646
    %v4691 = vpack.c.b16 %v4651, %v4647
    %v4692 = vpack.c.b16 %v4652, %v4648
    %v4693 = vpack.c.b16 %v4657, %v4653
    %v4694 = vpack.c.b16 %v4658, %v4654
    %v4695 = vpack.c.b16 %v4659, %v4655
    %v4696 = vpack.c.b16 %v4660, %v4656
    %v4697 = vpack.c.b16 %v4665, %v4661
    %v4698 = vpack.c.b16 %v4666, %v4662
    %v4699 = vpack.c.b16 %v4667, %v4663
    %v4700 = vpack.c.b16 %v4668, %v4664
    %4733 = vmatpush.bf16.msra.mxu0 %v4697
    %4734 = vmatpush.bf16.msra.mxu0 %v4693
    %4735 = vmatpush.bf16.msra.mxu0 %v4689
    %4736 = vmatpush.bf16.msra.mxu0 %v4685
    %4737 = vmatpush.bf16.msra.mxu0 %v4681
    %4738 = vmatpush.bf16.msra.mxu0 %v4677
    %4739 = vmatpush.bf16.msra.mxu0 %v4673
    %4740 = vmatpush.bf16.msra.mxu0 %v4669
    %4741 = vmatmul.bf16.gmra.mxu0 %v4087
    %v4742 = vpop.f32.mrf.mxu0
    %v4743 = vadd.f32 0.0, %v4742
    %v4744 = vpop.f32.mrf.mxu0
    %4745 = vdwg.mxu0
    %4746 = vmatpush.bf16.msra.mxu0 %v4698
    %4747 = vmatpush.bf16.msra.mxu0 %v4694
    %4748 = vmatpush.bf16.msra.mxu0 %v4690
    %4749 = vmatpush.bf16.msra.mxu0 %v4686
    %4750 = vmatpush.bf16.msra.mxu0 %v4682
    %4751 = vmatpush.bf16.msra.mxu0 %v4678
    %4752 = vmatpush.bf16.msra.mxu0 %v4674
    %4753 = vmatpush.bf16.msra.mxu0 %v4670
    %4754 = vmatmul.bf16.gmra.mxu0 %v4087
    %v4755 = vpop.f32.mrf.mxu0
    %v4756 = vadd.f32 0.0, %v4755
    %v4757 = vpop.f32.mrf.mxu0
    %4758 = vdwg.mxu0
    %4759 = vmatpush.bf16.msra.mxu0 %v4699
    %4760 = vmatpush.bf16.msra.mxu0 %v4695
    %4761 = vmatpush.bf16.msra.mxu0 %v4691
    %4762 = vmatpush.bf16.msra.mxu0 %v4687
    %4763 = vmatpush.bf16.msra.mxu0 %v4683
    %4764 = vmatpush.bf16.msra.mxu0 %v4679
    %4765 = vmatpush.bf16.msra.mxu0 %v4675
    %4766 = vmatpush.bf16.msra.mxu0 %v4671
    %4767 = vmatmul.bf16.gmra.mxu0 %v4087
    %v4768 = vpop.f32.mrf.mxu0
    %v4769 = vadd.f32 0.0, %v4768
    %v4770 = vpop.f32.mrf.mxu0
    %4771 = vdwg.mxu0
    %4772 = vmatpush.bf16.msra.mxu0 %v4700
    %4773 = vmatpush.bf16.msra.mxu0 %v4696
    %4774 = vmatpush.bf16.msra.mxu0 %v4692
    %4775 = vmatpush.bf16.msra.mxu0 %v4688
    %4776 = vmatpush.bf16.msra.mxu0 %v4684
    %4777 = vmatpush.bf16.msra.mxu0 %v4680
    %4778 = vmatpush.bf16.msra.mxu0 %v4676
    %4779 = vmatpush.bf16.msra.mxu0 %v4672
    %4780 = vmatmul.bf16.gmra.mxu0 %v4087
    %v4781 = vpop.f32.mrf.mxu0
    %v4782 = vadd.f32 0.0, %v4781
    %v4783 = vpop.f32.mrf.mxu0
    %4784 = vdwg.mxu0
    %v4785 = vld [vmem:[#allocation14] sm:$0xff]
    %v4786 = vld [vmem:[#allocation14 + $0x8] sm:$0xff]
    %v4787 = vld [vmem:[#allocation14 + $0x10] sm:$0xff]
    %v4788 = vld [vmem:[#allocation14 + $0x18] sm:$0xff]
    %v4789 = vld [vmem:[#allocation14 + $0x20] sm:$0xff]
    %v4790 = vld [vmem:[#allocation14 + $0x28] sm:$0xff]
    %v4791 = vld [vmem:[#allocation14 + $0x30] sm:$0xff]
    %v4792 = vld [vmem:[#allocation14 + $0x38] sm:$0xff]
    %v4793 = vld [vmem:[#allocation14 + $0x40] sm:$0xff]
    %v4794 = vld [vmem:[#allocation14 + $0x48] sm:$0xff]
    %v4795 = vld [vmem:[#allocation14 + $0x50] sm:$0xff]
    %v4796 = vld [vmem:[#allocation14 + $0x58] sm:$0xff]
    %v4797 = vld [vmem:[#allocation14 + $0x60] sm:$0xff]
    %v4798 = vld [vmem:[#allocation14 + $0x68] sm:$0xff]
    %v4799 = vld [vmem:[#allocation14 + $0x70] sm:$0xff]
    %v4800 = vld [vmem:[#allocation14 + $0x78] sm:$0xff]
    %v4801 = vld [vmem:[#allocation14 + $0x80] sm:$0xff]
    %v4802 = vld [vmem:[#allocation14 + $0x88] sm:$0xff]
    %v4803 = vld [vmem:[#allocation14 + $0x90] sm:$0xff]
    %v4804 = vld [vmem:[#allocation14 + $0x98] sm:$0xff]
    %v4805 = vld [vmem:[#allocation14 + $0xa0] sm:$0xff]
    %v4806 = vld [vmem:[#allocation14 + $0xa8] sm:$0xff]
    %v4807 = vld [vmem:[#allocation14 + $0xb0] sm:$0xff]
    %v4808 = vld [vmem:[#allocation14 + $0xb8] sm:$0xff]
    %v4809 = vld [vmem:[#allocation14 + $0xc0] sm:$0xff]
    %v4810 = vld [vmem:[#allocation14 + $0xc8] sm:$0xff]
    %v4811 = vld [vmem:[#allocation14 + $0xd0] sm:$0xff]
    %v4812 = vld [vmem:[#allocation14 + $0xd8] sm:$0xff]
    %v4813 = vld [vmem:[#allocation14 + $0xe0] sm:$0xff]
    %v4814 = vld [vmem:[#allocation14 + $0xe8] sm:$0xff]
    %v4815 = vld [vmem:[#allocation14 + $0xf0] sm:$0xff]
    %v4816 = vld [vmem:[#allocation14 + $0xf8] sm:$0xff]
    %v4817 = vld [vmem:[#allocation5] sm:$0xf]
    %v4818 = vld [vmem:[#allocation5 + $0x4] sm:$0xf]
    %v4819 = vld [vmem:[#allocation5 + $0x8] sm:$0xf]
    %v4820 = vld [vmem:[#allocation5 + $0xc] sm:$0xf]
    %v4821 = vld [vmem:[#allocation5 + $0x10] sm:$0xf]
    %v4822 = vld [vmem:[#allocation5 + $0x14] sm:$0xf]
    %v4823 = vld [vmem:[#allocation5 + $0x18] sm:$0xf]
    %v4824 = vld [vmem:[#allocation5 + $0x1c] sm:$0xf]
    %v4825 = vld [vmem:[#allocation5 + $0x20] sm:$0xf]
    %v4826 = vld [vmem:[#allocation5 + $0x24] sm:$0xf]
    %v4827 = vld [vmem:[#allocation5 + $0x28] sm:$0xf]
    %v4828 = vld [vmem:[#allocation5 + $0x2c] sm:$0xf]
    %v4829 = vld [vmem:[#allocation5 + $0x30] sm:$0xf]
    %v4830 = vld [vmem:[#allocation5 + $0x34] sm:$0xf]
    %v4831 = vld [vmem:[#allocation5 + $0x38] sm:$0xf]
    %v4832 = vld [vmem:[#allocation5 + $0x3c] sm:$0xf]
    %v4833 = vld [vmem:[#allocation8] sm:$0xff]
    %v4850 = vunpack.c.l.b16 %v4817
    %v4851 = vunpack.c.l.b16 %v4818
    %v4852 = vunpack.c.l.b16 %v4819
    %v4853 = vunpack.c.l.b16 %v4820
    %v4854 = vunpack.c.l.b16 %v4821
    %v4855 = vunpack.c.l.b16 %v4822
    %v4856 = vunpack.c.l.b16 %v4823
    %v4857 = vunpack.c.l.b16 %v4824
    %v4858 = vunpack.c.l.b16 %v4825
    %v4859 = vunpack.c.l.b16 %v4826
    %v4860 = vunpack.c.l.b16 %v4827
    %v4861 = vunpack.c.l.b16 %v4828
    %v4862 = vunpack.c.l.b16 %v4829
    %v4863 = vunpack.c.l.b16 %v4830
    %v4864 = vunpack.c.l.b16 %v4831
    %v4865 = vunpack.c.l.b16 %v4832
    %v4866 = vpack.c.b16 %v4851, %v4850
    %v4867 = vpack.c.b16 %v4853, %v4852
    %v4868 = vpack.c.b16 %v4855, %v4854
    %v4869 = vpack.c.b16 %v4857, %v4856
    %v4870 = vpack.c.b16 %v4859, %v4858
    %v4871 = vpack.c.b16 %v4861, %v4860
    %v4872 = vpack.c.b16 %v4863, %v4862
    %v4873 = vpack.c.b16 %v4865, %v4864
    %4882 = vmatpush.bf16.msra.mxu0 %v4873
    %4883 = vmatpush.bf16.msra.mxu0 %v4872
    %4884 = vmatpush.bf16.msra.mxu0 %v4871
    %4885 = vmatpush.bf16.msra.mxu0 %v4870
    %4886 = vmatpush.bf16.msra.mxu0 %v4869
    %4887 = vmatpush.bf16.msra.mxu0 %v4868
    %4888 = vmatpush.bf16.msra.mxu0 %v4867
    %4889 = vmatpush.bf16.msra.mxu0 %v4866
    %4890 = vmatmul.bf16.gmra.mxu0 %v4460
    %v4891 = vpop.f32.mrf.mxu0
    %v4892 = vadd.f32 %v4833, %v4891
    %v4893 = vpop.f32.mrf.mxu0
    %4894 = vdwg.mxu0
    %4895 = vmax.xlane.f32.xlu0 %v4892
    %v4896 = vpop.xlane.xlu0 %4895
    %v4897 = vsub.f32 %v4892, %v4896
    %v4898 = vmul.f32 %v4897, 1.442695
    %v4899 = vpow.pop %v4898
    %4900 = vadd.xlane.f32.xlu0 %v4899
    %v4901 = vpop.xlane.xlu0 %4900
    %v4902 = vrcp.pop %v4901
    %v4903 = vmul.f32 %v4899, %v4902
    %v4904 = vpack.c.bf16 %v4903, %v4903
    %v4905 = vld [vmem:[#allocation7] sm:$0xf]
    %v4906 = vld [vmem:[#allocation7 + $0x4] sm:$0xf]
    %v4907 = vld [vmem:[#allocation7 + $0x8] sm:$0xf]
    %v4908 = vld [vmem:[#allocation7 + $0xc] sm:$0xf]
    %v4909 = vld [vmem:[#allocation7 + $0x10] sm:$0xf]
    %v4910 = vld [vmem:[#allocation7 + $0x14] sm:$0xf]
    %v4911 = vld [vmem:[#allocation7 + $0x18] sm:$0xf]
    %v4912 = vld [vmem:[#allocation7 + $0x1c] sm:$0xf]
    %v4913 = vld [vmem:[#allocation7 + $0x20] sm:$0xf]
    %v4914 = vld [vmem:[#allocation7 + $0x24] sm:$0xf]
    %v4915 = vld [vmem:[#allocation7 + $0x28] sm:$0xf]
    %v4916 = vld [vmem:[#allocation7 + $0x2c] sm:$0xf]
    %v4917 = vld [vmem:[#allocation7 + $0x30] sm:$0xf]
    %v4918 = vld [vmem:[#allocation7 + $0x34] sm:$0xf]
    %v4919 = vld [vmem:[#allocation7 + $0x38] sm:$0xf]
    %v4920 = vld [vmem:[#allocation7 + $0x3c] sm:$0xf]
    %v4937 = vunpack.c.l.b16 %v4905
    %v4938 = vunpack.c.l.b16 %v4906
    %v4939 = vunpack.c.l.b16 %v4907
    %v4940 = vunpack.c.l.b16 %v4908
    %v4941 = vunpack.c.l.b16 %v4909
    %v4942 = vunpack.c.l.b16 %v4910
    %v4943 = vunpack.c.l.b16 %v4911
    %v4944 = vunpack.c.l.b16 %v4912
    %v4945 = vunpack.c.l.b16 %v4913
    %v4946 = vunpack.c.l.b16 %v4914
    %v4947 = vunpack.c.l.b16 %v4915
    %v4948 = vunpack.c.l.b16 %v4916
    %v4949 = vunpack.c.l.b16 %v4917
    %v4950 = vunpack.c.l.b16 %v4918
    %v4951 = vunpack.c.l.b16 %v4919
    %v4952 = vunpack.c.l.b16 %v4920
    %v4953 = vpack.c.b16 %v4938, %v4937
    %v4954 = vpack.c.b16 %v4940, %v4939
    %v4955 = vpack.c.b16 %v4942, %v4941
    %v4956 = vpack.c.b16 %v4944, %v4943
    %v4957 = vpack.c.b16 %v4946, %v4945
    %v4958 = vpack.c.b16 %v4948, %v4947
    %v4959 = vpack.c.b16 %v4950, %v4949
    %v4960 = vpack.c.b16 %v4952, %v4951
    %4969 = vmatpush.bf16.msra.mxu0 %v4960
    %4970 = vmatpush.bf16.msra.mxu0 %v4959
    %4971 = vmatpush.bf16.msra.mxu0 %v4958
    %4972 = vmatpush.bf16.msra.mxu0 %v4957
    %4973 = vmatpush.bf16.msra.mxu0 %v4956
    %4974 = vmatpush.bf16.msra.mxu0 %v4955
    %4975 = vmatpush.bf16.msra.mxu0 %v4954
    %4976 = vmatpush.bf16.msra.mxu0 %v4953
    %4977 = vmatmul.bf16.gmra.mxu0 %v4904
    %v4978 = vpop.f32.mrf.mxu0
    %v4979 = vadd.f32 0.0, %v4978
    %v4980 = vpop.f32.mrf.mxu0
    %4981 = vdwg.mxu0
    %v4982 = vpack.c.bf16 %v4979, %v4979
    %v4983 = vld [vmem:[#allocation17] sm:$0xf]
    %v4984 = vld [vmem:[#allocation17 + $0x4] sm:$0xf]
    %v4985 = vld [vmem:[#allocation17 + $0x8] sm:$0xf]
    %v4986 = vld [vmem:[#allocation17 + $0xc] sm:$0xf]
    %v4987 = vld [vmem:[#allocation17 + $0x10] sm:$0xf]
    %v4988 = vld [vmem:[#allocation17 + $0x14] sm:$0xf]
    %v4989 = vld [vmem:[#allocation17 + $0x18] sm:$0xf]
    %v4990 = vld [vmem:[#allocation17 + $0x1c] sm:$0xf]
    %v4991 = vld [vmem:[#allocation17 + $0x20] sm:$0xf]
    %v4992 = vld [vmem:[#allocation17 + $0x24] sm:$0xf]
    %v4993 = vld [vmem:[#allocation17 + $0x28] sm:$0xf]
    %v4994 = vld [vmem:[#allocation17 + $0x2c] sm:$0xf]
    %v4995 = vld [vmem:[#allocation17 + $0x30] sm:$0xf]
    %v4996 = vld [vmem:[#allocation17 + $0x34] sm:$0xf]
    %v4997 = vld [vmem:[#allocation17 + $0x38] sm:$0xf]
    %v4998 = vld [vmem:[#allocation17 + $0x3c] sm:$0xf]
    %s4999 = scalar_lea.vmem [#allocation2], 96
    %v5000 = vld [vmem:[%s4999] sm:$0xff]
    %v5001 = vld [vmem:[%s4999 + $0x8] sm:$0xff]
    %v5002 = vld [vmem:[%s4999 + $0x10] sm:$0xff]
    %v5003 = vld [vmem:[%s4999 + $0x18] sm:$0xff]
    %v5004 = vadd.f32 %v5000, %v4743
    %v5005 = vadd.f32 %v5001, %v4756
    %v5006 = vadd.f32 %v5002, %v4769
    %v5007 = vadd.f32 %v5003, %v4782
    %v5008 = vld [vmem:[#allocation10] sm:$0xff]
    %v5009 = vld [vmem:[#allocation10 + $0x8] sm:$0xff]
    %v5010 = vld [vmem:[#allocation10 + $0x10] sm:$0xff]
    %v5011 = vld [vmem:[#allocation10 + $0x18] sm:$0xff]
    %v5012 = vld [vmem:[#allocation10 + $0x20] sm:$0xff]
    %v5013 = vld [vmem:[#allocation10 + $0x28] sm:$0xff]
    %v5014 = vld [vmem:[#allocation10 + $0x30] sm:$0xff]
    %v5015 = vld [vmem:[#allocation10 + $0x38] sm:$0xff]
    %v5016 = vld [vmem:[#allocation10 + $0x40] sm:$0xff]
    %v5017 = vld [vmem:[#allocation10 + $0x48] sm:$0xff]
    %v5018 = vld [vmem:[#allocation10 + $0x50] sm:$0xff]
    %v5019 = vld [vmem:[#allocation10 + $0x58] sm:$0xff]
    %v5020 = vld [vmem:[#allocation10 + $0x60] sm:$0xff]
    %v5021 = vld [vmem:[#allocation10 + $0x68] sm:$0xff]
    %v5022 = vld [vmem:[#allocation10 + $0x70] sm:$0xff]
    %v5023 = vld [vmem:[#allocation10 + $0x78] sm:$0xff]
    %v5024 = vld [vmem:[#allocation10 + $0x80] sm:$0xff]
    %v5025 = vld [vmem:[#allocation10 + $0x88] sm:$0xff]
    %v5026 = vld [vmem:[#allocation10 + $0x90] sm:$0xff]
    %v5027 = vld [vmem:[#allocation10 + $0x98] sm:$0xff]
    %v5028 = vld [vmem:[#allocation10 + $0xa0] sm:$0xff]
    %v5029 = vld [vmem:[#allocation10 + $0xa8] sm:$0xff]
    %v5030 = vld [vmem:[#allocation10 + $0xb0] sm:$0xff]
    %v5031 = vld [vmem:[#allocation10 + $0xb8] sm:$0xff]
    %v5032 = vld [vmem:[#allocation10 + $0xc0] sm:$0xff]
    %v5033 = vld [vmem:[#allocation10 + $0xc8] sm:$0xff]
    %v5034 = vld [vmem:[#allocation10 + $0xd0] sm:$0xff]
    %v5035 = vld [vmem:[#allocation10 + $0xd8] sm:$0xff]
    %v5036 = vld [vmem:[#allocation10 + $0xe0] sm:$0xff]
    %v5037 = vld [vmem:[#allocation10 + $0xe8] sm:$0xff]
    %v5038 = vld [vmem:[#allocation10 + $0xf0] sm:$0xff]
    %v5039 = vld [vmem:[#allocation10 + $0xf8] sm:$0xff]
    %v5072 = vunpack.c.l.b16 %v5008
    %v5073 = vunpack.c.h.b16 %v5008
    %v5074 = vunpack.c.l.b16 %v5009
    %v5075 = vunpack.c.h.b16 %v5009
    %v5076 = vunpack.c.l.b16 %v5010
    %v5077 = vunpack.c.h.b16 %v5010
    %v5078 = vunpack.c.l.b16 %v5011
    %v5079 = vunpack.c.h.b16 %v5011
    %v5080 = vunpack.c.l.b16 %v5012
    %v5081 = vunpack.c.h.b16 %v5012
    %v5082 = vunpack.c.l.b16 %v5013
    %v5083 = vunpack.c.h.b16 %v5013
    %v5084 = vunpack.c.l.b16 %v5014
    %v5085 = vunpack.c.h.b16 %v5014
    %v5086 = vunpack.c.l.b16 %v5015
    %v5087 = vunpack.c.h.b16 %v5015
    %v5088 = vunpack.c.l.b16 %v5016
    %v5089 = vunpack.c.h.b16 %v5016
    %v5090 = vunpack.c.l.b16 %v5017
    %v5091 = vunpack.c.h.b16 %v5017
    %v5092 = vunpack.c.l.b16 %v5018
    %v5093 = vunpack.c.h.b16 %v5018
    %v5094 = vunpack.c.l.b16 %v5019
    %v5095 = vunpack.c.h.b16 %v5019
    %v5096 = vunpack.c.l.b16 %v5020
    %v5097 = vunpack.c.h.b16 %v5020
    %v5098 = vunpack.c.l.b16 %v5021
    %v5099 = vunpack.c.h.b16 %v5021
    %v5100 = vunpack.c.l.b16 %v5022
    %v5101 = vunpack.c.h.b16 %v5022
    %v5102 = vunpack.c.l.b16 %v5023
    %v5103 = vunpack.c.h.b16 %v5023
    %v5104 = vunpack.c.l.b16 %v5024
    %v5105 = vunpack.c.h.b16 %v5024
    %v5106 = vunpack.c.l.b16 %v5025
    %v5107 = vunpack.c.h.b16 %v5025
    %v5108 = vunpack.c.l.b16 %v5026
    %v5109 = vunpack.c.h.b16 %v5026
    %v5110 = vunpack.c.l.b16 %v5027
    %v5111 = vunpack.c.h.b16 %v5027
    %v5112 = vunpack.c.l.b16 %v5028
    %v5113 = vunpack.c.h.b16 %v5028
    %v5114 = vunpack.c.l.b16 %v5029
    %v5115 = vunpack.c.h.b16 %v5029
    %v5116 = vunpack.c.l.b16 %v5030
    %v5117 = vunpack.c.h.b16 %v5030
    %v5118 = vunpack.c.l.b16 %v5031
    %v5119 = vunpack.c.h.b16 %v5031
    %v5120 = vunpack.c.l.b16 %v5032
    %v5121 = vunpack.c.h.b16 %v5032
    %v5122 = vunpack.c.l.b16 %v5033
    %v5123 = vunpack.c.h.b16 %v5033
    %v5124 = vunpack.c.l.b16 %v5034
    %v5125 = vunpack.c.h.b16 %v5034
    %v5126 = vunpack.c.l.b16 %v5035
    %v5127 = vunpack.c.h.b16 %v5035
    %v5128 = vunpack.c.l.b16 %v5036
    %v5129 = vunpack.c.h.b16 %v5036
    %v5130 = vunpack.c.l.b16 %v5037
    %v5131 = vunpack.c.h.b16 %v5037
    %v5132 = vunpack.c.l.b16 %v5038
    %v5133 = vunpack.c.h.b16 %v5038
    %v5134 = vunpack.c.l.b16 %v5039
    %v5135 = vunpack.c.h.b16 %v5039
    %v5136 = vpack.c.b16 %v5076, %v5072
    %v5137 = vpack.c.b16 %v5077, %v5073
    %v5138 = vpack.c.b16 %v5078, %v5074
    %v5139 = vpack.c.b16 %v5079, %v5075
    %v5140 = vpack.c.b16 %v5084, %v5080
    %v5141 = vpack.c.b16 %v5085, %v5081
    %v5142 = vpack.c.b16 %v5086, %v5082
    %v5143 = vpack.c.b16 %v5087, %v5083
    %v5144 = vpack.c.b16 %v5092, %v5088
    %v5145 = vpack.c.b16 %v5093, %v5089
    %v5146 = vpack.c.b16 %v5094, %v5090
    %v5147 = vpack.c.b16 %v5095, %v5091
    %v5148 = vpack.c.b16 %v5100, %v5096
    %v5149 = vpack.c.b16 %v5101, %v5097
    %v5150 = vpack.c.b16 %v5102, %v5098
    %v5151 = vpack.c.b16 %v5103, %v5099
    %v5152 = vpack.c.b16 %v5108, %v5104
    %v5153 = vpack.c.b16 %v5109, %v5105
    %v5154 = vpack.c.b16 %v5110, %v5106
    %v5155 = vpack.c.b16 %v5111, %v5107
    %v5156 = vpack.c.b16 %v5116, %v5112
    %v5157 = vpack.c.b16 %v5117, %v5113
    %v5158 = vpack.c.b16 %v5118, %v5114
    %v5159 = vpack.c.b16 %v5119, %v5115
    %v5160 = vpack.c.b16 %v5124, %v5120
    %v5161 = vpack.c.b16 %v5125, %v5121
    %v5162 = vpack.c.b16 %v5126, %v5122
    %v5163 = vpack.c.b16 %v5127, %v5123
    %v5164 = vpack.c.b16 %v5132, %v5128
    %v5165 = vpack.c.b16 %v5133, %v5129
    %v5166 = vpack.c.b16 %v5134, %v5130
    %v5167 = vpack.c.b16 %v5135, %v5131
    %5200 = vmatpush.bf16.msra.mxu0 %v5164
    %5201 = vmatpush.bf16.msra.mxu0 %v5160
    %5202 = vmatpush.bf16.msra.mxu0 %v5156
    %5203 = vmatpush.bf16.msra.mxu0 %v5152
    %5204 = vmatpush.bf16.msra.mxu0 %v5148
    %5205 = vmatpush.bf16.msra.mxu0 %v5144
    %5206 = vmatpush.bf16.msra.mxu0 %v5140
    %5207 = vmatpush.bf16.msra.mxu0 %v5136
    %5208 = vmatmul.bf16.gmra.mxu0 %v4982
    %v5209 = vpop.f32.mrf.mxu0
    %v5210 = vadd.f32 0.0, %v5209
    %v5211 = vpop.f32.mrf.mxu0
    %5212 = vdwg.mxu0
    %5213 = vmatpush.bf16.msra.mxu0 %v5165
    %5214 = vmatpush.bf16.msra.mxu0 %v5161
    %5215 = vmatpush.bf16.msra.mxu0 %v5157
    %5216 = vmatpush.bf16.msra.mxu0 %v5153
    %5217 = vmatpush.bf16.msra.mxu0 %v5149
    %5218 = vmatpush.bf16.msra.mxu0 %v5145
    %5219 = vmatpush.bf16.msra.mxu0 %v5141
    %5220 = vmatpush.bf16.msra.mxu0 %v5137
    %5221 = vmatmul.bf16.gmra.mxu0 %v4982
    %v5222 = vpop.f32.mrf.mxu0
    %v5223 = vadd.f32 0.0, %v5222
    %v5224 = vpop.f32.mrf.mxu0
    %5225 = vdwg.mxu0
    %5226 = vmatpush.bf16.msra.mxu0 %v5166
    %5227 = vmatpush.bf16.msra.mxu0 %v5162
    %5228 = vmatpush.bf16.msra.mxu0 %v5158
    %5229 = vmatpush.bf16.msra.mxu0 %v5154
    %5230 = vmatpush.bf16.msra.mxu0 %v5150
    %5231 = vmatpush.bf16.msra.mxu0 %v5146
    %5232 = vmatpush.bf16.msra.mxu0 %v5142
    %5233 = vmatpush.bf16.msra.mxu0 %v5138
    %5234 = vmatmul.bf16.gmra.mxu0 %v4982
    %v5235 = vpop.f32.mrf.mxu0
    %v5236 = vadd.f32 0.0, %v5235
    %v5237 = vpop.f32.mrf.mxu0
    %5238 = vdwg.mxu0
    %5239 = vmatpush.bf16.msra.mxu0 %v5167
    %5240 = vmatpush.bf16.msra.mxu0 %v5163
    %5241 = vmatpush.bf16.msra.mxu0 %v5159
    %5242 = vmatpush.bf16.msra.mxu0 %v5155
    %5243 = vmatpush.bf16.msra.mxu0 %v5151
    %5244 = vmatpush.bf16.msra.mxu0 %v5147
    %5245 = vmatpush.bf16.msra.mxu0 %v5143
    %5246 = vmatpush.bf16.msra.mxu0 %v5139
    %5247 = vmatmul.bf16.gmra.mxu0 %v4982
    %v5248 = vpop.f32.mrf.mxu0
    %v5249 = vadd.f32 0.0, %v5248
    %v5250 = vpop.f32.mrf.mxu0
    %5251 = vdwg.mxu0
    %v5252 = vadd.f32 %v5004, %v5210
    %v5253 = vadd.f32 %v5005, %v5223
    %v5254 = vadd.f32 %v5006, %v5236
    %v5255 = vadd.f32 %v5007, %v5249
    %v5256 = vxor.u32 %v5252, 2147483648
    %v5257 = vxor.u32 %v5253, 2147483648
    %v5258 = vxor.u32 %v5254, 2147483648
    %v5259 = vmul.f32 %v5256, 1.442695
    %v5260 = vpow.pop %v5259
    %v5261 = vmul.f32 %v5257, 1.442695
    %v5262 = vpow.pop %v5261
    %v5263 = vmul.f32 %v5258, 1.442695
    %v5264 = vpow.pop %v5263
    %v5265 = vadd.f32 %v5260, 1.0
    %v5266 = vadd.f32 %v5262, 1.0
    %v5267 = vadd.f32 %v5264, 1.0
    %v5268 = vrcp.pop %v5265
    %v5269 = vmul.f32 %v5265, %v5268
    %v5270 = vsub.f32 1.0, %v5269
    %v5271 = vmul.f32 %v5268, %v5270
    %v5272 = vadd.f32 %v5268, %v5271
    %vm5273 = vweird.f32 %v5265
    %vm5274 = vweird.f32 %v5268
    %vm5275 = vmor %vm5273, %vm5274
    %v5276 = vsel %vm5275, %v5268, %v5272
    %v5277 = vand.u32 2147483647, %v5265
    %vm5278 = vcmp.eq.f32.partialorder %v5277, 8.507059e+37
    %v5279 = vand.u32 %v5265, 2147483648
    %v5280 = vor.u32 1.1754944e-38, %v5279
    %v5281 = vsel %vm5278, %v5280, %v5276
    %v5282 = vmul.f32 1.0, %v5281
    %v5283 = vrcp.pop %v5266
    %v5284 = vmul.f32 %v5266, %v5283
    %v5285 = vsub.f32 1.0, %v5284
    %v5286 = vmul.f32 %v5283, %v5285
    %v5287 = vadd.f32 %v5283, %v5286
    %vm5288 = vweird.f32 %v5266
    %vm5289 = vweird.f32 %v5283
    %vm5290 = vmor %vm5288, %vm5289
    %v5291 = vsel %vm5290, %v5283, %v5287
    %v5292 = vand.u32 2147483647, %v5266
    %vm5293 = vcmp.eq.f32.partialorder %v5292, 8.507059e+37
    %v5294 = vand.u32 %v5266, 2147483648
    %v5295 = vor.u32 1.1754944e-38, %v5294
    %v5296 = vsel %vm5293, %v5295, %v5291
    %v5297 = vmul.f32 1.0, %v5296
    %v5298 = vrcp.pop %v5267
    %v5299 = vmul.f32 %v5267, %v5298
    %v5300 = vsub.f32 1.0, %v5299
    %v5301 = vmul.f32 %v5298, %v5300
    %v5302 = vadd.f32 %v5298, %v5301
    %vm5303 = vweird.f32 %v5267
    %vm5304 = vweird.f32 %v5298
    %vm5305 = vmor %vm5303, %vm5304
    %v5306 = vsel %vm5305, %v5298, %v5302
    %v5307 = vand.u32 2147483647, %v5267
    %vm5308 = vcmp.eq.f32.partialorder %v5307, 8.507059e+37
    %v5309 = vand.u32 %v5267, 2147483648
    %v5310 = vor.u32 1.1754944e-38, %v5309
    %v5311 = vsel %vm5308, %v5310, %v5306
    %v5312 = vmul.f32 1.0, %v5311
    %v5313 = vtanh.pop %v5255
    %v5314 = vmul.f32 %v5297, %v3872
    %v5315 = vmul.f32 %v5282, %v5313
    %v5316 = vadd.f32 %v5314, %v5315
    %v5317 = vtanh.pop %v5316
    %v5318 = vmul.f32 %v5312, %v5317
    %v5351 = vunpack.c.l.b16 %v4785
    %v5352 = vunpack.c.h.b16 %v4785
    %v5353 = vunpack.c.l.b16 %v4786
    %v5354 = vunpack.c.h.b16 %v4786
    %v5355 = vunpack.c.l.b16 %v4787
    %v5356 = vunpack.c.h.b16 %v4787
    %v5357 = vunpack.c.l.b16 %v4788
    %v5358 = vunpack.c.h.b16 %v4788
    %v5359 = vunpack.c.l.b16 %v4789
    %v5360 = vunpack.c.h.b16 %v4789
    %v5361 = vunpack.c.l.b16 %v4790
    %v5362 = vunpack.c.h.b16 %v4790
    %v5363 = vunpack.c.l.b16 %v4791
    %v5364 = vunpack.c.h.b16 %v4791
    %v5365 = vunpack.c.l.b16 %v4792
    %v5366 = vunpack.c.h.b16 %v4792
    %v5367 = vunpack.c.l.b16 %v4793
    %v5368 = vunpack.c.h.b16 %v4793
    %v5369 = vunpack.c.l.b16 %v4794
    %v5370 = vunpack.c.h.b16 %v4794
    %v5371 = vunpack.c.l.b16 %v4795
    %v5372 = vunpack.c.h.b16 %v4795
    %v5373 = vunpack.c.l.b16 %v4796
    %v5374 = vunpack.c.h.b16 %v4796
    %v5375 = vunpack.c.l.b16 %v4797
    %v5376 = vunpack.c.h.b16 %v4797
    %v5377 = vunpack.c.l.b16 %v4798
    %v5378 = vunpack.c.h.b16 %v4798
    %v5379 = vunpack.c.l.b16 %v4799
    %v5380 = vunpack.c.h.b16 %v4799
    %v5381 = vunpack.c.l.b16 %v4800
    %v5382 = vunpack.c.h.b16 %v4800
    %v5383 = vunpack.c.l.b16 %v4801
    %v5384 = vunpack.c.h.b16 %v4801
    %v5385 = vunpack.c.l.b16 %v4802
    %v5386 = vunpack.c.h.b16 %v4802
    %v5387 = vunpack.c.l.b16 %v4803
    %v5388 = vunpack.c.h.b16 %v4803
    %v5389 = vunpack.c.l.b16 %v4804
    %v5390 = vunpack.c.h.b16 %v4804
    %v5391 = vunpack.c.l.b16 %v4805
    %v5392 = vunpack.c.h.b16 %v4805
    %v5393 = vunpack.c.l.b16 %v4806
    %v5394 = vunpack.c.h.b16 %v4806
    %v5395 = vunpack.c.l.b16 %v4807
    %v5396 = vunpack.c.h.b16 %v4807
    %v5397 = vunpack.c.l.b16 %v4808
    %v5398 = vunpack.c.h.b16 %v4808
    %v5399 = vunpack.c.l.b16 %v4809
    %v5400 = vunpack.c.h.b16 %v4809
    %v5401 = vunpack.c.l.b16 %v4810
    %v5402 = vunpack.c.h.b16 %v4810
    %v5403 = vunpack.c.l.b16 %v4811
    %v5404 = vunpack.c.h.b16 %v4811
    %v5405 = vunpack.c.l.b16 %v4812
    %v5406 = vunpack.c.h.b16 %v4812
    %v5407 = vunpack.c.l.b16 %v4813
    %v5408 = vunpack.c.h.b16 %v4813
    %v5409 = vunpack.c.l.b16 %v4814
    %v5410 = vunpack.c.h.b16 %v4814
    %v5411 = vunpack.c.l.b16 %v4815
    %v5412 = vunpack.c.h.b16 %v4815
    %v5413 = vunpack.c.l.b16 %v4816
    %v5414 = vunpack.c.h.b16 %v4816
    %v5415 = vpack.c.b16 %v5355, %v5351
    %v5416 = vpack.c.b16 %v5356, %v5352
    %v5417 = vpack.c.b16 %v5357, %v5353
    %v5418 = vpack.c.b16 %v5358, %v5354
    %v5419 = vpack.c.b16 %v5363, %v5359
    %v5420 = vpack.c.b16 %v5364, %v5360
    %v5421 = vpack.c.b16 %v5365, %v5361
    %v5422 = vpack.c.b16 %v5366, %v5362
    %v5423 = vpack.c.b16 %v5371, %v5367
    %v5424 = vpack.c.b16 %v5372, %v5368
    %v5425 = vpack.c.b16 %v5373, %v5369
    %v5426 = vpack.c.b16 %v5374, %v5370
    %v5427 = vpack.c.b16 %v5379, %v5375
    %v5428 = vpack.c.b16 %v5380, %v5376
    %v5429 = vpack.c.b16 %v5381, %v5377
    %v5430 = vpack.c.b16 %v5382, %v5378
    %v5431 = vpack.c.b16 %v5387, %v5383
    %v5432 = vpack.c.b16 %v5388, %v5384
    %v5433 = vpack.c.b16 %v5389, %v5385
    %v5434 = vpack.c.b16 %v5390, %v5386
    %v5435 = vpack.c.b16 %v5395, %v5391
    %v5436 = vpack.c.b16 %v5396, %v5392
    %v5437 = vpack.c.b16 %v5397, %v5393
    %v5438 = vpack.c.b16 %v5398, %v5394
    %v5439 = vpack.c.b16 %v5403, %v5399
    %v5440 = vpack.c.b16 %v5404, %v5400
    %v5441 = vpack.c.b16 %v5405, %v5401
    %v5442 = vpack.c.b16 %v5406, %v5402
    %v5443 = vpack.c.b16 %v5411, %v5407
    %v5444 = vpack.c.b16 %v5412, %v5408
    %v5445 = vpack.c.b16 %v5413, %v5409
    %v5446 = vpack.c.b16 %v5414, %v5410
    %5479 = vmatpush.bf16.msra.mxu0 %v5443
    %5480 = vmatpush.bf16.msra.mxu0 %v5439
    %5481 = vmatpush.bf16.msra.mxu0 %v5435
    %5482 = vmatpush.bf16.msra.mxu0 %v5431
    %5483 = vmatpush.bf16.msra.mxu0 %v5427
    %5484 = vmatpush.bf16.msra.mxu0 %v5423
    %5485 = vmatpush.bf16.msra.mxu0 %v5419
    %5486 = vmatpush.bf16.msra.mxu0 %v5415
    %5487 = vmatmul.bf16.gmra.mxu0 %v4460
    %v5488 = vpop.f32.mrf.mxu0
    %v5489 = vadd.f32 %v199, %v5488
    %v5490 = vpop.f32.mrf.mxu0
    %5491 = vdwg.mxu0
    %5492 = vmatpush.bf16.msra.mxu0 %v5444
    %5493 = vmatpush.bf16.msra.mxu0 %v5440
    %5494 = vmatpush.bf16.msra.mxu0 %v5436
    %5495 = vmatpush.bf16.msra.mxu0 %v5432
    %5496 = vmatpush.bf16.msra.mxu0 %v5428
    %5497 = vmatpush.bf16.msra.mxu0 %v5424
    %5498 = vmatpush.bf16.msra.mxu0 %v5420
    %5499 = vmatpush.bf16.msra.mxu0 %v5416
    %5500 = vmatmul.bf16.gmra.mxu0 %v4460
    %v5501 = vpop.f32.mrf.mxu0
    %v5502 = vadd.f32 %v200, %v5501
    %v5503 = vpop.f32.mrf.mxu0
    %5504 = vdwg.mxu0
    %5505 = vmatpush.bf16.msra.mxu0 %v5445
    %5506 = vmatpush.bf16.msra.mxu0 %v5441
    %5507 = vmatpush.bf16.msra.mxu0 %v5437
    %5508 = vmatpush.bf16.msra.mxu0 %v5433
    %5509 = vmatpush.bf16.msra.mxu0 %v5429
    %5510 = vmatpush.bf16.msra.mxu0 %v5425
    %5511 = vmatpush.bf16.msra.mxu0 %v5421
    %5512 = vmatpush.bf16.msra.mxu0 %v5417
    %5513 = vmatmul.bf16.gmra.mxu0 %v4460
    %v5514 = vpop.f32.mrf.mxu0
    %v5515 = vadd.f32 %v201, %v5514
    %v5516 = vpop.f32.mrf.mxu0
    %5517 = vdwg.mxu0
    %5518 = vmatpush.bf16.msra.mxu0 %v5446
    %5519 = vmatpush.bf16.msra.mxu0 %v5442
    %5520 = vmatpush.bf16.msra.mxu0 %v5438
    %5521 = vmatpush.bf16.msra.mxu0 %v5434
    %5522 = vmatpush.bf16.msra.mxu0 %v5430
    %5523 = vmatpush.bf16.msra.mxu0 %v5426
    %5524 = vmatpush.bf16.msra.mxu0 %v5422
    %5525 = vmatpush.bf16.msra.mxu0 %v5418
    %5526 = vmatmul.bf16.gmra.mxu0 %v4460
    %v5527 = vpop.f32.mrf.mxu0
    %v5528 = vadd.f32 %v202, %v5527
    %v5529 = vpop.f32.mrf.mxu0
    %5530 = vdwg.mxu0
    %v5531 = vpack.c.bf16 %v5318, %v5318
    %v5532 = vld [vmem:[#allocation13] sm:$0xff]
    %v5533 = vld [vmem:[#allocation13 + $0x8] sm:$0xff]
    %v5534 = vld [vmem:[#allocation13 + $0x10] sm:$0xff]
    %v5535 = vld [vmem:[#allocation13 + $0x18] sm:$0xff]
    %v5536 = vld [vmem:[#allocation13 + $0x20] sm:$0xff]
    %v5537 = vld [vmem:[#allocation13 + $0x28] sm:$0xff]
    %v5538 = vld [vmem:[#allocation13 + $0x30] sm:$0xff]
    %v5539 = vld [vmem:[#allocation13 + $0x38] sm:$0xff]
    %v5540 = vld [vmem:[#allocation13 + $0x40] sm:$0xff]
    %v5541 = vld [vmem:[#allocation13 + $0x48] sm:$0xff]
    %v5542 = vld [vmem:[#allocation13 + $0x50] sm:$0xff]
    %v5543 = vld [vmem:[#allocation13 + $0x58] sm:$0xff]
    %v5544 = vld [vmem:[#allocation13 + $0x60] sm:$0xff]
    %v5545 = vld [vmem:[#allocation13 + $0x68] sm:$0xff]
    %v5546 = vld [vmem:[#allocation13 + $0x70] sm:$0xff]
    %v5547 = vld [vmem:[#allocation13 + $0x78] sm:$0xff]
    %v5548 = vld [vmem:[#allocation13 + $0x80] sm:$0xff]
    %v5549 = vld [vmem:[#allocation13 + $0x88] sm:$0xff]
    %v5550 = vld [vmem:[#allocation13 + $0x90] sm:$0xff]
    %v5551 = vld [vmem:[#allocation13 + $0x98] sm:$0xff]
    %v5552 = vld [vmem:[#allocation13 + $0xa0] sm:$0xff]
    %v5553 = vld [vmem:[#allocation13 + $0xa8] sm:$0xff]
    %v5554 = vld [vmem:[#allocation13 + $0xb0] sm:$0xff]
    %v5555 = vld [vmem:[#allocation13 + $0xb8] sm:$0xff]
    %v5556 = vld [vmem:[#allocation13 + $0xc0] sm:$0xff]
    %v5557 = vld [vmem:[#allocation13 + $0xc8] sm:$0xff]
    %v5558 = vld [vmem:[#allocation13 + $0xd0] sm:$0xff]
    %v5559 = vld [vmem:[#allocation13 + $0xd8] sm:$0xff]
    %v5560 = vld [vmem:[#allocation13 + $0xe0] sm:$0xff]
    %v5561 = vld [vmem:[#allocation13 + $0xe8] sm:$0xff]
    %v5562 = vld [vmem:[#allocation13 + $0xf0] sm:$0xff]
    %v5563 = vld [vmem:[#allocation13 + $0xf8] sm:$0xff]
    %v5596 = vunpack.c.l.b16 %v5532
    %v5597 = vunpack.c.h.b16 %v5532
    %v5598 = vunpack.c.l.b16 %v5533
    %v5599 = vunpack.c.h.b16 %v5533
    %v5600 = vunpack.c.l.b16 %v5534
    %v5601 = vunpack.c.h.b16 %v5534
    %v5602 = vunpack.c.l.b16 %v5535
    %v5603 = vunpack.c.h.b16 %v5535
    %v5604 = vunpack.c.l.b16 %v5536
    %v5605 = vunpack.c.h.b16 %v5536
    %v5606 = vunpack.c.l.b16 %v5537
    %v5607 = vunpack.c.h.b16 %v5537
    %v5608 = vunpack.c.l.b16 %v5538
    %v5609 = vunpack.c.h.b16 %v5538
    %v5610 = vunpack.c.l.b16 %v5539
    %v5611 = vunpack.c.h.b16 %v5539
    %v5612 = vunpack.c.l.b16 %v5540
    %v5613 = vunpack.c.h.b16 %v5540
    %v5614 = vunpack.c.l.b16 %v5541
    %v5615 = vunpack.c.h.b16 %v5541
    %v5616 = vunpack.c.l.b16 %v5542
    %v5617 = vunpack.c.h.b16 %v5542
    %v5618 = vunpack.c.l.b16 %v5543
    %v5619 = vunpack.c.h.b16 %v5543
    %v5620 = vunpack.c.l.b16 %v5544
    %v5621 = vunpack.c.h.b16 %v5544
    %v5622 = vunpack.c.l.b16 %v5545
    %v5623 = vunpack.c.h.b16 %v5545
    %v5624 = vunpack.c.l.b16 %v5546
    %v5625 = vunpack.c.h.b16 %v5546
    %v5626 = vunpack.c.l.b16 %v5547
    %v5627 = vunpack.c.h.b16 %v5547
    %v5628 = vunpack.c.l.b16 %v5548
    %v5629 = vunpack.c.h.b16 %v5548
    %v5630 = vunpack.c.l.b16 %v5549
    %v5631 = vunpack.c.h.b16 %v5549
    %v5632 = vunpack.c.l.b16 %v5550
    %v5633 = vunpack.c.h.b16 %v5550
    %v5634 = vunpack.c.l.b16 %v5551
    %v5635 = vunpack.c.h.b16 %v5551
    %v5636 = vunpack.c.l.b16 %v5552
    %v5637 = vunpack.c.h.b16 %v5552
    %v5638 = vunpack.c.l.b16 %v5553
    %v5639 = vunpack.c.h.b16 %v5553
    %v5640 = vunpack.c.l.b16 %v5554
    %v5641 = vunpack.c.h.b16 %v5554
    %v5642 = vunpack.c.l.b16 %v5555
    %v5643 = vunpack.c.h.b16 %v5555
    %v5644 = vunpack.c.l.b16 %v5556
    %v5645 = vunpack.c.h.b16 %v5556
    %v5646 = vunpack.c.l.b16 %v5557
    %v5647 = vunpack.c.h.b16 %v5557
    %v5648 = vunpack.c.l.b16 %v5558
    %v5649 = vunpack.c.h.b16 %v5558
    %v5650 = vunpack.c.l.b16 %v5559
    %v5651 = vunpack.c.h.b16 %v5559
    %v5652 = vunpack.c.l.b16 %v5560
    %v5653 = vunpack.c.h.b16 %v5560
    %v5654 = vunpack.c.l.b16 %v5561
    %v5655 = vunpack.c.h.b16 %v5561
    %v5656 = vunpack.c.l.b16 %v5562
    %v5657 = vunpack.c.h.b16 %v5562
    %v5658 = vunpack.c.l.b16 %v5563
    %v5659 = vunpack.c.h.b16 %v5563
    %v5660 = vpack.c.b16 %v5600, %v5596
    %v5661 = vpack.c.b16 %v5601, %v5597
    %v5662 = vpack.c.b16 %v5602, %v5598
    %v5663 = vpack.c.b16 %v5603, %v5599
    %v5664 = vpack.c.b16 %v5608, %v5604
    %v5665 = vpack.c.b16 %v5609, %v5605
    %v5666 = vpack.c.b16 %v5610, %v5606
    %v5667 = vpack.c.b16 %v5611, %v5607
    %v5668 = vpack.c.b16 %v5616, %v5612
    %v5669 = vpack.c.b16 %v5617, %v5613
    %v5670 = vpack.c.b16 %v5618, %v5614
    %v5671 = vpack.c.b16 %v5619, %v5615
    %v5672 = vpack.c.b16 %v5624, %v5620
    %v5673 = vpack.c.b16 %v5625, %v5621
    %v5674 = vpack.c.b16 %v5626, %v5622
    %v5675 = vpack.c.b16 %v5627, %v5623
    %v5676 = vpack.c.b16 %v5632, %v5628
    %v5677 = vpack.c.b16 %v5633, %v5629
    %v5678 = vpack.c.b16 %v5634, %v5630
    %v5679 = vpack.c.b16 %v5635, %v5631
    %v5680 = vpack.c.b16 %v5640, %v5636
    %v5681 = vpack.c.b16 %v5641, %v5637
    %v5682 = vpack.c.b16 %v5642, %v5638
    %v5683 = vpack.c.b16 %v5643, %v5639
    %v5684 = vpack.c.b16 %v5648, %v5644
    %v5685 = vpack.c.b16 %v5649, %v5645
    %v5686 = vpack.c.b16 %v5650, %v5646
    %v5687 = vpack.c.b16 %v5651, %v5647
    %v5688 = vpack.c.b16 %v5656, %v5652
    %v5689 = vpack.c.b16 %v5657, %v5653
    %v5690 = vpack.c.b16 %v5658, %v5654
    %v5691 = vpack.c.b16 %v5659, %v5655
    %5724 = vmatpush.bf16.msra.mxu0 %v5688
    %5725 = vmatpush.bf16.msra.mxu0 %v5684
    %5726 = vmatpush.bf16.msra.mxu0 %v5680
    %5727 = vmatpush.bf16.msra.mxu0 %v5676
    %5728 = vmatpush.bf16.msra.mxu0 %v5672
    %5729 = vmatpush.bf16.msra.mxu0 %v5668
    %5730 = vmatpush.bf16.msra.mxu0 %v5664
    %5731 = vmatpush.bf16.msra.mxu0 %v5660
    %5732 = vmatmul.bf16.gmra.mxu0 %v5531
    %v5733 = vpop.f32.mrf.mxu0
    %v5734 = vadd.f32 0.0, %v5733
    %v5735 = vpop.f32.mrf.mxu0
    %5736 = vdwg.mxu0
    %5737 = vmatpush.bf16.msra.mxu0 %v5689
    %5738 = vmatpush.bf16.msra.mxu0 %v5685
    %5739 = vmatpush.bf16.msra.mxu0 %v5681
    %5740 = vmatpush.bf16.msra.mxu0 %v5677
    %5741 = vmatpush.bf16.msra.mxu0 %v5673
    %5742 = vmatpush.bf16.msra.mxu0 %v5669
    %5743 = vmatpush.bf16.msra.mxu0 %v5665
    %5744 = vmatpush.bf16.msra.mxu0 %v5661
    %5745 = vmatmul.bf16.gmra.mxu0 %v5531
    %v5746 = vpop.f32.mrf.mxu0
    %v5747 = vadd.f32 0.0, %v5746
    %v5748 = vpop.f32.mrf.mxu0
    %5749 = vdwg.mxu0
    %5750 = vmatpush.bf16.msra.mxu0 %v5690
    %5751 = vmatpush.bf16.msra.mxu0 %v5686
    %5752 = vmatpush.bf16.msra.mxu0 %v5682
    %5753 = vmatpush.bf16.msra.mxu0 %v5678
    %5754 = vmatpush.bf16.msra.mxu0 %v5674
    %5755 = vmatpush.bf16.msra.mxu0 %v5670
    %5756 = vmatpush.bf16.msra.mxu0 %v5666
    %5757 = vmatpush.bf16.msra.mxu0 %v5662
    %5758 = vmatmul.bf16.gmra.mxu0 %v5531
    %v5759 = vpop.f32.mrf.mxu0
    %v5760 = vadd.f32 0.0, %v5759
    %v5761 = vpop.f32.mrf.mxu0
    %5762 = vdwg.mxu0
    %5763 = vmatpush.bf16.msra.mxu0 %v5691
    %5764 = vmatpush.bf16.msra.mxu0 %v5687
    %5765 = vmatpush.bf16.msra.mxu0 %v5683
    %5766 = vmatpush.bf16.msra.mxu0 %v5679
    %5767 = vmatpush.bf16.msra.mxu0 %v5675
    %5768 = vmatpush.bf16.msra.mxu0 %v5671
    %5769 = vmatpush.bf16.msra.mxu0 %v5667
    %5770 = vmatpush.bf16.msra.mxu0 %v5663
    %5771 = vmatmul.bf16.gmra.mxu0 %v5531
    %v5772 = vpop.f32.mrf.mxu0
    %v5773 = vadd.f32 0.0, %v5772
    %v5774 = vpop.f32.mrf.mxu0
    %5775 = vdwg.mxu0
    %v5776 = vadd.f32 %v5489, %v5734
    %v5777 = vadd.f32 %v5502, %v5747
    %v5778 = vadd.f32 %v5515, %v5760
    %v5779 = vadd.f32 %v5528, %v5773
    %v5780 = vxor.u32 %v5776, 2147483648
    %v5781 = vxor.u32 %v5777, 2147483648
    %v5782 = vxor.u32 %v5778, 2147483648
    %v5783 = vmul.f32 %v5780, 1.442695
    %v5784 = vpow.pop %v5783
    %v5785 = vmul.f32 %v5781, 1.442695
    %v5786 = vpow.pop %v5785
    %v5787 = vmul.f32 %v5782, 1.442695
    %v5788 = vpow.pop %v5787
    %v5789 = vadd.f32 %v5784, 1.0
    %v5790 = vadd.f32 %v5786, 1.0
    %v5791 = vadd.f32 %v5788, 1.0
    %v5792 = vrcp.pop %v5789
    %v5793 = vmul.f32 %v5789, %v5792
    %v5794 = vsub.f32 1.0, %v5793
    %v5795 = vmul.f32 %v5792, %v5794
    %v5796 = vadd.f32 %v5792, %v5795
    %vm5797 = vweird.f32 %v5789
    %vm5798 = vweird.f32 %v5792
    %vm5799 = vmor %vm5797, %vm5798
    %v5800 = vsel %vm5799, %v5792, %v5796
    %v5801 = vand.u32 2147483647, %v5789
    %vm5802 = vcmp.eq.f32.partialorder %v5801, 8.507059e+37
    %v5803 = vand.u32 %v5789, 2147483648
    %v5804 = vor.u32 1.1754944e-38, %v5803
    %v5805 = vsel %vm5802, %v5804, %v5800
    %v5806 = vmul.f32 1.0, %v5805
    %v5807 = vrcp.pop %v5790
    %v5808 = vmul.f32 %v5790, %v5807
    %v5809 = vsub.f32 1.0, %v5808
    %v5810 = vmul.f32 %v5807, %v5809
    %v5811 = vadd.f32 %v5807, %v5810
    %vm5812 = vweird.f32 %v5790
    %vm5813 = vweird.f32 %v5807
    %vm5814 = vmor %vm5812, %vm5813
    %v5815 = vsel %vm5814, %v5807, %v5811
    %v5816 = vand.u32 2147483647, %v5790
    %vm5817 = vcmp.eq.f32.partialorder %v5816, 8.507059e+37
    %v5818 = vand.u32 %v5790, 2147483648
    %v5819 = vor.u32 1.1754944e-38, %v5818
    %v5820 = vsel %vm5817, %v5819, %v5815
    %v5821 = vmul.f32 1.0, %v5820
    %v5822 = vrcp.pop %v5791
    %v5823 = vmul.f32 %v5791, %v5822
    %v5824 = vsub.f32 1.0, %v5823
    %v5825 = vmul.f32 %v5822, %v5824
    %v5826 = vadd.f32 %v5822, %v5825
    %vm5827 = vweird.f32 %v5791
    %vm5828 = vweird.f32 %v5822
    %vm5829 = vmor %vm5827, %vm5828
    %v5830 = vsel %vm5829, %v5822, %v5826
    %v5831 = vand.u32 2147483647, %v5791
    %vm5832 = vcmp.eq.f32.partialorder %v5831, 8.507059e+37
    %v5833 = vand.u32 %v5791, 2147483648
    %v5834 = vor.u32 1.1754944e-38, %v5833
    %v5835 = vsel %vm5832, %v5834, %v5830
    %v5836 = vmul.f32 1.0, %v5835
    %v5837 = vtanh.pop %v5779
    %v5838 = vmul.f32 %v5821, %v4396
    %v5839 = vmul.f32 %v5806, %v5837
    %v5840 = vadd.f32 %v5838, %v5839
    %v5841 = vtanh.pop %v5840
    %v5842 = vmul.f32 %v5836, %v5841
    %v5859 = vunpack.c.l.b16 %v4983
    %v5860 = vunpack.c.l.b16 %v4984
    %v5861 = vunpack.c.l.b16 %v4985
    %v5862 = vunpack.c.l.b16 %v4986
    %v5863 = vunpack.c.l.b16 %v4987
    %v5864 = vunpack.c.l.b16 %v4988
    %v5865 = vunpack.c.l.b16 %v4989
    %v5866 = vunpack.c.l.b16 %v4990
    %v5867 = vunpack.c.l.b16 %v4991
    %v5868 = vunpack.c.l.b16 %v4992
    %v5869 = vunpack.c.l.b16 %v4993
    %v5870 = vunpack.c.l.b16 %v4994
    %v5871 = vunpack.c.l.b16 %v4995
    %v5872 = vunpack.c.l.b16 %v4996
    %v5873 = vunpack.c.l.b16 %v4997
    %v5874 = vunpack.c.l.b16 %v4998
    %v5875 = vpack.c.b16 %v5860, %v5859
    %v5876 = vpack.c.b16 %v5862, %v5861
    %v5877 = vpack.c.b16 %v5864, %v5863
    %v5878 = vpack.c.b16 %v5866, %v5865
    %v5879 = vpack.c.b16 %v5868, %v5867
    %v5880 = vpack.c.b16 %v5870, %v5869
    %v5881 = vpack.c.b16 %v5872, %v5871
    %v5882 = vpack.c.b16 %v5874, %v5873
    %5891 = vmatpush.bf16.msra.mxu0 %v5882
    %5892 = vmatpush.bf16.msra.mxu0 %v5881
    %5893 = vmatpush.bf16.msra.mxu0 %v5880
    %5894 = vmatpush.bf16.msra.mxu0 %v5879
    %5895 = vmatpush.bf16.msra.mxu0 %v5878
    %5896 = vmatpush.bf16.msra.mxu0 %v5877
    %5897 = vmatpush.bf16.msra.mxu0 %v5876
    %5898 = vmatpush.bf16.msra.mxu0 %v5875
    %5899 = vmatmul.bf16.gmra.mxu0 %v4982
    %v5900 = vpop.f32.mrf.mxu0
    %v5901 = vadd.f32 %v209, %v5900
    %v5902 = vpop.f32.mrf.mxu0
    %5903 = vdwg.mxu0
    %v5904 = vpack.c.bf16 %v5842, %v5842
    %v5905 = vld [vmem:[#allocation16] sm:$0xf]
    %v5906 = vld [vmem:[#allocation16 + $0x4] sm:$0xf]
    %v5907 = vld [vmem:[#allocation16 + $0x8] sm:$0xf]
    %v5908 = vld [vmem:[#allocation16 + $0xc] sm:$0xf]
    %v5909 = vld [vmem:[#allocation16 + $0x10] sm:$0xf]
    %v5910 = vld [vmem:[#allocation16 + $0x14] sm:$0xf]
    %v5911 = vld [vmem:[#allocation16 + $0x18] sm:$0xf]
    %v5912 = vld [vmem:[#allocation16 + $0x1c] sm:$0xf]
    %v5913 = vld [vmem:[#allocation16 + $0x20] sm:$0xf]
    %v5914 = vld [vmem:[#allocation16 + $0x24] sm:$0xf]
    %v5915 = vld [vmem:[#allocation16 + $0x28] sm:$0xf]
    %v5916 = vld [vmem:[#allocation16 + $0x2c] sm:$0xf]
    %v5917 = vld [vmem:[#allocation16 + $0x30] sm:$0xf]
    %v5918 = vld [vmem:[#allocation16 + $0x34] sm:$0xf]
    %v5919 = vld [vmem:[#allocation16 + $0x38] sm:$0xf]
    %v5920 = vld [vmem:[#allocation16 + $0x3c] sm:$0xf]
    %v5937 = vunpack.c.l.b16 %v5905
    %v5938 = vunpack.c.l.b16 %v5906
    %v5939 = vunpack.c.l.b16 %v5907
    %v5940 = vunpack.c.l.b16 %v5908
    %v5941 = vunpack.c.l.b16 %v5909
    %v5942 = vunpack.c.l.b16 %v5910
    %v5943 = vunpack.c.l.b16 %v5911
    %v5944 = vunpack.c.l.b16 %v5912
    %v5945 = vunpack.c.l.b16 %v5913
    %v5946 = vunpack.c.l.b16 %v5914
    %v5947 = vunpack.c.l.b16 %v5915
    %v5948 = vunpack.c.l.b16 %v5916
    %v5949 = vunpack.c.l.b16 %v5917
    %v5950 = vunpack.c.l.b16 %v5918
    %v5951 = vunpack.c.l.b16 %v5919
    %v5952 = vunpack.c.l.b16 %v5920
    %v5953 = vpack.c.b16 %v5938, %v5937
    %v5954 = vpack.c.b16 %v5940, %v5939
    %v5955 = vpack.c.b16 %v5942, %v5941
    %v5956 = vpack.c.b16 %v5944, %v5943
    %v5957 = vpack.c.b16 %v5946, %v5945
    %v5958 = vpack.c.b16 %v5948, %v5947
    %v5959 = vpack.c.b16 %v5950, %v5949
    %v5960 = vpack.c.b16 %v5952, %v5951
    %5969 = vmatpush.bf16.msra.mxu0 %v5960
    %5970 = vmatpush.bf16.msra.mxu0 %v5959
    %5971 = vmatpush.bf16.msra.mxu0 %v5958
    %5972 = vmatpush.bf16.msra.mxu0 %v5957
    %5973 = vmatpush.bf16.msra.mxu0 %v5956
    %5974 = vmatpush.bf16.msra.mxu0 %v5955
    %5975 = vmatpush.bf16.msra.mxu0 %v5954
    %5976 = vmatpush.bf16.msra.mxu0 %v5953
    %5977 = vmatmul.bf16.gmra.mxu0 %v5904
    %v5978 = vpop.f32.mrf.mxu0
    %v5979 = vadd.f32 0.0, %v5978
    %v5980 = vpop.f32.mrf.mxu0
    %5981 = vdwg.mxu0
    %v5982 = vadd.f32 %v5901, %v5979
    %s5983 = scalar_lea.vmem [#allocation19], 24
    %5984 = vst [vmem:[%s5983] sm:$0xff] %v5982
    %v5985 = vld [vmem:[#allocation11] sm:$0xff]
    %v5986 = vld [vmem:[#allocation11 + $0x8] sm:$0xff]
    %v5987 = vld [vmem:[#allocation11 + $0x10] sm:$0xff]
    %v5988 = vld [vmem:[#allocation11 + $0x18] sm:$0xff]
    %v5989 = vld [vmem:[#allocation11 + $0x20] sm:$0xff]
    %v5990 = vld [vmem:[#allocation11 + $0x28] sm:$0xff]
    %v5991 = vld [vmem:[#allocation11 + $0x30] sm:$0xff]
    %v5992 = vld [vmem:[#allocation11 + $0x38] sm:$0xff]
    %v5993 = vld [vmem:[#allocation11 + $0x40] sm:$0xff]
    %v5994 = vld [vmem:[#allocation11 + $0x48] sm:$0xff]
    %v5995 = vld [vmem:[#allocation11 + $0x50] sm:$0xff]
    %v5996 = vld [vmem:[#allocation11 + $0x58] sm:$0xff]
    %v5997 = vld [vmem:[#allocation11 + $0x60] sm:$0xff]
    %v5998 = vld [vmem:[#allocation11 + $0x68] sm:$0xff]
    %v5999 = vld [vmem:[#allocation11 + $0x70] sm:$0xff]
    %v6000 = vld [vmem:[#allocation11 + $0x78] sm:$0xff]
    %v6001 = vld [vmem:[#allocation11 + $0x80] sm:$0xff]
    %v6002 = vld [vmem:[#allocation11 + $0x88] sm:$0xff]
    %v6003 = vld [vmem:[#allocation11 + $0x90] sm:$0xff]
    %v6004 = vld [vmem:[#allocation11 + $0x98] sm:$0xff]
    %v6005 = vld [vmem:[#allocation11 + $0xa0] sm:$0xff]
    %v6006 = vld [vmem:[#allocation11 + $0xa8] sm:$0xff]
    %v6007 = vld [vmem:[#allocation11 + $0xb0] sm:$0xff]
    %v6008 = vld [vmem:[#allocation11 + $0xb8] sm:$0xff]
    %v6009 = vld [vmem:[#allocation11 + $0xc0] sm:$0xff]
    %v6010 = vld [vmem:[#allocation11 + $0xc8] sm:$0xff]
    %v6011 = vld [vmem:[#allocation11 + $0xd0] sm:$0xff]
    %v6012 = vld [vmem:[#allocation11 + $0xd8] sm:$0xff]
    %v6013 = vld [vmem:[#allocation11 + $0xe0] sm:$0xff]
    %v6014 = vld [vmem:[#allocation11 + $0xe8] sm:$0xff]
    %v6015 = vld [vmem:[#allocation11 + $0xf0] sm:$0xff]
    %v6016 = vld [vmem:[#allocation11 + $0xf8] sm:$0xff]
    %v6049 = vunpack.c.l.b16 %v5985
    %v6050 = vunpack.c.h.b16 %v5985
    %v6051 = vunpack.c.l.b16 %v5986
    %v6052 = vunpack.c.h.b16 %v5986
    %v6053 = vunpack.c.l.b16 %v5987
    %v6054 = vunpack.c.h.b16 %v5987
    %v6055 = vunpack.c.l.b16 %v5988
    %v6056 = vunpack.c.h.b16 %v5988
    %v6057 = vunpack.c.l.b16 %v5989
    %v6058 = vunpack.c.h.b16 %v5989
    %v6059 = vunpack.c.l.b16 %v5990
    %v6060 = vunpack.c.h.b16 %v5990
    %v6061 = vunpack.c.l.b16 %v5991
    %v6062 = vunpack.c.h.b16 %v5991
    %v6063 = vunpack.c.l.b16 %v5992
    %v6064 = vunpack.c.h.b16 %v5992
    %v6065 = vunpack.c.l.b16 %v5993
    %v6066 = vunpack.c.h.b16 %v5993
    %v6067 = vunpack.c.l.b16 %v5994
    %v6068 = vunpack.c.h.b16 %v5994
    %v6069 = vunpack.c.l.b16 %v5995
    %v6070 = vunpack.c.h.b16 %v5995
    %v6071 = vunpack.c.l.b16 %v5996
    %v6072 = vunpack.c.h.b16 %v5996
    %v6073 = vunpack.c.l.b16 %v5997
    %v6074 = vunpack.c.h.b16 %v5997
    %v6075 = vunpack.c.l.b16 %v5998
    %v6076 = vunpack.c.h.b16 %v5998
    %v6077 = vunpack.c.l.b16 %v5999
    %v6078 = vunpack.c.h.b16 %v5999
    %v6079 = vunpack.c.l.b16 %v6000
    %v6080 = vunpack.c.h.b16 %v6000
    %v6081 = vunpack.c.l.b16 %v6001
    %v6082 = vunpack.c.h.b16 %v6001
    %v6083 = vunpack.c.l.b16 %v6002
    %v6084 = vunpack.c.h.b16 %v6002
    %v6085 = vunpack.c.l.b16 %v6003
    %v6086 = vunpack.c.h.b16 %v6003
    %v6087 = vunpack.c.l.b16 %v6004
    %v6088 = vunpack.c.h.b16 %v6004
    %v6089 = vunpack.c.l.b16 %v6005
    %v6090 = vunpack.c.h.b16 %v6005
    %v6091 = vunpack.c.l.b16 %v6006
    %v6092 = vunpack.c.h.b16 %v6006
    %v6093 = vunpack.c.l.b16 %v6007
    %v6094 = vunpack.c.h.b16 %v6007
    %v6095 = vunpack.c.l.b16 %v6008
    %v6096 = vunpack.c.h.b16 %v6008
    %v6097 = vunpack.c.l.b16 %v6009
    %v6098 = vunpack.c.h.b16 %v6009
    %v6099 = vunpack.c.l.b16 %v6010
    %v6100 = vunpack.c.h.b16 %v6010
    %v6101 = vunpack.c.l.b16 %v6011
    %v6102 = vunpack.c.h.b16 %v6011
    %v6103 = vunpack.c.l.b16 %v6012
    %v6104 = vunpack.c.h.b16 %v6012
    %v6105 = vunpack.c.l.b16 %v6013
    %v6106 = vunpack.c.h.b16 %v6013
    %v6107 = vunpack.c.l.b16 %v6014
    %v6108 = vunpack.c.h.b16 %v6014
    %v6109 = vunpack.c.l.b16 %v6015
    %v6110 = vunpack.c.h.b16 %v6015
    %v6111 = vunpack.c.l.b16 %v6016
    %v6112 = vunpack.c.h.b16 %v6016
    %v6113 = vpack.c.b16 %v6053, %v6049
    %v6114 = vpack.c.b16 %v6054, %v6050
    %v6115 = vpack.c.b16 %v6055, %v6051
    %v6116 = vpack.c.b16 %v6056, %v6052
    %v6117 = vpack.c.b16 %v6061, %v6057
    %v6118 = vpack.c.b16 %v6062, %v6058
    %v6119 = vpack.c.b16 %v6063, %v6059
    %v6120 = vpack.c.b16 %v6064, %v6060
    %v6121 = vpack.c.b16 %v6069, %v6065
    %v6122 = vpack.c.b16 %v6070, %v6066
    %v6123 = vpack.c.b16 %v6071, %v6067
    %v6124 = vpack.c.b16 %v6072, %v6068
    %v6125 = vpack.c.b16 %v6077, %v6073
    %v6126 = vpack.c.b16 %v6078, %v6074
    %v6127 = vpack.c.b16 %v6079, %v6075
    %v6128 = vpack.c.b16 %v6080, %v6076
    %v6129 = vpack.c.b16 %v6085, %v6081
    %v6130 = vpack.c.b16 %v6086, %v6082
    %v6131 = vpack.c.b16 %v6087, %v6083
    %v6132 = vpack.c.b16 %v6088, %v6084
    %v6133 = vpack.c.b16 %v6093, %v6089
    %v6134 = vpack.c.b16 %v6094, %v6090
    %v6135 = vpack.c.b16 %v6095, %v6091
    %v6136 = vpack.c.b16 %v6096, %v6092
    %v6137 = vpack.c.b16 %v6101, %v6097
    %v6138 = vpack.c.b16 %v6102, %v6098
    %v6139 = vpack.c.b16 %v6103, %v6099
    %v6140 = vpack.c.b16 %v6104, %v6100
    %v6141 = vpack.c.b16 %v6109, %v6105
    %v6142 = vpack.c.b16 %v6110, %v6106
    %v6143 = vpack.c.b16 %v6111, %v6107
    %v6144 = vpack.c.b16 %v6112, %v6108
    %6177 = vmatpush.bf16.msra.mxu0 %v6141
    %6178 = vmatpush.bf16.msra.mxu0 %v6137
    %6179 = vmatpush.bf16.msra.mxu0 %v6133
    %6180 = vmatpush.bf16.msra.mxu0 %v6129
    %6181 = vmatpush.bf16.msra.mxu0 %v6125
    %6182 = vmatpush.bf16.msra.mxu0 %v6121
    %6183 = vmatpush.bf16.msra.mxu0 %v6117
    %6184 = vmatpush.bf16.msra.mxu0 %v6113
    %6185 = vmatmul.bf16.gmra.mxu0 %v5531
    %v6186 = vpop.f32.mrf.mxu0
    %v6187 = vadd.f32 0.0, %v6186
    %v6188 = vpop.f32.mrf.mxu0
    %6189 = vdwg.mxu0
    %6190 = vmatpush.bf16.msra.mxu0 %v6142
    %6191 = vmatpush.bf16.msra.mxu0 %v6138
    %6192 = vmatpush.bf16.msra.mxu0 %v6134
    %6193 = vmatpush.bf16.msra.mxu0 %v6130
    %6194 = vmatpush.bf16.msra.mxu0 %v6126
    %6195 = vmatpush.bf16.msra.mxu0 %v6122
    %6196 = vmatpush.bf16.msra.mxu0 %v6118
    %6197 = vmatpush.bf16.msra.mxu0 %v6114
    %6198 = vmatmul.bf16.gmra.mxu0 %v5531
    %v6199 = vpop.f32.mrf.mxu0
    %v6200 = vadd.f32 0.0, %v6199
    %v6201 = vpop.f32.mrf.mxu0
    %6202 = vdwg.mxu0
    %6203 = vmatpush.bf16.msra.mxu0 %v6143
    %6204 = vmatpush.bf16.msra.mxu0 %v6139
    %6205 = vmatpush.bf16.msra.mxu0 %v6135
    %6206 = vmatpush.bf16.msra.mxu0 %v6131
    %6207 = vmatpush.bf16.msra.mxu0 %v6127
    %6208 = vmatpush.bf16.msra.mxu0 %v6123
    %6209 = vmatpush.bf16.msra.mxu0 %v6119
    %6210 = vmatpush.bf16.msra.mxu0 %v6115
    %6211 = vmatmul.bf16.gmra.mxu0 %v5531
    %v6212 = vpop.f32.mrf.mxu0
    %v6213 = vadd.f32 0.0, %v6212
    %v6214 = vpop.f32.mrf.mxu0
    %6215 = vdwg.mxu0
    %6216 = vmatpush.bf16.msra.mxu0 %v6144
    %6217 = vmatpush.bf16.msra.mxu0 %v6140
    %6218 = vmatpush.bf16.msra.mxu0 %v6136
    %6219 = vmatpush.bf16.msra.mxu0 %v6132
    %6220 = vmatpush.bf16.msra.mxu0 %v6128
    %6221 = vmatpush.bf16.msra.mxu0 %v6124
    %6222 = vmatpush.bf16.msra.mxu0 %v6120
    %6223 = vmatpush.bf16.msra.mxu0 %v6116
    %6224 = vmatmul.bf16.gmra.mxu0 %v5531
    %v6225 = vpop.f32.mrf.mxu0
    %v6226 = vadd.f32 0.0, %v6225
    %v6227 = vpop.f32.mrf.mxu0
    %6228 = vdwg.mxu0
    %v6229 = vld [vmem:[#allocation14] sm:$0xff]
    %v6230 = vld [vmem:[#allocation14 + $0x8] sm:$0xff]
    %v6231 = vld [vmem:[#allocation14 + $0x10] sm:$0xff]
    %v6232 = vld [vmem:[#allocation14 + $0x18] sm:$0xff]
    %v6233 = vld [vmem:[#allocation14 + $0x20] sm:$0xff]
    %v6234 = vld [vmem:[#allocation14 + $0x28] sm:$0xff]
    %v6235 = vld [vmem:[#allocation14 + $0x30] sm:$0xff]
    %v6236 = vld [vmem:[#allocation14 + $0x38] sm:$0xff]
    %v6237 = vld [vmem:[#allocation14 + $0x40] sm:$0xff]
    %v6238 = vld [vmem:[#allocation14 + $0x48] sm:$0xff]
    %v6239 = vld [vmem:[#allocation14 + $0x50] sm:$0xff]
    %v6240 = vld [vmem:[#allocation14 + $0x58] sm:$0xff]
    %v6241 = vld [vmem:[#allocation14 + $0x60] sm:$0xff]
    %v6242 = vld [vmem:[#allocation14 + $0x68] sm:$0xff]
    %v6243 = vld [vmem:[#allocation14 + $0x70] sm:$0xff]
    %v6244 = vld [vmem:[#allocation14 + $0x78] sm:$0xff]
    %v6245 = vld [vmem:[#allocation14 + $0x80] sm:$0xff]
    %v6246 = vld [vmem:[#allocation14 + $0x88] sm:$0xff]
    %v6247 = vld [vmem:[#allocation14 + $0x90] sm:$0xff]
    %v6248 = vld [vmem:[#allocation14 + $0x98] sm:$0xff]
    %v6249 = vld [vmem:[#allocation14 + $0xa0] sm:$0xff]
    %v6250 = vld [vmem:[#allocation14 + $0xa8] sm:$0xff]
    %v6251 = vld [vmem:[#allocation14 + $0xb0] sm:$0xff]
    %v6252 = vld [vmem:[#allocation14 + $0xb8] sm:$0xff]
    %v6253 = vld [vmem:[#allocation14 + $0xc0] sm:$0xff]
    %v6254 = vld [vmem:[#allocation14 + $0xc8] sm:$0xff]
    %v6255 = vld [vmem:[#allocation14 + $0xd0] sm:$0xff]
    %v6256 = vld [vmem:[#allocation14 + $0xd8] sm:$0xff]
    %v6257 = vld [vmem:[#allocation14 + $0xe0] sm:$0xff]
    %v6258 = vld [vmem:[#allocation14 + $0xe8] sm:$0xff]
    %v6259 = vld [vmem:[#allocation14 + $0xf0] sm:$0xff]
    %v6260 = vld [vmem:[#allocation14 + $0xf8] sm:$0xff]
    %v6261 = vld [vmem:[#allocation5] sm:$0xf]
    %v6262 = vld [vmem:[#allocation5 + $0x4] sm:$0xf]
    %v6263 = vld [vmem:[#allocation5 + $0x8] sm:$0xf]
    %v6264 = vld [vmem:[#allocation5 + $0xc] sm:$0xf]
    %v6265 = vld [vmem:[#allocation5 + $0x10] sm:$0xf]
    %v6266 = vld [vmem:[#allocation5 + $0x14] sm:$0xf]
    %v6267 = vld [vmem:[#allocation5 + $0x18] sm:$0xf]
    %v6268 = vld [vmem:[#allocation5 + $0x1c] sm:$0xf]
    %v6269 = vld [vmem:[#allocation5 + $0x20] sm:$0xf]
    %v6270 = vld [vmem:[#allocation5 + $0x24] sm:$0xf]
    %v6271 = vld [vmem:[#allocation5 + $0x28] sm:$0xf]
    %v6272 = vld [vmem:[#allocation5 + $0x2c] sm:$0xf]
    %v6273 = vld [vmem:[#allocation5 + $0x30] sm:$0xf]
    %v6274 = vld [vmem:[#allocation5 + $0x34] sm:$0xf]
    %v6275 = vld [vmem:[#allocation5 + $0x38] sm:$0xf]
    %v6276 = vld [vmem:[#allocation5 + $0x3c] sm:$0xf]
    %v6277 = vld [vmem:[#allocation8] sm:$0xff]
    %v6294 = vunpack.c.l.b16 %v6261
    %v6295 = vunpack.c.l.b16 %v6262
    %v6296 = vunpack.c.l.b16 %v6263
    %v6297 = vunpack.c.l.b16 %v6264
    %v6298 = vunpack.c.l.b16 %v6265
    %v6299 = vunpack.c.l.b16 %v6266
    %v6300 = vunpack.c.l.b16 %v6267
    %v6301 = vunpack.c.l.b16 %v6268
    %v6302 = vunpack.c.l.b16 %v6269
    %v6303 = vunpack.c.l.b16 %v6270
    %v6304 = vunpack.c.l.b16 %v6271
    %v6305 = vunpack.c.l.b16 %v6272
    %v6306 = vunpack.c.l.b16 %v6273
    %v6307 = vunpack.c.l.b16 %v6274
    %v6308 = vunpack.c.l.b16 %v6275
    %v6309 = vunpack.c.l.b16 %v6276
    %v6310 = vpack.c.b16 %v6295, %v6294
    %v6311 = vpack.c.b16 %v6297, %v6296
    %v6312 = vpack.c.b16 %v6299, %v6298
    %v6313 = vpack.c.b16 %v6301, %v6300
    %v6314 = vpack.c.b16 %v6303, %v6302
    %v6315 = vpack.c.b16 %v6305, %v6304
    %v6316 = vpack.c.b16 %v6307, %v6306
    %v6317 = vpack.c.b16 %v6309, %v6308
    %6326 = vmatpush.bf16.msra.mxu0 %v6317
    %6327 = vmatpush.bf16.msra.mxu0 %v6316
    %6328 = vmatpush.bf16.msra.mxu0 %v6315
    %6329 = vmatpush.bf16.msra.mxu0 %v6314
    %6330 = vmatpush.bf16.msra.mxu0 %v6313
    %6331 = vmatpush.bf16.msra.mxu0 %v6312
    %6332 = vmatpush.bf16.msra.mxu0 %v6311
    %6333 = vmatpush.bf16.msra.mxu0 %v6310
    %6334 = vmatmul.bf16.gmra.mxu0 %v5904
    %v6335 = vpop.f32.mrf.mxu0
    %v6336 = vadd.f32 %v6277, %v6335
    %v6337 = vpop.f32.mrf.mxu0
    %6338 = vdwg.mxu0
    %6339 = vmax.xlane.f32.xlu0 %v6336
    %v6340 = vpop.xlane.xlu0 %6339
    %v6341 = vsub.f32 %v6336, %v6340
    %v6342 = vmul.f32 %v6341, 1.442695
    %v6343 = vpow.pop %v6342
    %6344 = vadd.xlane.f32.xlu0 %v6343
    %v6345 = vpop.xlane.xlu0 %6344
    %v6346 = vrcp.pop %v6345
    %v6347 = vmul.f32 %v6343, %v6346
    %v6348 = vpack.c.bf16 %v6347, %v6347
    %v6349 = vld [vmem:[#allocation7] sm:$0xf]
    %v6350 = vld [vmem:[#allocation7 + $0x4] sm:$0xf]
    %v6351 = vld [vmem:[#allocation7 + $0x8] sm:$0xf]
    %v6352 = vld [vmem:[#allocation7 + $0xc] sm:$0xf]
    %v6353 = vld [vmem:[#allocation7 + $0x10] sm:$0xf]
    %v6354 = vld [vmem:[#allocation7 + $0x14] sm:$0xf]
    %v6355 = vld [vmem:[#allocation7 + $0x18] sm:$0xf]
    %v6356 = vld [vmem:[#allocation7 + $0x1c] sm:$0xf]
    %v6357 = vld [vmem:[#allocation7 + $0x20] sm:$0xf]
    %v6358 = vld [vmem:[#allocation7 + $0x24] sm:$0xf]
    %v6359 = vld [vmem:[#allocation7 + $0x28] sm:$0xf]
    %v6360 = vld [vmem:[#allocation7 + $0x2c] sm:$0xf]
    %v6361 = vld [vmem:[#allocation7 + $0x30] sm:$0xf]
    %v6362 = vld [vmem:[#allocation7 + $0x34] sm:$0xf]
    %v6363 = vld [vmem:[#allocation7 + $0x38] sm:$0xf]
    %v6364 = vld [vmem:[#allocation7 + $0x3c] sm:$0xf]
    %v6381 = vunpack.c.l.b16 %v6349
    %v6382 = vunpack.c.l.b16 %v6350
    %v6383 = vunpack.c.l.b16 %v6351
    %v6384 = vunpack.c.l.b16 %v6352
    %v6385 = vunpack.c.l.b16 %v6353
    %v6386 = vunpack.c.l.b16 %v6354
    %v6387 = vunpack.c.l.b16 %v6355
    %v6388 = vunpack.c.l.b16 %v6356
    %v6389 = vunpack.c.l.b16 %v6357
    %v6390 = vunpack.c.l.b16 %v6358
    %v6391 = vunpack.c.l.b16 %v6359
    %v6392 = vunpack.c.l.b16 %v6360
    %v6393 = vunpack.c.l.b16 %v6361
    %v6394 = vunpack.c.l.b16 %v6362
    %v6395 = vunpack.c.l.b16 %v6363
    %v6396 = vunpack.c.l.b16 %v6364
    %v6397 = vpack.c.b16 %v6382, %v6381
    %v6398 = vpack.c.b16 %v6384, %v6383
    %v6399 = vpack.c.b16 %v6386, %v6385
    %v6400 = vpack.c.b16 %v6388, %v6387
    %v6401 = vpack.c.b16 %v6390, %v6389
    %v6402 = vpack.c.b16 %v6392, %v6391
    %v6403 = vpack.c.b16 %v6394, %v6393
    %v6404 = vpack.c.b16 %v6396, %v6395
    %6413 = vmatpush.bf16.msra.mxu0 %v6404
    %6414 = vmatpush.bf16.msra.mxu0 %v6403
    %6415 = vmatpush.bf16.msra.mxu0 %v6402
    %6416 = vmatpush.bf16.msra.mxu0 %v6401
    %6417 = vmatpush.bf16.msra.mxu0 %v6400
    %6418 = vmatpush.bf16.msra.mxu0 %v6399
    %6419 = vmatpush.bf16.msra.mxu0 %v6398
    %6420 = vmatpush.bf16.msra.mxu0 %v6397
    %6421 = vmatmul.bf16.gmra.mxu0 %v6348
    %v6422 = vpop.f32.mrf.mxu0
    %v6423 = vadd.f32 0.0, %v6422
    %v6424 = vpop.f32.mrf.mxu0
    %6425 = vdwg.mxu0
    %v6426 = vpack.c.bf16 %v6423, %v6423
    %v6427 = vld [vmem:[#allocation17] sm:$0xf]
    %v6428 = vld [vmem:[#allocation17 + $0x4] sm:$0xf]
    %v6429 = vld [vmem:[#allocation17 + $0x8] sm:$0xf]
    %v6430 = vld [vmem:[#allocation17 + $0xc] sm:$0xf]
    %v6431 = vld [vmem:[#allocation17 + $0x10] sm:$0xf]
    %v6432 = vld [vmem:[#allocation17 + $0x14] sm:$0xf]
    %v6433 = vld [vmem:[#allocation17 + $0x18] sm:$0xf]
    %v6434 = vld [vmem:[#allocation17 + $0x1c] sm:$0xf]
    %v6435 = vld [vmem:[#allocation17 + $0x20] sm:$0xf]
    %v6436 = vld [vmem:[#allocation17 + $0x24] sm:$0xf]
    %v6437 = vld [vmem:[#allocation17 + $0x28] sm:$0xf]
    %v6438 = vld [vmem:[#allocation17 + $0x2c] sm:$0xf]
    %v6439 = vld [vmem:[#allocation17 + $0x30] sm:$0xf]
    %v6440 = vld [vmem:[#allocation17 + $0x34] sm:$0xf]
    %v6441 = vld [vmem:[#allocation17 + $0x38] sm:$0xf]
    %v6442 = vld [vmem:[#allocation17 + $0x3c] sm:$0xf]
    %s6443 = scalar_lea.vmem [#allocation2], 128
    %v6444 = vld [vmem:[%s6443] sm:$0xff]
    %v6445 = vld [vmem:[%s6443 + $0x8] sm:$0xff]
    %v6446 = vld [vmem:[%s6443 + $0x10] sm:$0xff]
    %v6447 = vld [vmem:[%s6443 + $0x18] sm:$0xff]
    %v6448 = vadd.f32 %v6444, %v6187
    %v6449 = vadd.f32 %v6445, %v6200
    %v6450 = vadd.f32 %v6446, %v6213
    %v6451 = vadd.f32 %v6447, %v6226
    %v6452 = vld [vmem:[#allocation10] sm:$0xff]
    %v6453 = vld [vmem:[#allocation10 + $0x8] sm:$0xff]
    %v6454 = vld [vmem:[#allocation10 + $0x10] sm:$0xff]
    %v6455 = vld [vmem:[#allocation10 + $0x18] sm:$0xff]
    %v6456 = vld [vmem:[#allocation10 + $0x20] sm:$0xff]
    %v6457 = vld [vmem:[#allocation10 + $0x28] sm:$0xff]
    %v6458 = vld [vmem:[#allocation10 + $0x30] sm:$0xff]
    %v6459 = vld [vmem:[#allocation10 + $0x38] sm:$0xff]
    %v6460 = vld [vmem:[#allocation10 + $0x40] sm:$0xff]
    %v6461 = vld [vmem:[#allocation10 + $0x48] sm:$0xff]
    %v6462 = vld [vmem:[#allocation10 + $0x50] sm:$0xff]
    %v6463 = vld [vmem:[#allocation10 + $0x58] sm:$0xff]
    %v6464 = vld [vmem:[#allocation10 + $0x60] sm:$0xff]
    %v6465 = vld [vmem:[#allocation10 + $0x68] sm:$0xff]
    %v6466 = vld [vmem:[#allocation10 + $0x70] sm:$0xff]
    %v6467 = vld [vmem:[#allocation10 + $0x78] sm:$0xff]
    %v6468 = vld [vmem:[#allocation10 + $0x80] sm:$0xff]
    %v6469 = vld [vmem:[#allocation10 + $0x88] sm:$0xff]
    %v6470 = vld [vmem:[#allocation10 + $0x90] sm:$0xff]
    %v6471 = vld [vmem:[#allocation10 + $0x98] sm:$0xff]
    %v6472 = vld [vmem:[#allocation10 + $0xa0] sm:$0xff]
    %v6473 = vld [vmem:[#allocation10 + $0xa8] sm:$0xff]
    %v6474 = vld [vmem:[#allocation10 + $0xb0] sm:$0xff]
    %v6475 = vld [vmem:[#allocation10 + $0xb8] sm:$0xff]
    %v6476 = vld [vmem:[#allocation10 + $0xc0] sm:$0xff]
    %v6477 = vld [vmem:[#allocation10 + $0xc8] sm:$0xff]
    %v6478 = vld [vmem:[#allocation10 + $0xd0] sm:$0xff]
    %v6479 = vld [vmem:[#allocation10 + $0xd8] sm:$0xff]
    %v6480 = vld [vmem:[#allocation10 + $0xe0] sm:$0xff]
    %v6481 = vld [vmem:[#allocation10 + $0xe8] sm:$0xff]
    %v6482 = vld [vmem:[#allocation10 + $0xf0] sm:$0xff]
    %v6483 = vld [vmem:[#allocation10 + $0xf8] sm:$0xff]
    %v6516 = vunpack.c.l.b16 %v6452
    %v6517 = vunpack.c.h.b16 %v6452
    %v6518 = vunpack.c.l.b16 %v6453
    %v6519 = vunpack.c.h.b16 %v6453
    %v6520 = vunpack.c.l.b16 %v6454
    %v6521 = vunpack.c.h.b16 %v6454
    %v6522 = vunpack.c.l.b16 %v6455
    %v6523 = vunpack.c.h.b16 %v6455
    %v6524 = vunpack.c.l.b16 %v6456
    %v6525 = vunpack.c.h.b16 %v6456
    %v6526 = vunpack.c.l.b16 %v6457
    %v6527 = vunpack.c.h.b16 %v6457
    %v6528 = vunpack.c.l.b16 %v6458
    %v6529 = vunpack.c.h.b16 %v6458
    %v6530 = vunpack.c.l.b16 %v6459
    %v6531 = vunpack.c.h.b16 %v6459
    %v6532 = vunpack.c.l.b16 %v6460
    %v6533 = vunpack.c.h.b16 %v6460
    %v6534 = vunpack.c.l.b16 %v6461
    %v6535 = vunpack.c.h.b16 %v6461
    %v6536 = vunpack.c.l.b16 %v6462
    %v6537 = vunpack.c.h.b16 %v6462
    %v6538 = vunpack.c.l.b16 %v6463
    %v6539 = vunpack.c.h.b16 %v6463
    %v6540 = vunpack.c.l.b16 %v6464
    %v6541 = vunpack.c.h.b16 %v6464
    %v6542 = vunpack.c.l.b16 %v6465
    %v6543 = vunpack.c.h.b16 %v6465
    %v6544 = vunpack.c.l.b16 %v6466
    %v6545 = vunpack.c.h.b16 %v6466
    %v6546 = vunpack.c.l.b16 %v6467
    %v6547 = vunpack.c.h.b16 %v6467
    %v6548 = vunpack.c.l.b16 %v6468
    %v6549 = vunpack.c.h.b16 %v6468
    %v6550 = vunpack.c.l.b16 %v6469
    %v6551 = vunpack.c.h.b16 %v6469
    %v6552 = vunpack.c.l.b16 %v6470
    %v6553 = vunpack.c.h.b16 %v6470
    %v6554 = vunpack.c.l.b16 %v6471
    %v6555 = vunpack.c.h.b16 %v6471
    %v6556 = vunpack.c.l.b16 %v6472
    %v6557 = vunpack.c.h.b16 %v6472
    %v6558 = vunpack.c.l.b16 %v6473
    %v6559 = vunpack.c.h.b16 %v6473
    %v6560 = vunpack.c.l.b16 %v6474
    %v6561 = vunpack.c.h.b16 %v6474
    %v6562 = vunpack.c.l.b16 %v6475
    %v6563 = vunpack.c.h.b16 %v6475
    %v6564 = vunpack.c.l.b16 %v6476
    %v6565 = vunpack.c.h.b16 %v6476
    %v6566 = vunpack.c.l.b16 %v6477
    %v6567 = vunpack.c.h.b16 %v6477
    %v6568 = vunpack.c.l.b16 %v6478
    %v6569 = vunpack.c.h.b16 %v6478
    %v6570 = vunpack.c.l.b16 %v6479
    %v6571 = vunpack.c.h.b16 %v6479
    %v6572 = vunpack.c.l.b16 %v6480
    %v6573 = vunpack.c.h.b16 %v6480
    %v6574 = vunpack.c.l.b16 %v6481
    %v6575 = vunpack.c.h.b16 %v6481
    %v6576 = vunpack.c.l.b16 %v6482
    %v6577 = vunpack.c.h.b16 %v6482
    %v6578 = vunpack.c.l.b16 %v6483
    %v6579 = vunpack.c.h.b16 %v6483
    %v6580 = vpack.c.b16 %v6520, %v6516
    %v6581 = vpack.c.b16 %v6521, %v6517
    %v6582 = vpack.c.b16 %v6522, %v6518
    %v6583 = vpack.c.b16 %v6523, %v6519
    %v6584 = vpack.c.b16 %v6528, %v6524
    %v6585 = vpack.c.b16 %v6529, %v6525
    %v6586 = vpack.c.b16 %v6530, %v6526
    %v6587 = vpack.c.b16 %v6531, %v6527
    %v6588 = vpack.c.b16 %v6536, %v6532
    %v6589 = vpack.c.b16 %v6537, %v6533
    %v6590 = vpack.c.b16 %v6538, %v6534
    %v6591 = vpack.c.b16 %v6539, %v6535
    %v6592 = vpack.c.b16 %v6544, %v6540
    %v6593 = vpack.c.b16 %v6545, %v6541
    %v6594 = vpack.c.b16 %v6546, %v6542
    %v6595 = vpack.c.b16 %v6547, %v6543
    %v6596 = vpack.c.b16 %v6552, %v6548
    %v6597 = vpack.c.b16 %v6553, %v6549
    %v6598 = vpack.c.b16 %v6554, %v6550
    %v6599 = vpack.c.b16 %v6555, %v6551
    %v6600 = vpack.c.b16 %v6560, %v6556
    %v6601 = vpack.c.b16 %v6561, %v6557
    %v6602 = vpack.c.b16 %v6562, %v6558
    %v6603 = vpack.c.b16 %v6563, %v6559
    %v6604 = vpack.c.b16 %v6568, %v6564
    %v6605 = vpack.c.b16 %v6569, %v6565
    %v6606 = vpack.c.b16 %v6570, %v6566
    %v6607 = vpack.c.b16 %v6571, %v6567
    %v6608 = vpack.c.b16 %v6576, %v6572
    %v6609 = vpack.c.b16 %v6577, %v6573
    %v6610 = vpack.c.b16 %v6578, %v6574
    %v6611 = vpack.c.b16 %v6579, %v6575
    %6644 = vmatpush.bf16.msra.mxu0 %v6608
    %6645 = vmatpush.bf16.msra.mxu0 %v6604
    %6646 = vmatpush.bf16.msra.mxu0 %v6600
    %6647 = vmatpush.bf16.msra.mxu0 %v6596
    %6648 = vmatpush.bf16.msra.mxu0 %v6592
    %6649 = vmatpush.bf16.msra.mxu0 %v6588
    %6650 = vmatpush.bf16.msra.mxu0 %v6584
    %6651 = vmatpush.bf16.msra.mxu0 %v6580
    %6652 = vmatmul.bf16.gmra.mxu0 %v6426
    %v6653 = vpop.f32.mrf.mxu0
    %v6654 = vadd.f32 0.0, %v6653
    %v6655 = vpop.f32.mrf.mxu0
    %6656 = vdwg.mxu0
    %6657 = vmatpush.bf16.msra.mxu0 %v6609
    %6658 = vmatpush.bf16.msra.mxu0 %v6605
    %6659 = vmatpush.bf16.msra.mxu0 %v6601
    %6660 = vmatpush.bf16.msra.mxu0 %v6597
    %6661 = vmatpush.bf16.msra.mxu0 %v6593
    %6662 = vmatpush.bf16.msra.mxu0 %v6589
    %6663 = vmatpush.bf16.msra.mxu0 %v6585
    %6664 = vmatpush.bf16.msra.mxu0 %v6581
    %6665 = vmatmul.bf16.gmra.mxu0 %v6426
    %v6666 = vpop.f32.mrf.mxu0
    %v6667 = vadd.f32 0.0, %v6666
    %v6668 = vpop.f32.mrf.mxu0
    %6669 = vdwg.mxu0
    %6670 = vmatpush.bf16.msra.mxu0 %v6610
    %6671 = vmatpush.bf16.msra.mxu0 %v6606
    %6672 = vmatpush.bf16.msra.mxu0 %v6602
    %6673 = vmatpush.bf16.msra.mxu0 %v6598
    %6674 = vmatpush.bf16.msra.mxu0 %v6594
    %6675 = vmatpush.bf16.msra.mxu0 %v6590
    %6676 = vmatpush.bf16.msra.mxu0 %v6586
    %6677 = vmatpush.bf16.msra.mxu0 %v6582
    %6678 = vmatmul.bf16.gmra.mxu0 %v6426
    %v6679 = vpop.f32.mrf.mxu0
    %v6680 = vadd.f32 0.0, %v6679
    %v6681 = vpop.f32.mrf.mxu0
    %6682 = vdwg.mxu0
    %6683 = vmatpush.bf16.msra.mxu0 %v6611
    %6684 = vmatpush.bf16.msra.mxu0 %v6607
    %6685 = vmatpush.bf16.msra.mxu0 %v6603
    %6686 = vmatpush.bf16.msra.mxu0 %v6599
    %6687 = vmatpush.bf16.msra.mxu0 %v6595
    %6688 = vmatpush.bf16.msra.mxu0 %v6591
    %6689 = vmatpush.bf16.msra.mxu0 %v6587
    %6690 = vmatpush.bf16.msra.mxu0 %v6583
    %6691 = vmatmul.bf16.gmra.mxu0 %v6426
    %v6692 = vpop.f32.mrf.mxu0
    %v6693 = vadd.f32 0.0, %v6692
    %v6694 = vpop.f32.mrf.mxu0
    %6695 = vdwg.mxu0
    %v6696 = vadd.f32 %v6448, %v6654
    %v6697 = vadd.f32 %v6449, %v6667
    %v6698 = vadd.f32 %v6450, %v6680
    %v6699 = vadd.f32 %v6451, %v6693
    %v6700 = vxor.u32 %v6696, 2147483648
    %v6701 = vxor.u32 %v6697, 2147483648
    %v6702 = vxor.u32 %v6698, 2147483648
    %v6703 = vmul.f32 %v6700, 1.442695
    %v6704 = vpow.pop %v6703
    %v6705 = vmul.f32 %v6701, 1.442695
    %v6706 = vpow.pop %v6705
    %v6707 = vmul.f32 %v6702, 1.442695
    %v6708 = vpow.pop %v6707
    %v6709 = vadd.f32 %v6704, 1.0
    %v6710 = vadd.f32 %v6706, 1.0
    %v6711 = vadd.f32 %v6708, 1.0
    %v6712 = vrcp.pop %v6709
    %v6713 = vmul.f32 %v6709, %v6712
    %v6714 = vsub.f32 1.0, %v6713
    %v6715 = vmul.f32 %v6712, %v6714
    %v6716 = vadd.f32 %v6712, %v6715
    %vm6717 = vweird.f32 %v6709
    %vm6718 = vweird.f32 %v6712
    %vm6719 = vmor %vm6717, %vm6718
    %v6720 = vsel %vm6719, %v6712, %v6716
    %v6721 = vand.u32 2147483647, %v6709
    %vm6722 = vcmp.eq.f32.partialorder %v6721, 8.507059e+37
    %v6723 = vand.u32 %v6709, 2147483648
    %v6724 = vor.u32 1.1754944e-38, %v6723
    %v6725 = vsel %vm6722, %v6724, %v6720
    %v6726 = vmul.f32 1.0, %v6725
    %v6727 = vrcp.pop %v6710
    %v6728 = vmul.f32 %v6710, %v6727
    %v6729 = vsub.f32 1.0, %v6728
    %v6730 = vmul.f32 %v6727, %v6729
    %v6731 = vadd.f32 %v6727, %v6730
    %vm6732 = vweird.f32 %v6710
    %vm6733 = vweird.f32 %v6727
    %vm6734 = vmor %vm6732, %vm6733
    %v6735 = vsel %vm6734, %v6727, %v6731
    %v6736 = vand.u32 2147483647, %v6710
    %vm6737 = vcmp.eq.f32.partialorder %v6736, 8.507059e+37
    %v6738 = vand.u32 %v6710, 2147483648
    %v6739 = vor.u32 1.1754944e-38, %v6738
    %v6740 = vsel %vm6737, %v6739, %v6735
    %v6741 = vmul.f32 1.0, %v6740
    %v6742 = vrcp.pop %v6711
    %v6743 = vmul.f32 %v6711, %v6742
    %v6744 = vsub.f32 1.0, %v6743
    %v6745 = vmul.f32 %v6742, %v6744
    %v6746 = vadd.f32 %v6742, %v6745
    %vm6747 = vweird.f32 %v6711
    %vm6748 = vweird.f32 %v6742
    %vm6749 = vmor %vm6747, %vm6748
    %v6750 = vsel %vm6749, %v6742, %v6746
    %v6751 = vand.u32 2147483647, %v6711
    %vm6752 = vcmp.eq.f32.partialorder %v6751, 8.507059e+37
    %v6753 = vand.u32 %v6711, 2147483648
    %v6754 = vor.u32 1.1754944e-38, %v6753
    %v6755 = vsel %vm6752, %v6754, %v6750
    %v6756 = vmul.f32 1.0, %v6755
    %v6757 = vtanh.pop %v6699
    %v6758 = vmul.f32 %v6741, %v5316
    %v6759 = vmul.f32 %v6726, %v6757
    %v6760 = vadd.f32 %v6758, %v6759
    %v6761 = vtanh.pop %v6760
    %v6762 = vmul.f32 %v6756, %v6761
    %v6795 = vunpack.c.l.b16 %v6229
    %v6796 = vunpack.c.h.b16 %v6229
    %v6797 = vunpack.c.l.b16 %v6230
    %v6798 = vunpack.c.h.b16 %v6230
    %v6799 = vunpack.c.l.b16 %v6231
    %v6800 = vunpack.c.h.b16 %v6231
    %v6801 = vunpack.c.l.b16 %v6232
    %v6802 = vunpack.c.h.b16 %v6232
    %v6803 = vunpack.c.l.b16 %v6233
    %v6804 = vunpack.c.h.b16 %v6233
    %v6805 = vunpack.c.l.b16 %v6234
    %v6806 = vunpack.c.h.b16 %v6234
    %v6807 = vunpack.c.l.b16 %v6235
    %v6808 = vunpack.c.h.b16 %v6235
    %v6809 = vunpack.c.l.b16 %v6236
    %v6810 = vunpack.c.h.b16 %v6236
    %v6811 = vunpack.c.l.b16 %v6237
    %v6812 = vunpack.c.h.b16 %v6237
    %v6813 = vunpack.c.l.b16 %v6238
    %v6814 = vunpack.c.h.b16 %v6238
    %v6815 = vunpack.c.l.b16 %v6239
    %v6816 = vunpack.c.h.b16 %v6239
    %v6817 = vunpack.c.l.b16 %v6240
    %v6818 = vunpack.c.h.b16 %v6240
    %v6819 = vunpack.c.l.b16 %v6241
    %v6820 = vunpack.c.h.b16 %v6241
    %v6821 = vunpack.c.l.b16 %v6242
    %v6822 = vunpack.c.h.b16 %v6242
    %v6823 = vunpack.c.l.b16 %v6243
    %v6824 = vunpack.c.h.b16 %v6243
    %v6825 = vunpack.c.l.b16 %v6244
    %v6826 = vunpack.c.h.b16 %v6244
    %v6827 = vunpack.c.l.b16 %v6245
    %v6828 = vunpack.c.h.b16 %v6245
    %v6829 = vunpack.c.l.b16 %v6246
    %v6830 = vunpack.c.h.b16 %v6246
    %v6831 = vunpack.c.l.b16 %v6247
    %v6832 = vunpack.c.h.b16 %v6247
    %v6833 = vunpack.c.l.b16 %v6248
    %v6834 = vunpack.c.h.b16 %v6248
    %v6835 = vunpack.c.l.b16 %v6249
    %v6836 = vunpack.c.h.b16 %v6249
    %v6837 = vunpack.c.l.b16 %v6250
    %v6838 = vunpack.c.h.b16 %v6250
    %v6839 = vunpack.c.l.b16 %v6251
    %v6840 = vunpack.c.h.b16 %v6251
    %v6841 = vunpack.c.l.b16 %v6252
    %v6842 = vunpack.c.h.b16 %v6252
    %v6843 = vunpack.c.l.b16 %v6253
    %v6844 = vunpack.c.h.b16 %v6253
    %v6845 = vunpack.c.l.b16 %v6254
    %v6846 = vunpack.c.h.b16 %v6254
    %v6847 = vunpack.c.l.b16 %v6255
    %v6848 = vunpack.c.h.b16 %v6255
    %v6849 = vunpack.c.l.b16 %v6256
    %v6850 = vunpack.c.h.b16 %v6256
    %v6851 = vunpack.c.l.b16 %v6257
    %v6852 = vunpack.c.h.b16 %v6257
    %v6853 = vunpack.c.l.b16 %v6258
    %v6854 = vunpack.c.h.b16 %v6258
    %v6855 = vunpack.c.l.b16 %v6259
    %v6856 = vunpack.c.h.b16 %v6259
    %v6857 = vunpack.c.l.b16 %v6260
    %v6858 = vunpack.c.h.b16 %v6260
    %v6859 = vpack.c.b16 %v6799, %v6795
    %v6860 = vpack.c.b16 %v6800, %v6796
    %v6861 = vpack.c.b16 %v6801, %v6797
    %v6862 = vpack.c.b16 %v6802, %v6798
    %v6863 = vpack.c.b16 %v6807, %v6803
    %v6864 = vpack.c.b16 %v6808, %v6804
    %v6865 = vpack.c.b16 %v6809, %v6805
    %v6866 = vpack.c.b16 %v6810, %v6806
    %v6867 = vpack.c.b16 %v6815, %v6811
    %v6868 = vpack.c.b16 %v6816, %v6812
    %v6869 = vpack.c.b16 %v6817, %v6813
    %v6870 = vpack.c.b16 %v6818, %v6814
    %v6871 = vpack.c.b16 %v6823, %v6819
    %v6872 = vpack.c.b16 %v6824, %v6820
    %v6873 = vpack.c.b16 %v6825, %v6821
    %v6874 = vpack.c.b16 %v6826, %v6822
    %v6875 = vpack.c.b16 %v6831, %v6827
    %v6876 = vpack.c.b16 %v6832, %v6828
    %v6877 = vpack.c.b16 %v6833, %v6829
    %v6878 = vpack.c.b16 %v6834, %v6830
    %v6879 = vpack.c.b16 %v6839, %v6835
    %v6880 = vpack.c.b16 %v6840, %v6836
    %v6881 = vpack.c.b16 %v6841, %v6837
    %v6882 = vpack.c.b16 %v6842, %v6838
    %v6883 = vpack.c.b16 %v6847, %v6843
    %v6884 = vpack.c.b16 %v6848, %v6844
    %v6885 = vpack.c.b16 %v6849, %v6845
    %v6886 = vpack.c.b16 %v6850, %v6846
    %v6887 = vpack.c.b16 %v6855, %v6851
    %v6888 = vpack.c.b16 %v6856, %v6852
    %v6889 = vpack.c.b16 %v6857, %v6853
    %v6890 = vpack.c.b16 %v6858, %v6854
    %6923 = vmatpush.bf16.msra.mxu0 %v6887
    %6924 = vmatpush.bf16.msra.mxu0 %v6883
    %6925 = vmatpush.bf16.msra.mxu0 %v6879
    %6926 = vmatpush.bf16.msra.mxu0 %v6875
    %6927 = vmatpush.bf16.msra.mxu0 %v6871
    %6928 = vmatpush.bf16.msra.mxu0 %v6867
    %6929 = vmatpush.bf16.msra.mxu0 %v6863
    %6930 = vmatpush.bf16.msra.mxu0 %v6859
    %6931 = vmatmul.bf16.gmra.mxu0 %v5904
    %v6932 = vpop.f32.mrf.mxu0
    %v6933 = vadd.f32 %v199, %v6932
    %v6934 = vpop.f32.mrf.mxu0
    %6935 = vdwg.mxu0
    %6936 = vmatpush.bf16.msra.mxu0 %v6888
    %6937 = vmatpush.bf16.msra.mxu0 %v6884
    %6938 = vmatpush.bf16.msra.mxu0 %v6880
    %6939 = vmatpush.bf16.msra.mxu0 %v6876
    %6940 = vmatpush.bf16.msra.mxu0 %v6872
    %6941 = vmatpush.bf16.msra.mxu0 %v6868
    %6942 = vmatpush.bf16.msra.mxu0 %v6864
    %6943 = vmatpush.bf16.msra.mxu0 %v6860
    %6944 = vmatmul.bf16.gmra.mxu0 %v5904
    %v6945 = vpop.f32.mrf.mxu0
    %v6946 = vadd.f32 %v200, %v6945
    %v6947 = vpop.f32.mrf.mxu0
    %6948 = vdwg.mxu0
    %6949 = vmatpush.bf16.msra.mxu0 %v6889
    %6950 = vmatpush.bf16.msra.mxu0 %v6885
    %6951 = vmatpush.bf16.msra.mxu0 %v6881
    %6952 = vmatpush.bf16.msra.mxu0 %v6877
    %6953 = vmatpush.bf16.msra.mxu0 %v6873
    %6954 = vmatpush.bf16.msra.mxu0 %v6869
    %6955 = vmatpush.bf16.msra.mxu0 %v6865
    %6956 = vmatpush.bf16.msra.mxu0 %v6861
    %6957 = vmatmul.bf16.gmra.mxu0 %v5904
    %v6958 = vpop.f32.mrf.mxu0
    %v6959 = vadd.f32 %v201, %v6958
    %v6960 = vpop.f32.mrf.mxu0
    %6961 = vdwg.mxu0
    %6962 = vmatpush.bf16.msra.mxu0 %v6890
    %6963 = vmatpush.bf16.msra.mxu0 %v6886
    %6964 = vmatpush.bf16.msra.mxu0 %v6882
    %6965 = vmatpush.bf16.msra.mxu0 %v6878
    %6966 = vmatpush.bf16.msra.mxu0 %v6874
    %6967 = vmatpush.bf16.msra.mxu0 %v6870
    %6968 = vmatpush.bf16.msra.mxu0 %v6866
    %6969 = vmatpush.bf16.msra.mxu0 %v6862
    %6970 = vmatmul.bf16.gmra.mxu0 %v5904
    %v6971 = vpop.f32.mrf.mxu0
    %v6972 = vadd.f32 %v202, %v6971
    %v6973 = vpop.f32.mrf.mxu0
    %6974 = vdwg.mxu0
    %v6975 = vpack.c.bf16 %v6762, %v6762
    %v6976 = vld [vmem:[#allocation13] sm:$0xff]
    %v6977 = vld [vmem:[#allocation13 + $0x8] sm:$0xff]
    %v6978 = vld [vmem:[#allocation13 + $0x10] sm:$0xff]
    %v6979 = vld [vmem:[#allocation13 + $0x18] sm:$0xff]
    %v6980 = vld [vmem:[#allocation13 + $0x20] sm:$0xff]
    %v6981 = vld [vmem:[#allocation13 + $0x28] sm:$0xff]
    %v6982 = vld [vmem:[#allocation13 + $0x30] sm:$0xff]
    %v6983 = vld [vmem:[#allocation13 + $0x38] sm:$0xff]
    %v6984 = vld [vmem:[#allocation13 + $0x40] sm:$0xff]
    %v6985 = vld [vmem:[#allocation13 + $0x48] sm:$0xff]
    %v6986 = vld [vmem:[#allocation13 + $0x50] sm:$0xff]
    %v6987 = vld [vmem:[#allocation13 + $0x58] sm:$0xff]
    %v6988 = vld [vmem:[#allocation13 + $0x60] sm:$0xff]
    %v6989 = vld [vmem:[#allocation13 + $0x68] sm:$0xff]
    %v6990 = vld [vmem:[#allocation13 + $0x70] sm:$0xff]
    %v6991 = vld [vmem:[#allocation13 + $0x78] sm:$0xff]
    %v6992 = vld [vmem:[#allocation13 + $0x80] sm:$0xff]
    %v6993 = vld [vmem:[#allocation13 + $0x88] sm:$0xff]
    %v6994 = vld [vmem:[#allocation13 + $0x90] sm:$0xff]
    %v6995 = vld [vmem:[#allocation13 + $0x98] sm:$0xff]
    %v6996 = vld [vmem:[#allocation13 + $0xa0] sm:$0xff]
    %v6997 = vld [vmem:[#allocation13 + $0xa8] sm:$0xff]
    %v6998 = vld [vmem:[#allocation13 + $0xb0] sm:$0xff]
    %v6999 = vld [vmem:[#allocation13 + $0xb8] sm:$0xff]
    %v7000 = vld [vmem:[#allocation13 + $0xc0] sm:$0xff]
    %v7001 = vld [vmem:[#allocation13 + $0xc8] sm:$0xff]
    %v7002 = vld [vmem:[#allocation13 + $0xd0] sm:$0xff]
    %v7003 = vld [vmem:[#allocation13 + $0xd8] sm:$0xff]
    %v7004 = vld [vmem:[#allocation13 + $0xe0] sm:$0xff]
    %v7005 = vld [vmem:[#allocation13 + $0xe8] sm:$0xff]
    %v7006 = vld [vmem:[#allocation13 + $0xf0] sm:$0xff]
    %v7007 = vld [vmem:[#allocation13 + $0xf8] sm:$0xff]
    %v7040 = vunpack.c.l.b16 %v6976
    %v7041 = vunpack.c.h.b16 %v6976
    %v7042 = vunpack.c.l.b16 %v6977
    %v7043 = vunpack.c.h.b16 %v6977
    %v7044 = vunpack.c.l.b16 %v6978
    %v7045 = vunpack.c.h.b16 %v6978
    %v7046 = vunpack.c.l.b16 %v6979
    %v7047 = vunpack.c.h.b16 %v6979
    %v7048 = vunpack.c.l.b16 %v6980
    %v7049 = vunpack.c.h.b16 %v6980
    %v7050 = vunpack.c.l.b16 %v6981
    %v7051 = vunpack.c.h.b16 %v6981
    %v7052 = vunpack.c.l.b16 %v6982
    %v7053 = vunpack.c.h.b16 %v6982
    %v7054 = vunpack.c.l.b16 %v6983
    %v7055 = vunpack.c.h.b16 %v6983
    %v7056 = vunpack.c.l.b16 %v6984
    %v7057 = vunpack.c.h.b16 %v6984
    %v7058 = vunpack.c.l.b16 %v6985
    %v7059 = vunpack.c.h.b16 %v6985
    %v7060 = vunpack.c.l.b16 %v6986
    %v7061 = vunpack.c.h.b16 %v6986
    %v7062 = vunpack.c.l.b16 %v6987
    %v7063 = vunpack.c.h.b16 %v6987
    %v7064 = vunpack.c.l.b16 %v6988
    %v7065 = vunpack.c.h.b16 %v6988
    %v7066 = vunpack.c.l.b16 %v6989
    %v7067 = vunpack.c.h.b16 %v6989
    %v7068 = vunpack.c.l.b16 %v6990
    %v7069 = vunpack.c.h.b16 %v6990
    %v7070 = vunpack.c.l.b16 %v6991
    %v7071 = vunpack.c.h.b16 %v6991
    %v7072 = vunpack.c.l.b16 %v6992
    %v7073 = vunpack.c.h.b16 %v6992
    %v7074 = vunpack.c.l.b16 %v6993
    %v7075 = vunpack.c.h.b16 %v6993
    %v7076 = vunpack.c.l.b16 %v6994
    %v7077 = vunpack.c.h.b16 %v6994
    %v7078 = vunpack.c.l.b16 %v6995
    %v7079 = vunpack.c.h.b16 %v6995
    %v7080 = vunpack.c.l.b16 %v6996
    %v7081 = vunpack.c.h.b16 %v6996
    %v7082 = vunpack.c.l.b16 %v6997
    %v7083 = vunpack.c.h.b16 %v6997
    %v7084 = vunpack.c.l.b16 %v6998
    %v7085 = vunpack.c.h.b16 %v6998
    %v7086 = vunpack.c.l.b16 %v6999
    %v7087 = vunpack.c.h.b16 %v6999
    %v7088 = vunpack.c.l.b16 %v7000
    %v7089 = vunpack.c.h.b16 %v7000
    %v7090 = vunpack.c.l.b16 %v7001
    %v7091 = vunpack.c.h.b16 %v7001
    %v7092 = vunpack.c.l.b16 %v7002
    %v7093 = vunpack.c.h.b16 %v7002
    %v7094 = vunpack.c.l.b16 %v7003
    %v7095 = vunpack.c.h.b16 %v7003
    %v7096 = vunpack.c.l.b16 %v7004
    %v7097 = vunpack.c.h.b16 %v7004
    %v7098 = vunpack.c.l.b16 %v7005
    %v7099 = vunpack.c.h.b16 %v7005
    %v7100 = vunpack.c.l.b16 %v7006
    %v7101 = vunpack.c.h.b16 %v7006
    %v7102 = vunpack.c.l.b16 %v7007
    %v7103 = vunpack.c.h.b16 %v7007
    %v7104 = vpack.c.b16 %v7044, %v7040
    %v7105 = vpack.c.b16 %v7045, %v7041
    %v7106 = vpack.c.b16 %v7046, %v7042
    %v7107 = vpack.c.b16 %v7047, %v7043
    %v7108 = vpack.c.b16 %v7052, %v7048
    %v7109 = vpack.c.b16 %v7053, %v7049
    %v7110 = vpack.c.b16 %v7054, %v7050
    %v7111 = vpack.c.b16 %v7055, %v7051
    %v7112 = vpack.c.b16 %v7060, %v7056
    %v7113 = vpack.c.b16 %v7061, %v7057
    %v7114 = vpack.c.b16 %v7062, %v7058
    %v7115 = vpack.c.b16 %v7063, %v7059
    %v7116 = vpack.c.b16 %v7068, %v7064
    %v7117 = vpack.c.b16 %v7069, %v7065
    %v7118 = vpack.c.b16 %v7070, %v7066
    %v7119 = vpack.c.b16 %v7071, %v7067
    %v7120 = vpack.c.b16 %v7076, %v7072
    %v7121 = vpack.c.b16 %v7077, %v7073
    %v7122 = vpack.c.b16 %v7078, %v7074
    %v7123 = vpack.c.b16 %v7079, %v7075
    %v7124 = vpack.c.b16 %v7084, %v7080
    %v7125 = vpack.c.b16 %v7085, %v7081
    %v7126 = vpack.c.b16 %v7086, %v7082
    %v7127 = vpack.c.b16 %v7087, %v7083
    %v7128 = vpack.c.b16 %v7092, %v7088
    %v7129 = vpack.c.b16 %v7093, %v7089
    %v7130 = vpack.c.b16 %v7094, %v7090
    %v7131 = vpack.c.b16 %v7095, %v7091
    %v7132 = vpack.c.b16 %v7100, %v7096
    %v7133 = vpack.c.b16 %v7101, %v7097
    %v7134 = vpack.c.b16 %v7102, %v7098
    %v7135 = vpack.c.b16 %v7103, %v7099
    %7168 = vmatpush.bf16.msra.mxu0 %v7132
    %7169 = vmatpush.bf16.msra.mxu0 %v7128
    %7170 = vmatpush.bf16.msra.mxu0 %v7124
    %7171 = vmatpush.bf16.msra.mxu0 %v7120
    %7172 = vmatpush.bf16.msra.mxu0 %v7116
    %7173 = vmatpush.bf16.msra.mxu0 %v7112
    %7174 = vmatpush.bf16.msra.mxu0 %v7108
    %7175 = vmatpush.bf16.msra.mxu0 %v7104
    %7176 = vmatmul.bf16.gmra.mxu0 %v6975
    %v7177 = vpop.f32.mrf.mxu0
    %v7178 = vadd.f32 0.0, %v7177
    %v7179 = vpop.f32.mrf.mxu0
    %7180 = vdwg.mxu0
    %7181 = vmatpush.bf16.msra.mxu0 %v7133
    %7182 = vmatpush.bf16.msra.mxu0 %v7129
    %7183 = vmatpush.bf16.msra.mxu0 %v7125
    %7184 = vmatpush.bf16.msra.mxu0 %v7121
    %7185 = vmatpush.bf16.msra.mxu0 %v7117
    %7186 = vmatpush.bf16.msra.mxu0 %v7113
    %7187 = vmatpush.bf16.msra.mxu0 %v7109
    %7188 = vmatpush.bf16.msra.mxu0 %v7105
    %7189 = vmatmul.bf16.gmra.mxu0 %v6975
    %v7190 = vpop.f32.mrf.mxu0
    %v7191 = vadd.f32 0.0, %v7190
    %v7192 = vpop.f32.mrf.mxu0
    %7193 = vdwg.mxu0
    %7194 = vmatpush.bf16.msra.mxu0 %v7134
    %7195 = vmatpush.bf16.msra.mxu0 %v7130
    %7196 = vmatpush.bf16.msra.mxu0 %v7126
    %7197 = vmatpush.bf16.msra.mxu0 %v7122
    %7198 = vmatpush.bf16.msra.mxu0 %v7118
    %7199 = vmatpush.bf16.msra.mxu0 %v7114
    %7200 = vmatpush.bf16.msra.mxu0 %v7110
    %7201 = vmatpush.bf16.msra.mxu0 %v7106
    %7202 = vmatmul.bf16.gmra.mxu0 %v6975
    %v7203 = vpop.f32.mrf.mxu0
    %v7204 = vadd.f32 0.0, %v7203
    %v7205 = vpop.f32.mrf.mxu0
    %7206 = vdwg.mxu0
    %7207 = vmatpush.bf16.msra.mxu0 %v7135
    %7208 = vmatpush.bf16.msra.mxu0 %v7131
    %7209 = vmatpush.bf16.msra.mxu0 %v7127
    %7210 = vmatpush.bf16.msra.mxu0 %v7123
    %7211 = vmatpush.bf16.msra.mxu0 %v7119
    %7212 = vmatpush.bf16.msra.mxu0 %v7115
    %7213 = vmatpush.bf16.msra.mxu0 %v7111
    %7214 = vmatpush.bf16.msra.mxu0 %v7107
    %7215 = vmatmul.bf16.gmra.mxu0 %v6975
    %v7216 = vpop.f32.mrf.mxu0
    %v7217 = vadd.f32 0.0, %v7216
    %v7218 = vpop.f32.mrf.mxu0
    %7219 = vdwg.mxu0
    %v7220 = vadd.f32 %v6933, %v7178
    %v7221 = vadd.f32 %v6946, %v7191
    %v7222 = vadd.f32 %v6959, %v7204
    %v7223 = vadd.f32 %v6972, %v7217
    %v7224 = vxor.u32 %v7220, 2147483648
    %v7225 = vxor.u32 %v7221, 2147483648
    %v7226 = vxor.u32 %v7222, 2147483648
    %v7227 = vmul.f32 %v7224, 1.442695
    %v7228 = vpow.pop %v7227
    %v7229 = vmul.f32 %v7225, 1.442695
    %v7230 = vpow.pop %v7229
    %v7231 = vmul.f32 %v7226, 1.442695
    %v7232 = vpow.pop %v7231
    %v7233 = vadd.f32 %v7228, 1.0
    %v7234 = vadd.f32 %v7230, 1.0
    %v7235 = vadd.f32 %v7232, 1.0
    %v7236 = vrcp.pop %v7233
    %v7237 = vmul.f32 %v7233, %v7236
    %v7238 = vsub.f32 1.0, %v7237
    %v7239 = vmul.f32 %v7236, %v7238
    %v7240 = vadd.f32 %v7236, %v7239
    %vm7241 = vweird.f32 %v7233
    %vm7242 = vweird.f32 %v7236
    %vm7243 = vmor %vm7241, %vm7242
    %v7244 = vsel %vm7243, %v7236, %v7240
    %v7245 = vand.u32 2147483647, %v7233
    %vm7246 = vcmp.eq.f32.partialorder %v7245, 8.507059e+37
    %v7247 = vand.u32 %v7233, 2147483648
    %v7248 = vor.u32 1.1754944e-38, %v7247
    %v7249 = vsel %vm7246, %v7248, %v7244
    %v7250 = vmul.f32 1.0, %v7249
    %v7251 = vrcp.pop %v7234
    %v7252 = vmul.f32 %v7234, %v7251
    %v7253 = vsub.f32 1.0, %v7252
    %v7254 = vmul.f32 %v7251, %v7253
    %v7255 = vadd.f32 %v7251, %v7254
    %vm7256 = vweird.f32 %v7234
    %vm7257 = vweird.f32 %v7251
    %vm7258 = vmor %vm7256, %vm7257
    %v7259 = vsel %vm7258, %v7251, %v7255
    %v7260 = vand.u32 2147483647, %v7234
    %vm7261 = vcmp.eq.f32.partialorder %v7260, 8.507059e+37
    %v7262 = vand.u32 %v7234, 2147483648
    %v7263 = vor.u32 1.1754944e-38, %v7262
    %v7264 = vsel %vm7261, %v7263, %v7259
    %v7265 = vmul.f32 1.0, %v7264
    %v7266 = vrcp.pop %v7235
    %v7267 = vmul.f32 %v7235, %v7266
    %v7268 = vsub.f32 1.0, %v7267
    %v7269 = vmul.f32 %v7266, %v7268
    %v7270 = vadd.f32 %v7266, %v7269
    %vm7271 = vweird.f32 %v7235
    %vm7272 = vweird.f32 %v7266
    %vm7273 = vmor %vm7271, %vm7272
    %v7274 = vsel %vm7273, %v7266, %v7270
    %v7275 = vand.u32 2147483647, %v7235
    %vm7276 = vcmp.eq.f32.partialorder %v7275, 8.507059e+37
    %v7277 = vand.u32 %v7235, 2147483648
    %v7278 = vor.u32 1.1754944e-38, %v7277
    %v7279 = vsel %vm7276, %v7278, %v7274
    %v7280 = vmul.f32 1.0, %v7279
    %v7281 = vtanh.pop %v7223
    %v7282 = vmul.f32 %v7265, %v5840
    %v7283 = vmul.f32 %v7250, %v7281
    %v7284 = vadd.f32 %v7282, %v7283
    %v7285 = vtanh.pop %v7284
    %v7286 = vmul.f32 %v7280, %v7285
    %v7303 = vunpack.c.l.b16 %v6427
    %v7304 = vunpack.c.l.b16 %v6428
    %v7305 = vunpack.c.l.b16 %v6429
    %v7306 = vunpack.c.l.b16 %v6430
    %v7307 = vunpack.c.l.b16 %v6431
    %v7308 = vunpack.c.l.b16 %v6432
    %v7309 = vunpack.c.l.b16 %v6433
    %v7310 = vunpack.c.l.b16 %v6434
    %v7311 = vunpack.c.l.b16 %v6435
    %v7312 = vunpack.c.l.b16 %v6436
    %v7313 = vunpack.c.l.b16 %v6437
    %v7314 = vunpack.c.l.b16 %v6438
    %v7315 = vunpack.c.l.b16 %v6439
    %v7316 = vunpack.c.l.b16 %v6440
    %v7317 = vunpack.c.l.b16 %v6441
    %v7318 = vunpack.c.l.b16 %v6442
    %v7319 = vpack.c.b16 %v7304, %v7303
    %v7320 = vpack.c.b16 %v7306, %v7305
    %v7321 = vpack.c.b16 %v7308, %v7307
    %v7322 = vpack.c.b16 %v7310, %v7309
    %v7323 = vpack.c.b16 %v7312, %v7311
    %v7324 = vpack.c.b16 %v7314, %v7313
    %v7325 = vpack.c.b16 %v7316, %v7315
    %v7326 = vpack.c.b16 %v7318, %v7317
    %7335 = vmatpush.bf16.msra.mxu0 %v7326
    %7336 = vmatpush.bf16.msra.mxu0 %v7325
    %7337 = vmatpush.bf16.msra.mxu0 %v7324
    %7338 = vmatpush.bf16.msra.mxu0 %v7323
    %7339 = vmatpush.bf16.msra.mxu0 %v7322
    %7340 = vmatpush.bf16.msra.mxu0 %v7321
    %7341 = vmatpush.bf16.msra.mxu0 %v7320
    %7342 = vmatpush.bf16.msra.mxu0 %v7319
    %7343 = vmatmul.bf16.gmra.mxu0 %v6426
    %v7344 = vpop.f32.mrf.mxu0
    %v7345 = vadd.f32 %v209, %v7344
    %v7346 = vpop.f32.mrf.mxu0
    %7347 = vdwg.mxu0
    %v7348 = vpack.c.bf16 %v7286, %v7286
    %v7349 = vld [vmem:[#allocation16] sm:$0xf]
    %v7350 = vld [vmem:[#allocation16 + $0x4] sm:$0xf]
    %v7351 = vld [vmem:[#allocation16 + $0x8] sm:$0xf]
    %v7352 = vld [vmem:[#allocation16 + $0xc] sm:$0xf]
    %v7353 = vld [vmem:[#allocation16 + $0x10] sm:$0xf]
    %v7354 = vld [vmem:[#allocation16 + $0x14] sm:$0xf]
    %v7355 = vld [vmem:[#allocation16 + $0x18] sm:$0xf]
    %v7356 = vld [vmem:[#allocation16 + $0x1c] sm:$0xf]
    %v7357 = vld [vmem:[#allocation16 + $0x20] sm:$0xf]
    %v7358 = vld [vmem:[#allocation16 + $0x24] sm:$0xf]
    %v7359 = vld [vmem:[#allocation16 + $0x28] sm:$0xf]
    %v7360 = vld [vmem:[#allocation16 + $0x2c] sm:$0xf]
    %v7361 = vld [vmem:[#allocation16 + $0x30] sm:$0xf]
    %v7362 = vld [vmem:[#allocation16 + $0x34] sm:$0xf]
    %v7363 = vld [vmem:[#allocation16 + $0x38] sm:$0xf]
    %v7364 = vld [vmem:[#allocation16 + $0x3c] sm:$0xf]
    %v7381 = vunpack.c.l.b16 %v7349
    %v7382 = vunpack.c.l.b16 %v7350
    %v7383 = vunpack.c.l.b16 %v7351
    %v7384 = vunpack.c.l.b16 %v7352
    %v7385 = vunpack.c.l.b16 %v7353
    %v7386 = vunpack.c.l.b16 %v7354
    %v7387 = vunpack.c.l.b16 %v7355
    %v7388 = vunpack.c.l.b16 %v7356
    %v7389 = vunpack.c.l.b16 %v7357
    %v7390 = vunpack.c.l.b16 %v7358
    %v7391 = vunpack.c.l.b16 %v7359
    %v7392 = vunpack.c.l.b16 %v7360
    %v7393 = vunpack.c.l.b16 %v7361
    %v7394 = vunpack.c.l.b16 %v7362
    %v7395 = vunpack.c.l.b16 %v7363
    %v7396 = vunpack.c.l.b16 %v7364
    %v7397 = vpack.c.b16 %v7382, %v7381
    %v7398 = vpack.c.b16 %v7384, %v7383
    %v7399 = vpack.c.b16 %v7386, %v7385
    %v7400 = vpack.c.b16 %v7388, %v7387
    %v7401 = vpack.c.b16 %v7390, %v7389
    %v7402 = vpack.c.b16 %v7392, %v7391
    %v7403 = vpack.c.b16 %v7394, %v7393
    %v7404 = vpack.c.b16 %v7396, %v7395
    %7413 = vmatpush.bf16.msra.mxu0 %v7404
    %7414 = vmatpush.bf16.msra.mxu0 %v7403
    %7415 = vmatpush.bf16.msra.mxu0 %v7402
    %7416 = vmatpush.bf16.msra.mxu0 %v7401
    %7417 = vmatpush.bf16.msra.mxu0 %v7400
    %7418 = vmatpush.bf16.msra.mxu0 %v7399
    %7419 = vmatpush.bf16.msra.mxu0 %v7398
    %7420 = vmatpush.bf16.msra.mxu0 %v7397
    %7421 = vmatmul.bf16.gmra.mxu0 %v7348
    %v7422 = vpop.f32.mrf.mxu0
    %v7423 = vadd.f32 0.0, %v7422
    %v7424 = vpop.f32.mrf.mxu0
    %7425 = vdwg.mxu0
    %v7426 = vadd.f32 %v7345, %v7423
    %s7427 = scalar_lea.vmem [#allocation19], 32
    %7428 = vst [vmem:[%s7427] sm:$0xff] %v7426
    %v7429 = vld [vmem:[#allocation11] sm:$0xff]
    %v7430 = vld [vmem:[#allocation11 + $0x8] sm:$0xff]
    %v7431 = vld [vmem:[#allocation11 + $0x10] sm:$0xff]
    %v7432 = vld [vmem:[#allocation11 + $0x18] sm:$0xff]
    %v7433 = vld [vmem:[#allocation11 + $0x20] sm:$0xff]
    %v7434 = vld [vmem:[#allocation11 + $0x28] sm:$0xff]
    %v7435 = vld [vmem:[#allocation11 + $0x30] sm:$0xff]
    %v7436 = vld [vmem:[#allocation11 + $0x38] sm:$0xff]
    %v7437 = vld [vmem:[#allocation11 + $0x40] sm:$0xff]
    %v7438 = vld [vmem:[#allocation11 + $0x48] sm:$0xff]
    %v7439 = vld [vmem:[#allocation11 + $0x50] sm:$0xff]
    %v7440 = vld [vmem:[#allocation11 + $0x58] sm:$0xff]
    %v7441 = vld [vmem:[#allocation11 + $0x60] sm:$0xff]
    %v7442 = vld [vmem:[#allocation11 + $0x68] sm:$0xff]
    %v7443 = vld [vmem:[#allocation11 + $0x70] sm:$0xff]
    %v7444 = vld [vmem:[#allocation11 + $0x78] sm:$0xff]
    %v7445 = vld [vmem:[#allocation11 + $0x80] sm:$0xff]
    %v7446 = vld [vmem:[#allocation11 + $0x88] sm:$0xff]
    %v7447 = vld [vmem:[#allocation11 + $0x90] sm:$0xff]
    %v7448 = vld [vmem:[#allocation11 + $0x98] sm:$0xff]
    %v7449 = vld [vmem:[#allocation11 + $0xa0] sm:$0xff]
    %v7450 = vld [vmem:[#allocation11 + $0xa8] sm:$0xff]
    %v7451 = vld [vmem:[#allocation11 + $0xb0] sm:$0xff]
    %v7452 = vld [vmem:[#allocation11 + $0xb8] sm:$0xff]
    %v7453 = vld [vmem:[#allocation11 + $0xc0] sm:$0xff]
    %v7454 = vld [vmem:[#allocation11 + $0xc8] sm:$0xff]
    %v7455 = vld [vmem:[#allocation11 + $0xd0] sm:$0xff]
    %v7456 = vld [vmem:[#allocation11 + $0xd8] sm:$0xff]
    %v7457 = vld [vmem:[#allocation11 + $0xe0] sm:$0xff]
    %v7458 = vld [vmem:[#allocation11 + $0xe8] sm:$0xff]
    %v7459 = vld [vmem:[#allocation11 + $0xf0] sm:$0xff]
    %v7460 = vld [vmem:[#allocation11 + $0xf8] sm:$0xff]
    %v7493 = vunpack.c.l.b16 %v7429
    %v7494 = vunpack.c.h.b16 %v7429
    %v7495 = vunpack.c.l.b16 %v7430
    %v7496 = vunpack.c.h.b16 %v7430
    %v7497 = vunpack.c.l.b16 %v7431
    %v7498 = vunpack.c.h.b16 %v7431
    %v7499 = vunpack.c.l.b16 %v7432
    %v7500 = vunpack.c.h.b16 %v7432
    %v7501 = vunpack.c.l.b16 %v7433
    %v7502 = vunpack.c.h.b16 %v7433
    %v7503 = vunpack.c.l.b16 %v7434
    %v7504 = vunpack.c.h.b16 %v7434
    %v7505 = vunpack.c.l.b16 %v7435
    %v7506 = vunpack.c.h.b16 %v7435
    %v7507 = vunpack.c.l.b16 %v7436
    %v7508 = vunpack.c.h.b16 %v7436
    %v7509 = vunpack.c.l.b16 %v7437
    %v7510 = vunpack.c.h.b16 %v7437
    %v7511 = vunpack.c.l.b16 %v7438
    %v7512 = vunpack.c.h.b16 %v7438
    %v7513 = vunpack.c.l.b16 %v7439
    %v7514 = vunpack.c.h.b16 %v7439
    %v7515 = vunpack.c.l.b16 %v7440
    %v7516 = vunpack.c.h.b16 %v7440
    %v7517 = vunpack.c.l.b16 %v7441
    %v7518 = vunpack.c.h.b16 %v7441
    %v7519 = vunpack.c.l.b16 %v7442
    %v7520 = vunpack.c.h.b16 %v7442
    %v7521 = vunpack.c.l.b16 %v7443
    %v7522 = vunpack.c.h.b16 %v7443
    %v7523 = vunpack.c.l.b16 %v7444
    %v7524 = vunpack.c.h.b16 %v7444
    %v7525 = vunpack.c.l.b16 %v7445
    %v7526 = vunpack.c.h.b16 %v7445
    %v7527 = vunpack.c.l.b16 %v7446
    %v7528 = vunpack.c.h.b16 %v7446
    %v7529 = vunpack.c.l.b16 %v7447
    %v7530 = vunpack.c.h.b16 %v7447
    %v7531 = vunpack.c.l.b16 %v7448
    %v7532 = vunpack.c.h.b16 %v7448
    %v7533 = vunpack.c.l.b16 %v7449
    %v7534 = vunpack.c.h.b16 %v7449
    %v7535 = vunpack.c.l.b16 %v7450
    %v7536 = vunpack.c.h.b16 %v7450
    %v7537 = vunpack.c.l.b16 %v7451
    %v7538 = vunpack.c.h.b16 %v7451
    %v7539 = vunpack.c.l.b16 %v7452
    %v7540 = vunpack.c.h.b16 %v7452
    %v7541 = vunpack.c.l.b16 %v7453
    %v7542 = vunpack.c.h.b16 %v7453
    %v7543 = vunpack.c.l.b16 %v7454
    %v7544 = vunpack.c.h.b16 %v7454
    %v7545 = vunpack.c.l.b16 %v7455
    %v7546 = vunpack.c.h.b16 %v7455
    %v7547 = vunpack.c.l.b16 %v7456
    %v7548 = vunpack.c.h.b16 %v7456
    %v7549 = vunpack.c.l.b16 %v7457
    %v7550 = vunpack.c.h.b16 %v7457
    %v7551 = vunpack.c.l.b16 %v7458
    %v7552 = vunpack.c.h.b16 %v7458
    %v7553 = vunpack.c.l.b16 %v7459
    %v7554 = vunpack.c.h.b16 %v7459
    %v7555 = vunpack.c.l.b16 %v7460
    %v7556 = vunpack.c.h.b16 %v7460
    %v7557 = vpack.c.b16 %v7497, %v7493
    %v7558 = vpack.c.b16 %v7498, %v7494
    %v7559 = vpack.c.b16 %v7499, %v7495
    %v7560 = vpack.c.b16 %v7500, %v7496
    %v7561 = vpack.c.b16 %v7505, %v7501
    %v7562 = vpack.c.b16 %v7506, %v7502
    %v7563 = vpack.c.b16 %v7507, %v7503
    %v7564 = vpack.c.b16 %v7508, %v7504
    %v7565 = vpack.c.b16 %v7513, %v7509
    %v7566 = vpack.c.b16 %v7514, %v7510
    %v7567 = vpack.c.b16 %v7515, %v7511
    %v7568 = vpack.c.b16 %v7516, %v7512
    %v7569 = vpack.c.b16 %v7521, %v7517
    %v7570 = vpack.c.b16 %v7522, %v7518
    %v7571 = vpack.c.b16 %v7523, %v7519
    %v7572 = vpack.c.b16 %v7524, %v7520
    %v7573 = vpack.c.b16 %v7529, %v7525
    %v7574 = vpack.c.b16 %v7530, %v7526
    %v7575 = vpack.c.b16 %v7531, %v7527
    %v7576 = vpack.c.b16 %v7532, %v7528
    %v7577 = vpack.c.b16 %v7537, %v7533
    %v7578 = vpack.c.b16 %v7538, %v7534
    %v7579 = vpack.c.b16 %v7539, %v7535
    %v7580 = vpack.c.b16 %v7540, %v7536
    %v7581 = vpack.c.b16 %v7545, %v7541
    %v7582 = vpack.c.b16 %v7546, %v7542
    %v7583 = vpack.c.b16 %v7547, %v7543
    %v7584 = vpack.c.b16 %v7548, %v7544
    %v7585 = vpack.c.b16 %v7553, %v7549
    %v7586 = vpack.c.b16 %v7554, %v7550
    %v7587 = vpack.c.b16 %v7555, %v7551
    %v7588 = vpack.c.b16 %v7556, %v7552
    %7621 = vmatpush.bf16.msra.mxu0 %v7585
    %7622 = vmatpush.bf16.msra.mxu0 %v7581
    %7623 = vmatpush.bf16.msra.mxu0 %v7577
    %7624 = vmatpush.bf16.msra.mxu0 %v7573
    %7625 = vmatpush.bf16.msra.mxu0 %v7569
    %7626 = vmatpush.bf16.msra.mxu0 %v7565
    %7627 = vmatpush.bf16.msra.mxu0 %v7561
    %7628 = vmatpush.bf16.msra.mxu0 %v7557
    %7629 = vmatmul.bf16.gmra.mxu0 %v6975
    %v7630 = vpop.f32.mrf.mxu0
    %v7631 = vadd.f32 0.0, %v7630
    %v7632 = vpop.f32.mrf.mxu0
    %7633 = vdwg.mxu0
    %7634 = vmatpush.bf16.msra.mxu0 %v7586
    %7635 = vmatpush.bf16.msra.mxu0 %v7582
    %7636 = vmatpush.bf16.msra.mxu0 %v7578
    %7637 = vmatpush.bf16.msra.mxu0 %v7574
    %7638 = vmatpush.bf16.msra.mxu0 %v7570
    %7639 = vmatpush.bf16.msra.mxu0 %v7566
    %7640 = vmatpush.bf16.msra.mxu0 %v7562
    %7641 = vmatpush.bf16.msra.mxu0 %v7558
    %7642 = vmatmul.bf16.gmra.mxu0 %v6975
    %v7643 = vpop.f32.mrf.mxu0
    %v7644 = vadd.f32 0.0, %v7643
    %v7645 = vpop.f32.mrf.mxu0
    %7646 = vdwg.mxu0
    %7647 = vmatpush.bf16.msra.mxu0 %v7587
    %7648 = vmatpush.bf16.msra.mxu0 %v7583
    %7649 = vmatpush.bf16.msra.mxu0 %v7579
    %7650 = vmatpush.bf16.msra.mxu0 %v7575
    %7651 = vmatpush.bf16.msra.mxu0 %v7571
    %7652 = vmatpush.bf16.msra.mxu0 %v7567
    %7653 = vmatpush.bf16.msra.mxu0 %v7563
    %7654 = vmatpush.bf16.msra.mxu0 %v7559
    %7655 = vmatmul.bf16.gmra.mxu0 %v6975
    %v7656 = vpop.f32.mrf.mxu0
    %v7657 = vadd.f32 0.0, %v7656
    %v7658 = vpop.f32.mrf.mxu0
    %7659 = vdwg.mxu0
    %7660 = vmatpush.bf16.msra.mxu0 %v7588
    %7661 = vmatpush.bf16.msra.mxu0 %v7584
    %7662 = vmatpush.bf16.msra.mxu0 %v7580
    %7663 = vmatpush.bf16.msra.mxu0 %v7576
    %7664 = vmatpush.bf16.msra.mxu0 %v7572
    %7665 = vmatpush.bf16.msra.mxu0 %v7568
    %7666 = vmatpush.bf16.msra.mxu0 %v7564
    %7667 = vmatpush.bf16.msra.mxu0 %v7560
    %7668 = vmatmul.bf16.gmra.mxu0 %v6975
    %v7669 = vpop.f32.mrf.mxu0
    %v7670 = vadd.f32 0.0, %v7669
    %v7671 = vpop.f32.mrf.mxu0
    %7672 = vdwg.mxu0
    %v7673 = vld [vmem:[#allocation14] sm:$0xff]
    %v7674 = vld [vmem:[#allocation14 + $0x8] sm:$0xff]
    %v7675 = vld [vmem:[#allocation14 + $0x10] sm:$0xff]
    %v7676 = vld [vmem:[#allocation14 + $0x18] sm:$0xff]
    %v7677 = vld [vmem:[#allocation14 + $0x20] sm:$0xff]
    %v7678 = vld [vmem:[#allocation14 + $0x28] sm:$0xff]
    %v7679 = vld [vmem:[#allocation14 + $0x30] sm:$0xff]
    %v7680 = vld [vmem:[#allocation14 + $0x38] sm:$0xff]
    %v7681 = vld [vmem:[#allocation14 + $0x40] sm:$0xff]
    %v7682 = vld [vmem:[#allocation14 + $0x48] sm:$0xff]
    %v7683 = vld [vmem:[#allocation14 + $0x50] sm:$0xff]
    %v7684 = vld [vmem:[#allocation14 + $0x58] sm:$0xff]
    %v7685 = vld [vmem:[#allocation14 + $0x60] sm:$0xff]
    %v7686 = vld [vmem:[#allocation14 + $0x68] sm:$0xff]
    %v7687 = vld [vmem:[#allocation14 + $0x70] sm:$0xff]
    %v7688 = vld [vmem:[#allocation14 + $0x78] sm:$0xff]
    %v7689 = vld [vmem:[#allocation14 + $0x80] sm:$0xff]
    %v7690 = vld [vmem:[#allocation14 + $0x88] sm:$0xff]
    %v7691 = vld [vmem:[#allocation14 + $0x90] sm:$0xff]
    %v7692 = vld [vmem:[#allocation14 + $0x98] sm:$0xff]
    %v7693 = vld [vmem:[#allocation14 + $0xa0] sm:$0xff]
    %v7694 = vld [vmem:[#allocation14 + $0xa8] sm:$0xff]
    %v7695 = vld [vmem:[#allocation14 + $0xb0] sm:$0xff]
    %v7696 = vld [vmem:[#allocation14 + $0xb8] sm:$0xff]
    %v7697 = vld [vmem:[#allocation14 + $0xc0] sm:$0xff]
    %v7698 = vld [vmem:[#allocation14 + $0xc8] sm:$0xff]
    %v7699 = vld [vmem:[#allocation14 + $0xd0] sm:$0xff]
    %v7700 = vld [vmem:[#allocation14 + $0xd8] sm:$0xff]
    %v7701 = vld [vmem:[#allocation14 + $0xe0] sm:$0xff]
    %v7702 = vld [vmem:[#allocation14 + $0xe8] sm:$0xff]
    %v7703 = vld [vmem:[#allocation14 + $0xf0] sm:$0xff]
    %v7704 = vld [vmem:[#allocation14 + $0xf8] sm:$0xff]
    %v7705 = vld [vmem:[#allocation5] sm:$0xf]
    %v7706 = vld [vmem:[#allocation5 + $0x4] sm:$0xf]
    %v7707 = vld [vmem:[#allocation5 + $0x8] sm:$0xf]
    %v7708 = vld [vmem:[#allocation5 + $0xc] sm:$0xf]
    %v7709 = vld [vmem:[#allocation5 + $0x10] sm:$0xf]
    %v7710 = vld [vmem:[#allocation5 + $0x14] sm:$0xf]
    %v7711 = vld [vmem:[#allocation5 + $0x18] sm:$0xf]
    %v7712 = vld [vmem:[#allocation5 + $0x1c] sm:$0xf]
    %v7713 = vld [vmem:[#allocation5 + $0x20] sm:$0xf]
    %v7714 = vld [vmem:[#allocation5 + $0x24] sm:$0xf]
    %v7715 = vld [vmem:[#allocation5 + $0x28] sm:$0xf]
    %v7716 = vld [vmem:[#allocation5 + $0x2c] sm:$0xf]
    %v7717 = vld [vmem:[#allocation5 + $0x30] sm:$0xf]
    %v7718 = vld [vmem:[#allocation5 + $0x34] sm:$0xf]
    %v7719 = vld [vmem:[#allocation5 + $0x38] sm:$0xf]
    %v7720 = vld [vmem:[#allocation5 + $0x3c] sm:$0xf]
    %v7721 = vld [vmem:[#allocation8] sm:$0xff]
    %v7738 = vunpack.c.l.b16 %v7705
    %v7739 = vunpack.c.l.b16 %v7706
    %v7740 = vunpack.c.l.b16 %v7707
    %v7741 = vunpack.c.l.b16 %v7708
    %v7742 = vunpack.c.l.b16 %v7709
    %v7743 = vunpack.c.l.b16 %v7710
    %v7744 = vunpack.c.l.b16 %v7711
    %v7745 = vunpack.c.l.b16 %v7712
    %v7746 = vunpack.c.l.b16 %v7713
    %v7747 = vunpack.c.l.b16 %v7714
    %v7748 = vunpack.c.l.b16 %v7715
    %v7749 = vunpack.c.l.b16 %v7716
    %v7750 = vunpack.c.l.b16 %v7717
    %v7751 = vunpack.c.l.b16 %v7718
    %v7752 = vunpack.c.l.b16 %v7719
    %v7753 = vunpack.c.l.b16 %v7720
    %v7754 = vpack.c.b16 %v7739, %v7738
    %v7755 = vpack.c.b16 %v7741, %v7740
    %v7756 = vpack.c.b16 %v7743, %v7742
    %v7757 = vpack.c.b16 %v7745, %v7744
    %v7758 = vpack.c.b16 %v7747, %v7746
    %v7759 = vpack.c.b16 %v7749, %v7748
    %v7760 = vpack.c.b16 %v7751, %v7750
    %v7761 = vpack.c.b16 %v7753, %v7752
    %7770 = vmatpush.bf16.msra.mxu0 %v7761
    %7771 = vmatpush.bf16.msra.mxu0 %v7760
    %7772 = vmatpush.bf16.msra.mxu0 %v7759
    %7773 = vmatpush.bf16.msra.mxu0 %v7758
    %7774 = vmatpush.bf16.msra.mxu0 %v7757
    %7775 = vmatpush.bf16.msra.mxu0 %v7756
    %7776 = vmatpush.bf16.msra.mxu0 %v7755
    %7777 = vmatpush.bf16.msra.mxu0 %v7754
    %7778 = vmatmul.bf16.gmra.mxu0 %v7348
    %v7779 = vpop.f32.mrf.mxu0
    %v7780 = vadd.f32 %v7721, %v7779
    %v7781 = vpop.f32.mrf.mxu0
    %7782 = vdwg.mxu0
    %7783 = vmax.xlane.f32.xlu0 %v7780
    %v7784 = vpop.xlane.xlu0 %7783
    %v7785 = vsub.f32 %v7780, %v7784
    %v7786 = vmul.f32 %v7785, 1.442695
    %v7787 = vpow.pop %v7786
    %7788 = vadd.xlane.f32.xlu0 %v7787
    %v7789 = vpop.xlane.xlu0 %7788
    %v7790 = vrcp.pop %v7789
    %v7791 = vmul.f32 %v7787, %v7790
    %v7792 = vpack.c.bf16 %v7791, %v7791
    %v7793 = vld [vmem:[#allocation7] sm:$0xf]
    %v7794 = vld [vmem:[#allocation7 + $0x4] sm:$0xf]
    %v7795 = vld [vmem:[#allocation7 + $0x8] sm:$0xf]
    %v7796 = vld [vmem:[#allocation7 + $0xc] sm:$0xf]
    %v7797 = vld [vmem:[#allocation7 + $0x10] sm:$0xf]
    %v7798 = vld [vmem:[#allocation7 + $0x14] sm:$0xf]
    %v7799 = vld [vmem:[#allocation7 + $0x18] sm:$0xf]
    %v7800 = vld [vmem:[#allocation7 + $0x1c] sm:$0xf]
    %v7801 = vld [vmem:[#allocation7 + $0x20] sm:$0xf]
    %v7802 = vld [vmem:[#allocation7 + $0x24] sm:$0xf]
    %v7803 = vld [vmem:[#allocation7 + $0x28] sm:$0xf]
    %v7804 = vld [vmem:[#allocation7 + $0x2c] sm:$0xf]
    %v7805 = vld [vmem:[#allocation7 + $0x30] sm:$0xf]
    %v7806 = vld [vmem:[#allocation7 + $0x34] sm:$0xf]
    %v7807 = vld [vmem:[#allocation7 + $0x38] sm:$0xf]
    %v7808 = vld [vmem:[#allocation7 + $0x3c] sm:$0xf]
    %v7825 = vunpack.c.l.b16 %v7793
    %v7826 = vunpack.c.l.b16 %v7794
    %v7827 = vunpack.c.l.b16 %v7795
    %v7828 = vunpack.c.l.b16 %v7796
    %v7829 = vunpack.c.l.b16 %v7797
    %v7830 = vunpack.c.l.b16 %v7798
    %v7831 = vunpack.c.l.b16 %v7799
    %v7832 = vunpack.c.l.b16 %v7800
    %v7833 = vunpack.c.l.b16 %v7801
    %v7834 = vunpack.c.l.b16 %v7802
    %v7835 = vunpack.c.l.b16 %v7803
    %v7836 = vunpack.c.l.b16 %v7804
    %v7837 = vunpack.c.l.b16 %v7805
    %v7838 = vunpack.c.l.b16 %v7806
    %v7839 = vunpack.c.l.b16 %v7807
    %v7840 = vunpack.c.l.b16 %v7808
    %v7841 = vpack.c.b16 %v7826, %v7825
    %v7842 = vpack.c.b16 %v7828, %v7827
    %v7843 = vpack.c.b16 %v7830, %v7829
    %v7844 = vpack.c.b16 %v7832, %v7831
    %v7845 = vpack.c.b16 %v7834, %v7833
    %v7846 = vpack.c.b16 %v7836, %v7835
    %v7847 = vpack.c.b16 %v7838, %v7837
    %v7848 = vpack.c.b16 %v7840, %v7839
    %7857 = vmatpush.bf16.msra.mxu0 %v7848
    %7858 = vmatpush.bf16.msra.mxu0 %v7847
    %7859 = vmatpush.bf16.msra.mxu0 %v7846
    %7860 = vmatpush.bf16.msra.mxu0 %v7845
    %7861 = vmatpush.bf16.msra.mxu0 %v7844
    %7862 = vmatpush.bf16.msra.mxu0 %v7843
    %7863 = vmatpush.bf16.msra.mxu0 %v7842
    %7864 = vmatpush.bf16.msra.mxu0 %v7841
    %7865 = vmatmul.bf16.gmra.mxu0 %v7792
    %v7866 = vpop.f32.mrf.mxu0
    %v7867 = vadd.f32 0.0, %v7866
    %v7868 = vpop.f32.mrf.mxu0
    %7869 = vdwg.mxu0
    %v7870 = vpack.c.bf16 %v7867, %v7867
    %v7871 = vld [vmem:[#allocation17] sm:$0xf]
    %v7872 = vld [vmem:[#allocation17 + $0x4] sm:$0xf]
    %v7873 = vld [vmem:[#allocation17 + $0x8] sm:$0xf]
    %v7874 = vld [vmem:[#allocation17 + $0xc] sm:$0xf]
    %v7875 = vld [vmem:[#allocation17 + $0x10] sm:$0xf]
    %v7876 = vld [vmem:[#allocation17 + $0x14] sm:$0xf]
    %v7877 = vld [vmem:[#allocation17 + $0x18] sm:$0xf]
    %v7878 = vld [vmem:[#allocation17 + $0x1c] sm:$0xf]
    %v7879 = vld [vmem:[#allocation17 + $0x20] sm:$0xf]
    %v7880 = vld [vmem:[#allocation17 + $0x24] sm:$0xf]
    %v7881 = vld [vmem:[#allocation17 + $0x28] sm:$0xf]
    %v7882 = vld [vmem:[#allocation17 + $0x2c] sm:$0xf]
    %v7883 = vld [vmem:[#allocation17 + $0x30] sm:$0xf]
    %v7884 = vld [vmem:[#allocation17 + $0x34] sm:$0xf]
    %v7885 = vld [vmem:[#allocation17 + $0x38] sm:$0xf]
    %v7886 = vld [vmem:[#allocation17 + $0x3c] sm:$0xf]
    %s7887 = scalar_lea.vmem [#allocation2], 160
    %v7888 = vld [vmem:[%s7887] sm:$0xff]
    %v7889 = vld [vmem:[%s7887 + $0x8] sm:$0xff]
    %v7890 = vld [vmem:[%s7887 + $0x10] sm:$0xff]
    %v7891 = vld [vmem:[%s7887 + $0x18] sm:$0xff]
    %v7892 = vadd.f32 %v7888, %v7631
    %v7893 = vadd.f32 %v7889, %v7644
    %v7894 = vadd.f32 %v7890, %v7657
    %v7895 = vadd.f32 %v7891, %v7670
    %v7896 = vld [vmem:[#allocation10] sm:$0xff]
    %v7897 = vld [vmem:[#allocation10 + $0x8] sm:$0xff]
    %v7898 = vld [vmem:[#allocation10 + $0x10] sm:$0xff]
    %v7899 = vld [vmem:[#allocation10 + $0x18] sm:$0xff]
    %v7900 = vld [vmem:[#allocation10 + $0x20] sm:$0xff]
    %v7901 = vld [vmem:[#allocation10 + $0x28] sm:$0xff]
    %v7902 = vld [vmem:[#allocation10 + $0x30] sm:$0xff]
    %v7903 = vld [vmem:[#allocation10 + $0x38] sm:$0xff]
    %v7904 = vld [vmem:[#allocation10 + $0x40] sm:$0xff]
    %v7905 = vld [vmem:[#allocation10 + $0x48] sm:$0xff]
    %v7906 = vld [vmem:[#allocation10 + $0x50] sm:$0xff]
    %v7907 = vld [vmem:[#allocation10 + $0x58] sm:$0xff]
    %v7908 = vld [vmem:[#allocation10 + $0x60] sm:$0xff]
    %v7909 = vld [vmem:[#allocation10 + $0x68] sm:$0xff]
    %v7910 = vld [vmem:[#allocation10 + $0x70] sm:$0xff]
    %v7911 = vld [vmem:[#allocation10 + $0x78] sm:$0xff]
    %v7912 = vld [vmem:[#allocation10 + $0x80] sm:$0xff]
    %v7913 = vld [vmem:[#allocation10 + $0x88] sm:$0xff]
    %v7914 = vld [vmem:[#allocation10 + $0x90] sm:$0xff]
    %v7915 = vld [vmem:[#allocation10 + $0x98] sm:$0xff]
    %v7916 = vld [vmem:[#allocation10 + $0xa0] sm:$0xff]
    %v7917 = vld [vmem:[#allocation10 + $0xa8] sm:$0xff]
    %v7918 = vld [vmem:[#allocation10 + $0xb0] sm:$0xff]
    %v7919 = vld [vmem:[#allocation10 + $0xb8] sm:$0xff]
    %v7920 = vld [vmem:[#allocation10 + $0xc0] sm:$0xff]
    %v7921 = vld [vmem:[#allocation10 + $0xc8] sm:$0xff]
    %v7922 = vld [vmem:[#allocation10 + $0xd0] sm:$0xff]
    %v7923 = vld [vmem:[#allocation10 + $0xd8] sm:$0xff]
    %v7924 = vld [vmem:[#allocation10 + $0xe0] sm:$0xff]
    %v7925 = vld [vmem:[#allocation10 + $0xe8] sm:$0xff]
    %v7926 = vld [vmem:[#allocation10 + $0xf0] sm:$0xff]
    %v7927 = vld [vmem:[#allocation10 + $0xf8] sm:$0xff]
    %v7960 = vunpack.c.l.b16 %v7896
    %v7961 = vunpack.c.h.b16 %v7896
    %v7962 = vunpack.c.l.b16 %v7897
    %v7963 = vunpack.c.h.b16 %v7897
    %v7964 = vunpack.c.l.b16 %v7898
    %v7965 = vunpack.c.h.b16 %v7898
    %v7966 = vunpack.c.l.b16 %v7899
    %v7967 = vunpack.c.h.b16 %v7899
    %v7968 = vunpack.c.l.b16 %v7900
    %v7969 = vunpack.c.h.b16 %v7900
    %v7970 = vunpack.c.l.b16 %v7901
    %v7971 = vunpack.c.h.b16 %v7901
    %v7972 = vunpack.c.l.b16 %v7902
    %v7973 = vunpack.c.h.b16 %v7902
    %v7974 = vunpack.c.l.b16 %v7903
    %v7975 = vunpack.c.h.b16 %v7903
    %v7976 = vunpack.c.l.b16 %v7904
    %v7977 = vunpack.c.h.b16 %v7904
    %v7978 = vunpack.c.l.b16 %v7905
    %v7979 = vunpack.c.h.b16 %v7905
    %v7980 = vunpack.c.l.b16 %v7906
    %v7981 = vunpack.c.h.b16 %v7906
    %v7982 = vunpack.c.l.b16 %v7907
    %v7983 = vunpack.c.h.b16 %v7907
    %v7984 = vunpack.c.l.b16 %v7908
    %v7985 = vunpack.c.h.b16 %v7908
    %v7986 = vunpack.c.l.b16 %v7909
    %v7987 = vunpack.c.h.b16 %v7909
    %v7988 = vunpack.c.l.b16 %v7910
    %v7989 = vunpack.c.h.b16 %v7910
    %v7990 = vunpack.c.l.b16 %v7911
    %v7991 = vunpack.c.h.b16 %v7911
    %v7992 = vunpack.c.l.b16 %v7912
    %v7993 = vunpack.c.h.b16 %v7912
    %v7994 = vunpack.c.l.b16 %v7913
    %v7995 = vunpack.c.h.b16 %v7913
    %v7996 = vunpack.c.l.b16 %v7914
    %v7997 = vunpack.c.h.b16 %v7914
    %v7998 = vunpack.c.l.b16 %v7915
    %v7999 = vunpack.c.h.b16 %v7915
    %v8000 = vunpack.c.l.b16 %v7916
    %v8001 = vunpack.c.h.b16 %v7916
    %v8002 = vunpack.c.l.b16 %v7917
    %v8003 = vunpack.c.h.b16 %v7917
    %v8004 = vunpack.c.l.b16 %v7918
    %v8005 = vunpack.c.h.b16 %v7918
    %v8006 = vunpack.c.l.b16 %v7919
    %v8007 = vunpack.c.h.b16 %v7919
    %v8008 = vunpack.c.l.b16 %v7920
    %v8009 = vunpack.c.h.b16 %v7920
    %v8010 = vunpack.c.l.b16 %v7921
    %v8011 = vunpack.c.h.b16 %v7921
    %v8012 = vunpack.c.l.b16 %v7922
    %v8013 = vunpack.c.h.b16 %v7922
    %v8014 = vunpack.c.l.b16 %v7923
    %v8015 = vunpack.c.h.b16 %v7923
    %v8016 = vunpack.c.l.b16 %v7924
    %v8017 = vunpack.c.h.b16 %v7924
    %v8018 = vunpack.c.l.b16 %v7925
    %v8019 = vunpack.c.h.b16 %v7925
    %v8020 = vunpack.c.l.b16 %v7926
    %v8021 = vunpack.c.h.b16 %v7926
    %v8022 = vunpack.c.l.b16 %v7927
    %v8023 = vunpack.c.h.b16 %v7927
    %v8024 = vpack.c.b16 %v7964, %v7960
    %v8025 = vpack.c.b16 %v7965, %v7961
    %v8026 = vpack.c.b16 %v7966, %v7962
    %v8027 = vpack.c.b16 %v7967, %v7963
    %v8028 = vpack.c.b16 %v7972, %v7968
    %v8029 = vpack.c.b16 %v7973, %v7969
    %v8030 = vpack.c.b16 %v7974, %v7970
    %v8031 = vpack.c.b16 %v7975, %v7971
    %v8032 = vpack.c.b16 %v7980, %v7976
    %v8033 = vpack.c.b16 %v7981, %v7977
    %v8034 = vpack.c.b16 %v7982, %v7978
    %v8035 = vpack.c.b16 %v7983, %v7979
    %v8036 = vpack.c.b16 %v7988, %v7984
    %v8037 = vpack.c.b16 %v7989, %v7985
    %v8038 = vpack.c.b16 %v7990, %v7986
    %v8039 = vpack.c.b16 %v7991, %v7987
    %v8040 = vpack.c.b16 %v7996, %v7992
    %v8041 = vpack.c.b16 %v7997, %v7993
    %v8042 = vpack.c.b16 %v7998, %v7994
    %v8043 = vpack.c.b16 %v7999, %v7995
    %v8044 = vpack.c.b16 %v8004, %v8000
    %v8045 = vpack.c.b16 %v8005, %v8001
    %v8046 = vpack.c.b16 %v8006, %v8002
    %v8047 = vpack.c.b16 %v8007, %v8003
    %v8048 = vpack.c.b16 %v8012, %v8008
    %v8049 = vpack.c.b16 %v8013, %v8009
    %v8050 = vpack.c.b16 %v8014, %v8010
    %v8051 = vpack.c.b16 %v8015, %v8011
    %v8052 = vpack.c.b16 %v8020, %v8016
    %v8053 = vpack.c.b16 %v8021, %v8017
    %v8054 = vpack.c.b16 %v8022, %v8018
    %v8055 = vpack.c.b16 %v8023, %v8019
    %8088 = vmatpush.bf16.msra.mxu0 %v8052
    %8089 = vmatpush.bf16.msra.mxu0 %v8048
    %8090 = vmatpush.bf16.msra.mxu0 %v8044
    %8091 = vmatpush.bf16.msra.mxu0 %v8040
    %8092 = vmatpush.bf16.msra.mxu0 %v8036
    %8093 = vmatpush.bf16.msra.mxu0 %v8032
    %8094 = vmatpush.bf16.msra.mxu0 %v8028
    %8095 = vmatpush.bf16.msra.mxu0 %v8024
    %8096 = vmatmul.bf16.gmra.mxu0 %v7870
    %v8097 = vpop.f32.mrf.mxu0
    %v8098 = vadd.f32 0.0, %v8097
    %v8099 = vpop.f32.mrf.mxu0
    %8100 = vdwg.mxu0
    %8101 = vmatpush.bf16.msra.mxu0 %v8053
    %8102 = vmatpush.bf16.msra.mxu0 %v8049
    %8103 = vmatpush.bf16.msra.mxu0 %v8045
    %8104 = vmatpush.bf16.msra.mxu0 %v8041
    %8105 = vmatpush.bf16.msra.mxu0 %v8037
    %8106 = vmatpush.bf16.msra.mxu0 %v8033
    %8107 = vmatpush.bf16.msra.mxu0 %v8029
    %8108 = vmatpush.bf16.msra.mxu0 %v8025
    %8109 = vmatmul.bf16.gmra.mxu0 %v7870
    %v8110 = vpop.f32.mrf.mxu0
    %v8111 = vadd.f32 0.0, %v8110
    %v8112 = vpop.f32.mrf.mxu0
    %8113 = vdwg.mxu0
    %8114 = vmatpush.bf16.msra.mxu0 %v8054
    %8115 = vmatpush.bf16.msra.mxu0 %v8050
    %8116 = vmatpush.bf16.msra.mxu0 %v8046
    %8117 = vmatpush.bf16.msra.mxu0 %v8042
    %8118 = vmatpush.bf16.msra.mxu0 %v8038
    %8119 = vmatpush.bf16.msra.mxu0 %v8034
    %8120 = vmatpush.bf16.msra.mxu0 %v8030
    %8121 = vmatpush.bf16.msra.mxu0 %v8026
    %8122 = vmatmul.bf16.gmra.mxu0 %v7870
    %v8123 = vpop.f32.mrf.mxu0
    %v8124 = vadd.f32 0.0, %v8123
    %v8125 = vpop.f32.mrf.mxu0
    %8126 = vdwg.mxu0
    %8127 = vmatpush.bf16.msra.mxu0 %v8055
    %8128 = vmatpush.bf16.msra.mxu0 %v8051
    %8129 = vmatpush.bf16.msra.mxu0 %v8047
    %8130 = vmatpush.bf16.msra.mxu0 %v8043
    %8131 = vmatpush.bf16.msra.mxu0 %v8039
    %8132 = vmatpush.bf16.msra.mxu0 %v8035
    %8133 = vmatpush.bf16.msra.mxu0 %v8031
    %8134 = vmatpush.bf16.msra.mxu0 %v8027
    %8135 = vmatmul.bf16.gmra.mxu0 %v7870
    %v8136 = vpop.f32.mrf.mxu0
    %v8137 = vadd.f32 0.0, %v8136
    %v8138 = vpop.f32.mrf.mxu0
    %8139 = vdwg.mxu0
    %v8140 = vadd.f32 %v7892, %v8098
    %v8141 = vadd.f32 %v7893, %v8111
    %v8142 = vadd.f32 %v7894, %v8124
    %v8143 = vadd.f32 %v7895, %v8137
    %v8144 = vxor.u32 %v8140, 2147483648
    %v8145 = vxor.u32 %v8141, 2147483648
    %v8146 = vxor.u32 %v8142, 2147483648
    %v8147 = vmul.f32 %v8144, 1.442695
    %v8148 = vpow.pop %v8147
    %v8149 = vmul.f32 %v8145, 1.442695
    %v8150 = vpow.pop %v8149
    %v8151 = vmul.f32 %v8146, 1.442695
    %v8152 = vpow.pop %v8151
    %v8153 = vadd.f32 %v8148, 1.0
    %v8154 = vadd.f32 %v8150, 1.0
    %v8155 = vadd.f32 %v8152, 1.0
    %v8156 = vrcp.pop %v8153
    %v8157 = vmul.f32 %v8153, %v8156
    %v8158 = vsub.f32 1.0, %v8157
    %v8159 = vmul.f32 %v8156, %v8158
    %v8160 = vadd.f32 %v8156, %v8159
    %vm8161 = vweird.f32 %v8153
    %vm8162 = vweird.f32 %v8156
    %vm8163 = vmor %vm8161, %vm8162
    %v8164 = vsel %vm8163, %v8156, %v8160
    %v8165 = vand.u32 2147483647, %v8153
    %vm8166 = vcmp.eq.f32.partialorder %v8165, 8.507059e+37
    %v8167 = vand.u32 %v8153, 2147483648
    %v8168 = vor.u32 1.1754944e-38, %v8167
    %v8169 = vsel %vm8166, %v8168, %v8164
    %v8170 = vmul.f32 1.0, %v8169
    %v8171 = vrcp.pop %v8154
    %v8172 = vmul.f32 %v8154, %v8171
    %v8173 = vsub.f32 1.0, %v8172
    %v8174 = vmul.f32 %v8171, %v8173
    %v8175 = vadd.f32 %v8171, %v8174
    %vm8176 = vweird.f32 %v8154
    %vm8177 = vweird.f32 %v8171
    %vm8178 = vmor %vm8176, %vm8177
    %v8179 = vsel %vm8178, %v8171, %v8175
    %v8180 = vand.u32 2147483647, %v8154
    %vm8181 = vcmp.eq.f32.partialorder %v8180, 8.507059e+37
    %v8182 = vand.u32 %v8154, 2147483648
    %v8183 = vor.u32 1.1754944e-38, %v8182
    %v8184 = vsel %vm8181, %v8183, %v8179
    %v8185 = vmul.f32 1.0, %v8184
    %v8186 = vrcp.pop %v8155
    %v8187 = vmul.f32 %v8155, %v8186
    %v8188 = vsub.f32 1.0, %v8187
    %v8189 = vmul.f32 %v8186, %v8188
    %v8190 = vadd.f32 %v8186, %v8189
    %vm8191 = vweird.f32 %v8155
    %vm8192 = vweird.f32 %v8186
    %vm8193 = vmor %vm8191, %vm8192
    %v8194 = vsel %vm8193, %v8186, %v8190
    %v8195 = vand.u32 2147483647, %v8155
    %vm8196 = vcmp.eq.f32.partialorder %v8195, 8.507059e+37
    %v8197 = vand.u32 %v8155, 2147483648
    %v8198 = vor.u32 1.1754944e-38, %v8197
    %v8199 = vsel %vm8196, %v8198, %v8194
    %v8200 = vmul.f32 1.0, %v8199
    %v8201 = vtanh.pop %v8143
    %v8202 = vmul.f32 %v8185, %v6760
    %v8203 = vmul.f32 %v8170, %v8201
    %v8204 = vadd.f32 %v8202, %v8203
    %v8205 = vtanh.pop %v8204
    %v8206 = vmul.f32 %v8200, %v8205
    %v8239 = vunpack.c.l.b16 %v7673
    %v8240 = vunpack.c.h.b16 %v7673
    %v8241 = vunpack.c.l.b16 %v7674
    %v8242 = vunpack.c.h.b16 %v7674
    %v8243 = vunpack.c.l.b16 %v7675
    %v8244 = vunpack.c.h.b16 %v7675
    %v8245 = vunpack.c.l.b16 %v7676
    %v8246 = vunpack.c.h.b16 %v7676
    %v8247 = vunpack.c.l.b16 %v7677
    %v8248 = vunpack.c.h.b16 %v7677
    %v8249 = vunpack.c.l.b16 %v7678
    %v8250 = vunpack.c.h.b16 %v7678
    %v8251 = vunpack.c.l.b16 %v7679
    %v8252 = vunpack.c.h.b16 %v7679
    %v8253 = vunpack.c.l.b16 %v7680
    %v8254 = vunpack.c.h.b16 %v7680
    %v8255 = vunpack.c.l.b16 %v7681
    %v8256 = vunpack.c.h.b16 %v7681
    %v8257 = vunpack.c.l.b16 %v7682
    %v8258 = vunpack.c.h.b16 %v7682
    %v8259 = vunpack.c.l.b16 %v7683
    %v8260 = vunpack.c.h.b16 %v7683
    %v8261 = vunpack.c.l.b16 %v7684
    %v8262 = vunpack.c.h.b16 %v7684
    %v8263 = vunpack.c.l.b16 %v7685
    %v8264 = vunpack.c.h.b16 %v7685
    %v8265 = vunpack.c.l.b16 %v7686
    %v8266 = vunpack.c.h.b16 %v7686
    %v8267 = vunpack.c.l.b16 %v7687
    %v8268 = vunpack.c.h.b16 %v7687
    %v8269 = vunpack.c.l.b16 %v7688
    %v8270 = vunpack.c.h.b16 %v7688
    %v8271 = vunpack.c.l.b16 %v7689
    %v8272 = vunpack.c.h.b16 %v7689
    %v8273 = vunpack.c.l.b16 %v7690
    %v8274 = vunpack.c.h.b16 %v7690
    %v8275 = vunpack.c.l.b16 %v7691
    %v8276 = vunpack.c.h.b16 %v7691
    %v8277 = vunpack.c.l.b16 %v7692
    %v8278 = vunpack.c.h.b16 %v7692
    %v8279 = vunpack.c.l.b16 %v7693
    %v8280 = vunpack.c.h.b16 %v7693
    %v8281 = vunpack.c.l.b16 %v7694
    %v8282 = vunpack.c.h.b16 %v7694
    %v8283 = vunpack.c.l.b16 %v7695
    %v8284 = vunpack.c.h.b16 %v7695
    %v8285 = vunpack.c.l.b16 %v7696
    %v8286 = vunpack.c.h.b16 %v7696
    %v8287 = vunpack.c.l.b16 %v7697
    %v8288 = vunpack.c.h.b16 %v7697
    %v8289 = vunpack.c.l.b16 %v7698
    %v8290 = vunpack.c.h.b16 %v7698
    %v8291 = vunpack.c.l.b16 %v7699
    %v8292 = vunpack.c.h.b16 %v7699
    %v8293 = vunpack.c.l.b16 %v7700
    %v8294 = vunpack.c.h.b16 %v7700
    %v8295 = vunpack.c.l.b16 %v7701
    %v8296 = vunpack.c.h.b16 %v7701
    %v8297 = vunpack.c.l.b16 %v7702
    %v8298 = vunpack.c.h.b16 %v7702
    %v8299 = vunpack.c.l.b16 %v7703
    %v8300 = vunpack.c.h.b16 %v7703
    %v8301 = vunpack.c.l.b16 %v7704
    %v8302 = vunpack.c.h.b16 %v7704
    %v8303 = vpack.c.b16 %v8243, %v8239
    %v8304 = vpack.c.b16 %v8244, %v8240
    %v8305 = vpack.c.b16 %v8245, %v8241
    %v8306 = vpack.c.b16 %v8246, %v8242
    %v8307 = vpack.c.b16 %v8251, %v8247
    %v8308 = vpack.c.b16 %v8252, %v8248
    %v8309 = vpack.c.b16 %v8253, %v8249
    %v8310 = vpack.c.b16 %v8254, %v8250
    %v8311 = vpack.c.b16 %v8259, %v8255
    %v8312 = vpack.c.b16 %v8260, %v8256
    %v8313 = vpack.c.b16 %v8261, %v8257
    %v8314 = vpack.c.b16 %v8262, %v8258
    %v8315 = vpack.c.b16 %v8267, %v8263
    %v8316 = vpack.c.b16 %v8268, %v8264
    %v8317 = vpack.c.b16 %v8269, %v8265
    %v8318 = vpack.c.b16 %v8270, %v8266
    %v8319 = vpack.c.b16 %v8275, %v8271
    %v8320 = vpack.c.b16 %v8276, %v8272
    %v8321 = vpack.c.b16 %v8277, %v8273
    %v8322 = vpack.c.b16 %v8278, %v8274
    %v8323 = vpack.c.b16 %v8283, %v8279
    %v8324 = vpack.c.b16 %v8284, %v8280
    %v8325 = vpack.c.b16 %v8285, %v8281
    %v8326 = vpack.c.b16 %v8286, %v8282
    %v8327 = vpack.c.b16 %v8291, %v8287
    %v8328 = vpack.c.b16 %v8292, %v8288
    %v8329 = vpack.c.b16 %v8293, %v8289
    %v8330 = vpack.c.b16 %v8294, %v8290
    %v8331 = vpack.c.b16 %v8299, %v8295
    %v8332 = vpack.c.b16 %v8300, %v8296
    %v8333 = vpack.c.b16 %v8301, %v8297
    %v8334 = vpack.c.b16 %v8302, %v8298
    %8367 = vmatpush.bf16.msra.mxu0 %v8331
    %8368 = vmatpush.bf16.msra.mxu0 %v8327
    %8369 = vmatpush.bf16.msra.mxu0 %v8323
    %8370 = vmatpush.bf16.msra.mxu0 %v8319
    %8371 = vmatpush.bf16.msra.mxu0 %v8315
    %8372 = vmatpush.bf16.msra.mxu0 %v8311
    %8373 = vmatpush.bf16.msra.mxu0 %v8307
    %8374 = vmatpush.bf16.msra.mxu0 %v8303
    %8375 = vmatmul.bf16.gmra.mxu0 %v7348
    %v8376 = vpop.f32.mrf.mxu0
    %v8377 = vadd.f32 %v199, %v8376
    %v8378 = vpop.f32.mrf.mxu0
    %8379 = vdwg.mxu0
    %8380 = vmatpush.bf16.msra.mxu0 %v8332
    %8381 = vmatpush.bf16.msra.mxu0 %v8328
    %8382 = vmatpush.bf16.msra.mxu0 %v8324
    %8383 = vmatpush.bf16.msra.mxu0 %v8320
    %8384 = vmatpush.bf16.msra.mxu0 %v8316
    %8385 = vmatpush.bf16.msra.mxu0 %v8312
    %8386 = vmatpush.bf16.msra.mxu0 %v8308
    %8387 = vmatpush.bf16.msra.mxu0 %v8304
    %8388 = vmatmul.bf16.gmra.mxu0 %v7348
    %v8389 = vpop.f32.mrf.mxu0
    %v8390 = vadd.f32 %v200, %v8389
    %v8391 = vpop.f32.mrf.mxu0
    %8392 = vdwg.mxu0
    %8393 = vmatpush.bf16.msra.mxu0 %v8333
    %8394 = vmatpush.bf16.msra.mxu0 %v8329
    %8395 = vmatpush.bf16.msra.mxu0 %v8325
    %8396 = vmatpush.bf16.msra.mxu0 %v8321
    %8397 = vmatpush.bf16.msra.mxu0 %v8317
    %8398 = vmatpush.bf16.msra.mxu0 %v8313
    %8399 = vmatpush.bf16.msra.mxu0 %v8309
    %8400 = vmatpush.bf16.msra.mxu0 %v8305
    %8401 = vmatmul.bf16.gmra.mxu0 %v7348
    %v8402 = vpop.f32.mrf.mxu0
    %v8403 = vadd.f32 %v201, %v8402
    %v8404 = vpop.f32.mrf.mxu0
    %8405 = vdwg.mxu0
    %8406 = vmatpush.bf16.msra.mxu0 %v8334
    %8407 = vmatpush.bf16.msra.mxu0 %v8330
    %8408 = vmatpush.bf16.msra.mxu0 %v8326
    %8409 = vmatpush.bf16.msra.mxu0 %v8322
    %8410 = vmatpush.bf16.msra.mxu0 %v8318
    %8411 = vmatpush.bf16.msra.mxu0 %v8314
    %8412 = vmatpush.bf16.msra.mxu0 %v8310
    %8413 = vmatpush.bf16.msra.mxu0 %v8306
    %8414 = vmatmul.bf16.gmra.mxu0 %v7348
    %v8415 = vpop.f32.mrf.mxu0
    %v8416 = vadd.f32 %v202, %v8415
    %v8417 = vpop.f32.mrf.mxu0
    %8418 = vdwg.mxu0
    %v8419 = vpack.c.bf16 %v8206, %v8206
    %v8420 = vld [vmem:[#allocation13] sm:$0xff]
    %v8421 = vld [vmem:[#allocation13 + $0x8] sm:$0xff]
    %v8422 = vld [vmem:[#allocation13 + $0x10] sm:$0xff]
    %v8423 = vld [vmem:[#allocation13 + $0x18] sm:$0xff]
    %v8424 = vld [vmem:[#allocation13 + $0x20] sm:$0xff]
    %v8425 = vld [vmem:[#allocation13 + $0x28] sm:$0xff]
    %v8426 = vld [vmem:[#allocation13 + $0x30] sm:$0xff]
    %v8427 = vld [vmem:[#allocation13 + $0x38] sm:$0xff]
    %v8428 = vld [vmem:[#allocation13 + $0x40] sm:$0xff]
    %v8429 = vld [vmem:[#allocation13 + $0x48] sm:$0xff]
    %v8430 = vld [vmem:[#allocation13 + $0x50] sm:$0xff]
    %v8431 = vld [vmem:[#allocation13 + $0x58] sm:$0xff]
    %v8432 = vld [vmem:[#allocation13 + $0x60] sm:$0xff]
    %v8433 = vld [vmem:[#allocation13 + $0x68] sm:$0xff]
    %v8434 = vld [vmem:[#allocation13 + $0x70] sm:$0xff]
    %v8435 = vld [vmem:[#allocation13 + $0x78] sm:$0xff]
    %v8436 = vld [vmem:[#allocation13 + $0x80] sm:$0xff]
    %v8437 = vld [vmem:[#allocation13 + $0x88] sm:$0xff]
    %v8438 = vld [vmem:[#allocation13 + $0x90] sm:$0xff]
    %v8439 = vld [vmem:[#allocation13 + $0x98] sm:$0xff]
    %v8440 = vld [vmem:[#allocation13 + $0xa0] sm:$0xff]
    %v8441 = vld [vmem:[#allocation13 + $0xa8] sm:$0xff]
    %v8442 = vld [vmem:[#allocation13 + $0xb0] sm:$0xff]
    %v8443 = vld [vmem:[#allocation13 + $0xb8] sm:$0xff]
    %v8444 = vld [vmem:[#allocation13 + $0xc0] sm:$0xff]
    %v8445 = vld [vmem:[#allocation13 + $0xc8] sm:$0xff]
    %v8446 = vld [vmem:[#allocation13 + $0xd0] sm:$0xff]
    %v8447 = vld [vmem:[#allocation13 + $0xd8] sm:$0xff]
    %v8448 = vld [vmem:[#allocation13 + $0xe0] sm:$0xff]
    %v8449 = vld [vmem:[#allocation13 + $0xe8] sm:$0xff]
    %v8450 = vld [vmem:[#allocation13 + $0xf0] sm:$0xff]
    %v8451 = vld [vmem:[#allocation13 + $0xf8] sm:$0xff]
    %v8484 = vunpack.c.l.b16 %v8420
    %v8485 = vunpack.c.h.b16 %v8420
    %v8486 = vunpack.c.l.b16 %v8421
    %v8487 = vunpack.c.h.b16 %v8421
    %v8488 = vunpack.c.l.b16 %v8422
    %v8489 = vunpack.c.h.b16 %v8422
    %v8490 = vunpack.c.l.b16 %v8423
    %v8491 = vunpack.c.h.b16 %v8423
    %v8492 = vunpack.c.l.b16 %v8424
    %v8493 = vunpack.c.h.b16 %v8424
    %v8494 = vunpack.c.l.b16 %v8425
    %v8495 = vunpack.c.h.b16 %v8425
    %v8496 = vunpack.c.l.b16 %v8426
    %v8497 = vunpack.c.h.b16 %v8426
    %v8498 = vunpack.c.l.b16 %v8427
    %v8499 = vunpack.c.h.b16 %v8427
    %v8500 = vunpack.c.l.b16 %v8428
    %v8501 = vunpack.c.h.b16 %v8428
    %v8502 = vunpack.c.l.b16 %v8429
    %v8503 = vunpack.c.h.b16 %v8429
    %v8504 = vunpack.c.l.b16 %v8430
    %v8505 = vunpack.c.h.b16 %v8430
    %v8506 = vunpack.c.l.b16 %v8431
    %v8507 = vunpack.c.h.b16 %v8431
    %v8508 = vunpack.c.l.b16 %v8432
    %v8509 = vunpack.c.h.b16 %v8432
    %v8510 = vunpack.c.l.b16 %v8433
    %v8511 = vunpack.c.h.b16 %v8433
    %v8512 = vunpack.c.l.b16 %v8434
    %v8513 = vunpack.c.h.b16 %v8434
    %v8514 = vunpack.c.l.b16 %v8435
    %v8515 = vunpack.c.h.b16 %v8435
    %v8516 = vunpack.c.l.b16 %v8436
    %v8517 = vunpack.c.h.b16 %v8436
    %v8518 = vunpack.c.l.b16 %v8437
    %v8519 = vunpack.c.h.b16 %v8437
    %v8520 = vunpack.c.l.b16 %v8438
    %v8521 = vunpack.c.h.b16 %v8438
    %v8522 = vunpack.c.l.b16 %v8439
    %v8523 = vunpack.c.h.b16 %v8439
    %v8524 = vunpack.c.l.b16 %v8440
    %v8525 = vunpack.c.h.b16 %v8440
    %v8526 = vunpack.c.l.b16 %v8441
    %v8527 = vunpack.c.h.b16 %v8441
    %v8528 = vunpack.c.l.b16 %v8442
    %v8529 = vunpack.c.h.b16 %v8442
    %v8530 = vunpack.c.l.b16 %v8443
    %v8531 = vunpack.c.h.b16 %v8443
    %v8532 = vunpack.c.l.b16 %v8444
    %v8533 = vunpack.c.h.b16 %v8444
    %v8534 = vunpack.c.l.b16 %v8445
    %v8535 = vunpack.c.h.b16 %v8445
    %v8536 = vunpack.c.l.b16 %v8446
    %v8537 = vunpack.c.h.b16 %v8446
    %v8538 = vunpack.c.l.b16 %v8447
    %v8539 = vunpack.c.h.b16 %v8447
    %v8540 = vunpack.c.l.b16 %v8448
    %v8541 = vunpack.c.h.b16 %v8448
    %v8542 = vunpack.c.l.b16 %v8449
    %v8543 = vunpack.c.h.b16 %v8449
    %v8544 = vunpack.c.l.b16 %v8450
    %v8545 = vunpack.c.h.b16 %v8450
    %v8546 = vunpack.c.l.b16 %v8451
    %v8547 = vunpack.c.h.b16 %v8451
    %v8548 = vpack.c.b16 %v8488, %v8484
    %v8549 = vpack.c.b16 %v8489, %v8485
    %v8550 = vpack.c.b16 %v8490, %v8486
    %v8551 = vpack.c.b16 %v8491, %v8487
    %v8552 = vpack.c.b16 %v8496, %v8492
    %v8553 = vpack.c.b16 %v8497, %v8493
    %v8554 = vpack.c.b16 %v8498, %v8494
    %v8555 = vpack.c.b16 %v8499, %v8495
    %v8556 = vpack.c.b16 %v8504, %v8500
    %v8557 = vpack.c.b16 %v8505, %v8501
    %v8558 = vpack.c.b16 %v8506, %v8502
    %v8559 = vpack.c.b16 %v8507, %v8503
    %v8560 = vpack.c.b16 %v8512, %v8508
    %v8561 = vpack.c.b16 %v8513, %v8509
    %v8562 = vpack.c.b16 %v8514, %v8510
    %v8563 = vpack.c.b16 %v8515, %v8511
    %v8564 = vpack.c.b16 %v8520, %v8516
    %v8565 = vpack.c.b16 %v8521, %v8517
    %v8566 = vpack.c.b16 %v8522, %v8518
    %v8567 = vpack.c.b16 %v8523, %v8519
    %v8568 = vpack.c.b16 %v8528, %v8524
    %v8569 = vpack.c.b16 %v8529, %v8525
    %v8570 = vpack.c.b16 %v8530, %v8526
    %v8571 = vpack.c.b16 %v8531, %v8527
    %v8572 = vpack.c.b16 %v8536, %v8532
    %v8573 = vpack.c.b16 %v8537, %v8533
    %v8574 = vpack.c.b16 %v8538, %v8534
    %v8575 = vpack.c.b16 %v8539, %v8535
    %v8576 = vpack.c.b16 %v8544, %v8540
    %v8577 = vpack.c.b16 %v8545, %v8541
    %v8578 = vpack.c.b16 %v8546, %v8542
    %v8579 = vpack.c.b16 %v8547, %v8543
    %8612 = vmatpush.bf16.msra.mxu0 %v8576
    %8613 = vmatpush.bf16.msra.mxu0 %v8572
    %8614 = vmatpush.bf16.msra.mxu0 %v8568
    %8615 = vmatpush.bf16.msra.mxu0 %v8564
    %8616 = vmatpush.bf16.msra.mxu0 %v8560
    %8617 = vmatpush.bf16.msra.mxu0 %v8556
    %8618 = vmatpush.bf16.msra.mxu0 %v8552
    %8619 = vmatpush.bf16.msra.mxu0 %v8548
    %8620 = vmatmul.bf16.gmra.mxu0 %v8419
    %v8621 = vpop.f32.mrf.mxu0
    %v8622 = vadd.f32 0.0, %v8621
    %v8623 = vpop.f32.mrf.mxu0
    %8624 = vdwg.mxu0
    %8625 = vmatpush.bf16.msra.mxu0 %v8577
    %8626 = vmatpush.bf16.msra.mxu0 %v8573
    %8627 = vmatpush.bf16.msra.mxu0 %v8569
    %8628 = vmatpush.bf16.msra.mxu0 %v8565
    %8629 = vmatpush.bf16.msra.mxu0 %v8561
    %8630 = vmatpush.bf16.msra.mxu0 %v8557
    %8631 = vmatpush.bf16.msra.mxu0 %v8553
    %8632 = vmatpush.bf16.msra.mxu0 %v8549
    %8633 = vmatmul.bf16.gmra.mxu0 %v8419
    %v8634 = vpop.f32.mrf.mxu0
    %v8635 = vadd.f32 0.0, %v8634
    %v8636 = vpop.f32.mrf.mxu0
    %8637 = vdwg.mxu0
    %8638 = vmatpush.bf16.msra.mxu0 %v8578
    %8639 = vmatpush.bf16.msra.mxu0 %v8574
    %8640 = vmatpush.bf16.msra.mxu0 %v8570
    %8641 = vmatpush.bf16.msra.mxu0 %v8566
    %8642 = vmatpush.bf16.msra.mxu0 %v8562
    %8643 = vmatpush.bf16.msra.mxu0 %v8558
    %8644 = vmatpush.bf16.msra.mxu0 %v8554
    %8645 = vmatpush.bf16.msra.mxu0 %v8550
    %8646 = vmatmul.bf16.gmra.mxu0 %v8419
    %v8647 = vpop.f32.mrf.mxu0
    %v8648 = vadd.f32 0.0, %v8647
    %v8649 = vpop.f32.mrf.mxu0
    %8650 = vdwg.mxu0
    %8651 = vmatpush.bf16.msra.mxu0 %v8579
    %8652 = vmatpush.bf16.msra.mxu0 %v8575
    %8653 = vmatpush.bf16.msra.mxu0 %v8571
    %8654 = vmatpush.bf16.msra.mxu0 %v8567
    %8655 = vmatpush.bf16.msra.mxu0 %v8563
    %8656 = vmatpush.bf16.msra.mxu0 %v8559
    %8657 = vmatpush.bf16.msra.mxu0 %v8555
    %8658 = vmatpush.bf16.msra.mxu0 %v8551
    %8659 = vmatmul.bf16.gmra.mxu0 %v8419
    %v8660 = vpop.f32.mrf.mxu0
    %v8661 = vadd.f32 0.0, %v8660
    %v8662 = vpop.f32.mrf.mxu0
    %8663 = vdwg.mxu0
    %v8664 = vadd.f32 %v8377, %v8622
    %v8665 = vadd.f32 %v8390, %v8635
    %v8666 = vadd.f32 %v8403, %v8648
    %v8667 = vadd.f32 %v8416, %v8661
    %v8668 = vxor.u32 %v8664, 2147483648
    %v8669 = vxor.u32 %v8665, 2147483648
    %v8670 = vxor.u32 %v8666, 2147483648
    %v8671 = vmul.f32 %v8668, 1.442695
    %v8672 = vpow.pop %v8671
    %v8673 = vmul.f32 %v8669, 1.442695
    %v8674 = vpow.pop %v8673
    %v8675 = vmul.f32 %v8670, 1.442695
    %v8676 = vpow.pop %v8675
    %v8677 = vadd.f32 %v8672, 1.0
    %v8678 = vadd.f32 %v8674, 1.0
    %v8679 = vadd.f32 %v8676, 1.0
    %v8680 = vrcp.pop %v8677
    %v8681 = vmul.f32 %v8677, %v8680
    %v8682 = vsub.f32 1.0, %v8681
    %v8683 = vmul.f32 %v8680, %v8682
    %v8684 = vadd.f32 %v8680, %v8683
    %vm8685 = vweird.f32 %v8677
    %vm8686 = vweird.f32 %v8680
    %vm8687 = vmor %vm8685, %vm8686
    %v8688 = vsel %vm8687, %v8680, %v8684
    %v8689 = vand.u32 2147483647, %v8677
    %vm8690 = vcmp.eq.f32.partialorder %v8689, 8.507059e+37
    %v8691 = vand.u32 %v8677, 2147483648
    %v8692 = vor.u32 1.1754944e-38, %v8691
    %v8693 = vsel %vm8690, %v8692, %v8688
    %v8694 = vmul.f32 1.0, %v8693
    %v8695 = vrcp.pop %v8678
    %v8696 = vmul.f32 %v8678, %v8695
    %v8697 = vsub.f32 1.0, %v8696
    %v8698 = vmul.f32 %v8695, %v8697
    %v8699 = vadd.f32 %v8695, %v8698
    %vm8700 = vweird.f32 %v8678
    %vm8701 = vweird.f32 %v8695
    %vm8702 = vmor %vm8700, %vm8701
    %v8703 = vsel %vm8702, %v8695, %v8699
    %v8704 = vand.u32 2147483647, %v8678
    %vm8705 = vcmp.eq.f32.partialorder %v8704, 8.507059e+37
    %v8706 = vand.u32 %v8678, 2147483648
    %v8707 = vor.u32 1.1754944e-38, %v8706
    %v8708 = vsel %vm8705, %v8707, %v8703
    %v8709 = vmul.f32 1.0, %v8708
    %v8710 = vrcp.pop %v8679
    %v8711 = vmul.f32 %v8679, %v8710
    %v8712 = vsub.f32 1.0, %v8711
    %v8713 = vmul.f32 %v8710, %v8712
    %v8714 = vadd.f32 %v8710, %v8713
    %vm8715 = vweird.f32 %v8679
    %vm8716 = vweird.f32 %v8710
    %vm8717 = vmor %vm8715, %vm8716
    %v8718 = vsel %vm8717, %v8710, %v8714
    %v8719 = vand.u32 2147483647, %v8679
    %vm8720 = vcmp.eq.f32.partialorder %v8719, 8.507059e+37
    %v8721 = vand.u32 %v8679, 2147483648
    %v8722 = vor.u32 1.1754944e-38, %v8721
    %v8723 = vsel %vm8720, %v8722, %v8718
    %v8724 = vmul.f32 1.0, %v8723
    %v8725 = vtanh.pop %v8667
    %v8726 = vmul.f32 %v8709, %v7284
    %v8727 = vmul.f32 %v8694, %v8725
    %v8728 = vadd.f32 %v8726, %v8727
    %v8729 = vtanh.pop %v8728
    %v8730 = vmul.f32 %v8724, %v8729
    %v8747 = vunpack.c.l.b16 %v7871
    %v8748 = vunpack.c.l.b16 %v7872
    %v8749 = vunpack.c.l.b16 %v7873
    %v8750 = vunpack.c.l.b16 %v7874
    %v8751 = vunpack.c.l.b16 %v7875
    %v8752 = vunpack.c.l.b16 %v7876
    %v8753 = vunpack.c.l.b16 %v7877
    %v8754 = vunpack.c.l.b16 %v7878
    %v8755 = vunpack.c.l.b16 %v7879
    %v8756 = vunpack.c.l.b16 %v7880
    %v8757 = vunpack.c.l.b16 %v7881
    %v8758 = vunpack.c.l.b16 %v7882
    %v8759 = vunpack.c.l.b16 %v7883
    %v8760 = vunpack.c.l.b16 %v7884
    %v8761 = vunpack.c.l.b16 %v7885
    %v8762 = vunpack.c.l.b16 %v7886
    %v8763 = vpack.c.b16 %v8748, %v8747
    %v8764 = vpack.c.b16 %v8750, %v8749
    %v8765 = vpack.c.b16 %v8752, %v8751
    %v8766 = vpack.c.b16 %v8754, %v8753
    %v8767 = vpack.c.b16 %v8756, %v8755
    %v8768 = vpack.c.b16 %v8758, %v8757
    %v8769 = vpack.c.b16 %v8760, %v8759
    %v8770 = vpack.c.b16 %v8762, %v8761
    %8779 = vmatpush.bf16.msra.mxu0 %v8770
    %8780 = vmatpush.bf16.msra.mxu0 %v8769
    %8781 = vmatpush.bf16.msra.mxu0 %v8768
    %8782 = vmatpush.bf16.msra.mxu0 %v8767
    %8783 = vmatpush.bf16.msra.mxu0 %v8766
    %8784 = vmatpush.bf16.msra.mxu0 %v8765
    %8785 = vmatpush.bf16.msra.mxu0 %v8764
    %8786 = vmatpush.bf16.msra.mxu0 %v8763
    %8787 = vmatmul.bf16.gmra.mxu0 %v7870
    %v8788 = vpop.f32.mrf.mxu0
    %v8789 = vadd.f32 %v209, %v8788
    %v8790 = vpop.f32.mrf.mxu0
    %8791 = vdwg.mxu0
    %v8792 = vpack.c.bf16 %v8730, %v8730
    %v8793 = vld [vmem:[#allocation16] sm:$0xf]
    %v8794 = vld [vmem:[#allocation16 + $0x4] sm:$0xf]
    %v8795 = vld [vmem:[#allocation16 + $0x8] sm:$0xf]
    %v8796 = vld [vmem:[#allocation16 + $0xc] sm:$0xf]
    %v8797 = vld [vmem:[#allocation16 + $0x10] sm:$0xf]
    %v8798 = vld [vmem:[#allocation16 + $0x14] sm:$0xf]
    %v8799 = vld [vmem:[#allocation16 + $0x18] sm:$0xf]
    %v8800 = vld [vmem:[#allocation16 + $0x1c] sm:$0xf]
    %v8801 = vld [vmem:[#allocation16 + $0x20] sm:$0xf]
    %v8802 = vld [vmem:[#allocation16 + $0x24] sm:$0xf]
    %v8803 = vld [vmem:[#allocation16 + $0x28] sm:$0xf]
    %v8804 = vld [vmem:[#allocation16 + $0x2c] sm:$0xf]
    %v8805 = vld [vmem:[#allocation16 + $0x30] sm:$0xf]
    %v8806 = vld [vmem:[#allocation16 + $0x34] sm:$0xf]
    %v8807 = vld [vmem:[#allocation16 + $0x38] sm:$0xf]
    %v8808 = vld [vmem:[#allocation16 + $0x3c] sm:$0xf]
    %v8825 = vunpack.c.l.b16 %v8793
    %v8826 = vunpack.c.l.b16 %v8794
    %v8827 = vunpack.c.l.b16 %v8795
    %v8828 = vunpack.c.l.b16 %v8796
    %v8829 = vunpack.c.l.b16 %v8797
    %v8830 = vunpack.c.l.b16 %v8798
    %v8831 = vunpack.c.l.b16 %v8799
    %v8832 = vunpack.c.l.b16 %v8800
    %v8833 = vunpack.c.l.b16 %v8801
    %v8834 = vunpack.c.l.b16 %v8802
    %v8835 = vunpack.c.l.b16 %v8803
    %v8836 = vunpack.c.l.b16 %v8804
    %v8837 = vunpack.c.l.b16 %v8805
    %v8838 = vunpack.c.l.b16 %v8806
    %v8839 = vunpack.c.l.b16 %v8807
    %v8840 = vunpack.c.l.b16 %v8808
    %v8841 = vpack.c.b16 %v8826, %v8825
    %v8842 = vpack.c.b16 %v8828, %v8827
    %v8843 = vpack.c.b16 %v8830, %v8829
    %v8844 = vpack.c.b16 %v8832, %v8831
    %v8845 = vpack.c.b16 %v8834, %v8833
    %v8846 = vpack.c.b16 %v8836, %v8835
    %v8847 = vpack.c.b16 %v8838, %v8837
    %v8848 = vpack.c.b16 %v8840, %v8839
    %8857 = vmatpush.bf16.msra.mxu0 %v8848
    %8858 = vmatpush.bf16.msra.mxu0 %v8847
    %8859 = vmatpush.bf16.msra.mxu0 %v8846
    %8860 = vmatpush.bf16.msra.mxu0 %v8845
    %8861 = vmatpush.bf16.msra.mxu0 %v8844
    %8862 = vmatpush.bf16.msra.mxu0 %v8843
    %8863 = vmatpush.bf16.msra.mxu0 %v8842
    %8864 = vmatpush.bf16.msra.mxu0 %v8841
    %8865 = vmatmul.bf16.gmra.mxu0 %v8792
    %v8866 = vpop.f32.mrf.mxu0
    %v8867 = vadd.f32 0.0, %v8866
    %v8868 = vpop.f32.mrf.mxu0
    %8869 = vdwg.mxu0
    %v8870 = vadd.f32 %v8789, %v8867
    %s8871 = scalar_lea.vmem [#allocation19], 40
    %8872 = vst [vmem:[%s8871] sm:$0xff] %v8870
    %v8873 = vld [vmem:[#allocation11] sm:$0xff]
    %v8874 = vld [vmem:[#allocation11 + $0x8] sm:$0xff]
    %v8875 = vld [vmem:[#allocation11 + $0x10] sm:$0xff]
    %v8876 = vld [vmem:[#allocation11 + $0x18] sm:$0xff]
    %v8877 = vld [vmem:[#allocation11 + $0x20] sm:$0xff]
    %v8878 = vld [vmem:[#allocation11 + $0x28] sm:$0xff]
    %v8879 = vld [vmem:[#allocation11 + $0x30] sm:$0xff]
    %v8880 = vld [vmem:[#allocation11 + $0x38] sm:$0xff]
    %v8881 = vld [vmem:[#allocation11 + $0x40] sm:$0xff]
    %v8882 = vld [vmem:[#allocation11 + $0x48] sm:$0xff]
    %v8883 = vld [vmem:[#allocation11 + $0x50] sm:$0xff]
    %v8884 = vld [vmem:[#allocation11 + $0x58] sm:$0xff]
    %v8885 = vld [vmem:[#allocation11 + $0x60] sm:$0xff]
    %v8886 = vld [vmem:[#allocation11 + $0x68] sm:$0xff]
    %v8887 = vld [vmem:[#allocation11 + $0x70] sm:$0xff]
    %v8888 = vld [vmem:[#allocation11 + $0x78] sm:$0xff]
    %v8889 = vld [vmem:[#allocation11 + $0x80] sm:$0xff]
    %v8890 = vld [vmem:[#allocation11 + $0x88] sm:$0xff]
    %v8891 = vld [vmem:[#allocation11 + $0x90] sm:$0xff]
    %v8892 = vld [vmem:[#allocation11 + $0x98] sm:$0xff]
    %v8893 = vld [vmem:[#allocation11 + $0xa0] sm:$0xff]
    %v8894 = vld [vmem:[#allocation11 + $0xa8] sm:$0xff]
    %v8895 = vld [vmem:[#allocation11 + $0xb0] sm:$0xff]
    %v8896 = vld [vmem:[#allocation11 + $0xb8] sm:$0xff]
    %v8897 = vld [vmem:[#allocation11 + $0xc0] sm:$0xff]
    %v8898 = vld [vmem:[#allocation11 + $0xc8] sm:$0xff]
    %v8899 = vld [vmem:[#allocation11 + $0xd0] sm:$0xff]
    %v8900 = vld [vmem:[#allocation11 + $0xd8] sm:$0xff]
    %v8901 = vld [vmem:[#allocation11 + $0xe0] sm:$0xff]
    %v8902 = vld [vmem:[#allocation11 + $0xe8] sm:$0xff]
    %v8903 = vld [vmem:[#allocation11 + $0xf0] sm:$0xff]
    %v8904 = vld [vmem:[#allocation11 + $0xf8] sm:$0xff]
    %v8937 = vunpack.c.l.b16 %v8873
    %v8938 = vunpack.c.h.b16 %v8873
    %v8939 = vunpack.c.l.b16 %v8874
    %v8940 = vunpack.c.h.b16 %v8874
    %v8941 = vunpack.c.l.b16 %v8875
    %v8942 = vunpack.c.h.b16 %v8875
    %v8943 = vunpack.c.l.b16 %v8876
    %v8944 = vunpack.c.h.b16 %v8876
    %v8945 = vunpack.c.l.b16 %v8877
    %v8946 = vunpack.c.h.b16 %v8877
    %v8947 = vunpack.c.l.b16 %v8878
    %v8948 = vunpack.c.h.b16 %v8878
    %v8949 = vunpack.c.l.b16 %v8879
    %v8950 = vunpack.c.h.b16 %v8879
    %v8951 = vunpack.c.l.b16 %v8880
    %v8952 = vunpack.c.h.b16 %v8880
    %v8953 = vunpack.c.l.b16 %v8881
    %v8954 = vunpack.c.h.b16 %v8881
    %v8955 = vunpack.c.l.b16 %v8882
    %v8956 = vunpack.c.h.b16 %v8882
    %v8957 = vunpack.c.l.b16 %v8883
    %v8958 = vunpack.c.h.b16 %v8883
    %v8959 = vunpack.c.l.b16 %v8884
    %v8960 = vunpack.c.h.b16 %v8884
    %v8961 = vunpack.c.l.b16 %v8885
    %v8962 = vunpack.c.h.b16 %v8885
    %v8963 = vunpack.c.l.b16 %v8886
    %v8964 = vunpack.c.h.b16 %v8886
    %v8965 = vunpack.c.l.b16 %v8887
    %v8966 = vunpack.c.h.b16 %v8887
    %v8967 = vunpack.c.l.b16 %v8888
    %v8968 = vunpack.c.h.b16 %v8888
    %v8969 = vunpack.c.l.b16 %v8889
    %v8970 = vunpack.c.h.b16 %v8889
    %v8971 = vunpack.c.l.b16 %v8890
    %v8972 = vunpack.c.h.b16 %v8890
    %v8973 = vunpack.c.l.b16 %v8891
    %v8974 = vunpack.c.h.b16 %v8891
    %v8975 = vunpack.c.l.b16 %v8892
    %v8976 = vunpack.c.h.b16 %v8892
    %v8977 = vunpack.c.l.b16 %v8893
    %v8978 = vunpack.c.h.b16 %v8893
    %v8979 = vunpack.c.l.b16 %v8894
    %v8980 = vunpack.c.h.b16 %v8894
    %v8981 = vunpack.c.l.b16 %v8895
    %v8982 = vunpack.c.h.b16 %v8895
    %v8983 = vunpack.c.l.b16 %v8896
    %v8984 = vunpack.c.h.b16 %v8896
    %v8985 = vunpack.c.l.b16 %v8897
    %v8986 = vunpack.c.h.b16 %v8897
    %v8987 = vunpack.c.l.b16 %v8898
    %v8988 = vunpack.c.h.b16 %v8898
    %v8989 = vunpack.c.l.b16 %v8899
    %v8990 = vunpack.c.h.b16 %v8899
    %v8991 = vunpack.c.l.b16 %v8900
    %v8992 = vunpack.c.h.b16 %v8900
    %v8993 = vunpack.c.l.b16 %v8901
    %v8994 = vunpack.c.h.b16 %v8901
    %v8995 = vunpack.c.l.b16 %v8902
    %v8996 = vunpack.c.h.b16 %v8902
    %v8997 = vunpack.c.l.b16 %v8903
    %v8998 = vunpack.c.h.b16 %v8903
    %v8999 = vunpack.c.l.b16 %v8904
    %v9000 = vunpack.c.h.b16 %v8904
    %v9001 = vpack.c.b16 %v8941, %v8937
    %v9002 = vpack.c.b16 %v8942, %v8938
    %v9003 = vpack.c.b16 %v8943, %v8939
    %v9004 = vpack.c.b16 %v8944, %v8940
    %v9005 = vpack.c.b16 %v8949, %v8945
    %v9006 = vpack.c.b16 %v8950, %v8946
    %v9007 = vpack.c.b16 %v8951, %v8947
    %v9008 = vpack.c.b16 %v8952, %v8948
    %v9009 = vpack.c.b16 %v8957, %v8953
    %v9010 = vpack.c.b16 %v8958, %v8954
    %v9011 = vpack.c.b16 %v8959, %v8955
    %v9012 = vpack.c.b16 %v8960, %v8956
    %v9013 = vpack.c.b16 %v8965, %v8961
    %v9014 = vpack.c.b16 %v8966, %v8962
    %v9015 = vpack.c.b16 %v8967, %v8963
    %v9016 = vpack.c.b16 %v8968, %v8964
    %v9017 = vpack.c.b16 %v8973, %v8969
    %v9018 = vpack.c.b16 %v8974, %v8970
    %v9019 = vpack.c.b16 %v8975, %v8971
    %v9020 = vpack.c.b16 %v8976, %v8972
    %v9021 = vpack.c.b16 %v8981, %v8977
    %v9022 = vpack.c.b16 %v8982, %v8978
    %v9023 = vpack.c.b16 %v8983, %v8979
    %v9024 = vpack.c.b16 %v8984, %v8980
    %v9025 = vpack.c.b16 %v8989, %v8985
    %v9026 = vpack.c.b16 %v8990, %v8986
    %v9027 = vpack.c.b16 %v8991, %v8987
    %v9028 = vpack.c.b16 %v8992, %v8988
    %v9029 = vpack.c.b16 %v8997, %v8993
    %v9030 = vpack.c.b16 %v8998, %v8994
    %v9031 = vpack.c.b16 %v8999, %v8995
    %v9032 = vpack.c.b16 %v9000, %v8996
    %9065 = vmatpush.bf16.msra.mxu0 %v9029
    %9066 = vmatpush.bf16.msra.mxu0 %v9025
    %9067 = vmatpush.bf16.msra.mxu0 %v9021
    %9068 = vmatpush.bf16.msra.mxu0 %v9017
    %9069 = vmatpush.bf16.msra.mxu0 %v9013
    %9070 = vmatpush.bf16.msra.mxu0 %v9009
    %9071 = vmatpush.bf16.msra.mxu0 %v9005
    %9072 = vmatpush.bf16.msra.mxu0 %v9001
    %9073 = vmatmul.bf16.gmra.mxu0 %v8419
    %v9074 = vpop.f32.mrf.mxu0
    %v9075 = vadd.f32 0.0, %v9074
    %v9076 = vpop.f32.mrf.mxu0
    %9077 = vdwg.mxu0
    %9078 = vmatpush.bf16.msra.mxu0 %v9030
    %9079 = vmatpush.bf16.msra.mxu0 %v9026
    %9080 = vmatpush.bf16.msra.mxu0 %v9022
    %9081 = vmatpush.bf16.msra.mxu0 %v9018
    %9082 = vmatpush.bf16.msra.mxu0 %v9014
    %9083 = vmatpush.bf16.msra.mxu0 %v9010
    %9084 = vmatpush.bf16.msra.mxu0 %v9006
    %9085 = vmatpush.bf16.msra.mxu0 %v9002
    %9086 = vmatmul.bf16.gmra.mxu0 %v8419
    %v9087 = vpop.f32.mrf.mxu0
    %v9088 = vadd.f32 0.0, %v9087
    %v9089 = vpop.f32.mrf.mxu0
    %9090 = vdwg.mxu0
    %9091 = vmatpush.bf16.msra.mxu0 %v9031
    %9092 = vmatpush.bf16.msra.mxu0 %v9027
    %9093 = vmatpush.bf16.msra.mxu0 %v9023
    %9094 = vmatpush.bf16.msra.mxu0 %v9019
    %9095 = vmatpush.bf16.msra.mxu0 %v9015
    %9096 = vmatpush.bf16.msra.mxu0 %v9011
    %9097 = vmatpush.bf16.msra.mxu0 %v9007
    %9098 = vmatpush.bf16.msra.mxu0 %v9003
    %9099 = vmatmul.bf16.gmra.mxu0 %v8419
    %v9100 = vpop.f32.mrf.mxu0
    %v9101 = vadd.f32 0.0, %v9100
    %v9102 = vpop.f32.mrf.mxu0
    %9103 = vdwg.mxu0
    %9104 = vmatpush.bf16.msra.mxu0 %v9032
    %9105 = vmatpush.bf16.msra.mxu0 %v9028
    %9106 = vmatpush.bf16.msra.mxu0 %v9024
    %9107 = vmatpush.bf16.msra.mxu0 %v9020
    %9108 = vmatpush.bf16.msra.mxu0 %v9016
    %9109 = vmatpush.bf16.msra.mxu0 %v9012
    %9110 = vmatpush.bf16.msra.mxu0 %v9008
    %9111 = vmatpush.bf16.msra.mxu0 %v9004
    %9112 = vmatmul.bf16.gmra.mxu0 %v8419
    %v9113 = vpop.f32.mrf.mxu0
    %v9114 = vadd.f32 0.0, %v9113
    %v9115 = vpop.f32.mrf.mxu0
    %9116 = vdwg.mxu0
    %v9117 = vld [vmem:[#allocation14] sm:$0xff]
    %v9118 = vld [vmem:[#allocation14 + $0x8] sm:$0xff]
    %v9119 = vld [vmem:[#allocation14 + $0x10] sm:$0xff]
    %v9120 = vld [vmem:[#allocation14 + $0x18] sm:$0xff]
    %v9121 = vld [vmem:[#allocation14 + $0x20] sm:$0xff]
    %v9122 = vld [vmem:[#allocation14 + $0x28] sm:$0xff]
    %v9123 = vld [vmem:[#allocation14 + $0x30] sm:$0xff]
    %v9124 = vld [vmem:[#allocation14 + $0x38] sm:$0xff]
    %v9125 = vld [vmem:[#allocation14 + $0x40] sm:$0xff]
    %v9126 = vld [vmem:[#allocation14 + $0x48] sm:$0xff]
    %v9127 = vld [vmem:[#allocation14 + $0x50] sm:$0xff]
    %v9128 = vld [vmem:[#allocation14 + $0x58] sm:$0xff]
    %v9129 = vld [vmem:[#allocation14 + $0x60] sm:$0xff]
    %v9130 = vld [vmem:[#allocation14 + $0x68] sm:$0xff]
    %v9131 = vld [vmem:[#allocation14 + $0x70] sm:$0xff]
    %v9132 = vld [vmem:[#allocation14 + $0x78] sm:$0xff]
    %v9133 = vld [vmem:[#allocation14 + $0x80] sm:$0xff]
    %v9134 = vld [vmem:[#allocation14 + $0x88] sm:$0xff]
    %v9135 = vld [vmem:[#allocation14 + $0x90] sm:$0xff]
    %v9136 = vld [vmem:[#allocation14 + $0x98] sm:$0xff]
    %v9137 = vld [vmem:[#allocation14 + $0xa0] sm:$0xff]
    %v9138 = vld [vmem:[#allocation14 + $0xa8] sm:$0xff]
    %v9139 = vld [vmem:[#allocation14 + $0xb0] sm:$0xff]
    %v9140 = vld [vmem:[#allocation14 + $0xb8] sm:$0xff]
    %v9141 = vld [vmem:[#allocation14 + $0xc0] sm:$0xff]
    %v9142 = vld [vmem:[#allocation14 + $0xc8] sm:$0xff]
    %v9143 = vld [vmem:[#allocation14 + $0xd0] sm:$0xff]
    %v9144 = vld [vmem:[#allocation14 + $0xd8] sm:$0xff]
    %v9145 = vld [vmem:[#allocation14 + $0xe0] sm:$0xff]
    %v9146 = vld [vmem:[#allocation14 + $0xe8] sm:$0xff]
    %v9147 = vld [vmem:[#allocation14 + $0xf0] sm:$0xff]
    %v9148 = vld [vmem:[#allocation14 + $0xf8] sm:$0xff]
    %v9149 = vld [vmem:[#allocation5] sm:$0xf]
    %v9150 = vld [vmem:[#allocation5 + $0x4] sm:$0xf]
    %v9151 = vld [vmem:[#allocation5 + $0x8] sm:$0xf]
    %v9152 = vld [vmem:[#allocation5 + $0xc] sm:$0xf]
    %v9153 = vld [vmem:[#allocation5 + $0x10] sm:$0xf]
    %v9154 = vld [vmem:[#allocation5 + $0x14] sm:$0xf]
    %v9155 = vld [vmem:[#allocation5 + $0x18] sm:$0xf]
    %v9156 = vld [vmem:[#allocation5 + $0x1c] sm:$0xf]
    %v9157 = vld [vmem:[#allocation5 + $0x20] sm:$0xf]
    %v9158 = vld [vmem:[#allocation5 + $0x24] sm:$0xf]
    %v9159 = vld [vmem:[#allocation5 + $0x28] sm:$0xf]
    %v9160 = vld [vmem:[#allocation5 + $0x2c] sm:$0xf]
    %v9161 = vld [vmem:[#allocation5 + $0x30] sm:$0xf]
    %v9162 = vld [vmem:[#allocation5 + $0x34] sm:$0xf]
    %v9163 = vld [vmem:[#allocation5 + $0x38] sm:$0xf]
    %v9164 = vld [vmem:[#allocation5 + $0x3c] sm:$0xf]
    %v9165 = vld [vmem:[#allocation8] sm:$0xff]
    %v9182 = vunpack.c.l.b16 %v9149
    %v9183 = vunpack.c.l.b16 %v9150
    %v9184 = vunpack.c.l.b16 %v9151
    %v9185 = vunpack.c.l.b16 %v9152
    %v9186 = vunpack.c.l.b16 %v9153
    %v9187 = vunpack.c.l.b16 %v9154
    %v9188 = vunpack.c.l.b16 %v9155
    %v9189 = vunpack.c.l.b16 %v9156
    %v9190 = vunpack.c.l.b16 %v9157
    %v9191 = vunpack.c.l.b16 %v9158
    %v9192 = vunpack.c.l.b16 %v9159
    %v9193 = vunpack.c.l.b16 %v9160
    %v9194 = vunpack.c.l.b16 %v9161
    %v9195 = vunpack.c.l.b16 %v9162
    %v9196 = vunpack.c.l.b16 %v9163
    %v9197 = vunpack.c.l.b16 %v9164
    %v9198 = vpack.c.b16 %v9183, %v9182
    %v9199 = vpack.c.b16 %v9185, %v9184
    %v9200 = vpack.c.b16 %v9187, %v9186
    %v9201 = vpack.c.b16 %v9189, %v9188
    %v9202 = vpack.c.b16 %v9191, %v9190
    %v9203 = vpack.c.b16 %v9193, %v9192
    %v9204 = vpack.c.b16 %v9195, %v9194
    %v9205 = vpack.c.b16 %v9197, %v9196
    %9214 = vmatpush.bf16.msra.mxu0 %v9205
    %9215 = vmatpush.bf16.msra.mxu0 %v9204
    %9216 = vmatpush.bf16.msra.mxu0 %v9203
    %9217 = vmatpush.bf16.msra.mxu0 %v9202
    %9218 = vmatpush.bf16.msra.mxu0 %v9201
    %9219 = vmatpush.bf16.msra.mxu0 %v9200
    %9220 = vmatpush.bf16.msra.mxu0 %v9199
    %9221 = vmatpush.bf16.msra.mxu0 %v9198
    %9222 = vmatmul.bf16.gmra.mxu0 %v8792
    %v9223 = vpop.f32.mrf.mxu0
    %v9224 = vadd.f32 %v9165, %v9223
    %v9225 = vpop.f32.mrf.mxu0
    %9226 = vdwg.mxu0
    %9227 = vmax.xlane.f32.xlu0 %v9224
    %v9228 = vpop.xlane.xlu0 %9227
    %v9229 = vsub.f32 %v9224, %v9228
    %v9230 = vmul.f32 %v9229, 1.442695
    %v9231 = vpow.pop %v9230
    %9232 = vadd.xlane.f32.xlu0 %v9231
    %v9233 = vpop.xlane.xlu0 %9232
    %v9234 = vrcp.pop %v9233
    %v9235 = vmul.f32 %v9231, %v9234
    %v9236 = vpack.c.bf16 %v9235, %v9235
    %v9237 = vld [vmem:[#allocation7] sm:$0xf]
    %v9238 = vld [vmem:[#allocation7 + $0x4] sm:$0xf]
    %v9239 = vld [vmem:[#allocation7 + $0x8] sm:$0xf]
    %v9240 = vld [vmem:[#allocation7 + $0xc] sm:$0xf]
    %v9241 = vld [vmem:[#allocation7 + $0x10] sm:$0xf]
    %v9242 = vld [vmem:[#allocation7 + $0x14] sm:$0xf]
    %v9243 = vld [vmem:[#allocation7 + $0x18] sm:$0xf]
    %v9244 = vld [vmem:[#allocation7 + $0x1c] sm:$0xf]
    %v9245 = vld [vmem:[#allocation7 + $0x20] sm:$0xf]
    %v9246 = vld [vmem:[#allocation7 + $0x24] sm:$0xf]
    %v9247 = vld [vmem:[#allocation7 + $0x28] sm:$0xf]
    %v9248 = vld [vmem:[#allocation7 + $0x2c] sm:$0xf]
    %v9249 = vld [vmem:[#allocation7 + $0x30] sm:$0xf]
    %v9250 = vld [vmem:[#allocation7 + $0x34] sm:$0xf]
    %v9251 = vld [vmem:[#allocation7 + $0x38] sm:$0xf]
    %v9252 = vld [vmem:[#allocation7 + $0x3c] sm:$0xf]
    %v9269 = vunpack.c.l.b16 %v9237
    %v9270 = vunpack.c.l.b16 %v9238
    %v9271 = vunpack.c.l.b16 %v9239
    %v9272 = vunpack.c.l.b16 %v9240
    %v9273 = vunpack.c.l.b16 %v9241
    %v9274 = vunpack.c.l.b16 %v9242
    %v9275 = vunpack.c.l.b16 %v9243
    %v9276 = vunpack.c.l.b16 %v9244
    %v9277 = vunpack.c.l.b16 %v9245
    %v9278 = vunpack.c.l.b16 %v9246
    %v9279 = vunpack.c.l.b16 %v9247
    %v9280 = vunpack.c.l.b16 %v9248
    %v9281 = vunpack.c.l.b16 %v9249
    %v9282 = vunpack.c.l.b16 %v9250
    %v9283 = vunpack.c.l.b16 %v9251
    %v9284 = vunpack.c.l.b16 %v9252
    %v9285 = vpack.c.b16 %v9270, %v9269
    %v9286 = vpack.c.b16 %v9272, %v9271
    %v9287 = vpack.c.b16 %v9274, %v9273
    %v9288 = vpack.c.b16 %v9276, %v9275
    %v9289 = vpack.c.b16 %v9278, %v9277
    %v9290 = vpack.c.b16 %v9280, %v9279
    %v9291 = vpack.c.b16 %v9282, %v9281
    %v9292 = vpack.c.b16 %v9284, %v9283
    %9301 = vmatpush.bf16.msra.mxu0 %v9292
    %9302 = vmatpush.bf16.msra.mxu0 %v9291
    %9303 = vmatpush.bf16.msra.mxu0 %v9290
    %9304 = vmatpush.bf16.msra.mxu0 %v9289
    %9305 = vmatpush.bf16.msra.mxu0 %v9288
    %9306 = vmatpush.bf16.msra.mxu0 %v9287
    %9307 = vmatpush.bf16.msra.mxu0 %v9286
    %9308 = vmatpush.bf16.msra.mxu0 %v9285
    %9309 = vmatmul.bf16.gmra.mxu0 %v9236
    %v9310 = vpop.f32.mrf.mxu0
    %v9311 = vadd.f32 0.0, %v9310
    %v9312 = vpop.f32.mrf.mxu0
    %9313 = vdwg.mxu0
    %v9314 = vpack.c.bf16 %v9311, %v9311
    %v9315 = vld [vmem:[#allocation17] sm:$0xf]
    %v9316 = vld [vmem:[#allocation17 + $0x4] sm:$0xf]
    %v9317 = vld [vmem:[#allocation17 + $0x8] sm:$0xf]
    %v9318 = vld [vmem:[#allocation17 + $0xc] sm:$0xf]
    %v9319 = vld [vmem:[#allocation17 + $0x10] sm:$0xf]
    %v9320 = vld [vmem:[#allocation17 + $0x14] sm:$0xf]
    %v9321 = vld [vmem:[#allocation17 + $0x18] sm:$0xf]
    %v9322 = vld [vmem:[#allocation17 + $0x1c] sm:$0xf]
    %v9323 = vld [vmem:[#allocation17 + $0x20] sm:$0xf]
    %v9324 = vld [vmem:[#allocation17 + $0x24] sm:$0xf]
    %v9325 = vld [vmem:[#allocation17 + $0x28] sm:$0xf]
    %v9326 = vld [vmem:[#allocation17 + $0x2c] sm:$0xf]
    %v9327 = vld [vmem:[#allocation17 + $0x30] sm:$0xf]
    %v9328 = vld [vmem:[#allocation17 + $0x34] sm:$0xf]
    %v9329 = vld [vmem:[#allocation17 + $0x38] sm:$0xf]
    %v9330 = vld [vmem:[#allocation17 + $0x3c] sm:$0xf]
    %s9331 = scalar_lea.vmem [#allocation2], 192
    %v9332 = vld [vmem:[%s9331] sm:$0xff]
    %v9333 = vld [vmem:[%s9331 + $0x8] sm:$0xff]
    %v9334 = vld [vmem:[%s9331 + $0x10] sm:$0xff]
    %v9335 = vld [vmem:[%s9331 + $0x18] sm:$0xff]
    %v9336 = vadd.f32 %v9332, %v9075
    %v9337 = vadd.f32 %v9333, %v9088
    %v9338 = vadd.f32 %v9334, %v9101
    %v9339 = vadd.f32 %v9335, %v9114
    %v9340 = vld [vmem:[#allocation10] sm:$0xff]
    %v9341 = vld [vmem:[#allocation10 + $0x8] sm:$0xff]
    %v9342 = vld [vmem:[#allocation10 + $0x10] sm:$0xff]
    %v9343 = vld [vmem:[#allocation10 + $0x18] sm:$0xff]
    %v9344 = vld [vmem:[#allocation10 + $0x20] sm:$0xff]
    %v9345 = vld [vmem:[#allocation10 + $0x28] sm:$0xff]
    %v9346 = vld [vmem:[#allocation10 + $0x30] sm:$0xff]
    %v9347 = vld [vmem:[#allocation10 + $0x38] sm:$0xff]
    %v9348 = vld [vmem:[#allocation10 + $0x40] sm:$0xff]
    %v9349 = vld [vmem:[#allocation10 + $0x48] sm:$0xff]
    %v9350 = vld [vmem:[#allocation10 + $0x50] sm:$0xff]
    %v9351 = vld [vmem:[#allocation10 + $0x58] sm:$0xff]
    %v9352 = vld [vmem:[#allocation10 + $0x60] sm:$0xff]
    %v9353 = vld [vmem:[#allocation10 + $0x68] sm:$0xff]
    %v9354 = vld [vmem:[#allocation10 + $0x70] sm:$0xff]
    %v9355 = vld [vmem:[#allocation10 + $0x78] sm:$0xff]
    %v9356 = vld [vmem:[#allocation10 + $0x80] sm:$0xff]
    %v9357 = vld [vmem:[#allocation10 + $0x88] sm:$0xff]
    %v9358 = vld [vmem:[#allocation10 + $0x90] sm:$0xff]
    %v9359 = vld [vmem:[#allocation10 + $0x98] sm:$0xff]
    %v9360 = vld [vmem:[#allocation10 + $0xa0] sm:$0xff]
    %v9361 = vld [vmem:[#allocation10 + $0xa8] sm:$0xff]
    %v9362 = vld [vmem:[#allocation10 + $0xb0] sm:$0xff]
    %v9363 = vld [vmem:[#allocation10 + $0xb8] sm:$0xff]
    %v9364 = vld [vmem:[#allocation10 + $0xc0] sm:$0xff]
    %v9365 = vld [vmem:[#allocation10 + $0xc8] sm:$0xff]
    %v9366 = vld [vmem:[#allocation10 + $0xd0] sm:$0xff]
    %v9367 = vld [vmem:[#allocation10 + $0xd8] sm:$0xff]
    %v9368 = vld [vmem:[#allocation10 + $0xe0] sm:$0xff]
    %v9369 = vld [vmem:[#allocation10 + $0xe8] sm:$0xff]
    %v9370 = vld [vmem:[#allocation10 + $0xf0] sm:$0xff]
    %v9371 = vld [vmem:[#allocation10 + $0xf8] sm:$0xff]
    %v9404 = vunpack.c.l.b16 %v9340
    %v9405 = vunpack.c.h.b16 %v9340
    %v9406 = vunpack.c.l.b16 %v9341
    %v9407 = vunpack.c.h.b16 %v9341
    %v9408 = vunpack.c.l.b16 %v9342
    %v9409 = vunpack.c.h.b16 %v9342
    %v9410 = vunpack.c.l.b16 %v9343
    %v9411 = vunpack.c.h.b16 %v9343
    %v9412 = vunpack.c.l.b16 %v9344
    %v9413 = vunpack.c.h.b16 %v9344
    %v9414 = vunpack.c.l.b16 %v9345
    %v9415 = vunpack.c.h.b16 %v9345
    %v9416 = vunpack.c.l.b16 %v9346
    %v9417 = vunpack.c.h.b16 %v9346
    %v9418 = vunpack.c.l.b16 %v9347
    %v9419 = vunpack.c.h.b16 %v9347
    %v9420 = vunpack.c.l.b16 %v9348
    %v9421 = vunpack.c.h.b16 %v9348
    %v9422 = vunpack.c.l.b16 %v9349
    %v9423 = vunpack.c.h.b16 %v9349
    %v9424 = vunpack.c.l.b16 %v9350
    %v9425 = vunpack.c.h.b16 %v9350
    %v9426 = vunpack.c.l.b16 %v9351
    %v9427 = vunpack.c.h.b16 %v9351
    %v9428 = vunpack.c.l.b16 %v9352
    %v9429 = vunpack.c.h.b16 %v9352
    %v9430 = vunpack.c.l.b16 %v9353
    %v9431 = vunpack.c.h.b16 %v9353
    %v9432 = vunpack.c.l.b16 %v9354
    %v9433 = vunpack.c.h.b16 %v9354
    %v9434 = vunpack.c.l.b16 %v9355
    %v9435 = vunpack.c.h.b16 %v9355
    %v9436 = vunpack.c.l.b16 %v9356
    %v9437 = vunpack.c.h.b16 %v9356
    %v9438 = vunpack.c.l.b16 %v9357
    %v9439 = vunpack.c.h.b16 %v9357
    %v9440 = vunpack.c.l.b16 %v9358
    %v9441 = vunpack.c.h.b16 %v9358
    %v9442 = vunpack.c.l.b16 %v9359
    %v9443 = vunpack.c.h.b16 %v9359
    %v9444 = vunpack.c.l.b16 %v9360
    %v9445 = vunpack.c.h.b16 %v9360
    %v9446 = vunpack.c.l.b16 %v9361
    %v9447 = vunpack.c.h.b16 %v9361
    %v9448 = vunpack.c.l.b16 %v9362
    %v9449 = vunpack.c.h.b16 %v9362
    %v9450 = vunpack.c.l.b16 %v9363
    %v9451 = vunpack.c.h.b16 %v9363
    %v9452 = vunpack.c.l.b16 %v9364
    %v9453 = vunpack.c.h.b16 %v9364
    %v9454 = vunpack.c.l.b16 %v9365
    %v9455 = vunpack.c.h.b16 %v9365
    %v9456 = vunpack.c.l.b16 %v9366
    %v9457 = vunpack.c.h.b16 %v9366
    %v9458 = vunpack.c.l.b16 %v9367
    %v9459 = vunpack.c.h.b16 %v9367
    %v9460 = vunpack.c.l.b16 %v9368
    %v9461 = vunpack.c.h.b16 %v9368
    %v9462 = vunpack.c.l.b16 %v9369
    %v9463 = vunpack.c.h.b16 %v9369
    %v9464 = vunpack.c.l.b16 %v9370
    %v9465 = vunpack.c.h.b16 %v9370
    %v9466 = vunpack.c.l.b16 %v9371
    %v9467 = vunpack.c.h.b16 %v9371
    %v9468 = vpack.c.b16 %v9408, %v9404
    %v9469 = vpack.c.b16 %v9409, %v9405
    %v9470 = vpack.c.b16 %v9410, %v9406
    %v9471 = vpack.c.b16 %v9411, %v9407
    %v9472 = vpack.c.b16 %v9416, %v9412
    %v9473 = vpack.c.b16 %v9417, %v9413
    %v9474 = vpack.c.b16 %v9418, %v9414
    %v9475 = vpack.c.b16 %v9419, %v9415
    %v9476 = vpack.c.b16 %v9424, %v9420
    %v9477 = vpack.c.b16 %v9425, %v9421
    %v9478 = vpack.c.b16 %v9426, %v9422
    %v9479 = vpack.c.b16 %v9427, %v9423
    %v9480 = vpack.c.b16 %v9432, %v9428
    %v9481 = vpack.c.b16 %v9433, %v9429
    %v9482 = vpack.c.b16 %v9434, %v9430
    %v9483 = vpack.c.b16 %v9435, %v9431
    %v9484 = vpack.c.b16 %v9440, %v9436
    %v9485 = vpack.c.b16 %v9441, %v9437
    %v9486 = vpack.c.b16 %v9442, %v9438
    %v9487 = vpack.c.b16 %v9443, %v9439
    %v9488 = vpack.c.b16 %v9448, %v9444
    %v9489 = vpack.c.b16 %v9449, %v9445
    %v9490 = vpack.c.b16 %v9450, %v9446
    %v9491 = vpack.c.b16 %v9451, %v9447
    %v9492 = vpack.c.b16 %v9456, %v9452
    %v9493 = vpack.c.b16 %v9457, %v9453
    %v9494 = vpack.c.b16 %v9458, %v9454
    %v9495 = vpack.c.b16 %v9459, %v9455
    %v9496 = vpack.c.b16 %v9464, %v9460
    %v9497 = vpack.c.b16 %v9465, %v9461
    %v9498 = vpack.c.b16 %v9466, %v9462
    %v9499 = vpack.c.b16 %v9467, %v9463
    %9532 = vmatpush.bf16.msra.mxu0 %v9496
    %9533 = vmatpush.bf16.msra.mxu0 %v9492
    %9534 = vmatpush.bf16.msra.mxu0 %v9488
    %9535 = vmatpush.bf16.msra.mxu0 %v9484
    %9536 = vmatpush.bf16.msra.mxu0 %v9480
    %9537 = vmatpush.bf16.msra.mxu0 %v9476
    %9538 = vmatpush.bf16.msra.mxu0 %v9472
    %9539 = vmatpush.bf16.msra.mxu0 %v9468
    %9540 = vmatmul.bf16.gmra.mxu0 %v9314
    %v9541 = vpop.f32.mrf.mxu0
    %v9542 = vadd.f32 0.0, %v9541
    %v9543 = vpop.f32.mrf.mxu0
    %9544 = vdwg.mxu0
    %9545 = vmatpush.bf16.msra.mxu0 %v9497
    %9546 = vmatpush.bf16.msra.mxu0 %v9493
    %9547 = vmatpush.bf16.msra.mxu0 %v9489
    %9548 = vmatpush.bf16.msra.mxu0 %v9485
    %9549 = vmatpush.bf16.msra.mxu0 %v9481
    %9550 = vmatpush.bf16.msra.mxu0 %v9477
    %9551 = vmatpush.bf16.msra.mxu0 %v9473
    %9552 = vmatpush.bf16.msra.mxu0 %v9469
    %9553 = vmatmul.bf16.gmra.mxu0 %v9314
    %v9554 = vpop.f32.mrf.mxu0
    %v9555 = vadd.f32 0.0, %v9554
    %v9556 = vpop.f32.mrf.mxu0
    %9557 = vdwg.mxu0
    %9558 = vmatpush.bf16.msra.mxu0 %v9498
    %9559 = vmatpush.bf16.msra.mxu0 %v9494
    %9560 = vmatpush.bf16.msra.mxu0 %v9490
    %9561 = vmatpush.bf16.msra.mxu0 %v9486
    %9562 = vmatpush.bf16.msra.mxu0 %v9482
    %9563 = vmatpush.bf16.msra.mxu0 %v9478
    %9564 = vmatpush.bf16.msra.mxu0 %v9474
    %9565 = vmatpush.bf16.msra.mxu0 %v9470
    %9566 = vmatmul.bf16.gmra.mxu0 %v9314
    %v9567 = vpop.f32.mrf.mxu0
    %v9568 = vadd.f32 0.0, %v9567
    %v9569 = vpop.f32.mrf.mxu0
    %9570 = vdwg.mxu0
    %9571 = vmatpush.bf16.msra.mxu0 %v9499
    %9572 = vmatpush.bf16.msra.mxu0 %v9495
    %9573 = vmatpush.bf16.msra.mxu0 %v9491
    %9574 = vmatpush.bf16.msra.mxu0 %v9487
    %9575 = vmatpush.bf16.msra.mxu0 %v9483
    %9576 = vmatpush.bf16.msra.mxu0 %v9479
    %9577 = vmatpush.bf16.msra.mxu0 %v9475
    %9578 = vmatpush.bf16.msra.mxu0 %v9471
    %9579 = vmatmul.bf16.gmra.mxu0 %v9314
    %v9580 = vpop.f32.mrf.mxu0
    %v9581 = vadd.f32 0.0, %v9580
    %v9582 = vpop.f32.mrf.mxu0
    %9583 = vdwg.mxu0
    %v9584 = vadd.f32 %v9336, %v9542
    %v9585 = vadd.f32 %v9337, %v9555
    %v9586 = vadd.f32 %v9338, %v9568
    %v9587 = vadd.f32 %v9339, %v9581
    %v9588 = vxor.u32 %v9584, 2147483648
    %v9589 = vxor.u32 %v9585, 2147483648
    %v9590 = vxor.u32 %v9586, 2147483648
    %v9591 = vmul.f32 %v9588, 1.442695
    %v9592 = vpow.pop %v9591
    %v9593 = vmul.f32 %v9589, 1.442695
    %v9594 = vpow.pop %v9593
    %v9595 = vmul.f32 %v9590, 1.442695
    %v9596 = vpow.pop %v9595
    %v9597 = vadd.f32 %v9592, 1.0
    %v9598 = vadd.f32 %v9594, 1.0
    %v9599 = vadd.f32 %v9596, 1.0
    %v9600 = vrcp.pop %v9597
    %v9601 = vmul.f32 %v9597, %v9600
    %v9602 = vsub.f32 1.0, %v9601
    %v9603 = vmul.f32 %v9600, %v9602
    %v9604 = vadd.f32 %v9600, %v9603
    %vm9605 = vweird.f32 %v9597
    %vm9606 = vweird.f32 %v9600
    %vm9607 = vmor %vm9605, %vm9606
    %v9608 = vsel %vm9607, %v9600, %v9604
    %v9609 = vand.u32 2147483647, %v9597
    %vm9610 = vcmp.eq.f32.partialorder %v9609, 8.507059e+37
    %v9611 = vand.u32 %v9597, 2147483648
    %v9612 = vor.u32 1.1754944e-38, %v9611
    %v9613 = vsel %vm9610, %v9612, %v9608
    %v9614 = vmul.f32 1.0, %v9613
    %v9615 = vrcp.pop %v9598
    %v9616 = vmul.f32 %v9598, %v9615
    %v9617 = vsub.f32 1.0, %v9616
    %v9618 = vmul.f32 %v9615, %v9617
    %v9619 = vadd.f32 %v9615, %v9618
    %vm9620 = vweird.f32 %v9598
    %vm9621 = vweird.f32 %v9615
    %vm9622 = vmor %vm9620, %vm9621
    %v9623 = vsel %vm9622, %v9615, %v9619
    %v9624 = vand.u32 2147483647, %v9598
    %vm9625 = vcmp.eq.f32.partialorder %v9624, 8.507059e+37
    %v9626 = vand.u32 %v9598, 2147483648
    %v9627 = vor.u32 1.1754944e-38, %v9626
    %v9628 = vsel %vm9625, %v9627, %v9623
    %v9629 = vmul.f32 1.0, %v9628
    %v9630 = vrcp.pop %v9599
    %v9631 = vmul.f32 %v9599, %v9630
    %v9632 = vsub.f32 1.0, %v9631
    %v9633 = vmul.f32 %v9630, %v9632
    %v9634 = vadd.f32 %v9630, %v9633
    %vm9635 = vweird.f32 %v9599
    %vm9636 = vweird.f32 %v9630
    %vm9637 = vmor %vm9635, %vm9636
    %v9638 = vsel %vm9637, %v9630, %v9634
    %v9639 = vand.u32 2147483647, %v9599
    %vm9640 = vcmp.eq.f32.partialorder %v9639, 8.507059e+37
    %v9641 = vand.u32 %v9599, 2147483648
    %v9642 = vor.u32 1.1754944e-38, %v9641
    %v9643 = vsel %vm9640, %v9642, %v9638
    %v9644 = vmul.f32 1.0, %v9643
    %v9645 = vtanh.pop %v9587
    %v9646 = vmul.f32 %v9629, %v8204
    %v9647 = vmul.f32 %v9614, %v9645
    %v9648 = vadd.f32 %v9646, %v9647
    %v9649 = vtanh.pop %v9648
    %v9650 = vmul.f32 %v9644, %v9649
    %v9683 = vunpack.c.l.b16 %v9117
    %v9684 = vunpack.c.h.b16 %v9117
    %v9685 = vunpack.c.l.b16 %v9118
    %v9686 = vunpack.c.h.b16 %v9118
    %v9687 = vunpack.c.l.b16 %v9119
    %v9688 = vunpack.c.h.b16 %v9119
    %v9689 = vunpack.c.l.b16 %v9120
    %v9690 = vunpack.c.h.b16 %v9120
    %v9691 = vunpack.c.l.b16 %v9121
    %v9692 = vunpack.c.h.b16 %v9121
    %v9693 = vunpack.c.l.b16 %v9122
    %v9694 = vunpack.c.h.b16 %v9122
    %v9695 = vunpack.c.l.b16 %v9123
    %v9696 = vunpack.c.h.b16 %v9123
    %v9697 = vunpack.c.l.b16 %v9124
    %v9698 = vunpack.c.h.b16 %v9124
    %v9699 = vunpack.c.l.b16 %v9125
    %v9700 = vunpack.c.h.b16 %v9125
    %v9701 = vunpack.c.l.b16 %v9126
    %v9702 = vunpack.c.h.b16 %v9126
    %v9703 = vunpack.c.l.b16 %v9127
    %v9704 = vunpack.c.h.b16 %v9127
    %v9705 = vunpack.c.l.b16 %v9128
    %v9706 = vunpack.c.h.b16 %v9128
    %v9707 = vunpack.c.l.b16 %v9129
    %v9708 = vunpack.c.h.b16 %v9129
    %v9709 = vunpack.c.l.b16 %v9130
    %v9710 = vunpack.c.h.b16 %v9130
    %v9711 = vunpack.c.l.b16 %v9131
    %v9712 = vunpack.c.h.b16 %v9131
    %v9713 = vunpack.c.l.b16 %v9132
    %v9714 = vunpack.c.h.b16 %v9132
    %v9715 = vunpack.c.l.b16 %v9133
    %v9716 = vunpack.c.h.b16 %v9133
    %v9717 = vunpack.c.l.b16 %v9134
    %v9718 = vunpack.c.h.b16 %v9134
    %v9719 = vunpack.c.l.b16 %v9135
    %v9720 = vunpack.c.h.b16 %v9135
    %v9721 = vunpack.c.l.b16 %v9136
    %v9722 = vunpack.c.h.b16 %v9136
    %v9723 = vunpack.c.l.b16 %v9137
    %v9724 = vunpack.c.h.b16 %v9137
    %v9725 = vunpack.c.l.b16 %v9138
    %v9726 = vunpack.c.h.b16 %v9138
    %v9727 = vunpack.c.l.b16 %v9139
    %v9728 = vunpack.c.h.b16 %v9139
    %v9729 = vunpack.c.l.b16 %v9140
    %v9730 = vunpack.c.h.b16 %v9140
    %v9731 = vunpack.c.l.b16 %v9141
    %v9732 = vunpack.c.h.b16 %v9141
    %v9733 = vunpack.c.l.b16 %v9142
    %v9734 = vunpack.c.h.b16 %v9142
    %v9735 = vunpack.c.l.b16 %v9143
    %v9736 = vunpack.c.h.b16 %v9143
    %v9737 = vunpack.c.l.b16 %v9144
    %v9738 = vunpack.c.h.b16 %v9144
    %v9739 = vunpack.c.l.b16 %v9145
    %v9740 = vunpack.c.h.b16 %v9145
    %v9741 = vunpack.c.l.b16 %v9146
    %v9742 = vunpack.c.h.b16 %v9146
    %v9743 = vunpack.c.l.b16 %v9147
    %v9744 = vunpack.c.h.b16 %v9147
    %v9745 = vunpack.c.l.b16 %v9148
    %v9746 = vunpack.c.h.b16 %v9148
    %v9747 = vpack.c.b16 %v9687, %v9683
    %v9748 = vpack.c.b16 %v9688, %v9684
    %v9749 = vpack.c.b16 %v9689, %v9685
    %v9750 = vpack.c.b16 %v9690, %v9686
    %v9751 = vpack.c.b16 %v9695, %v9691
    %v9752 = vpack.c.b16 %v9696, %v9692
    %v9753 = vpack.c.b16 %v9697, %v9693
    %v9754 = vpack.c.b16 %v9698, %v9694
    %v9755 = vpack.c.b16 %v9703, %v9699
    %v9756 = vpack.c.b16 %v9704, %v9700
    %v9757 = vpack.c.b16 %v9705, %v9701
    %v9758 = vpack.c.b16 %v9706, %v9702
    %v9759 = vpack.c.b16 %v9711, %v9707
    %v9760 = vpack.c.b16 %v9712, %v9708
    %v9761 = vpack.c.b16 %v9713, %v9709
    %v9762 = vpack.c.b16 %v9714, %v9710
    %v9763 = vpack.c.b16 %v9719, %v9715
    %v9764 = vpack.c.b16 %v9720, %v9716
    %v9765 = vpack.c.b16 %v9721, %v9717
    %v9766 = vpack.c.b16 %v9722, %v9718
    %v9767 = vpack.c.b16 %v9727, %v9723
    %v9768 = vpack.c.b16 %v9728, %v9724
    %v9769 = vpack.c.b16 %v9729, %v9725
    %v9770 = vpack.c.b16 %v9730, %v9726
    %v9771 = vpack.c.b16 %v9735, %v9731
    %v9772 = vpack.c.b16 %v9736, %v9732
    %v9773 = vpack.c.b16 %v9737, %v9733
    %v9774 = vpack.c.b16 %v9738, %v9734
    %v9775 = vpack.c.b16 %v9743, %v9739
    %v9776 = vpack.c.b16 %v9744, %v9740
    %v9777 = vpack.c.b16 %v9745, %v9741
    %v9778 = vpack.c.b16 %v9746, %v9742
    %9811 = vmatpush.bf16.msra.mxu0 %v9775
    %9812 = vmatpush.bf16.msra.mxu0 %v9771
    %9813 = vmatpush.bf16.msra.mxu0 %v9767
    %9814 = vmatpush.bf16.msra.mxu0 %v9763
    %9815 = vmatpush.bf16.msra.mxu0 %v9759
    %9816 = vmatpush.bf16.msra.mxu0 %v9755
    %9817 = vmatpush.bf16.msra.mxu0 %v9751
    %9818 = vmatpush.bf16.msra.mxu0 %v9747
    %9819 = vmatmul.bf16.gmra.mxu0 %v8792
    %v9820 = vpop.f32.mrf.mxu0
    %v9821 = vadd.f32 %v199, %v9820
    %v9822 = vpop.f32.mrf.mxu0
    %9823 = vdwg.mxu0
    %9824 = vmatpush.bf16.msra.mxu0 %v9776
    %9825 = vmatpush.bf16.msra.mxu0 %v9772
    %9826 = vmatpush.bf16.msra.mxu0 %v9768
    %9827 = vmatpush.bf16.msra.mxu0 %v9764
    %9828 = vmatpush.bf16.msra.mxu0 %v9760
    %9829 = vmatpush.bf16.msra.mxu0 %v9756
    %9830 = vmatpush.bf16.msra.mxu0 %v9752
    %9831 = vmatpush.bf16.msra.mxu0 %v9748
    %9832 = vmatmul.bf16.gmra.mxu0 %v8792
    %v9833 = vpop.f32.mrf.mxu0
    %v9834 = vadd.f32 %v200, %v9833
    %v9835 = vpop.f32.mrf.mxu0
    %9836 = vdwg.mxu0
    %9837 = vmatpush.bf16.msra.mxu0 %v9777
    %9838 = vmatpush.bf16.msra.mxu0 %v9773
    %9839 = vmatpush.bf16.msra.mxu0 %v9769
    %9840 = vmatpush.bf16.msra.mxu0 %v9765
    %9841 = vmatpush.bf16.msra.mxu0 %v9761
    %9842 = vmatpush.bf16.msra.mxu0 %v9757
    %9843 = vmatpush.bf16.msra.mxu0 %v9753
    %9844 = vmatpush.bf16.msra.mxu0 %v9749
    %9845 = vmatmul.bf16.gmra.mxu0 %v8792
    %v9846 = vpop.f32.mrf.mxu0
    %v9847 = vadd.f32 %v201, %v9846
    %v9848 = vpop.f32.mrf.mxu0
    %9849 = vdwg.mxu0
    %9850 = vmatpush.bf16.msra.mxu0 %v9778
    %9851 = vmatpush.bf16.msra.mxu0 %v9774
    %9852 = vmatpush.bf16.msra.mxu0 %v9770
    %9853 = vmatpush.bf16.msra.mxu0 %v9766
    %9854 = vmatpush.bf16.msra.mxu0 %v9762
    %9855 = vmatpush.bf16.msra.mxu0 %v9758
    %9856 = vmatpush.bf16.msra.mxu0 %v9754
    %9857 = vmatpush.bf16.msra.mxu0 %v9750
    %9858 = vmatmul.bf16.gmra.mxu0 %v8792
    %v9859 = vpop.f32.mrf.mxu0
    %v9860 = vadd.f32 %v202, %v9859
    %v9861 = vpop.f32.mrf.mxu0
    %9862 = vdwg.mxu0
    %v9863 = vpack.c.bf16 %v9650, %v9650
    %v9864 = vld [vmem:[#allocation13] sm:$0xff]
    %v9865 = vld [vmem:[#allocation13 + $0x8] sm:$0xff]
    %v9866 = vld [vmem:[#allocation13 + $0x10] sm:$0xff]
    %v9867 = vld [vmem:[#allocation13 + $0x18] sm:$0xff]
    %v9868 = vld [vmem:[#allocation13 + $0x20] sm:$0xff]
    %v9869 = vld [vmem:[#allocation13 + $0x28] sm:$0xff]
    %v9870 = vld [vmem:[#allocation13 + $0x30] sm:$0xff]
    %v9871 = vld [vmem:[#allocation13 + $0x38] sm:$0xff]
    %v9872 = vld [vmem:[#allocation13 + $0x40] sm:$0xff]
    %v9873 = vld [vmem:[#allocation13 + $0x48] sm:$0xff]
    %v9874 = vld [vmem:[#allocation13 + $0x50] sm:$0xff]
    %v9875 = vld [vmem:[#allocation13 + $0x58] sm:$0xff]
    %v9876 = vld [vmem:[#allocation13 + $0x60] sm:$0xff]
    %v9877 = vld [vmem:[#allocation13 + $0x68] sm:$0xff]
    %v9878 = vld [vmem:[#allocation13 + $0x70] sm:$0xff]
    %v9879 = vld [vmem:[#allocation13 + $0x78] sm:$0xff]
    %v9880 = vld [vmem:[#allocation13 + $0x80] sm:$0xff]
    %v9881 = vld [vmem:[#allocation13 + $0x88] sm:$0xff]
    %v9882 = vld [vmem:[#allocation13 + $0x90] sm:$0xff]
    %v9883 = vld [vmem:[#allocation13 + $0x98] sm:$0xff]
    %v9884 = vld [vmem:[#allocation13 + $0xa0] sm:$0xff]
    %v9885 = vld [vmem:[#allocation13 + $0xa8] sm:$0xff]
    %v9886 = vld [vmem:[#allocation13 + $0xb0] sm:$0xff]
    %v9887 = vld [vmem:[#allocation13 + $0xb8] sm:$0xff]
    %v9888 = vld [vmem:[#allocation13 + $0xc0] sm:$0xff]
    %v9889 = vld [vmem:[#allocation13 + $0xc8] sm:$0xff]
    %v9890 = vld [vmem:[#allocation13 + $0xd0] sm:$0xff]
    %v9891 = vld [vmem:[#allocation13 + $0xd8] sm:$0xff]
    %v9892 = vld [vmem:[#allocation13 + $0xe0] sm:$0xff]
    %v9893 = vld [vmem:[#allocation13 + $0xe8] sm:$0xff]
    %v9894 = vld [vmem:[#allocation13 + $0xf0] sm:$0xff]
    %v9895 = vld [vmem:[#allocation13 + $0xf8] sm:$0xff]
    %v9928 = vunpack.c.l.b16 %v9864
    %v9929 = vunpack.c.h.b16 %v9864
    %v9930 = vunpack.c.l.b16 %v9865
    %v9931 = vunpack.c.h.b16 %v9865
    %v9932 = vunpack.c.l.b16 %v9866
    %v9933 = vunpack.c.h.b16 %v9866
    %v9934 = vunpack.c.l.b16 %v9867
    %v9935 = vunpack.c.h.b16 %v9867
    %v9936 = vunpack.c.l.b16 %v9868
    %v9937 = vunpack.c.h.b16 %v9868
    %v9938 = vunpack.c.l.b16 %v9869
    %v9939 = vunpack.c.h.b16 %v9869
    %v9940 = vunpack.c.l.b16 %v9870
    %v9941 = vunpack.c.h.b16 %v9870
    %v9942 = vunpack.c.l.b16 %v9871
    %v9943 = vunpack.c.h.b16 %v9871
    %v9944 = vunpack.c.l.b16 %v9872
    %v9945 = vunpack.c.h.b16 %v9872
    %v9946 = vunpack.c.l.b16 %v9873
    %v9947 = vunpack.c.h.b16 %v9873
    %v9948 = vunpack.c.l.b16 %v9874
    %v9949 = vunpack.c.h.b16 %v9874
    %v9950 = vunpack.c.l.b16 %v9875
    %v9951 = vunpack.c.h.b16 %v9875
    %v9952 = vunpack.c.l.b16 %v9876
    %v9953 = vunpack.c.h.b16 %v9876
    %v9954 = vunpack.c.l.b16 %v9877
    %v9955 = vunpack.c.h.b16 %v9877
    %v9956 = vunpack.c.l.b16 %v9878
    %v9957 = vunpack.c.h.b16 %v9878
    %v9958 = vunpack.c.l.b16 %v9879
    %v9959 = vunpack.c.h.b16 %v9879
    %v9960 = vunpack.c.l.b16 %v9880
    %v9961 = vunpack.c.h.b16 %v9880
    %v9962 = vunpack.c.l.b16 %v9881
    %v9963 = vunpack.c.h.b16 %v9881
    %v9964 = vunpack.c.l.b16 %v9882
    %v9965 = vunpack.c.h.b16 %v9882
    %v9966 = vunpack.c.l.b16 %v9883
    %v9967 = vunpack.c.h.b16 %v9883
    %v9968 = vunpack.c.l.b16 %v9884
    %v9969 = vunpack.c.h.b16 %v9884
    %v9970 = vunpack.c.l.b16 %v9885
    %v9971 = vunpack.c.h.b16 %v9885
    %v9972 = vunpack.c.l.b16 %v9886
    %v9973 = vunpack.c.h.b16 %v9886
    %v9974 = vunpack.c.l.b16 %v9887
    %v9975 = vunpack.c.h.b16 %v9887
    %v9976 = vunpack.c.l.b16 %v9888
    %v9977 = vunpack.c.h.b16 %v9888
    %v9978 = vunpack.c.l.b16 %v9889
    %v9979 = vunpack.c.h.b16 %v9889
    %v9980 = vunpack.c.l.b16 %v9890
    %v9981 = vunpack.c.h.b16 %v9890
    %v9982 = vunpack.c.l.b16 %v9891
    %v9983 = vunpack.c.h.b16 %v9891
    %v9984 = vunpack.c.l.b16 %v9892
    %v9985 = vunpack.c.h.b16 %v9892
    %v9986 = vunpack.c.l.b16 %v9893
    %v9987 = vunpack.c.h.b16 %v9893
    %v9988 = vunpack.c.l.b16 %v9894
    %v9989 = vunpack.c.h.b16 %v9894
    %v9990 = vunpack.c.l.b16 %v9895
    %v9991 = vunpack.c.h.b16 %v9895
    %v9992 = vpack.c.b16 %v9932, %v9928
    %v9993 = vpack.c.b16 %v9933, %v9929
    %v9994 = vpack.c.b16 %v9934, %v9930
    %v9995 = vpack.c.b16 %v9935, %v9931
    %v9996 = vpack.c.b16 %v9940, %v9936
    %v9997 = vpack.c.b16 %v9941, %v9937
    %v9998 = vpack.c.b16 %v9942, %v9938
    %v9999 = vpack.c.b16 %v9943, %v9939
    %v10000 = vpack.c.b16 %v9948, %v9944
    %v10001 = vpack.c.b16 %v9949, %v9945
    %v10002 = vpack.c.b16 %v9950, %v9946
    %v10003 = vpack.c.b16 %v9951, %v9947
    %v10004 = vpack.c.b16 %v9956, %v9952
    %v10005 = vpack.c.b16 %v9957, %v9953
    %v10006 = vpack.c.b16 %v9958, %v9954
    %v10007 = vpack.c.b16 %v9959, %v9955
    %v10008 = vpack.c.b16 %v9964, %v9960
    %v10009 = vpack.c.b16 %v9965, %v9961
    %v10010 = vpack.c.b16 %v9966, %v9962
    %v10011 = vpack.c.b16 %v9967, %v9963
    %v10012 = vpack.c.b16 %v9972, %v9968
    %v10013 = vpack.c.b16 %v9973, %v9969
    %v10014 = vpack.c.b16 %v9974, %v9970
    %v10015 = vpack.c.b16 %v9975, %v9971
    %v10016 = vpack.c.b16 %v9980, %v9976
    %v10017 = vpack.c.b16 %v9981, %v9977
    %v10018 = vpack.c.b16 %v9982, %v9978
    %v10019 = vpack.c.b16 %v9983, %v9979
    %v10020 = vpack.c.b16 %v9988, %v9984
    %v10021 = vpack.c.b16 %v9989, %v9985
    %v10022 = vpack.c.b16 %v9990, %v9986
    %v10023 = vpack.c.b16 %v9991, %v9987
    %10056 = vmatpush.bf16.msra.mxu0 %v10020
    %10057 = vmatpush.bf16.msra.mxu0 %v10016
    %10058 = vmatpush.bf16.msra.mxu0 %v10012
    %10059 = vmatpush.bf16.msra.mxu0 %v10008
    %10060 = vmatpush.bf16.msra.mxu0 %v10004
    %10061 = vmatpush.bf16.msra.mxu0 %v10000
    %10062 = vmatpush.bf16.msra.mxu0 %v9996
    %10063 = vmatpush.bf16.msra.mxu0 %v9992
    %10064 = vmatmul.bf16.gmra.mxu0 %v9863
    %v10065 = vpop.f32.mrf.mxu0
    %v10066 = vadd.f32 0.0, %v10065
    %v10067 = vpop.f32.mrf.mxu0
    %10068 = vdwg.mxu0
    %10069 = vmatpush.bf16.msra.mxu0 %v10021
    %10070 = vmatpush.bf16.msra.mxu0 %v10017
    %10071 = vmatpush.bf16.msra.mxu0 %v10013
    %10072 = vmatpush.bf16.msra.mxu0 %v10009
    %10073 = vmatpush.bf16.msra.mxu0 %v10005
    %10074 = vmatpush.bf16.msra.mxu0 %v10001
    %10075 = vmatpush.bf16.msra.mxu0 %v9997
    %10076 = vmatpush.bf16.msra.mxu0 %v9993
    %10077 = vmatmul.bf16.gmra.mxu0 %v9863
    %v10078 = vpop.f32.mrf.mxu0
    %v10079 = vadd.f32 0.0, %v10078
    %v10080 = vpop.f32.mrf.mxu0
    %10081 = vdwg.mxu0
    %10082 = vmatpush.bf16.msra.mxu0 %v10022
    %10083 = vmatpush.bf16.msra.mxu0 %v10018
    %10084 = vmatpush.bf16.msra.mxu0 %v10014
    %10085 = vmatpush.bf16.msra.mxu0 %v10010
    %10086 = vmatpush.bf16.msra.mxu0 %v10006
    %10087 = vmatpush.bf16.msra.mxu0 %v10002
    %10088 = vmatpush.bf16.msra.mxu0 %v9998
    %10089 = vmatpush.bf16.msra.mxu0 %v9994
    %10090 = vmatmul.bf16.gmra.mxu0 %v9863
    %v10091 = vpop.f32.mrf.mxu0
    %v10092 = vadd.f32 0.0, %v10091
    %v10093 = vpop.f32.mrf.mxu0
    %10094 = vdwg.mxu0
    %10095 = vmatpush.bf16.msra.mxu0 %v10023
    %10096 = vmatpush.bf16.msra.mxu0 %v10019
    %10097 = vmatpush.bf16.msra.mxu0 %v10015
    %10098 = vmatpush.bf16.msra.mxu0 %v10011
    %10099 = vmatpush.bf16.msra.mxu0 %v10007
    %10100 = vmatpush.bf16.msra.mxu0 %v10003
    %10101 = vmatpush.bf16.msra.mxu0 %v9999
    %10102 = vmatpush.bf16.msra.mxu0 %v9995
    %10103 = vmatmul.bf16.gmra.mxu0 %v9863
    %v10104 = vpop.f32.mrf.mxu0
    %v10105 = vadd.f32 0.0, %v10104
    %v10106 = vpop.f32.mrf.mxu0
    %10107 = vdwg.mxu0
    %v10108 = vadd.f32 %v9821, %v10066
    %v10109 = vadd.f32 %v9834, %v10079
    %v10110 = vadd.f32 %v9847, %v10092
    %v10111 = vadd.f32 %v9860, %v10105
    %v10112 = vxor.u32 %v10108, 2147483648
    %v10113 = vxor.u32 %v10109, 2147483648
    %v10114 = vxor.u32 %v10110, 2147483648
    %v10115 = vmul.f32 %v10112, 1.442695
    %v10116 = vpow.pop %v10115
    %v10117 = vmul.f32 %v10113, 1.442695
    %v10118 = vpow.pop %v10117
    %v10119 = vmul.f32 %v10114, 1.442695
    %v10120 = vpow.pop %v10119
    %v10121 = vadd.f32 %v10116, 1.0
    %v10122 = vadd.f32 %v10118, 1.0
    %v10123 = vadd.f32 %v10120, 1.0
    %v10124 = vrcp.pop %v10121
    %v10125 = vmul.f32 %v10121, %v10124
    %v10126 = vsub.f32 1.0, %v10125
    %v10127 = vmul.f32 %v10124, %v10126
    %v10128 = vadd.f32 %v10124, %v10127
    %vm10129 = vweird.f32 %v10121
    %vm10130 = vweird.f32 %v10124
    %vm10131 = vmor %vm10129, %vm10130
    %v10132 = vsel %vm10131, %v10124, %v10128
    %v10133 = vand.u32 2147483647, %v10121
    %vm10134 = vcmp.eq.f32.partialorder %v10133, 8.507059e+37
    %v10135 = vand.u32 %v10121, 2147483648
    %v10136 = vor.u32 1.1754944e-38, %v10135
    %v10137 = vsel %vm10134, %v10136, %v10132
    %v10138 = vmul.f32 1.0, %v10137
    %v10139 = vrcp.pop %v10122
    %v10140 = vmul.f32 %v10122, %v10139
    %v10141 = vsub.f32 1.0, %v10140
    %v10142 = vmul.f32 %v10139, %v10141
    %v10143 = vadd.f32 %v10139, %v10142
    %vm10144 = vweird.f32 %v10122
    %vm10145 = vweird.f32 %v10139
    %vm10146 = vmor %vm10144, %vm10145
    %v10147 = vsel %vm10146, %v10139, %v10143
    %v10148 = vand.u32 2147483647, %v10122
    %vm10149 = vcmp.eq.f32.partialorder %v10148, 8.507059e+37
    %v10150 = vand.u32 %v10122, 2147483648
    %v10151 = vor.u32 1.1754944e-38, %v10150
    %v10152 = vsel %vm10149, %v10151, %v10147
    %v10153 = vmul.f32 1.0, %v10152
    %v10154 = vrcp.pop %v10123
    %v10155 = vmul.f32 %v10123, %v10154
    %v10156 = vsub.f32 1.0, %v10155
    %v10157 = vmul.f32 %v10154, %v10156
    %v10158 = vadd.f32 %v10154, %v10157
    %vm10159 = vweird.f32 %v10123
    %vm10160 = vweird.f32 %v10154
    %vm10161 = vmor %vm10159, %vm10160
    %v10162 = vsel %vm10161, %v10154, %v10158
    %v10163 = vand.u32 2147483647, %v10123
    %vm10164 = vcmp.eq.f32.partialorder %v10163, 8.507059e+37
    %v10165 = vand.u32 %v10123, 2147483648
    %v10166 = vor.u32 1.1754944e-38, %v10165
    %v10167 = vsel %vm10164, %v10166, %v10162
    %v10168 = vmul.f32 1.0, %v10167
    %v10169 = vtanh.pop %v10111
    %v10170 = vmul.f32 %v10153, %v8728
    %v10171 = vmul.f32 %v10138, %v10169
    %v10172 = vadd.f32 %v10170, %v10171
    %v10173 = vtanh.pop %v10172
    %v10174 = vmul.f32 %v10168, %v10173
    %v10191 = vunpack.c.l.b16 %v9315
    %v10192 = vunpack.c.l.b16 %v9316
    %v10193 = vunpack.c.l.b16 %v9317
    %v10194 = vunpack.c.l.b16 %v9318
    %v10195 = vunpack.c.l.b16 %v9319
    %v10196 = vunpack.c.l.b16 %v9320
    %v10197 = vunpack.c.l.b16 %v9321
    %v10198 = vunpack.c.l.b16 %v9322
    %v10199 = vunpack.c.l.b16 %v9323
    %v10200 = vunpack.c.l.b16 %v9324
    %v10201 = vunpack.c.l.b16 %v9325
    %v10202 = vunpack.c.l.b16 %v9326
    %v10203 = vunpack.c.l.b16 %v9327
    %v10204 = vunpack.c.l.b16 %v9328
    %v10205 = vunpack.c.l.b16 %v9329
    %v10206 = vunpack.c.l.b16 %v9330
    %v10207 = vpack.c.b16 %v10192, %v10191
    %v10208 = vpack.c.b16 %v10194, %v10193
    %v10209 = vpack.c.b16 %v10196, %v10195
    %v10210 = vpack.c.b16 %v10198, %v10197
    %v10211 = vpack.c.b16 %v10200, %v10199
    %v10212 = vpack.c.b16 %v10202, %v10201
    %v10213 = vpack.c.b16 %v10204, %v10203
    %v10214 = vpack.c.b16 %v10206, %v10205
    %10223 = vmatpush.bf16.msra.mxu0 %v10214
    %10224 = vmatpush.bf16.msra.mxu0 %v10213
    %10225 = vmatpush.bf16.msra.mxu0 %v10212
    %10226 = vmatpush.bf16.msra.mxu0 %v10211
    %10227 = vmatpush.bf16.msra.mxu0 %v10210
    %10228 = vmatpush.bf16.msra.mxu0 %v10209
    %10229 = vmatpush.bf16.msra.mxu0 %v10208
    %10230 = vmatpush.bf16.msra.mxu0 %v10207
    %10231 = vmatmul.bf16.gmra.mxu0 %v9314
    %v10232 = vpop.f32.mrf.mxu0
    %v10233 = vadd.f32 %v209, %v10232
    %v10234 = vpop.f32.mrf.mxu0
    %10235 = vdwg.mxu0
    %v10236 = vpack.c.bf16 %v10174, %v10174
    %v10237 = vld [vmem:[#allocation16] sm:$0xf]
    %v10238 = vld [vmem:[#allocation16 + $0x4] sm:$0xf]
    %v10239 = vld [vmem:[#allocation16 + $0x8] sm:$0xf]
    %v10240 = vld [vmem:[#allocation16 + $0xc] sm:$0xf]
    %v10241 = vld [vmem:[#allocation16 + $0x10] sm:$0xf]
    %v10242 = vld [vmem:[#allocation16 + $0x14] sm:$0xf]
    %v10243 = vld [vmem:[#allocation16 + $0x18] sm:$0xf]
    %v10244 = vld [vmem:[#allocation16 + $0x1c] sm:$0xf]
    %v10245 = vld [vmem:[#allocation16 + $0x20] sm:$0xf]
    %v10246 = vld [vmem:[#allocation16 + $0x24] sm:$0xf]
    %v10247 = vld [vmem:[#allocation16 + $0x28] sm:$0xf]
    %v10248 = vld [vmem:[#allocation16 + $0x2c] sm:$0xf]
    %v10249 = vld [vmem:[#allocation16 + $0x30] sm:$0xf]
    %v10250 = vld [vmem:[#allocation16 + $0x34] sm:$0xf]
    %v10251 = vld [vmem:[#allocation16 + $0x38] sm:$0xf]
    %v10252 = vld [vmem:[#allocation16 + $0x3c] sm:$0xf]
    %v10269 = vunpack.c.l.b16 %v10237
    %v10270 = vunpack.c.l.b16 %v10238
    %v10271 = vunpack.c.l.b16 %v10239
    %v10272 = vunpack.c.l.b16 %v10240
    %v10273 = vunpack.c.l.b16 %v10241
    %v10274 = vunpack.c.l.b16 %v10242
    %v10275 = vunpack.c.l.b16 %v10243
    %v10276 = vunpack.c.l.b16 %v10244
    %v10277 = vunpack.c.l.b16 %v10245
    %v10278 = vunpack.c.l.b16 %v10246
    %v10279 = vunpack.c.l.b16 %v10247
    %v10280 = vunpack.c.l.b16 %v10248
    %v10281 = vunpack.c.l.b16 %v10249
    %v10282 = vunpack.c.l.b16 %v10250
    %v10283 = vunpack.c.l.b16 %v10251
    %v10284 = vunpack.c.l.b16 %v10252
    %v10285 = vpack.c.b16 %v10270, %v10269
    %v10286 = vpack.c.b16 %v10272, %v10271
    %v10287 = vpack.c.b16 %v10274, %v10273
    %v10288 = vpack.c.b16 %v10276, %v10275
    %v10289 = vpack.c.b16 %v10278, %v10277
    %v10290 = vpack.c.b16 %v10280, %v10279
    %v10291 = vpack.c.b16 %v10282, %v10281
    %v10292 = vpack.c.b16 %v10284, %v10283
    %10301 = vmatpush.bf16.msra.mxu0 %v10292
    %10302 = vmatpush.bf16.msra.mxu0 %v10291
    %10303 = vmatpush.bf16.msra.mxu0 %v10290
    %10304 = vmatpush.bf16.msra.mxu0 %v10289
    %10305 = vmatpush.bf16.msra.mxu0 %v10288
    %10306 = vmatpush.bf16.msra.mxu0 %v10287
    %10307 = vmatpush.bf16.msra.mxu0 %v10286
    %10308 = vmatpush.bf16.msra.mxu0 %v10285
    %10309 = vmatmul.bf16.gmra.mxu0 %v10236
    %v10310 = vpop.f32.mrf.mxu0
    %v10311 = vadd.f32 0.0, %v10310
    %v10312 = vpop.f32.mrf.mxu0
    %10313 = vdwg.mxu0
    %v10314 = vadd.f32 %v10233, %v10311
    %s10315 = scalar_lea.vmem [#allocation19], 48
    %10316 = vst [vmem:[%s10315] sm:$0xff] %v10314
    %v10317 = vld [vmem:[#allocation11] sm:$0xff]
    %v10318 = vld [vmem:[#allocation11 + $0x8] sm:$0xff]
    %v10319 = vld [vmem:[#allocation11 + $0x10] sm:$0xff]
    %v10320 = vld [vmem:[#allocation11 + $0x18] sm:$0xff]
    %v10321 = vld [vmem:[#allocation11 + $0x20] sm:$0xff]
    %v10322 = vld [vmem:[#allocation11 + $0x28] sm:$0xff]
    %v10323 = vld [vmem:[#allocation11 + $0x30] sm:$0xff]
    %v10324 = vld [vmem:[#allocation11 + $0x38] sm:$0xff]
    %v10325 = vld [vmem:[#allocation11 + $0x40] sm:$0xff]
    %v10326 = vld [vmem:[#allocation11 + $0x48] sm:$0xff]
    %v10327 = vld [vmem:[#allocation11 + $0x50] sm:$0xff]
    %v10328 = vld [vmem:[#allocation11 + $0x58] sm:$0xff]
    %v10329 = vld [vmem:[#allocation11 + $0x60] sm:$0xff]
    %v10330 = vld [vmem:[#allocation11 + $0x68] sm:$0xff]
    %v10331 = vld [vmem:[#allocation11 + $0x70] sm:$0xff]
    %v10332 = vld [vmem:[#allocation11 + $0x78] sm:$0xff]
    %v10333 = vld [vmem:[#allocation11 + $0x80] sm:$0xff]
    %v10334 = vld [vmem:[#allocation11 + $0x88] sm:$0xff]
    %v10335 = vld [vmem:[#allocation11 + $0x90] sm:$0xff]
    %v10336 = vld [vmem:[#allocation11 + $0x98] sm:$0xff]
    %v10337 = vld [vmem:[#allocation11 + $0xa0] sm:$0xff]
    %v10338 = vld [vmem:[#allocation11 + $0xa8] sm:$0xff]
    %v10339 = vld [vmem:[#allocation11 + $0xb0] sm:$0xff]
    %v10340 = vld [vmem:[#allocation11 + $0xb8] sm:$0xff]
    %v10341 = vld [vmem:[#allocation11 + $0xc0] sm:$0xff]
    %v10342 = vld [vmem:[#allocation11 + $0xc8] sm:$0xff]
    %v10343 = vld [vmem:[#allocation11 + $0xd0] sm:$0xff]
    %v10344 = vld [vmem:[#allocation11 + $0xd8] sm:$0xff]
    %v10345 = vld [vmem:[#allocation11 + $0xe0] sm:$0xff]
    %v10346 = vld [vmem:[#allocation11 + $0xe8] sm:$0xff]
    %v10347 = vld [vmem:[#allocation11 + $0xf0] sm:$0xff]
    %v10348 = vld [vmem:[#allocation11 + $0xf8] sm:$0xff]
    %v10381 = vunpack.c.l.b16 %v10317
    %v10382 = vunpack.c.h.b16 %v10317
    %v10383 = vunpack.c.l.b16 %v10318
    %v10384 = vunpack.c.h.b16 %v10318
    %v10385 = vunpack.c.l.b16 %v10319
    %v10386 = vunpack.c.h.b16 %v10319
    %v10387 = vunpack.c.l.b16 %v10320
    %v10388 = vunpack.c.h.b16 %v10320
    %v10389 = vunpack.c.l.b16 %v10321
    %v10390 = vunpack.c.h.b16 %v10321
    %v10391 = vunpack.c.l.b16 %v10322
    %v10392 = vunpack.c.h.b16 %v10322
    %v10393 = vunpack.c.l.b16 %v10323
    %v10394 = vunpack.c.h.b16 %v10323
    %v10395 = vunpack.c.l.b16 %v10324
    %v10396 = vunpack.c.h.b16 %v10324
    %v10397 = vunpack.c.l.b16 %v10325
    %v10398 = vunpack.c.h.b16 %v10325
    %v10399 = vunpack.c.l.b16 %v10326
    %v10400 = vunpack.c.h.b16 %v10326
    %v10401 = vunpack.c.l.b16 %v10327
    %v10402 = vunpack.c.h.b16 %v10327
    %v10403 = vunpack.c.l.b16 %v10328
    %v10404 = vunpack.c.h.b16 %v10328
    %v10405 = vunpack.c.l.b16 %v10329
    %v10406 = vunpack.c.h.b16 %v10329
    %v10407 = vunpack.c.l.b16 %v10330
    %v10408 = vunpack.c.h.b16 %v10330
    %v10409 = vunpack.c.l.b16 %v10331
    %v10410 = vunpack.c.h.b16 %v10331
    %v10411 = vunpack.c.l.b16 %v10332
    %v10412 = vunpack.c.h.b16 %v10332
    %v10413 = vunpack.c.l.b16 %v10333
    %v10414 = vunpack.c.h.b16 %v10333
    %v10415 = vunpack.c.l.b16 %v10334
    %v10416 = vunpack.c.h.b16 %v10334
    %v10417 = vunpack.c.l.b16 %v10335
    %v10418 = vunpack.c.h.b16 %v10335
    %v10419 = vunpack.c.l.b16 %v10336
    %v10420 = vunpack.c.h.b16 %v10336
    %v10421 = vunpack.c.l.b16 %v10337
    %v10422 = vunpack.c.h.b16 %v10337
    %v10423 = vunpack.c.l.b16 %v10338
    %v10424 = vunpack.c.h.b16 %v10338
    %v10425 = vunpack.c.l.b16 %v10339
    %v10426 = vunpack.c.h.b16 %v10339
    %v10427 = vunpack.c.l.b16 %v10340
    %v10428 = vunpack.c.h.b16 %v10340
    %v10429 = vunpack.c.l.b16 %v10341
    %v10430 = vunpack.c.h.b16 %v10341
    %v10431 = vunpack.c.l.b16 %v10342
    %v10432 = vunpack.c.h.b16 %v10342
    %v10433 = vunpack.c.l.b16 %v10343
    %v10434 = vunpack.c.h.b16 %v10343
    %v10435 = vunpack.c.l.b16 %v10344
    %v10436 = vunpack.c.h.b16 %v10344
    %v10437 = vunpack.c.l.b16 %v10345
    %v10438 = vunpack.c.h.b16 %v10345
    %v10439 = vunpack.c.l.b16 %v10346
    %v10440 = vunpack.c.h.b16 %v10346
    %v10441 = vunpack.c.l.b16 %v10347
    %v10442 = vunpack.c.h.b16 %v10347
    %v10443 = vunpack.c.l.b16 %v10348
    %v10444 = vunpack.c.h.b16 %v10348
    %v10445 = vpack.c.b16 %v10385, %v10381
    %v10446 = vpack.c.b16 %v10386, %v10382
    %v10447 = vpack.c.b16 %v10387, %v10383
    %v10448 = vpack.c.b16 %v10388, %v10384
    %v10449 = vpack.c.b16 %v10393, %v10389
    %v10450 = vpack.c.b16 %v10394, %v10390
    %v10451 = vpack.c.b16 %v10395, %v10391
    %v10452 = vpack.c.b16 %v10396, %v10392
    %v10453 = vpack.c.b16 %v10401, %v10397
    %v10454 = vpack.c.b16 %v10402, %v10398
    %v10455 = vpack.c.b16 %v10403, %v10399
    %v10456 = vpack.c.b16 %v10404, %v10400
    %v10457 = vpack.c.b16 %v10409, %v10405
    %v10458 = vpack.c.b16 %v10410, %v10406
    %v10459 = vpack.c.b16 %v10411, %v10407
    %v10460 = vpack.c.b16 %v10412, %v10408
    %v10461 = vpack.c.b16 %v10417, %v10413
    %v10462 = vpack.c.b16 %v10418, %v10414
    %v10463 = vpack.c.b16 %v10419, %v10415
    %v10464 = vpack.c.b16 %v10420, %v10416
    %v10465 = vpack.c.b16 %v10425, %v10421
    %v10466 = vpack.c.b16 %v10426, %v10422
    %v10467 = vpack.c.b16 %v10427, %v10423
    %v10468 = vpack.c.b16 %v10428, %v10424
    %v10469 = vpack.c.b16 %v10433, %v10429
    %v10470 = vpack.c.b16 %v10434, %v10430
    %v10471 = vpack.c.b16 %v10435, %v10431
    %v10472 = vpack.c.b16 %v10436, %v10432
    %v10473 = vpack.c.b16 %v10441, %v10437
    %v10474 = vpack.c.b16 %v10442, %v10438
    %v10475 = vpack.c.b16 %v10443, %v10439
    %v10476 = vpack.c.b16 %v10444, %v10440
    %10509 = vmatpush.bf16.msra.mxu0 %v10473
    %10510 = vmatpush.bf16.msra.mxu0 %v10469
    %10511 = vmatpush.bf16.msra.mxu0 %v10465
    %10512 = vmatpush.bf16.msra.mxu0 %v10461
    %10513 = vmatpush.bf16.msra.mxu0 %v10457
    %10514 = vmatpush.bf16.msra.mxu0 %v10453
    %10515 = vmatpush.bf16.msra.mxu0 %v10449
    %10516 = vmatpush.bf16.msra.mxu0 %v10445
    %10517 = vmatmul.bf16.gmra.mxu0 %v9863
    %v10518 = vpop.f32.mrf.mxu0
    %v10519 = vadd.f32 0.0, %v10518
    %v10520 = vpop.f32.mrf.mxu0
    %10521 = vdwg.mxu0
    %10522 = vmatpush.bf16.msra.mxu0 %v10474
    %10523 = vmatpush.bf16.msra.mxu0 %v10470
    %10524 = vmatpush.bf16.msra.mxu0 %v10466
    %10525 = vmatpush.bf16.msra.mxu0 %v10462
    %10526 = vmatpush.bf16.msra.mxu0 %v10458
    %10527 = vmatpush.bf16.msra.mxu0 %v10454
    %10528 = vmatpush.bf16.msra.mxu0 %v10450
    %10529 = vmatpush.bf16.msra.mxu0 %v10446
    %10530 = vmatmul.bf16.gmra.mxu0 %v9863
    %v10531 = vpop.f32.mrf.mxu0
    %v10532 = vadd.f32 0.0, %v10531
    %v10533 = vpop.f32.mrf.mxu0
    %10534 = vdwg.mxu0
    %10535 = vmatpush.bf16.msra.mxu0 %v10475
    %10536 = vmatpush.bf16.msra.mxu0 %v10471
    %10537 = vmatpush.bf16.msra.mxu0 %v10467
    %10538 = vmatpush.bf16.msra.mxu0 %v10463
    %10539 = vmatpush.bf16.msra.mxu0 %v10459
    %10540 = vmatpush.bf16.msra.mxu0 %v10455
    %10541 = vmatpush.bf16.msra.mxu0 %v10451
    %10542 = vmatpush.bf16.msra.mxu0 %v10447
    %10543 = vmatmul.bf16.gmra.mxu0 %v9863
    %v10544 = vpop.f32.mrf.mxu0
    %v10545 = vadd.f32 0.0, %v10544
    %v10546 = vpop.f32.mrf.mxu0
    %10547 = vdwg.mxu0
    %10548 = vmatpush.bf16.msra.mxu0 %v10476
    %10549 = vmatpush.bf16.msra.mxu0 %v10472
    %10550 = vmatpush.bf16.msra.mxu0 %v10468
    %10551 = vmatpush.bf16.msra.mxu0 %v10464
    %10552 = vmatpush.bf16.msra.mxu0 %v10460
    %10553 = vmatpush.bf16.msra.mxu0 %v10456
    %10554 = vmatpush.bf16.msra.mxu0 %v10452
    %10555 = vmatpush.bf16.msra.mxu0 %v10448
    %10556 = vmatmul.bf16.gmra.mxu0 %v9863
    %v10557 = vpop.f32.mrf.mxu0
    %v10558 = vadd.f32 0.0, %v10557
    %v10559 = vpop.f32.mrf.mxu0
    %10560 = vdwg.mxu0
    %v10561 = vld [vmem:[#allocation14] sm:$0xff]
    %v10562 = vld [vmem:[#allocation14 + $0x8] sm:$0xff]
    %v10563 = vld [vmem:[#allocation14 + $0x10] sm:$0xff]
    %v10564 = vld [vmem:[#allocation14 + $0x18] sm:$0xff]
    %v10565 = vld [vmem:[#allocation14 + $0x20] sm:$0xff]
    %v10566 = vld [vmem:[#allocation14 + $0x28] sm:$0xff]
    %v10567 = vld [vmem:[#allocation14 + $0x30] sm:$0xff]
    %v10568 = vld [vmem:[#allocation14 + $0x38] sm:$0xff]
    %v10569 = vld [vmem:[#allocation14 + $0x40] sm:$0xff]
    %v10570 = vld [vmem:[#allocation14 + $0x48] sm:$0xff]
    %v10571 = vld [vmem:[#allocation14 + $0x50] sm:$0xff]
    %v10572 = vld [vmem:[#allocation14 + $0x58] sm:$0xff]
    %v10573 = vld [vmem:[#allocation14 + $0x60] sm:$0xff]
    %v10574 = vld [vmem:[#allocation14 + $0x68] sm:$0xff]
    %v10575 = vld [vmem:[#allocation14 + $0x70] sm:$0xff]
    %v10576 = vld [vmem:[#allocation14 + $0x78] sm:$0xff]
    %v10577 = vld [vmem:[#allocation14 + $0x80] sm:$0xff]
    %v10578 = vld [vmem:[#allocation14 + $0x88] sm:$0xff]
    %v10579 = vld [vmem:[#allocation14 + $0x90] sm:$0xff]
    %v10580 = vld [vmem:[#allocation14 + $0x98] sm:$0xff]
    %v10581 = vld [vmem:[#allocation14 + $0xa0] sm:$0xff]
    %v10582 = vld [vmem:[#allocation14 + $0xa8] sm:$0xff]
    %v10583 = vld [vmem:[#allocation14 + $0xb0] sm:$0xff]
    %v10584 = vld [vmem:[#allocation14 + $0xb8] sm:$0xff]
    %v10585 = vld [vmem:[#allocation14 + $0xc0] sm:$0xff]
    %v10586 = vld [vmem:[#allocation14 + $0xc8] sm:$0xff]
    %v10587 = vld [vmem:[#allocation14 + $0xd0] sm:$0xff]
    %v10588 = vld [vmem:[#allocation14 + $0xd8] sm:$0xff]
    %v10589 = vld [vmem:[#allocation14 + $0xe0] sm:$0xff]
    %v10590 = vld [vmem:[#allocation14 + $0xe8] sm:$0xff]
    %v10591 = vld [vmem:[#allocation14 + $0xf0] sm:$0xff]
    %v10592 = vld [vmem:[#allocation14 + $0xf8] sm:$0xff]
    %v10593 = vld [vmem:[#allocation5] sm:$0xf]
    %v10594 = vld [vmem:[#allocation5 + $0x4] sm:$0xf]
    %v10595 = vld [vmem:[#allocation5 + $0x8] sm:$0xf]
    %v10596 = vld [vmem:[#allocation5 + $0xc] sm:$0xf]
    %v10597 = vld [vmem:[#allocation5 + $0x10] sm:$0xf]
    %v10598 = vld [vmem:[#allocation5 + $0x14] sm:$0xf]
    %v10599 = vld [vmem:[#allocation5 + $0x18] sm:$0xf]
    %v10600 = vld [vmem:[#allocation5 + $0x1c] sm:$0xf]
    %v10601 = vld [vmem:[#allocation5 + $0x20] sm:$0xf]
    %v10602 = vld [vmem:[#allocation5 + $0x24] sm:$0xf]
    %v10603 = vld [vmem:[#allocation5 + $0x28] sm:$0xf]
    %v10604 = vld [vmem:[#allocation5 + $0x2c] sm:$0xf]
    %v10605 = vld [vmem:[#allocation5 + $0x30] sm:$0xf]
    %v10606 = vld [vmem:[#allocation5 + $0x34] sm:$0xf]
    %v10607 = vld [vmem:[#allocation5 + $0x38] sm:$0xf]
    %v10608 = vld [vmem:[#allocation5 + $0x3c] sm:$0xf]
    %v10609 = vld [vmem:[#allocation8] sm:$0xff]
    %v10626 = vunpack.c.l.b16 %v10593
    %v10627 = vunpack.c.l.b16 %v10594
    %v10628 = vunpack.c.l.b16 %v10595
    %v10629 = vunpack.c.l.b16 %v10596
    %v10630 = vunpack.c.l.b16 %v10597
    %v10631 = vunpack.c.l.b16 %v10598
    %v10632 = vunpack.c.l.b16 %v10599
    %v10633 = vunpack.c.l.b16 %v10600
    %v10634 = vunpack.c.l.b16 %v10601
    %v10635 = vunpack.c.l.b16 %v10602
    %v10636 = vunpack.c.l.b16 %v10603
    %v10637 = vunpack.c.l.b16 %v10604
    %v10638 = vunpack.c.l.b16 %v10605
    %v10639 = vunpack.c.l.b16 %v10606
    %v10640 = vunpack.c.l.b16 %v10607
    %v10641 = vunpack.c.l.b16 %v10608
    %v10642 = vpack.c.b16 %v10627, %v10626
    %v10643 = vpack.c.b16 %v10629, %v10628
    %v10644 = vpack.c.b16 %v10631, %v10630
    %v10645 = vpack.c.b16 %v10633, %v10632
    %v10646 = vpack.c.b16 %v10635, %v10634
    %v10647 = vpack.c.b16 %v10637, %v10636
    %v10648 = vpack.c.b16 %v10639, %v10638
    %v10649 = vpack.c.b16 %v10641, %v10640
    %10658 = vmatpush.bf16.msra.mxu0 %v10649
    %10659 = vmatpush.bf16.msra.mxu0 %v10648
    %10660 = vmatpush.bf16.msra.mxu0 %v10647
    %10661 = vmatpush.bf16.msra.mxu0 %v10646
    %10662 = vmatpush.bf16.msra.mxu0 %v10645
    %10663 = vmatpush.bf16.msra.mxu0 %v10644
    %10664 = vmatpush.bf16.msra.mxu0 %v10643
    %10665 = vmatpush.bf16.msra.mxu0 %v10642
    %10666 = vmatmul.bf16.gmra.mxu0 %v10236
    %v10667 = vpop.f32.mrf.mxu0
    %v10668 = vadd.f32 %v10609, %v10667
    %v10669 = vpop.f32.mrf.mxu0
    %10670 = vdwg.mxu0
    %10671 = vmax.xlane.f32.xlu0 %v10668
    %v10672 = vpop.xlane.xlu0 %10671
    %v10673 = vsub.f32 %v10668, %v10672
    %v10674 = vmul.f32 %v10673, 1.442695
    %v10675 = vpow.pop %v10674
    %10676 = vadd.xlane.f32.xlu0 %v10675
    %v10677 = vpop.xlane.xlu0 %10676
    %v10678 = vrcp.pop %v10677
    %v10679 = vmul.f32 %v10675, %v10678
    %v10680 = vpack.c.bf16 %v10679, %v10679
    %v10681 = vld [vmem:[#allocation7] sm:$0xf]
    %v10682 = vld [vmem:[#allocation7 + $0x4] sm:$0xf]
    %v10683 = vld [vmem:[#allocation7 + $0x8] sm:$0xf]
    %v10684 = vld [vmem:[#allocation7 + $0xc] sm:$0xf]
    %v10685 = vld [vmem:[#allocation7 + $0x10] sm:$0xf]
    %v10686 = vld [vmem:[#allocation7 + $0x14] sm:$0xf]
    %v10687 = vld [vmem:[#allocation7 + $0x18] sm:$0xf]
    %v10688 = vld [vmem:[#allocation7 + $0x1c] sm:$0xf]
    %v10689 = vld [vmem:[#allocation7 + $0x20] sm:$0xf]
    %v10690 = vld [vmem:[#allocation7 + $0x24] sm:$0xf]
    %v10691 = vld [vmem:[#allocation7 + $0x28] sm:$0xf]
    %v10692 = vld [vmem:[#allocation7 + $0x2c] sm:$0xf]
    %v10693 = vld [vmem:[#allocation7 + $0x30] sm:$0xf]
    %v10694 = vld [vmem:[#allocation7 + $0x34] sm:$0xf]
    %v10695 = vld [vmem:[#allocation7 + $0x38] sm:$0xf]
    %v10696 = vld [vmem:[#allocation7 + $0x3c] sm:$0xf]
    %v10713 = vunpack.c.l.b16 %v10681
    %v10714 = vunpack.c.l.b16 %v10682
    %v10715 = vunpack.c.l.b16 %v10683
    %v10716 = vunpack.c.l.b16 %v10684
    %v10717 = vunpack.c.l.b16 %v10685
    %v10718 = vunpack.c.l.b16 %v10686
    %v10719 = vunpack.c.l.b16 %v10687
    %v10720 = vunpack.c.l.b16 %v10688
    %v10721 = vunpack.c.l.b16 %v10689
    %v10722 = vunpack.c.l.b16 %v10690
    %v10723 = vunpack.c.l.b16 %v10691
    %v10724 = vunpack.c.l.b16 %v10692
    %v10725 = vunpack.c.l.b16 %v10693
    %v10726 = vunpack.c.l.b16 %v10694
    %v10727 = vunpack.c.l.b16 %v10695
    %v10728 = vunpack.c.l.b16 %v10696
    %v10729 = vpack.c.b16 %v10714, %v10713
    %v10730 = vpack.c.b16 %v10716, %v10715
    %v10731 = vpack.c.b16 %v10718, %v10717
    %v10732 = vpack.c.b16 %v10720, %v10719
    %v10733 = vpack.c.b16 %v10722, %v10721
    %v10734 = vpack.c.b16 %v10724, %v10723
    %v10735 = vpack.c.b16 %v10726, %v10725
    %v10736 = vpack.c.b16 %v10728, %v10727
    %10745 = vmatpush.bf16.msra.mxu0 %v10736
    %10746 = vmatpush.bf16.msra.mxu0 %v10735
    %10747 = vmatpush.bf16.msra.mxu0 %v10734
    %10748 = vmatpush.bf16.msra.mxu0 %v10733
    %10749 = vmatpush.bf16.msra.mxu0 %v10732
    %10750 = vmatpush.bf16.msra.mxu0 %v10731
    %10751 = vmatpush.bf16.msra.mxu0 %v10730
    %10752 = vmatpush.bf16.msra.mxu0 %v10729
    %10753 = vmatmul.bf16.gmra.mxu0 %v10680
    %v10754 = vpop.f32.mrf.mxu0
    %v10755 = vadd.f32 0.0, %v10754
    %v10756 = vpop.f32.mrf.mxu0
    %10757 = vdwg.mxu0
    %v10758 = vpack.c.bf16 %v10755, %v10755
    %v10759 = vld [vmem:[#allocation17] sm:$0xf]
    %v10760 = vld [vmem:[#allocation17 + $0x4] sm:$0xf]
    %v10761 = vld [vmem:[#allocation17 + $0x8] sm:$0xf]
    %v10762 = vld [vmem:[#allocation17 + $0xc] sm:$0xf]
    %v10763 = vld [vmem:[#allocation17 + $0x10] sm:$0xf]
    %v10764 = vld [vmem:[#allocation17 + $0x14] sm:$0xf]
    %v10765 = vld [vmem:[#allocation17 + $0x18] sm:$0xf]
    %v10766 = vld [vmem:[#allocation17 + $0x1c] sm:$0xf]
    %v10767 = vld [vmem:[#allocation17 + $0x20] sm:$0xf]
    %v10768 = vld [vmem:[#allocation17 + $0x24] sm:$0xf]
    %v10769 = vld [vmem:[#allocation17 + $0x28] sm:$0xf]
    %v10770 = vld [vmem:[#allocation17 + $0x2c] sm:$0xf]
    %v10771 = vld [vmem:[#allocation17 + $0x30] sm:$0xf]
    %v10772 = vld [vmem:[#allocation17 + $0x34] sm:$0xf]
    %v10773 = vld [vmem:[#allocation17 + $0x38] sm:$0xf]
    %v10774 = vld [vmem:[#allocation17 + $0x3c] sm:$0xf]
    %s10775 = scalar_lea.vmem [#allocation2], 224
    %v10776 = vld [vmem:[%s10775] sm:$0xff]
    %v10777 = vld [vmem:[%s10775 + $0x8] sm:$0xff]
    %v10778 = vld [vmem:[%s10775 + $0x10] sm:$0xff]
    %v10779 = vld [vmem:[%s10775 + $0x18] sm:$0xff]
    %v10780 = vadd.f32 %v10776, %v10519
    %v10781 = vadd.f32 %v10777, %v10532
    %v10782 = vadd.f32 %v10778, %v10545
    %v10783 = vadd.f32 %v10779, %v10558
    %v10784 = vld [vmem:[#allocation10] sm:$0xff]
    %v10785 = vld [vmem:[#allocation10 + $0x8] sm:$0xff]
    %v10786 = vld [vmem:[#allocation10 + $0x10] sm:$0xff]
    %v10787 = vld [vmem:[#allocation10 + $0x18] sm:$0xff]
    %v10788 = vld [vmem:[#allocation10 + $0x20] sm:$0xff]
    %v10789 = vld [vmem:[#allocation10 + $0x28] sm:$0xff]
    %v10790 = vld [vmem:[#allocation10 + $0x30] sm:$0xff]
    %v10791 = vld [vmem:[#allocation10 + $0x38] sm:$0xff]
    %v10792 = vld [vmem:[#allocation10 + $0x40] sm:$0xff]
    %v10793 = vld [vmem:[#allocation10 + $0x48] sm:$0xff]
    %v10794 = vld [vmem:[#allocation10 + $0x50] sm:$0xff]
    %v10795 = vld [vmem:[#allocation10 + $0x58] sm:$0xff]
    %v10796 = vld [vmem:[#allocation10 + $0x60] sm:$0xff]
    %v10797 = vld [vmem:[#allocation10 + $0x68] sm:$0xff]
    %v10798 = vld [vmem:[#allocation10 + $0x70] sm:$0xff]
    %v10799 = vld [vmem:[#allocation10 + $0x78] sm:$0xff]
    %v10800 = vld [vmem:[#allocation10 + $0x80] sm:$0xff]
    %v10801 = vld [vmem:[#allocation10 + $0x88] sm:$0xff]
    %v10802 = vld [vmem:[#allocation10 + $0x90] sm:$0xff]
    %v10803 = vld [vmem:[#allocation10 + $0x98] sm:$0xff]
    %v10804 = vld [vmem:[#allocation10 + $0xa0] sm:$0xff]
    %v10805 = vld [vmem:[#allocation10 + $0xa8] sm:$0xff]
    %v10806 = vld [vmem:[#allocation10 + $0xb0] sm:$0xff]
    %v10807 = vld [vmem:[#allocation10 + $0xb8] sm:$0xff]
    %v10808 = vld [vmem:[#allocation10 + $0xc0] sm:$0xff]
    %v10809 = vld [vmem:[#allocation10 + $0xc8] sm:$0xff]
    %v10810 = vld [vmem:[#allocation10 + $0xd0] sm:$0xff]
    %v10811 = vld [vmem:[#allocation10 + $0xd8] sm:$0xff]
    %v10812 = vld [vmem:[#allocation10 + $0xe0] sm:$0xff]
    %v10813 = vld [vmem:[#allocation10 + $0xe8] sm:$0xff]
    %v10814 = vld [vmem:[#allocation10 + $0xf0] sm:$0xff]
    %v10815 = vld [vmem:[#allocation10 + $0xf8] sm:$0xff]
    %v10848 = vunpack.c.l.b16 %v10784
    %v10849 = vunpack.c.h.b16 %v10784
    %v10850 = vunpack.c.l.b16 %v10785
    %v10851 = vunpack.c.h.b16 %v10785
    %v10852 = vunpack.c.l.b16 %v10786
    %v10853 = vunpack.c.h.b16 %v10786
    %v10854 = vunpack.c.l.b16 %v10787
    %v10855 = vunpack.c.h.b16 %v10787
    %v10856 = vunpack.c.l.b16 %v10788
    %v10857 = vunpack.c.h.b16 %v10788
    %v10858 = vunpack.c.l.b16 %v10789
    %v10859 = vunpack.c.h.b16 %v10789
    %v10860 = vunpack.c.l.b16 %v10790
    %v10861 = vunpack.c.h.b16 %v10790
    %v10862 = vunpack.c.l.b16 %v10791
    %v10863 = vunpack.c.h.b16 %v10791
    %v10864 = vunpack.c.l.b16 %v10792
    %v10865 = vunpack.c.h.b16 %v10792
    %v10866 = vunpack.c.l.b16 %v10793
    %v10867 = vunpack.c.h.b16 %v10793
    %v10868 = vunpack.c.l.b16 %v10794
    %v10869 = vunpack.c.h.b16 %v10794
    %v10870 = vunpack.c.l.b16 %v10795
    %v10871 = vunpack.c.h.b16 %v10795
    %v10872 = vunpack.c.l.b16 %v10796
    %v10873 = vunpack.c.h.b16 %v10796
    %v10874 = vunpack.c.l.b16 %v10797
    %v10875 = vunpack.c.h.b16 %v10797
    %v10876 = vunpack.c.l.b16 %v10798
    %v10877 = vunpack.c.h.b16 %v10798
    %v10878 = vunpack.c.l.b16 %v10799
    %v10879 = vunpack.c.h.b16 %v10799
    %v10880 = vunpack.c.l.b16 %v10800
    %v10881 = vunpack.c.h.b16 %v10800
    %v10882 = vunpack.c.l.b16 %v10801
    %v10883 = vunpack.c.h.b16 %v10801
    %v10884 = vunpack.c.l.b16 %v10802
    %v10885 = vunpack.c.h.b16 %v10802
    %v10886 = vunpack.c.l.b16 %v10803
    %v10887 = vunpack.c.h.b16 %v10803
    %v10888 = vunpack.c.l.b16 %v10804
    %v10889 = vunpack.c.h.b16 %v10804
    %v10890 = vunpack.c.l.b16 %v10805
    %v10891 = vunpack.c.h.b16 %v10805
    %v10892 = vunpack.c.l.b16 %v10806
    %v10893 = vunpack.c.h.b16 %v10806
    %v10894 = vunpack.c.l.b16 %v10807
    %v10895 = vunpack.c.h.b16 %v10807
    %v10896 = vunpack.c.l.b16 %v10808
    %v10897 = vunpack.c.h.b16 %v10808
    %v10898 = vunpack.c.l.b16 %v10809
    %v10899 = vunpack.c.h.b16 %v10809
    %v10900 = vunpack.c.l.b16 %v10810
    %v10901 = vunpack.c.h.b16 %v10810
    %v10902 = vunpack.c.l.b16 %v10811
    %v10903 = vunpack.c.h.b16 %v10811
    %v10904 = vunpack.c.l.b16 %v10812
    %v10905 = vunpack.c.h.b16 %v10812
    %v10906 = vunpack.c.l.b16 %v10813
    %v10907 = vunpack.c.h.b16 %v10813
    %v10908 = vunpack.c.l.b16 %v10814
    %v10909 = vunpack.c.h.b16 %v10814
    %v10910 = vunpack.c.l.b16 %v10815
    %v10911 = vunpack.c.h.b16 %v10815
    %v10912 = vpack.c.b16 %v10852, %v10848
    %v10913 = vpack.c.b16 %v10853, %v10849
    %v10914 = vpack.c.b16 %v10854, %v10850
    %v10915 = vpack.c.b16 %v10855, %v10851
    %v10916 = vpack.c.b16 %v10860, %v10856
    %v10917 = vpack.c.b16 %v10861, %v10857
    %v10918 = vpack.c.b16 %v10862, %v10858
    %v10919 = vpack.c.b16 %v10863, %v10859
    %v10920 = vpack.c.b16 %v10868, %v10864
    %v10921 = vpack.c.b16 %v10869, %v10865
    %v10922 = vpack.c.b16 %v10870, %v10866
    %v10923 = vpack.c.b16 %v10871, %v10867
    %v10924 = vpack.c.b16 %v10876, %v10872
    %v10925 = vpack.c.b16 %v10877, %v10873
    %v10926 = vpack.c.b16 %v10878, %v10874
    %v10927 = vpack.c.b16 %v10879, %v10875
    %v10928 = vpack.c.b16 %v10884, %v10880
    %v10929 = vpack.c.b16 %v10885, %v10881
    %v10930 = vpack.c.b16 %v10886, %v10882
    %v10931 = vpack.c.b16 %v10887, %v10883
    %v10932 = vpack.c.b16 %v10892, %v10888
    %v10933 = vpack.c.b16 %v10893, %v10889
    %v10934 = vpack.c.b16 %v10894, %v10890
    %v10935 = vpack.c.b16 %v10895, %v10891
    %v10936 = vpack.c.b16 %v10900, %v10896
    %v10937 = vpack.c.b16 %v10901, %v10897
    %v10938 = vpack.c.b16 %v10902, %v10898
    %v10939 = vpack.c.b16 %v10903, %v10899
    %v10940 = vpack.c.b16 %v10908, %v10904
    %v10941 = vpack.c.b16 %v10909, %v10905
    %v10942 = vpack.c.b16 %v10910, %v10906
    %v10943 = vpack.c.b16 %v10911, %v10907
    %10976 = vmatpush.bf16.msra.mxu0 %v10940
    %10977 = vmatpush.bf16.msra.mxu0 %v10936
    %10978 = vmatpush.bf16.msra.mxu0 %v10932
    %10979 = vmatpush.bf16.msra.mxu0 %v10928
    %10980 = vmatpush.bf16.msra.mxu0 %v10924
    %10981 = vmatpush.bf16.msra.mxu0 %v10920
    %10982 = vmatpush.bf16.msra.mxu0 %v10916
    %10983 = vmatpush.bf16.msra.mxu0 %v10912
    %10984 = vmatmul.bf16.gmra.mxu0 %v10758
    %v10985 = vpop.f32.mrf.mxu0
    %v10986 = vadd.f32 0.0, %v10985
    %v10987 = vpop.f32.mrf.mxu0
    %10988 = vdwg.mxu0
    %10989 = vmatpush.bf16.msra.mxu0 %v10941
    %10990 = vmatpush.bf16.msra.mxu0 %v10937
    %10991 = vmatpush.bf16.msra.mxu0 %v10933
    %10992 = vmatpush.bf16.msra.mxu0 %v10929
    %10993 = vmatpush.bf16.msra.mxu0 %v10925
    %10994 = vmatpush.bf16.msra.mxu0 %v10921
    %10995 = vmatpush.bf16.msra.mxu0 %v10917
    %10996 = vmatpush.bf16.msra.mxu0 %v10913
    %10997 = vmatmul.bf16.gmra.mxu0 %v10758
    %v10998 = vpop.f32.mrf.mxu0
    %v10999 = vadd.f32 0.0, %v10998
    %v11000 = vpop.f32.mrf.mxu0
    %11001 = vdwg.mxu0
    %11002 = vmatpush.bf16.msra.mxu0 %v10942
    %11003 = vmatpush.bf16.msra.mxu0 %v10938
    %11004 = vmatpush.bf16.msra.mxu0 %v10934
    %11005 = vmatpush.bf16.msra.mxu0 %v10930
    %11006 = vmatpush.bf16.msra.mxu0 %v10926
    %11007 = vmatpush.bf16.msra.mxu0 %v10922
    %11008 = vmatpush.bf16.msra.mxu0 %v10918
    %11009 = vmatpush.bf16.msra.mxu0 %v10914
    %11010 = vmatmul.bf16.gmra.mxu0 %v10758
    %v11011 = vpop.f32.mrf.mxu0
    %v11012 = vadd.f32 0.0, %v11011
    %v11013 = vpop.f32.mrf.mxu0
    %11014 = vdwg.mxu0
    %11015 = vmatpush.bf16.msra.mxu0 %v10943
    %11016 = vmatpush.bf16.msra.mxu0 %v10939
    %11017 = vmatpush.bf16.msra.mxu0 %v10935
    %11018 = vmatpush.bf16.msra.mxu0 %v10931
    %11019 = vmatpush.bf16.msra.mxu0 %v10927
    %11020 = vmatpush.bf16.msra.mxu0 %v10923
    %11021 = vmatpush.bf16.msra.mxu0 %v10919
    %11022 = vmatpush.bf16.msra.mxu0 %v10915
    %11023 = vmatmul.bf16.gmra.mxu0 %v10758
    %v11024 = vpop.f32.mrf.mxu0
    %v11025 = vadd.f32 0.0, %v11024
    %v11026 = vpop.f32.mrf.mxu0
    %11027 = vdwg.mxu0
    %v11028 = vadd.f32 %v10780, %v10986
    %v11029 = vadd.f32 %v10781, %v10999
    %v11030 = vadd.f32 %v10782, %v11012
    %v11031 = vadd.f32 %v10783, %v11025
    %v11032 = vxor.u32 %v11028, 2147483648
    %v11033 = vxor.u32 %v11029, 2147483648
    %v11034 = vxor.u32 %v11030, 2147483648
    %v11035 = vmul.f32 %v11032, 1.442695
    %v11036 = vpow.pop %v11035
    %v11037 = vmul.f32 %v11033, 1.442695
    %v11038 = vpow.pop %v11037
    %v11039 = vmul.f32 %v11034, 1.442695
    %v11040 = vpow.pop %v11039
    %v11041 = vadd.f32 %v11036, 1.0
    %v11042 = vadd.f32 %v11038, 1.0
    %v11043 = vadd.f32 %v11040, 1.0
    %v11044 = vrcp.pop %v11041
    %v11045 = vmul.f32 %v11041, %v11044
    %v11046 = vsub.f32 1.0, %v11045
    %v11047 = vmul.f32 %v11044, %v11046
    %v11048 = vadd.f32 %v11044, %v11047
    %vm11049 = vweird.f32 %v11041
    %vm11050 = vweird.f32 %v11044
    %vm11051 = vmor %vm11049, %vm11050
    %v11052 = vsel %vm11051, %v11044, %v11048
    %v11053 = vand.u32 2147483647, %v11041
    %vm11054 = vcmp.eq.f32.partialorder %v11053, 8.507059e+37
    %v11055 = vand.u32 %v11041, 2147483648
    %v11056 = vor.u32 1.1754944e-38, %v11055
    %v11057 = vsel %vm11054, %v11056, %v11052
    %v11058 = vmul.f32 1.0, %v11057
    %v11059 = vrcp.pop %v11042
    %v11060 = vmul.f32 %v11042, %v11059
    %v11061 = vsub.f32 1.0, %v11060
    %v11062 = vmul.f32 %v11059, %v11061
    %v11063 = vadd.f32 %v11059, %v11062
    %vm11064 = vweird.f32 %v11042
    %vm11065 = vweird.f32 %v11059
    %vm11066 = vmor %vm11064, %vm11065
    %v11067 = vsel %vm11066, %v11059, %v11063
    %v11068 = vand.u32 2147483647, %v11042
    %vm11069 = vcmp.eq.f32.partialorder %v11068, 8.507059e+37
    %v11070 = vand.u32 %v11042, 2147483648
    %v11071 = vor.u32 1.1754944e-38, %v11070
    %v11072 = vsel %vm11069, %v11071, %v11067
    %v11073 = vmul.f32 1.0, %v11072
    %v11074 = vrcp.pop %v11043
    %v11075 = vmul.f32 %v11043, %v11074
    %v11076 = vsub.f32 1.0, %v11075
    %v11077 = vmul.f32 %v11074, %v11076
    %v11078 = vadd.f32 %v11074, %v11077
    %vm11079 = vweird.f32 %v11043
    %vm11080 = vweird.f32 %v11074
    %vm11081 = vmor %vm11079, %vm11080
    %v11082 = vsel %vm11081, %v11074, %v11078
    %v11083 = vand.u32 2147483647, %v11043
    %vm11084 = vcmp.eq.f32.partialorder %v11083, 8.507059e+37
    %v11085 = vand.u32 %v11043, 2147483648
    %v11086 = vor.u32 1.1754944e-38, %v11085
    %v11087 = vsel %vm11084, %v11086, %v11082
    %v11088 = vmul.f32 1.0, %v11087
    %v11089 = vtanh.pop %v11031
    %v11090 = vmul.f32 %v11073, %v9648
    %v11091 = vmul.f32 %v11058, %v11089
    %v11092 = vadd.f32 %v11090, %v11091
    %v11093 = vtanh.pop %v11092
    %v11094 = vmul.f32 %v11088, %v11093
    %v11127 = vunpack.c.l.b16 %v10561
    %v11128 = vunpack.c.h.b16 %v10561
    %v11129 = vunpack.c.l.b16 %v10562
    %v11130 = vunpack.c.h.b16 %v10562
    %v11131 = vunpack.c.l.b16 %v10563
    %v11132 = vunpack.c.h.b16 %v10563
    %v11133 = vunpack.c.l.b16 %v10564
    %v11134 = vunpack.c.h.b16 %v10564
    %v11135 = vunpack.c.l.b16 %v10565
    %v11136 = vunpack.c.h.b16 %v10565
    %v11137 = vunpack.c.l.b16 %v10566
    %v11138 = vunpack.c.h.b16 %v10566
    %v11139 = vunpack.c.l.b16 %v10567
    %v11140 = vunpack.c.h.b16 %v10567
    %v11141 = vunpack.c.l.b16 %v10568
    %v11142 = vunpack.c.h.b16 %v10568
    %v11143 = vunpack.c.l.b16 %v10569
    %v11144 = vunpack.c.h.b16 %v10569
    %v11145 = vunpack.c.l.b16 %v10570
    %v11146 = vunpack.c.h.b16 %v10570
    %v11147 = vunpack.c.l.b16 %v10571
    %v11148 = vunpack.c.h.b16 %v10571
    %v11149 = vunpack.c.l.b16 %v10572
    %v11150 = vunpack.c.h.b16 %v10572
    %v11151 = vunpack.c.l.b16 %v10573
    %v11152 = vunpack.c.h.b16 %v10573
    %v11153 = vunpack.c.l.b16 %v10574
    %v11154 = vunpack.c.h.b16 %v10574
    %v11155 = vunpack.c.l.b16 %v10575
    %v11156 = vunpack.c.h.b16 %v10575
    %v11157 = vunpack.c.l.b16 %v10576
    %v11158 = vunpack.c.h.b16 %v10576
    %v11159 = vunpack.c.l.b16 %v10577
    %v11160 = vunpack.c.h.b16 %v10577
    %v11161 = vunpack.c.l.b16 %v10578
    %v11162 = vunpack.c.h.b16 %v10578
    %v11163 = vunpack.c.l.b16 %v10579
    %v11164 = vunpack.c.h.b16 %v10579
    %v11165 = vunpack.c.l.b16 %v10580
    %v11166 = vunpack.c.h.b16 %v10580
    %v11167 = vunpack.c.l.b16 %v10581
    %v11168 = vunpack.c.h.b16 %v10581
    %v11169 = vunpack.c.l.b16 %v10582
    %v11170 = vunpack.c.h.b16 %v10582
    %v11171 = vunpack.c.l.b16 %v10583
    %v11172 = vunpack.c.h.b16 %v10583
    %v11173 = vunpack.c.l.b16 %v10584
    %v11174 = vunpack.c.h.b16 %v10584
    %v11175 = vunpack.c.l.b16 %v10585
    %v11176 = vunpack.c.h.b16 %v10585
    %v11177 = vunpack.c.l.b16 %v10586
    %v11178 = vunpack.c.h.b16 %v10586
    %v11179 = vunpack.c.l.b16 %v10587
    %v11180 = vunpack.c.h.b16 %v10587
    %v11181 = vunpack.c.l.b16 %v10588
    %v11182 = vunpack.c.h.b16 %v10588
    %v11183 = vunpack.c.l.b16 %v10589
    %v11184 = vunpack.c.h.b16 %v10589
    %v11185 = vunpack.c.l.b16 %v10590
    %v11186 = vunpack.c.h.b16 %v10590
    %v11187 = vunpack.c.l.b16 %v10591
    %v11188 = vunpack.c.h.b16 %v10591
    %v11189 = vunpack.c.l.b16 %v10592
    %v11190 = vunpack.c.h.b16 %v10592
    %v11191 = vpack.c.b16 %v11131, %v11127
    %v11192 = vpack.c.b16 %v11132, %v11128
    %v11193 = vpack.c.b16 %v11133, %v11129
    %v11194 = vpack.c.b16 %v11134, %v11130
    %v11195 = vpack.c.b16 %v11139, %v11135
    %v11196 = vpack.c.b16 %v11140, %v11136
    %v11197 = vpack.c.b16 %v11141, %v11137
    %v11198 = vpack.c.b16 %v11142, %v11138
    %v11199 = vpack.c.b16 %v11147, %v11143
    %v11200 = vpack.c.b16 %v11148, %v11144
    %v11201 = vpack.c.b16 %v11149, %v11145
    %v11202 = vpack.c.b16 %v11150, %v11146
    %v11203 = vpack.c.b16 %v11155, %v11151
    %v11204 = vpack.c.b16 %v11156, %v11152
    %v11205 = vpack.c.b16 %v11157, %v11153
    %v11206 = vpack.c.b16 %v11158, %v11154
    %v11207 = vpack.c.b16 %v11163, %v11159
    %v11208 = vpack.c.b16 %v11164, %v11160
    %v11209 = vpack.c.b16 %v11165, %v11161
    %v11210 = vpack.c.b16 %v11166, %v11162
    %v11211 = vpack.c.b16 %v11171, %v11167
    %v11212 = vpack.c.b16 %v11172, %v11168
    %v11213 = vpack.c.b16 %v11173, %v11169
    %v11214 = vpack.c.b16 %v11174, %v11170
    %v11215 = vpack.c.b16 %v11179, %v11175
    %v11216 = vpack.c.b16 %v11180, %v11176
    %v11217 = vpack.c.b16 %v11181, %v11177
    %v11218 = vpack.c.b16 %v11182, %v11178
    %v11219 = vpack.c.b16 %v11187, %v11183
    %v11220 = vpack.c.b16 %v11188, %v11184
    %v11221 = vpack.c.b16 %v11189, %v11185
    %v11222 = vpack.c.b16 %v11190, %v11186
    %11255 = vmatpush.bf16.msra.mxu0 %v11219
    %11256 = vmatpush.bf16.msra.mxu0 %v11215
    %11257 = vmatpush.bf16.msra.mxu0 %v11211
    %11258 = vmatpush.bf16.msra.mxu0 %v11207
    %11259 = vmatpush.bf16.msra.mxu0 %v11203
    %11260 = vmatpush.bf16.msra.mxu0 %v11199
    %11261 = vmatpush.bf16.msra.mxu0 %v11195
    %11262 = vmatpush.bf16.msra.mxu0 %v11191
    %11263 = vmatmul.bf16.gmra.mxu0 %v10236
    %v11264 = vpop.f32.mrf.mxu0
    %v11265 = vadd.f32 %v199, %v11264
    %v11266 = vpop.f32.mrf.mxu0
    %11267 = vdwg.mxu0
    %11268 = vmatpush.bf16.msra.mxu0 %v11220
    %11269 = vmatpush.bf16.msra.mxu0 %v11216
    %11270 = vmatpush.bf16.msra.mxu0 %v11212
    %11271 = vmatpush.bf16.msra.mxu0 %v11208
    %11272 = vmatpush.bf16.msra.mxu0 %v11204
    %11273 = vmatpush.bf16.msra.mxu0 %v11200
    %11274 = vmatpush.bf16.msra.mxu0 %v11196
    %11275 = vmatpush.bf16.msra.mxu0 %v11192
    %11276 = vmatmul.bf16.gmra.mxu0 %v10236
    %v11277 = vpop.f32.mrf.mxu0
    %v11278 = vadd.f32 %v200, %v11277
    %v11279 = vpop.f32.mrf.mxu0
    %11280 = vdwg.mxu0
    %11281 = vmatpush.bf16.msra.mxu0 %v11221
    %11282 = vmatpush.bf16.msra.mxu0 %v11217
    %11283 = vmatpush.bf16.msra.mxu0 %v11213
    %11284 = vmatpush.bf16.msra.mxu0 %v11209
    %11285 = vmatpush.bf16.msra.mxu0 %v11205
    %11286 = vmatpush.bf16.msra.mxu0 %v11201
    %11287 = vmatpush.bf16.msra.mxu0 %v11197
    %11288 = vmatpush.bf16.msra.mxu0 %v11193
    %11289 = vmatmul.bf16.gmra.mxu0 %v10236
    %v11290 = vpop.f32.mrf.mxu0
    %v11291 = vadd.f32 %v201, %v11290
    %v11292 = vpop.f32.mrf.mxu0
    %11293 = vdwg.mxu0
    %11294 = vmatpush.bf16.msra.mxu0 %v11222
    %11295 = vmatpush.bf16.msra.mxu0 %v11218
    %11296 = vmatpush.bf16.msra.mxu0 %v11214
    %11297 = vmatpush.bf16.msra.mxu0 %v11210
    %11298 = vmatpush.bf16.msra.mxu0 %v11206
    %11299 = vmatpush.bf16.msra.mxu0 %v11202
    %11300 = vmatpush.bf16.msra.mxu0 %v11198
    %11301 = vmatpush.bf16.msra.mxu0 %v11194
    %11302 = vmatmul.bf16.gmra.mxu0 %v10236
    %v11303 = vpop.f32.mrf.mxu0
    %v11304 = vadd.f32 %v202, %v11303
    %v11305 = vpop.f32.mrf.mxu0
    %11306 = vdwg.mxu0
    %v11307 = vpack.c.bf16 %v11094, %v11094
    %v11308 = vld [vmem:[#allocation13] sm:$0xff]
    %v11309 = vld [vmem:[#allocation13 + $0x8] sm:$0xff]
    %v11310 = vld [vmem:[#allocation13 + $0x10] sm:$0xff]
    %v11311 = vld [vmem:[#allocation13 + $0x18] sm:$0xff]
    %v11312 = vld [vmem:[#allocation13 + $0x20] sm:$0xff]
    %v11313 = vld [vmem:[#allocation13 + $0x28] sm:$0xff]
    %v11314 = vld [vmem:[#allocation13 + $0x30] sm:$0xff]
    %v11315 = vld [vmem:[#allocation13 + $0x38] sm:$0xff]
    %v11316 = vld [vmem:[#allocation13 + $0x40] sm:$0xff]
    %v11317 = vld [vmem:[#allocation13 + $0x48] sm:$0xff]
    %v11318 = vld [vmem:[#allocation13 + $0x50] sm:$0xff]
    %v11319 = vld [vmem:[#allocation13 + $0x58] sm:$0xff]
    %v11320 = vld [vmem:[#allocation13 + $0x60] sm:$0xff]
    %v11321 = vld [vmem:[#allocation13 + $0x68] sm:$0xff]
    %v11322 = vld [vmem:[#allocation13 + $0x70] sm:$0xff]
    %v11323 = vld [vmem:[#allocation13 + $0x78] sm:$0xff]
    %v11324 = vld [vmem:[#allocation13 + $0x80] sm:$0xff]
    %v11325 = vld [vmem:[#allocation13 + $0x88] sm:$0xff]
    %v11326 = vld [vmem:[#allocation13 + $0x90] sm:$0xff]
    %v11327 = vld [vmem:[#allocation13 + $0x98] sm:$0xff]
    %v11328 = vld [vmem:[#allocation13 + $0xa0] sm:$0xff]
    %v11329 = vld [vmem:[#allocation13 + $0xa8] sm:$0xff]
    %v11330 = vld [vmem:[#allocation13 + $0xb0] sm:$0xff]
    %v11331 = vld [vmem:[#allocation13 + $0xb8] sm:$0xff]
    %v11332 = vld [vmem:[#allocation13 + $0xc0] sm:$0xff]
    %v11333 = vld [vmem:[#allocation13 + $0xc8] sm:$0xff]
    %v11334 = vld [vmem:[#allocation13 + $0xd0] sm:$0xff]
    %v11335 = vld [vmem:[#allocation13 + $0xd8] sm:$0xff]
    %v11336 = vld [vmem:[#allocation13 + $0xe0] sm:$0xff]
    %v11337 = vld [vmem:[#allocation13 + $0xe8] sm:$0xff]
    %v11338 = vld [vmem:[#allocation13 + $0xf0] sm:$0xff]
    %v11339 = vld [vmem:[#allocation13 + $0xf8] sm:$0xff]
    %v11372 = vunpack.c.l.b16 %v11308
    %v11373 = vunpack.c.h.b16 %v11308
    %v11374 = vunpack.c.l.b16 %v11309
    %v11375 = vunpack.c.h.b16 %v11309
    %v11376 = vunpack.c.l.b16 %v11310
    %v11377 = vunpack.c.h.b16 %v11310
    %v11378 = vunpack.c.l.b16 %v11311
    %v11379 = vunpack.c.h.b16 %v11311
    %v11380 = vunpack.c.l.b16 %v11312
    %v11381 = vunpack.c.h.b16 %v11312
    %v11382 = vunpack.c.l.b16 %v11313
    %v11383 = vunpack.c.h.b16 %v11313
    %v11384 = vunpack.c.l.b16 %v11314
    %v11385 = vunpack.c.h.b16 %v11314
    %v11386 = vunpack.c.l.b16 %v11315
    %v11387 = vunpack.c.h.b16 %v11315
    %v11388 = vunpack.c.l.b16 %v11316
    %v11389 = vunpack.c.h.b16 %v11316
    %v11390 = vunpack.c.l.b16 %v11317
    %v11391 = vunpack.c.h.b16 %v11317
    %v11392 = vunpack.c.l.b16 %v11318
    %v11393 = vunpack.c.h.b16 %v11318
    %v11394 = vunpack.c.l.b16 %v11319
    %v11395 = vunpack.c.h.b16 %v11319
    %v11396 = vunpack.c.l.b16 %v11320
    %v11397 = vunpack.c.h.b16 %v11320
    %v11398 = vunpack.c.l.b16 %v11321
    %v11399 = vunpack.c.h.b16 %v11321
    %v11400 = vunpack.c.l.b16 %v11322
    %v11401 = vunpack.c.h.b16 %v11322
    %v11402 = vunpack.c.l.b16 %v11323
    %v11403 = vunpack.c.h.b16 %v11323
    %v11404 = vunpack.c.l.b16 %v11324
    %v11405 = vunpack.c.h.b16 %v11324
    %v11406 = vunpack.c.l.b16 %v11325
    %v11407 = vunpack.c.h.b16 %v11325
    %v11408 = vunpack.c.l.b16 %v11326
    %v11409 = vunpack.c.h.b16 %v11326
    %v11410 = vunpack.c.l.b16 %v11327
    %v11411 = vunpack.c.h.b16 %v11327
    %v11412 = vunpack.c.l.b16 %v11328
    %v11413 = vunpack.c.h.b16 %v11328
    %v11414 = vunpack.c.l.b16 %v11329
    %v11415 = vunpack.c.h.b16 %v11329
    %v11416 = vunpack.c.l.b16 %v11330
    %v11417 = vunpack.c.h.b16 %v11330
    %v11418 = vunpack.c.l.b16 %v11331
    %v11419 = vunpack.c.h.b16 %v11331
    %v11420 = vunpack.c.l.b16 %v11332
    %v11421 = vunpack.c.h.b16 %v11332
    %v11422 = vunpack.c.l.b16 %v11333
    %v11423 = vunpack.c.h.b16 %v11333
    %v11424 = vunpack.c.l.b16 %v11334
    %v11425 = vunpack.c.h.b16 %v11334
    %v11426 = vunpack.c.l.b16 %v11335
    %v11427 = vunpack.c.h.b16 %v11335
    %v11428 = vunpack.c.l.b16 %v11336
    %v11429 = vunpack.c.h.b16 %v11336
    %v11430 = vunpack.c.l.b16 %v11337
    %v11431 = vunpack.c.h.b16 %v11337
    %v11432 = vunpack.c.l.b16 %v11338
    %v11433 = vunpack.c.h.b16 %v11338
    %v11434 = vunpack.c.l.b16 %v11339
    %v11435 = vunpack.c.h.b16 %v11339
    %v11436 = vpack.c.b16 %v11376, %v11372
    %v11437 = vpack.c.b16 %v11377, %v11373
    %v11438 = vpack.c.b16 %v11378, %v11374
    %v11439 = vpack.c.b16 %v11379, %v11375
    %v11440 = vpack.c.b16 %v11384, %v11380
    %v11441 = vpack.c.b16 %v11385, %v11381
    %v11442 = vpack.c.b16 %v11386, %v11382
    %v11443 = vpack.c.b16 %v11387, %v11383
    %v11444 = vpack.c.b16 %v11392, %v11388
    %v11445 = vpack.c.b16 %v11393, %v11389
    %v11446 = vpack.c.b16 %v11394, %v11390
    %v11447 = vpack.c.b16 %v11395, %v11391
    %v11448 = vpack.c.b16 %v11400, %v11396
    %v11449 = vpack.c.b16 %v11401, %v11397
    %v11450 = vpack.c.b16 %v11402, %v11398
    %v11451 = vpack.c.b16 %v11403, %v11399
    %v11452 = vpack.c.b16 %v11408, %v11404
    %v11453 = vpack.c.b16 %v11409, %v11405
    %v11454 = vpack.c.b16 %v11410, %v11406
    %v11455 = vpack.c.b16 %v11411, %v11407
    %v11456 = vpack.c.b16 %v11416, %v11412
    %v11457 = vpack.c.b16 %v11417, %v11413
    %v11458 = vpack.c.b16 %v11418, %v11414
    %v11459 = vpack.c.b16 %v11419, %v11415
    %v11460 = vpack.c.b16 %v11424, %v11420
    %v11461 = vpack.c.b16 %v11425, %v11421
    %v11462 = vpack.c.b16 %v11426, %v11422
    %v11463 = vpack.c.b16 %v11427, %v11423
    %v11464 = vpack.c.b16 %v11432, %v11428
    %v11465 = vpack.c.b16 %v11433, %v11429
    %v11466 = vpack.c.b16 %v11434, %v11430
    %v11467 = vpack.c.b16 %v11435, %v11431
    %11500 = vmatpush.bf16.msra.mxu0 %v11464
    %11501 = vmatpush.bf16.msra.mxu0 %v11460
    %11502 = vmatpush.bf16.msra.mxu0 %v11456
    %11503 = vmatpush.bf16.msra.mxu0 %v11452
    %11504 = vmatpush.bf16.msra.mxu0 %v11448
    %11505 = vmatpush.bf16.msra.mxu0 %v11444
    %11506 = vmatpush.bf16.msra.mxu0 %v11440
    %11507 = vmatpush.bf16.msra.mxu0 %v11436
    %11508 = vmatmul.bf16.gmra.mxu0 %v11307
    %v11509 = vpop.f32.mrf.mxu0
    %v11510 = vadd.f32 0.0, %v11509
    %v11511 = vpop.f32.mrf.mxu0
    %11512 = vdwg.mxu0
    %11513 = vmatpush.bf16.msra.mxu0 %v11465
    %11514 = vmatpush.bf16.msra.mxu0 %v11461
    %11515 = vmatpush.bf16.msra.mxu0 %v11457
    %11516 = vmatpush.bf16.msra.mxu0 %v11453
    %11517 = vmatpush.bf16.msra.mxu0 %v11449
    %11518 = vmatpush.bf16.msra.mxu0 %v11445
    %11519 = vmatpush.bf16.msra.mxu0 %v11441
    %11520 = vmatpush.bf16.msra.mxu0 %v11437
    %11521 = vmatmul.bf16.gmra.mxu0 %v11307
    %v11522 = vpop.f32.mrf.mxu0
    %v11523 = vadd.f32 0.0, %v11522
    %v11524 = vpop.f32.mrf.mxu0
    %11525 = vdwg.mxu0
    %11526 = vmatpush.bf16.msra.mxu0 %v11466
    %11527 = vmatpush.bf16.msra.mxu0 %v11462
    %11528 = vmatpush.bf16.msra.mxu0 %v11458
    %11529 = vmatpush.bf16.msra.mxu0 %v11454
    %11530 = vmatpush.bf16.msra.mxu0 %v11450
    %11531 = vmatpush.bf16.msra.mxu0 %v11446
    %11532 = vmatpush.bf16.msra.mxu0 %v11442
    %11533 = vmatpush.bf16.msra.mxu0 %v11438
    %11534 = vmatmul.bf16.gmra.mxu0 %v11307
    %v11535 = vpop.f32.mrf.mxu0
    %v11536 = vadd.f32 0.0, %v11535
    %v11537 = vpop.f32.mrf.mxu0
    %11538 = vdwg.mxu0
    %11539 = vmatpush.bf16.msra.mxu0 %v11467
    %11540 = vmatpush.bf16.msra.mxu0 %v11463
    %11541 = vmatpush.bf16.msra.mxu0 %v11459
    %11542 = vmatpush.bf16.msra.mxu0 %v11455
    %11543 = vmatpush.bf16.msra.mxu0 %v11451
    %11544 = vmatpush.bf16.msra.mxu0 %v11447
    %11545 = vmatpush.bf16.msra.mxu0 %v11443
    %11546 = vmatpush.bf16.msra.mxu0 %v11439
    %11547 = vmatmul.bf16.gmra.mxu0 %v11307
    %v11548 = vpop.f32.mrf.mxu0
    %v11549 = vadd.f32 0.0, %v11548
    %v11550 = vpop.f32.mrf.mxu0
    %11551 = vdwg.mxu0
    %v11552 = vadd.f32 %v11265, %v11510
    %v11553 = vadd.f32 %v11278, %v11523
    %v11554 = vadd.f32 %v11291, %v11536
    %v11555 = vadd.f32 %v11304, %v11549
    %v11556 = vxor.u32 %v11552, 2147483648
    %v11557 = vxor.u32 %v11553, 2147483648
    %v11558 = vxor.u32 %v11554, 2147483648
    %v11559 = vmul.f32 %v11556, 1.442695
    %v11560 = vpow.pop %v11559
    %v11561 = vmul.f32 %v11557, 1.442695
    %v11562 = vpow.pop %v11561
    %v11563 = vmul.f32 %v11558, 1.442695
    %v11564 = vpow.pop %v11563
    %v11565 = vadd.f32 %v11560, 1.0
    %v11566 = vadd.f32 %v11562, 1.0
    %v11567 = vadd.f32 %v11564, 1.0
    %v11568 = vrcp.pop %v11565
    %v11569 = vmul.f32 %v11565, %v11568
    %v11570 = vsub.f32 1.0, %v11569
    %v11571 = vmul.f32 %v11568, %v11570
    %v11572 = vadd.f32 %v11568, %v11571
    %vm11573 = vweird.f32 %v11565
    %vm11574 = vweird.f32 %v11568
    %vm11575 = vmor %vm11573, %vm11574
    %v11576 = vsel %vm11575, %v11568, %v11572
    %v11577 = vand.u32 2147483647, %v11565
    %vm11578 = vcmp.eq.f32.partialorder %v11577, 8.507059e+37
    %v11579 = vand.u32 %v11565, 2147483648
    %v11580 = vor.u32 1.1754944e-38, %v11579
    %v11581 = vsel %vm11578, %v11580, %v11576
    %v11582 = vmul.f32 1.0, %v11581
    %v11583 = vrcp.pop %v11566
    %v11584 = vmul.f32 %v11566, %v11583
    %v11585 = vsub.f32 1.0, %v11584
    %v11586 = vmul.f32 %v11583, %v11585
    %v11587 = vadd.f32 %v11583, %v11586
    %vm11588 = vweird.f32 %v11566
    %vm11589 = vweird.f32 %v11583
    %vm11590 = vmor %vm11588, %vm11589
    %v11591 = vsel %vm11590, %v11583, %v11587
    %v11592 = vand.u32 2147483647, %v11566
    %vm11593 = vcmp.eq.f32.partialorder %v11592, 8.507059e+37
    %v11594 = vand.u32 %v11566, 2147483648
    %v11595 = vor.u32 1.1754944e-38, %v11594
    %v11596 = vsel %vm11593, %v11595, %v11591
    %v11597 = vmul.f32 1.0, %v11596
    %v11598 = vrcp.pop %v11567
    %v11599 = vmul.f32 %v11567, %v11598
    %v11600 = vsub.f32 1.0, %v11599
    %v11601 = vmul.f32 %v11598, %v11600
    %v11602 = vadd.f32 %v11598, %v11601
    %vm11603 = vweird.f32 %v11567
    %vm11604 = vweird.f32 %v11598
    %vm11605 = vmor %vm11603, %vm11604
    %v11606 = vsel %vm11605, %v11598, %v11602
    %v11607 = vand.u32 2147483647, %v11567
    %vm11608 = vcmp.eq.f32.partialorder %v11607, 8.507059e+37
    %v11609 = vand.u32 %v11567, 2147483648
    %v11610 = vor.u32 1.1754944e-38, %v11609
    %v11611 = vsel %vm11608, %v11610, %v11606
    %v11612 = vmul.f32 1.0, %v11611
    %v11613 = vtanh.pop %v11555
    %v11614 = vmul.f32 %v11597, %v10172
    %v11615 = vmul.f32 %v11582, %v11613
    %v11616 = vadd.f32 %v11614, %v11615
    %v11617 = vtanh.pop %v11616
    %v11618 = vmul.f32 %v11612, %v11617
    %v11635 = vunpack.c.l.b16 %v10759
    %v11636 = vunpack.c.l.b16 %v10760
    %v11637 = vunpack.c.l.b16 %v10761
    %v11638 = vunpack.c.l.b16 %v10762
    %v11639 = vunpack.c.l.b16 %v10763
    %v11640 = vunpack.c.l.b16 %v10764
    %v11641 = vunpack.c.l.b16 %v10765
    %v11642 = vunpack.c.l.b16 %v10766
    %v11643 = vunpack.c.l.b16 %v10767
    %v11644 = vunpack.c.l.b16 %v10768
    %v11645 = vunpack.c.l.b16 %v10769
    %v11646 = vunpack.c.l.b16 %v10770
    %v11647 = vunpack.c.l.b16 %v10771
    %v11648 = vunpack.c.l.b16 %v10772
    %v11649 = vunpack.c.l.b16 %v10773
    %v11650 = vunpack.c.l.b16 %v10774
    %v11651 = vpack.c.b16 %v11636, %v11635
    %v11652 = vpack.c.b16 %v11638, %v11637
    %v11653 = vpack.c.b16 %v11640, %v11639
    %v11654 = vpack.c.b16 %v11642, %v11641
    %v11655 = vpack.c.b16 %v11644, %v11643
    %v11656 = vpack.c.b16 %v11646, %v11645
    %v11657 = vpack.c.b16 %v11648, %v11647
    %v11658 = vpack.c.b16 %v11650, %v11649
    %11667 = vmatpush.bf16.msra.mxu0 %v11658
    %11668 = vmatpush.bf16.msra.mxu0 %v11657
    %11669 = vmatpush.bf16.msra.mxu0 %v11656
    %11670 = vmatpush.bf16.msra.mxu0 %v11655
    %11671 = vmatpush.bf16.msra.mxu0 %v11654
    %11672 = vmatpush.bf16.msra.mxu0 %v11653
    %11673 = vmatpush.bf16.msra.mxu0 %v11652
    %11674 = vmatpush.bf16.msra.mxu0 %v11651
    %11675 = vmatmul.bf16.gmra.mxu0 %v10758
    %v11676 = vpop.f32.mrf.mxu0
    %v11677 = vadd.f32 %v209, %v11676
    %v11678 = vpop.f32.mrf.mxu0
    %11679 = vdwg.mxu0
    %v11680 = vpack.c.bf16 %v11618, %v11618
    %v11681 = vld [vmem:[#allocation16] sm:$0xf]
    %v11682 = vld [vmem:[#allocation16 + $0x4] sm:$0xf]
    %v11683 = vld [vmem:[#allocation16 + $0x8] sm:$0xf]
    %v11684 = vld [vmem:[#allocation16 + $0xc] sm:$0xf]
    %v11685 = vld [vmem:[#allocation16 + $0x10] sm:$0xf]
    %v11686 = vld [vmem:[#allocation16 + $0x14] sm:$0xf]
    %v11687 = vld [vmem:[#allocation16 + $0x18] sm:$0xf]
    %v11688 = vld [vmem:[#allocation16 + $0x1c] sm:$0xf]
    %v11689 = vld [vmem:[#allocation16 + $0x20] sm:$0xf]
    %v11690 = vld [vmem:[#allocation16 + $0x24] sm:$0xf]
    %v11691 = vld [vmem:[#allocation16 + $0x28] sm:$0xf]
    %v11692 = vld [vmem:[#allocation16 + $0x2c] sm:$0xf]
    %v11693 = vld [vmem:[#allocation16 + $0x30] sm:$0xf]
    %v11694 = vld [vmem:[#allocation16 + $0x34] sm:$0xf]
    %v11695 = vld [vmem:[#allocation16 + $0x38] sm:$0xf]
    %v11696 = vld [vmem:[#allocation16 + $0x3c] sm:$0xf]
    %v11713 = vunpack.c.l.b16 %v11681
    %v11714 = vunpack.c.l.b16 %v11682
    %v11715 = vunpack.c.l.b16 %v11683
    %v11716 = vunpack.c.l.b16 %v11684
    %v11717 = vunpack.c.l.b16 %v11685
    %v11718 = vunpack.c.l.b16 %v11686
    %v11719 = vunpack.c.l.b16 %v11687
    %v11720 = vunpack.c.l.b16 %v11688
    %v11721 = vunpack.c.l.b16 %v11689
    %v11722 = vunpack.c.l.b16 %v11690
    %v11723 = vunpack.c.l.b16 %v11691
    %v11724 = vunpack.c.l.b16 %v11692
    %v11725 = vunpack.c.l.b16 %v11693
    %v11726 = vunpack.c.l.b16 %v11694
    %v11727 = vunpack.c.l.b16 %v11695
    %v11728 = vunpack.c.l.b16 %v11696
    %v11729 = vpack.c.b16 %v11714, %v11713
    %v11730 = vpack.c.b16 %v11716, %v11715
    %v11731 = vpack.c.b16 %v11718, %v11717
    %v11732 = vpack.c.b16 %v11720, %v11719
    %v11733 = vpack.c.b16 %v11722, %v11721
    %v11734 = vpack.c.b16 %v11724, %v11723
    %v11735 = vpack.c.b16 %v11726, %v11725
    %v11736 = vpack.c.b16 %v11728, %v11727
    %11745 = vmatpush.bf16.msra.mxu0 %v11736
    %11746 = vmatpush.bf16.msra.mxu0 %v11735
    %11747 = vmatpush.bf16.msra.mxu0 %v11734
    %11748 = vmatpush.bf16.msra.mxu0 %v11733
    %11749 = vmatpush.bf16.msra.mxu0 %v11732
    %11750 = vmatpush.bf16.msra.mxu0 %v11731
    %11751 = vmatpush.bf16.msra.mxu0 %v11730
    %11752 = vmatpush.bf16.msra.mxu0 %v11729
    %11753 = vmatmul.bf16.gmra.mxu0 %v11680
    %v11754 = vpop.f32.mrf.mxu0
    %v11755 = vadd.f32 0.0, %v11754
    %v11756 = vpop.f32.mrf.mxu0
    %11757 = vdwg.mxu0
    %v11758 = vadd.f32 %v11677, %v11755
    %s11759 = scalar_lea.vmem [#allocation19], 56
    %11760 = vst [vmem:[%s11759] sm:$0xff] %v11758
    // Predicated region
    $region90: #{tpu_custom_call.1} parent=1 // pred_check
      _
    $region91: #{tpu_custom_call.1} parent=1 // pred_check_branch
      %11762 = sbr.rel (0) target = $region93
    $region92: #{tpu_custom_call.1} parent=1 // pred_region
      %11764 = vsyncadd [#allocation4], 0
      %s11765 = sshll.u32 [#allocation19], 4
      %s11766 = int_to_ptr.vmem [resolvable:$true] %s11765
      %s11767 = sshll.u32 %s12, 4
      %s11768 = int_to_ptr.hbm [resolvable:$true] %s11767
      %11773 = dma.vmem_to_hbm [thread:$0]  %s11766, 1024, %s11768, [#allocation4], 128, 128, 8
    $region93: #{tpu_custom_call.1} parent=1 // pred_fallthru
      _
    // Predicated region
    $region94: #{tpu_custom_call.1} parent=1 // pred_check
      _
    $region95: #{tpu_custom_call.1} parent=1 // pred_check_branch
      %11775 = sbr.rel (0) target = $region97
    $region96: #{tpu_custom_call.1} parent=1 // pred_region
      %11777 = dma.done [#allocation4], 1024
    $region97: #{tpu_custom_call.1} parent=1 // pred_fallthru
      _
    %11778 = vsyncpa [#allocation3], 1
    %11779 = vsyncpa [#allocation6], 1
    %11780 = vsyncpa [#allocation9], 1
    %11781 = vsyncpa [#allocation12], 1
    %11782 = vsyncpa [#allocation15], 1
    %11783 = vsyncpa [#allocation18], 1
    %11784 = vsyncpa [#allocation4], 1

</llo_original>
